<compile_context>
chip_gen: v7x
topology: tpu7x:2x2x1
jax: 0.10.0
libtpu: 0.0.40
codegen_flags: <defaults>
</compile_context>

<pallas_src>
import functools

import jax
import jax.numpy as jnp
from jax.experimental import pallas as pl
from jax.experimental.pallas import tpu as pltpu


# ----------------------------------------------------------------------------
# model hyper-parameters (match the PyTorch defaults / a small test setting)
# ----------------------------------------------------------------------------
IN_CHANNELS = 13
HIDDEN = 32
OUT_FEATURES = 243
OUT_PAD = 256                  # tile-aligned padded head output (sliced to 243)
MLP_WIDTH = 1024
NEG_SLOPE = 0.2

STATS = 3 * HIDDEN             # [var | std | mean]
STATS_AUG = STATS + 1          # + ones row (bias folding)
HID_AUG = MLP_WIDTH + 1        # hidden + propagated ones row

BATCH = 2
SEQ = 16


def _leaky(x):
    # LeakyReLU(0.2) as max(x, 0.2*x): 2 VPU ops instead of cmp+mul+select.
    return jnp.maximum(x, NEG_SLOPE * x)


def _bf16(x):
    return x.astype(jnp.bfloat16)


# ----------------------------------------------------------------------------
# residual signal encoder, feature-major, batched over all B*L columns.
#   x_cl : (2C, B*L) f32 merged [yx ; xy] slab
#   returns (H, B*L) f32
# Weights are stored pre-transposed (out-dim first) so every dot is a
# standard-form MXU matmul on the (C, cols) slabs -- no in-kernel transposes.
# ----------------------------------------------------------------------------
def _encode(x_cl, p):
    w0, b0, w1, b1, w2, b2, wo, bo = p
    h = _leaky(jnp.dot(w0, _bf16(x_cl), preferred_element_type=jnp.float32) + b0)
    r = _leaky(jnp.dot(w1, _bf16(h), preferred_element_type=jnp.float32) + b1)
    r = jnp.dot(w2, _bf16(r), preferred_element_type=jnp.float32) + b2
    h = _leaky(h + r)
    return jnp.dot(wo, _bf16(h), preferred_element_type=jnp.float32) + bo


# ----------------------------------------------------------------------------
# fused forward kernel: encoders + MXU statistical pooling + regression head
# ----------------------------------------------------------------------------
def _fused_kernel(inv_l, rho_ref, phi_ref, pool_ref, *refs):
    o_ref = refs[-1]
    rho_p = tuple(r[...] for r in refs[0:8])
    phi_p = tuple(r[...] for r in refs[8:16])
    w1h, w2h, w3h = (r[...] for r in refs[16:19])

    # encoders over ALL batch columns at once
    e = _encode(rho_ref[...], rho_p) + _encode(phi_ref[...], phi_p)   # (H, B*L) f32

    # statistical pooling on the MXU: per-batch block sums via 0/1 pooling matrix
    p = pool_ref[...]                                                 # (B*L, B) f32
    s1 = jnp.dot(e, p, preferred_element_type=jnp.float32)            # (H, B) sum
    s2 = jnp.dot(e * e, p, preferred_element_type=jnp.float32)        # (H, B) sum sq
    mean = s1 * inv_l
    var = s2 * inv_l - mean * mean        # torch.var(dim=2, unbiased=False)
    std = var * var                       # (sic) reference quirk: variance ** 2

    bsz = o_ref.shape[1]
    ones = jnp.ones((1, bsz), jnp.float32)                            # bias-fold row
    stats = jnp.concatenate([var, std, mean, ones], axis=0)           # (3H+1, B)

    # 3-layer regression head; biases are folded into the augmented weights and
    # the ones row is propagated through the LeakyReLUs (LeakyReLU(1) == 1).
    h = _leaky(jnp.dot(w1h, _bf16(stats), preferred_element_type=jnp.float32))
    h = _leaky(jnp.dot(w2h, _bf16(h), preferred_element_type=jnp.float32))
    out = jnp.dot(w3h, _bf16(h), preferred_element_type=jnp.float32)  # (OUT_PAD, B)
    o_ref[...] = jnp.maximum(out, 0.0).astype(o_ref.dtype)            # final ReLU


# ----------------------------------------------------------------------------
# parameter construction (deterministic, in-script).  Matmul weights are bf16,
# stored output-dim-first; encoder biases are tiny (H,1) f32 columns; head
# biases are folded into augmented weight matrices.
# ----------------------------------------------------------------------------
def _dense(key, shape, fan_in):
    w = jax.random.normal(key, shape, jnp.float32) * (fan_in ** -0.5)
    return w.astype(jnp.bfloat16)


def _bias(key, n):
    return jax.random.normal(key, (n, 1), jnp.float32) * 0.01


def _encoder_params(key):
    kk = jax.random.split(key, 8)
    return (
        _dense(kk[0], (HIDDEN, 2 * IN_CHANNELS), 2 * IN_CHANNELS),   # fused stem
        _bias(kk[1], HIDDEN),
        _dense(kk[2], (HIDDEN, HIDDEN), HIDDEN), _bias(kk[3], HIDDEN),
        _dense(kk[4], (HIDDEN, HIDDEN), HIDDEN), _bias(kk[5], HIDDEN),
        _dense(kk[6], (HIDDEN, HIDDEN), HIDDEN), _bias(kk[7], HIDDEN),
    )


def _head_params(key):
    kk = jax.random.split(key, 6)
    w1 = jax.random.normal(kk[0], (MLP_WIDTH, STATS), jnp.float32) * (STATS ** -0.5)
    b1 = jax.random.normal(kk[1], (MLP_WIDTH,), jnp.float32) * 0.01
    w2 = jax.random.normal(kk[2], (MLP_WIDTH, MLP_WIDTH), jnp.float32) * (MLP_WIDTH ** -0.5)
    b2 = jax.random.normal(kk[3], (MLP_WIDTH,), jnp.float32) * 0.01
    w3 = jax.random.normal(kk[4], (OUT_FEATURES, MLP_WIDTH), jnp.float32) * (MLP_WIDTH ** -0.5)
    b3 = jax.random.normal(kk[5], (OUT_FEATURES,), jnp.float32) * 0.01

    # layer 1: [W1 | b1] plus an identity row that turns the stats ones-row
    # into a ones-row of the hidden activation (LeakyReLU(1) = 1).
    w1a = jnp.zeros((HID_AUG, STATS_AUG), jnp.float32)
    w1a = w1a.at[:MLP_WIDTH, :STATS].set(w1).at[:MLP_WIDTH, STATS].set(b1)
    w1a = w1a.at[MLP_WIDTH, STATS].set(1.0)

    # layer 2: [W2 | b2] plus the same ones-row propagation.
    w2a = jnp.zeros((HID_AUG, HID_AUG), jnp.float32)
    w2a = w2a.at[:MLP_WIDTH, :MLP_WIDTH].set(w2).at[:MLP_WIDTH, MLP_WIDTH].set(b2)
    w2a = w2a.at[MLP_WIDTH, MLP_WIDTH].set(1.0)

    # layer 3: [W3 | b3], zero rows 243..255 (padded outputs stay exactly 0).
    w3a = jnp.zeros((OUT_PAD, HID_AUG), jnp.float32)
    w3a = w3a.at[:OUT_FEATURES, :MLP_WIDTH].set(w3).at[:OUT_FEATURES, MLP_WIDTH].set(b3)

    # TODO(synk): on v7x consider fp8 storage for w2a (the 2 MiB layer) since
    #             its MXU takes fp8 natively.
    return (w1a.astype(jnp.bfloat16), w2a.astype(jnp.bfloat16), w3a.astype(jnp.bfloat16))


def init_params(key):
    k_rho, k_phi, k_head = jax.random.split(key, 3)
    return {
        "rho": _encoder_params(k_rho),
        "phi": _encoder_params(k_phi),
        "head": _head_params(k_head),
    }


# ----------------------------------------------------------------------------
# forward pass: ONE pallas_call for the whole model
# ----------------------------------------------------------------------------
@jax.jit
def mt_param_model(params, rho_yx, rho_xy, phi_yx, phi_xy):
    bsz, c, seq = rho_yx.shape

    def merge(a, b):
        # (B, C, L) x2 -> feature-major (2C, B*L), batch-major column order.
        x = jnp.concatenate([a, b], axis=1)                  # (B, 2C, L)
        return jnp.transpose(x, (1, 0, 2)).reshape(2 * c, bsz * seq)

    rho_in = merge(rho_yx, rho_xy)
    phi_in = merge(phi_yx, phi_xy)
    # 0/1 per-batch pooling matrix (exact); 1/L scaling is done in-kernel in f32.
    pool = jnp.repeat(jnp.eye(bsz, dtype=jnp.float32), seq, axis=0)   # (B*L, B)

    flat = tuple(params["rho"]) + tuple(params["phi"]) + tuple(params["head"])
    vmem = pl.BlockSpec(memory_space=pltpu.MemorySpace.VMEM)
    kernel = functools.partial(_fused_kernel, 1.0 / float(seq))

    out_t = pl.pallas_call(
        kernel,
        out_shape=jax.ShapeDtypeStruct((OUT_PAD, bsz), jnp.float32),
        in_specs=[vmem] * (3 + len(flat)),
        out_specs=vmem,
    )(rho_in, phi_in, pool, *flat)

    # (OUT_PAD, B) -> (B, OUT_FEATURES): tiny XLA slice + transpose
    return out_t[:OUT_FEATURES, :].T


# ----------------------------------------------------------------------------
if __name__ == "__main__":
    key = jax.random.PRNGKey(0)
    kp, k1, k2, k3, k4 = jax.random.split(key, 5)

    params = init_params(kp)
    rho_yx = jax.random.normal(k1, (BATCH, IN_CHANNELS, SEQ), jnp.float32)
    rho_xy = jax.random.normal(k2, (BATCH, IN_CHANNELS, SEQ), jnp.float32)
    phi_yx = jax.random.normal(k3, (BATCH, IN_CHANNELS, SEQ), jnp.float32)
    phi_xy = jax.random.normal(k4, (BATCH, IN_CHANNELS, SEQ), jnp.float32)

    out = mt_param_model(params, rho_yx, rho_xy, phi_yx, phi_xy)
    out = jax.block_until_ready(out)
    assert out.shape == (BATCH, OUT_FEATURES), out.shape
    assert bool(jnp.all(out >= 0.0))  # final ReLU
    print("KERNEL_OK")
</pallas_src>

<mosaic_0001>
module attributes {stable_mosaic.version = 11 : i64} {
  func.func @_fused_kernel(%arg0: memref<26x32xf32, #tpu.memory_space<vmem>>, %arg1: memref<26x32xf32, #tpu.memory_space<vmem>>, %arg2: memref<32x2xf32, #tpu.memory_space<vmem>>, %arg3: memref<32x26xbf16, #tpu.memory_space<vmem>>, %arg4: memref<32x1xf32, #tpu.memory_space<vmem>>, %arg5: memref<32x32xbf16, #tpu.memory_space<vmem>>, %arg6: memref<32x1xf32, #tpu.memory_space<vmem>>, %arg7: memref<32x32xbf16, #tpu.memory_space<vmem>>, %arg8: memref<32x1xf32, #tpu.memory_space<vmem>>, %arg9: memref<32x32xbf16, #tpu.memory_space<vmem>>, %arg10: memref<32x1xf32, #tpu.memory_space<vmem>>, %arg11: memref<32x26xbf16, #tpu.memory_space<vmem>>, %arg12: memref<32x1xf32, #tpu.memory_space<vmem>>, %arg13: memref<32x32xbf16, #tpu.memory_space<vmem>>, %arg14: memref<32x1xf32, #tpu.memory_space<vmem>>, %arg15: memref<32x32xbf16, #tpu.memory_space<vmem>>, %arg16: memref<32x1xf32, #tpu.memory_space<vmem>>, %arg17: memref<32x32xbf16, #tpu.memory_space<vmem>>, %arg18: memref<32x1xf32, #tpu.memory_space<vmem>>, %arg19: memref<1025x97xbf16, #tpu.memory_space<vmem>>, %arg20: memref<1025x1025xbf16, #tpu.memory_space<vmem>>, %arg21: memref<256x1025xbf16, #tpu.memory_space<vmem>>, %arg22: memref<256x2xf32, #tpu.memory_space<vmem>>) attributes {dimension_semantics = [], scalar_prefetch = 0 : i64, scratch_operands = 0 : i64, tpu.core_type = #tpu.core_type<tc>} {
    %c0 = arith.constant 0 : index
    %c0_0 = arith.constant 0 : index
    %0 = vector.load %arg3[%c0, %c0_0] : memref<32x26xbf16, #tpu.memory_space<vmem>>, vector<32x26xbf16>
    %c0_1 = arith.constant 0 : index
    %c0_2 = arith.constant 0 : index
    %1 = vector.load %arg4[%c0_1, %c0_2] : memref<32x1xf32, #tpu.memory_space<vmem>>, vector<32x1xf32>
    %c0_3 = arith.constant 0 : index
    %c0_4 = arith.constant 0 : index
    %2 = vector.load %arg5[%c0_3, %c0_4] : memref<32x32xbf16, #tpu.memory_space<vmem>>, vector<32x32xbf16>
    %c0_5 = arith.constant 0 : index
    %c0_6 = arith.constant 0 : index
    %3 = vector.load %arg6[%c0_5, %c0_6] : memref<32x1xf32, #tpu.memory_space<vmem>>, vector<32x1xf32>
    %c0_7 = arith.constant 0 : index
    %c0_8 = arith.constant 0 : index
    %4 = vector.load %arg7[%c0_7, %c0_8] : memref<32x32xbf16, #tpu.memory_space<vmem>>, vector<32x32xbf16>
    %c0_9 = arith.constant 0 : index
    %c0_10 = arith.constant 0 : index
    %5 = vector.load %arg8[%c0_9, %c0_10] : memref<32x1xf32, #tpu.memory_space<vmem>>, vector<32x1xf32>
    %c0_11 = arith.constant 0 : index
    %c0_12 = arith.constant 0 : index
    %6 = vector.load %arg9[%c0_11, %c0_12] : memref<32x32xbf16, #tpu.memory_space<vmem>>, vector<32x32xbf16>
    %c0_13 = arith.constant 0 : index
    %c0_14 = arith.constant 0 : index
    %7 = vector.load %arg10[%c0_13, %c0_14] : memref<32x1xf32, #tpu.memory_space<vmem>>, vector<32x1xf32>
    %c0_15 = arith.constant 0 : index
    %c0_16 = arith.constant 0 : index
    %8 = vector.load %arg11[%c0_15, %c0_16] : memref<32x26xbf16, #tpu.memory_space<vmem>>, vector<32x26xbf16>
    %c0_17 = arith.constant 0 : index
    %c0_18 = arith.constant 0 : index
    %9 = vector.load %arg12[%c0_17, %c0_18] : memref<32x1xf32, #tpu.memory_space<vmem>>, vector<32x1xf32>
    %c0_19 = arith.constant 0 : index
    %c0_20 = arith.constant 0 : index
    %10 = vector.load %arg13[%c0_19, %c0_20] : memref<32x32xbf16, #tpu.memory_space<vmem>>, vector<32x32xbf16>
    %c0_21 = arith.constant 0 : index
    %c0_22 = arith.constant 0 : index
    %11 = vector.load %arg14[%c0_21, %c0_22] : memref<32x1xf32, #tpu.memory_space<vmem>>, vector<32x1xf32>
    %c0_23 = arith.constant 0 : index
    %c0_24 = arith.constant 0 : index
    %12 = vector.load %arg15[%c0_23, %c0_24] : memref<32x32xbf16, #tpu.memory_space<vmem>>, vector<32x32xbf16>
    %c0_25 = arith.constant 0 : index
    %c0_26 = arith.constant 0 : index
    %13 = vector.load %arg16[%c0_25, %c0_26] : memref<32x1xf32, #tpu.memory_space<vmem>>, vector<32x1xf32>
    %c0_27 = arith.constant 0 : index
    %c0_28 = arith.constant 0 : index
    %14 = vector.load %arg17[%c0_27, %c0_28] : memref<32x32xbf16, #tpu.memory_space<vmem>>, vector<32x32xbf16>
    %c0_29 = arith.constant 0 : index
    %c0_30 = arith.constant 0 : index
    %15 = vector.load %arg18[%c0_29, %c0_30] : memref<32x1xf32, #tpu.memory_space<vmem>>, vector<32x1xf32>
    %c0_31 = arith.constant 0 : index
    %c0_32 = arith.constant 0 : index
    %16 = vector.load %arg19[%c0_31, %c0_32] : memref<1025x97xbf16, #tpu.memory_space<vmem>>, vector<1025x97xbf16>
    %c0_33 = arith.constant 0 : index
    %c0_34 = arith.constant 0 : index
    %17 = vector.load %arg20[%c0_33, %c0_34] : memref<1025x1025xbf16, #tpu.memory_space<vmem>>, vector<1025x1025xbf16>
    %c0_35 = arith.constant 0 : index
    %c0_36 = arith.constant 0 : index
    %18 = vector.load %arg21[%c0_35, %c0_36] : memref<256x1025xbf16, #tpu.memory_space<vmem>>, vector<256x1025xbf16>
    %c0_37 = arith.constant 0 : index
    %c0_38 = arith.constant 0 : index
    %19 = vector.load %arg0[%c0_37, %c0_38] : memref<26x32xf32, #tpu.memory_space<vmem>>, vector<26x32xf32>
    %20 = arith.truncf %19 : vector<26x32xf32> to vector<26x32xbf16>
    %cst = arith.constant dense<0.000000e+00> : vector<32x32xf32>
    %21 = tpu.matmul %0, %20, %cst {dimension_numbers = #tpu.dot_dimension_numbers<[1], [0], [0], [1], [0, 0, 1, 1], [], []>} : vector<32x26xbf16>, vector<26x32xbf16>, vector<32x32xf32> -> vector<32x32xf32>
    %22 = vector.broadcast %1 : vector<32x1xf32> to vector<32x32xf32>
    %23 = arith.addf %21, %22 : vector<32x32xf32>
    %cst_39 = arith.constant 2.000000e-01 : f32
    %24 = vector.broadcast %cst_39 : f32 to vector<32x32xf32>
    %25 = arith.mulf %24, %23 : vector<32x32xf32>
    %26 = arith.maximumf %23, %25 : vector<32x32xf32>
    %27 = arith.truncf %26 : vector<32x32xf32> to vector<32x32xbf16>
    %cst_40 = arith.constant dense<0.000000e+00> : vector<32x32xf32>
    %28 = tpu.matmul %2, %27, %cst_40 {dimension_numbers = #tpu.dot_dimension_numbers<[1], [0], [0], [1], [0, 0, 1, 1], [], []>} : vector<32x32xbf16>, vector<32x32xbf16>, vector<32x32xf32> -> vector<32x32xf32>
    %29 = vector.broadcast %3 : vector<32x1xf32> to vector<32x32xf32>
    %30 = arith.addf %28, %29 : vector<32x32xf32>
    %cst_41 = arith.constant 2.000000e-01 : f32
    %31 = vector.broadcast %cst_41 : f32 to vector<32x32xf32>
    %32 = arith.mulf %31, %30 : vector<32x32xf32>
    %33 = arith.maximumf %30, %32 : vector<32x32xf32>
    %34 = arith.truncf %33 : vector<32x32xf32> to vector<32x32xbf16>
    %cst_42 = arith.constant dense<0.000000e+00> : vector<32x32xf32>
    %35 = tpu.matmul %4, %34, %cst_42 {dimension_numbers = #tpu.dot_dimension_numbers<[1], [0], [0], [1], [0, 0, 1, 1], [], []>} : vector<32x32xbf16>, vector<32x32xbf16>, vector<32x32xf32> -> vector<32x32xf32>
    %36 = vector.broadcast %5 : vector<32x1xf32> to vector<32x32xf32>
    %37 = arith.addf %35, %36 : vector<32x32xf32>
    %38 = arith.addf %26, %37 : vector<32x32xf32>
    %cst_43 = arith.constant 2.000000e-01 : f32
    %39 = vector.broadcast %cst_43 : f32 to vector<32x32xf32>
    %40 = arith.mulf %39, %38 : vector<32x32xf32>
    %41 = arith.maximumf %38, %40 : vector<32x32xf32>
    %42 = arith.truncf %41 : vector<32x32xf32> to vector<32x32xbf16>
    %cst_44 = arith.constant dense<0.000000e+00> : vector<32x32xf32>
    %43 = tpu.matmul %6, %42, %cst_44 {dimension_numbers = #tpu.dot_dimension_numbers<[1], [0], [0], [1], [0, 0, 1, 1], [], []>} : vector<32x32xbf16>, vector<32x32xbf16>, vector<32x32xf32> -> vector<32x32xf32>
    %44 = vector.broadcast %7 : vector<32x1xf32> to vector<32x32xf32>
    %45 = arith.addf %43, %44 : vector<32x32xf32>
    %c0_45 = arith.constant 0 : index
    %c0_46 = arith.constant 0 : index
    %46 = vector.load %arg1[%c0_45, %c0_46] : memref<26x32xf32, #tpu.memory_space<vmem>>, vector<26x32xf32>
    %47 = arith.truncf %46 : vector<26x32xf32> to vector<26x32xbf16>
    %cst_47 = arith.constant dense<0.000000e+00> : vector<32x32xf32>
    %48 = tpu.matmul %8, %47, %cst_47 {dimension_numbers = #tpu.dot_dimension_numbers<[1], [0], [0], [1], [0, 0, 1, 1], [], []>} : vector<32x26xbf16>, vector<26x32xbf16>, vector<32x32xf32> -> vector<32x32xf32>
    %49 = vector.broadcast %9 : vector<32x1xf32> to vector<32x32xf32>
    %50 = arith.addf %48, %49 : vector<32x32xf32>
    %cst_48 = arith.constant 2.000000e-01 : f32
    %51 = vector.broadcast %cst_48 : f32 to vector<32x32xf32>
    %52 = arith.mulf %51, %50 : vector<32x32xf32>
    %53 = arith.maximumf %50, %52 : vector<32x32xf32>
    %54 = arith.truncf %53 : vector<32x32xf32> to vector<32x32xbf16>
    %cst_49 = arith.constant dense<0.000000e+00> : vector<32x32xf32>
    %55 = tpu.matmul %10, %54, %cst_49 {dimension_numbers = #tpu.dot_dimension_numbers<[1], [0], [0], [1], [0, 0, 1, 1], [], []>} : vector<32x32xbf16>, vector<32x32xbf16>, vector<32x32xf32> -> vector<32x32xf32>
    %56 = vector.broadcast %11 : vector<32x1xf32> to vector<32x32xf32>
    %57 = arith.addf %55, %56 : vector<32x32xf32>
    %cst_50 = arith.constant 2.000000e-01 : f32
    %58 = vector.broadcast %cst_50 : f32 to vector<32x32xf32>
    %59 = arith.mulf %58, %57 : vector<32x32xf32>
    %60 = arith.maximumf %57, %59 : vector<32x32xf32>
    %61 = arith.truncf %60 : vector<32x32xf32> to vector<32x32xbf16>
    %cst_51 = arith.constant dense<0.000000e+00> : vector<32x32xf32>
    %62 = tpu.matmul %12, %61, %cst_51 {dimension_numbers = #tpu.dot_dimension_numbers<[1], [0], [0], [1], [0, 0, 1, 1], [], []>} : vector<32x32xbf16>, vector<32x32xbf16>, vector<32x32xf32> -> vector<32x32xf32>
    %63 = vector.broadcast %13 : vector<32x1xf32> to vector<32x32xf32>
    %64 = arith.addf %62, %63 : vector<32x32xf32>
    %65 = arith.addf %53, %64 : vector<32x32xf32>
    %cst_52 = arith.constant 2.000000e-01 : f32
    %66 = vector.broadcast %cst_52 : f32 to vector<32x32xf32>
    %67 = arith.mulf %66, %65 : vector<32x32xf32>
    %68 = arith.maximumf %65, %67 : vector<32x32xf32>
    %69 = arith.truncf %68 : vector<32x32xf32> to vector<32x32xbf16>
    %cst_53 = arith.constant dense<0.000000e+00> : vector<32x32xf32>
    %70 = tpu.matmul %14, %69, %cst_53 {dimension_numbers = #tpu.dot_dimension_numbers<[1], [0], [0], [1], [0, 0, 1, 1], [], []>} : vector<32x32xbf16>, vector<32x32xbf16>, vector<32x32xf32> -> vector<32x32xf32>
    %71 = vector.broadcast %15 : vector<32x1xf32> to vector<32x32xf32>
    %72 = arith.addf %70, %71 : vector<32x32xf32>
    %73 = arith.addf %45, %72 : vector<32x32xf32>
    %c0_54 = arith.constant 0 : index
    %c0_55 = arith.constant 0 : index
    %74 = vector.load %arg2[%c0_54, %c0_55] : memref<32x2xf32, #tpu.memory_space<vmem>>, vector<32x2xf32>
    %cst_56 = arith.constant dense<0.000000e+00> : vector<32x2xf32>
    %75 = tpu.matmul %73, %74, %cst_56 {dimension_numbers = #tpu.dot_dimension_numbers<[1], [0], [0], [1], [0, 0, 1, 1], [], []>} : vector<32x32xf32>, vector<32x2xf32>, vector<32x2xf32> -> vector<32x2xf32>
    %76 = arith.mulf %73, %73 : vector<32x32xf32>
    %cst_57 = arith.constant dense<0.000000e+00> : vector<32x2xf32>
    %77 = tpu.matmul %76, %74, %cst_57 {dimension_numbers = #tpu.dot_dimension_numbers<[1], [0], [0], [1], [0, 0, 1, 1], [], []>} : vector<32x32xf32>, vector<32x2xf32>, vector<32x2xf32> -> vector<32x2xf32>
    %cst_58 = arith.constant 6.250000e-02 : f32
    %78 = vector.broadcast %cst_58 : f32 to vector<32x2xf32>
    %79 = arith.mulf %75, %78 : vector<32x2xf32>
    %cst_59 = arith.constant 6.250000e-02 : f32
    %80 = vector.broadcast %cst_59 : f32 to vector<32x2xf32>
    %81 = arith.mulf %77, %80 : vector<32x2xf32>
    %82 = arith.mulf %79, %79 : vector<32x2xf32>
    %83 = arith.subf %81, %82 : vector<32x2xf32>
    %84 = arith.mulf %83, %83 : vector<32x2xf32>
    %cst_60 = arith.constant 1.000000e+00 : f32
    %85 = vector.broadcast %cst_60 : f32 to vector<1x2xf32>
    %86 = tpu.concatenate %83, %84, %79, %85 in 0 : vector<32x2xf32>, vector<32x2xf32>, vector<32x2xf32>, vector<1x2xf32> -> vector<97x2xf32>
    %87 = arith.truncf %86 : vector<97x2xf32> to vector<97x2xbf16>
    %cst_61 = arith.constant dense<0.000000e+00> : vector<1025x2xf32>
    %88 = tpu.matmul %16, %87, %cst_61 {dimension_numbers = #tpu.dot_dimension_numbers<[1], [0], [0], [1], [0, 0, 1, 1], [], []>} : vector<1025x97xbf16>, vector<97x2xbf16>, vector<1025x2xf32> -> vector<1025x2xf32>
    %cst_62 = arith.constant 2.000000e-01 : f32
    %89 = vector.broadcast %cst_62 : f32 to vector<1025x2xf32>
    %90 = arith.mulf %89, %88 : vector<1025x2xf32>
    %91 = arith.maximumf %88, %90 : vector<1025x2xf32>
    %92 = arith.truncf %91 : vector<1025x2xf32> to vector<1025x2xbf16>
    %cst_63 = arith.constant dense<0.000000e+00> : vector<1025x2xf32>
    %93 = tpu.matmul %17, %92, %cst_63 {dimension_numbers = #tpu.dot_dimension_numbers<[1], [0], [0], [1], [0, 0, 1, 1], [], []>} : vector<1025x1025xbf16>, vector<1025x2xbf16>, vector<1025x2xf32> -> vector<1025x2xf32>
    %cst_64 = arith.constant 2.000000e-01 : f32
    %94 = vector.broadcast %cst_64 : f32 to vector<1025x2xf32>
    %95 = arith.mulf %94, %93 : vector<1025x2xf32>
    %96 = arith.maximumf %93, %95 : vector<1025x2xf32>
    %97 = arith.truncf %96 : vector<1025x2xf32> to vector<1025x2xbf16>
    %cst_65 = arith.constant dense<0.000000e+00> : vector<256x2xf32>
    %98 = tpu.matmul %18, %97, %cst_65 {dimension_numbers = #tpu.dot_dimension_numbers<[1], [0], [0], [1], [0, 0, 1, 1], [], []>} : vector<256x1025xbf16>, vector<1025x2xbf16>, vector<256x2xf32> -> vector<256x2xf32>
    %cst_66 = arith.constant 0.000000e+00 : f32
    %99 = vector.broadcast %cst_66 : f32 to vector<256x2xf32>
    %100 = arith.maximumf %98, %99 : vector<256x2xf32>
    %c0_67 = arith.constant 0 : index
    %c0_68 = arith.constant 0 : index
    %101 = vector.load %arg22[%c0_67, %c0_68] : memref<256x2xf32, #tpu.memory_space<vmem>>, vector<256x2xf32>
    tpu.vector_store %arg22[%c0_67, %c0_68], %100 {strides = array<i32>} : memref<256x2xf32, #tpu.memory_space<vmem>>, vector<256x2xf32>,
    return
  }
}

</mosaic_0001>

<llo_original>
// kernel: mt_param_model.1
$region0: #{mt_param_model.1}
  #allocation0 [shape = 'u32[]', space=smem, size = 0x4, offset = 0x4, fixed_abs, tag = 'smem constant byte address 0x4 - core index']
  #allocation1 [shape = 'u32[144,128]{1,0:T(1,128)}', space=vmem, size = 0x12000, scoped, tag = 'internal scratch']
  %s0 = inlined_call_operand.vmem [shape: f32[26,32], index: 0, kind: input, shape index: {}]
  %s1 = inlined_call_operand.vmem [shape: f32[26,32], index: 1, kind: input, shape index: {}]
  %s2 = inlined_call_operand.vmem [shape: f32[32,2], index: 2, kind: input, shape index: {}]
  %s3 = inlined_call_operand.hbm [shape: bf16[32,26], index: 3, kind: input, shape index: {}]
  %s4 = inlined_call_operand.vmem [shape: f32[32,1], index: 4, kind: input, shape index: {}]
  %s5 = inlined_call_operand.hbm [shape: bf16[32,32], index: 5, kind: input, shape index: {}]
  %s6 = inlined_call_operand.vmem [shape: f32[32,1], index: 6, kind: input, shape index: {}]
  %s7 = inlined_call_operand.hbm [shape: bf16[32,32], index: 7, kind: input, shape index: {}]
  %s8 = inlined_call_operand.vmem [shape: f32[32,1], index: 8, kind: input, shape index: {}]
  %s9 = inlined_call_operand.hbm [shape: bf16[32,32], index: 9, kind: input, shape index: {}]
  %s10 = inlined_call_operand.vmem [shape: f32[32,1], index: 10, kind: input, shape index: {}]
  %s11 = inlined_call_operand.hbm [shape: bf16[32,26], index: 11, kind: input, shape index: {}]
  %s12 = inlined_call_operand.vmem [shape: f32[32,1], index: 12, kind: input, shape index: {}]
  %s13 = inlined_call_operand.hbm [shape: bf16[32,32], index: 13, kind: input, shape index: {}]
  %s14 = inlined_call_operand.vmem [shape: f32[32,1], index: 14, kind: input, shape index: {}]
  %s15 = inlined_call_operand.hbm [shape: bf16[32,32], index: 15, kind: input, shape index: {}]
  %s16 = inlined_call_operand.vmem [shape: f32[32,1], index: 16, kind: input, shape index: {}]
  %s17 = inlined_call_operand.hbm [shape: bf16[32,32], index: 17, kind: input, shape index: {}]
  %s18 = inlined_call_operand.vmem [shape: f32[32,1], index: 18, kind: input, shape index: {}]
  %s19 = inlined_call_operand.vmem [shape: bf16[1025,97], index: 19, kind: input, shape index: {}]
  %s20 = inlined_call_operand.hbm [shape: bf16[1025,1025], index: 20, kind: input, shape index: {}]
  %s21 = inlined_call_operand.vmem [shape: bf16[256,1025], index: 21, kind: input, shape index: {}]
  %s22 = inlined_call_operand.vmem [shape: f32[256,2], index: 22, kind: output, shape index: {}]
  %s23 = sld [smem:[#allocation0]]
  $region134: #{mt_param_model.1} parent=0
    _
  %s25 = ssub.s32 1, %s23
  %s26 = scalar_select 0, %s25, %s23
  $region1: #{mt_param_model.1} parent=0
    #allocation2 [shape = 'u8[8192]{0}', space=vmem, size = 0x2000, scoped, tag = 'input window, operand 3, single buffered']
    #allocation3 [shape = 's32[1]{0}', space=sflag, size = 0x4, scoped, tag = 'scoped memory for mt_param_model.1']
    #allocation4 [shape = 'u8[8192]{0}', space=vmem, size = 0x2000, scoped, tag = 'input window, operand 5, single buffered']
    #allocation5 [shape = 's32[1]{0}', space=sflag, size = 0x4, scoped, tag = 'scoped memory for mt_param_model.1']
    #allocation6 [shape = 'u8[8192]{0}', space=vmem, size = 0x2000, scoped, tag = 'input window, operand 7, single buffered']
    #allocation7 [shape = 'u8[8192]{0}', space=vmem, size = 0x2000, scoped, tag = 'input window, operand 9, single buffered']
    #allocation8 [shape = 's32[1]{0}', space=sflag, size = 0x4, scoped, tag = 'scoped memory for mt_param_model.1']
    #allocation9 [shape = 'u8[8192]{0}', space=vmem, size = 0x2000, scoped, tag = 'input window, operand 11, single buffered']
    #allocation10 [shape = 'u8[8192]{0}', space=vmem, size = 0x2000, scoped, tag = 'input window, operand 13, single buffered']
    #allocation11 [shape = 's32[1]{0}', space=sflag, size = 0x4, scoped, tag = 'scoped memory for mt_param_model.1']
    #allocation12 [shape = 'u8[8192]{0}', space=vmem, size = 0x2000, scoped, tag = 'input window, operand 15, single buffered']
    #allocation13 [shape = 'u8[8192]{0}', space=vmem, size = 0x2000, scoped, tag = 'input window, operand 17, single buffered']
    #allocation14 [shape = 's32[1]{0}', space=sflag, size = 0x4, scoped, tag = 'scoped memory for mt_param_model.1']
    #allocation15 [shape = 'u8[2377728]{0}', space=vmem, size = 0x244800, scoped, tag = 'input window, operand 20, single buffered']
    %27 = vsyncpa [#allocation3], 0
    %28 = vsyncpa [#allocation5], 0
    %29 = vsyncpa [#allocation8], 0
    %30 = vsyncpa [#allocation11], 0
    %31 = vsyncpa [#allocation14], 0
    // Predicated region
    $region2: #{mt_param_model.1} parent=1 // pred_check
      _
    $region3: #{mt_param_model.1} parent=1 // pred_check_branch
      %33 = sbr.rel (0) target = $region5
    $region4: #{mt_param_model.1} parent=1 // pred_region
      _
    $region5: #{mt_param_model.1} parent=1 // pred_fallthru
      _
    // Predicated region
    $region6: #{mt_param_model.1} parent=1 // pred_check
      _
    $region7: #{mt_param_model.1} parent=1 // pred_check_branch
      %35 = sbr.rel (0) target = $region9
    $region8: #{mt_param_model.1} parent=1 // pred_region
      _
    $region9: #{mt_param_model.1} parent=1 // pred_fallthru
      _
    // Predicated region
    $region10: #{mt_param_model.1} parent=1 // pred_check
      _
    $region11: #{mt_param_model.1} parent=1 // pred_check_branch
      %37 = sbr.rel (0) target = $region13
    $region12: #{mt_param_model.1} parent=1 // pred_region
      _
    $region13: #{mt_param_model.1} parent=1 // pred_fallthru
      _
    // Predicated region
    $region14: #{mt_param_model.1} parent=1 // pred_check
      _
    $region15: #{mt_param_model.1} parent=1 // pred_check_branch
      %39 = sbr.rel (0) target = $region17
    $region16: #{mt_param_model.1} parent=1 // pred_region
      %s41 = ssub.s32 256, 256
      %42 = vsyncadd [#allocation3], %s41
      %s43 = sshll.u32 [#allocation2], 4
      %s44 = int_to_ptr.vmem [resolvable:$true] %s43
      %49 = dma.hbm_to_vmem [thread:$0]  %s3, 256, %s44, [#allocation3], 64, 64, 4
    $region17: #{mt_param_model.1} parent=1 // pred_fallthru
      _
    // Predicated region
    $region18: #{mt_param_model.1} parent=1 // pred_check
      _
    $region19: #{mt_param_model.1} parent=1 // pred_check_branch
      %51 = sbr.rel (0) target = $region21
    $region20: #{mt_param_model.1} parent=1 // pred_region
      _
    $region21: #{mt_param_model.1} parent=1 // pred_fallthru
      _
    // Predicated region
    $region22: #{mt_param_model.1} parent=1 // pred_check
      _
    $region23: #{mt_param_model.1} parent=1 // pred_check_branch
      %53 = sbr.rel (0) target = $region25
    $region24: #{mt_param_model.1} parent=1 // pred_region
      %s55 = ssub.s32 256, 256
      %56 = vsyncadd [#allocation5], %s55
      %s57 = sshll.u32 [#allocation4], 4
      %s58 = int_to_ptr.vmem [resolvable:$true] %s57
      %63 = dma.hbm_to_vmem [thread:$0]  %s5, 256, %s58, [#allocation5], 64, 64, 4
    $region25: #{mt_param_model.1} parent=1 // pred_fallthru
      _
    // Predicated region
    $region26: #{mt_param_model.1} parent=1 // pred_check
      _
    $region27: #{mt_param_model.1} parent=1 // pred_check_branch
      %65 = sbr.rel (0) target = $region29
    $region28: #{mt_param_model.1} parent=1 // pred_region
      _
    $region29: #{mt_param_model.1} parent=1 // pred_fallthru
      _
    // Predicated region
    $region30: #{mt_param_model.1} parent=1 // pred_check
      _
    $region31: #{mt_param_model.1} parent=1 // pred_check_branch
      %67 = sbr.rel (0) target = $region33
    $region32: #{mt_param_model.1} parent=1 // pred_region
      %s69 = ssub.s32 256, 256
      %70 = vsyncadd [#allocation5], %s69
      %s71 = sshll.u32 [#allocation6], 4
      %s72 = int_to_ptr.vmem [resolvable:$true] %s71
      %77 = dma.hbm_to_vmem [thread:$0]  %s7, 256, %s72, [#allocation5], 64, 64, 4
    $region33: #{mt_param_model.1} parent=1 // pred_fallthru
      _
    // Predicated region
    $region34: #{mt_param_model.1} parent=1 // pred_check
      _
    $region35: #{mt_param_model.1} parent=1 // pred_check_branch
      %79 = sbr.rel (0) target = $region37
    $region36: #{mt_param_model.1} parent=1 // pred_region
      _
    $region37: #{mt_param_model.1} parent=1 // pred_fallthru
      _
    // Predicated region
    $region38: #{mt_param_model.1} parent=1 // pred_check
      _
    $region39: #{mt_param_model.1} parent=1 // pred_check_branch
      %81 = sbr.rel (0) target = $region41
    $region40: #{mt_param_model.1} parent=1 // pred_region
      %s83 = ssub.s32 256, 256
      %84 = vsyncadd [#allocation8], %s83
      %s85 = sshll.u32 [#allocation7], 4
      %s86 = int_to_ptr.vmem [resolvable:$true] %s85
      %91 = dma.hbm_to_vmem [thread:$0]  %s9, 256, %s86, [#allocation8], 64, 64, 4
    $region41: #{mt_param_model.1} parent=1 // pred_fallthru
      _
    // Predicated region
    $region42: #{mt_param_model.1} parent=1 // pred_check
      _
    $region43: #{mt_param_model.1} parent=1 // pred_check_branch
      %93 = sbr.rel (0) target = $region45
    $region44: #{mt_param_model.1} parent=1 // pred_region
      _
    $region45: #{mt_param_model.1} parent=1 // pred_fallthru
      _
    // Predicated region
    $region46: #{mt_param_model.1} parent=1 // pred_check
      _
    $region47: #{mt_param_model.1} parent=1 // pred_check_branch
      %95 = sbr.rel (0) target = $region49
    $region48: #{mt_param_model.1} parent=1 // pred_region
      %s97 = ssub.s32 256, 256
      %98 = vsyncadd [#allocation8], %s97
      %s99 = sshll.u32 [#allocation9], 4
      %s100 = int_to_ptr.vmem [resolvable:$true] %s99
      %105 = dma.hbm_to_vmem [thread:$0]  %s11, 256, %s100, [#allocation8], 64, 64, 4
    $region49: #{mt_param_model.1} parent=1 // pred_fallthru
      _
    // Predicated region
    $region50: #{mt_param_model.1} parent=1 // pred_check
      _
    $region51: #{mt_param_model.1} parent=1 // pred_check_branch
      %107 = sbr.rel (0) target = $region53
    $region52: #{mt_param_model.1} parent=1 // pred_region
      _
    $region53: #{mt_param_model.1} parent=1 // pred_fallthru
      _
    // Predicated region
    $region54: #{mt_param_model.1} parent=1 // pred_check
      _
    $region55: #{mt_param_model.1} parent=1 // pred_check_branch
      %109 = sbr.rel (0) target = $region57
    $region56: #{mt_param_model.1} parent=1 // pred_region
      %s111 = ssub.s32 256, 256
      %112 = vsyncadd [#allocation11], %s111
      %s113 = sshll.u32 [#allocation10], 4
      %s114 = int_to_ptr.vmem [resolvable:$true] %s113
      %119 = dma.hbm_to_vmem [thread:$0]  %s13, 256, %s114, [#allocation11], 64, 64, 4
    $region57: #{mt_param_model.1} parent=1 // pred_fallthru
      _
    // Predicated region
    $region58: #{mt_param_model.1} parent=1 // pred_check
      _
    $region59: #{mt_param_model.1} parent=1 // pred_check_branch
      %121 = sbr.rel (0) target = $region61
    $region60: #{mt_param_model.1} parent=1 // pred_region
      _
    $region61: #{mt_param_model.1} parent=1 // pred_fallthru
      _
    // Predicated region
    $region62: #{mt_param_model.1} parent=1 // pred_check
      _
    $region63: #{mt_param_model.1} parent=1 // pred_check_branch
      %123 = sbr.rel (0) target = $region65
    $region64: #{mt_param_model.1} parent=1 // pred_region
      %s125 = ssub.s32 256, 256
      %126 = vsyncadd [#allocation11], %s125
      %s127 = sshll.u32 [#allocation12], 4
      %s128 = int_to_ptr.vmem [resolvable:$true] %s127
      %133 = dma.hbm_to_vmem [thread:$0]  %s15, 256, %s128, [#allocation11], 64, 64, 4
    $region65: #{mt_param_model.1} parent=1 // pred_fallthru
      _
    // Predicated region
    $region66: #{mt_param_model.1} parent=1 // pred_check
      _
    $region67: #{mt_param_model.1} parent=1 // pred_check_branch
      %135 = sbr.rel (0) target = $region69
    $region68: #{mt_param_model.1} parent=1 // pred_region
      _
    $region69: #{mt_param_model.1} parent=1 // pred_fallthru
      _
    // Predicated region
    $region70: #{mt_param_model.1} parent=1 // pred_check
      _
    $region71: #{mt_param_model.1} parent=1 // pred_check_branch
      %137 = sbr.rel (0) target = $region73
    $region72: #{mt_param_model.1} parent=1 // pred_region
      %s139 = ssub.s32 256, 256
      %140 = vsyncadd [#allocation14], %s139
      %s141 = sshll.u32 [#allocation13], 4
      %s142 = int_to_ptr.vmem [resolvable:$true] %s141
      %147 = dma.hbm_to_vmem [thread:$0]  %s17, 256, %s142, [#allocation14], 64, 64, 4
    $region73: #{mt_param_model.1} parent=1 // pred_fallthru
      _
    // Predicated region
    $region74: #{mt_param_model.1} parent=1 // pred_check
      _
    $region75: #{mt_param_model.1} parent=1 // pred_check_branch
      %149 = sbr.rel (0) target = $region77
    $region76: #{mt_param_model.1} parent=1 // pred_region
      _
    $region77: #{mt_param_model.1} parent=1 // pred_fallthru
      _
    // Predicated region
    $region78: #{mt_param_model.1} parent=1 // pred_check
      _
    $region79: #{mt_param_model.1} parent=1 // pred_check_branch
      %151 = sbr.rel (0) target = $region81
    $region80: #{mt_param_model.1} parent=1 // pred_region
      _
    $region81: #{mt_param_model.1} parent=1 // pred_fallthru
      _
    // Predicated region
    $region82: #{mt_param_model.1} parent=1 // pred_check
      _
    $region83: #{mt_param_model.1} parent=1 // pred_check_branch
      %153 = sbr.rel (0) target = $region85
    $region84: #{mt_param_model.1} parent=1 // pred_region
      %s155 = ssub.s32 74304, 74304
      %156 = vsyncadd [#allocation14], %s155
      %s157 = sshll.u32 [#allocation15], 4
      %s158 = int_to_ptr.vmem [resolvable:$true] %s157
      %163 = dma.hbm_to_vmem [thread:$0]  %s20, 74304, %s158, [#allocation14], 576, 576, 36
    $region85: #{mt_param_model.1} parent=1 // pred_fallthru
      _
    // Predicated region
    $region86: #{mt_param_model.1} parent=1 // pred_check
      _
    $region87: #{mt_param_model.1} parent=1 // pred_check_branch
      %165 = sbr.rel (0) target = $region89
    $region88: #{mt_param_model.1} parent=1 // pred_region
      _
    $region89: #{mt_param_model.1} parent=1 // pred_fallthru
      _
    // Predicated region
    $region90: #{mt_param_model.1} parent=1 // pred_check
      _
    $region91: #{mt_param_model.1} parent=1 // pred_check_branch
      %167 = sbr.rel (0) target = $region93
    $region92: #{mt_param_model.1} parent=1 // pred_region
      %168 = dma.done [#allocation3], 256
    $region93: #{mt_param_model.1} parent=1 // pred_fallthru
      _
    // Predicated region
    $region94: #{mt_param_model.1} parent=1 // pred_check
      _
    $region95: #{mt_param_model.1} parent=1 // pred_check_branch
      %170 = sbr.rel (0) target = $region97
    $region96: #{mt_param_model.1} parent=1 // pred_region
      %171 = dma.done [#allocation5], 256
    $region97: #{mt_param_model.1} parent=1 // pred_fallthru
      _
    // Predicated region
    $region98: #{mt_param_model.1} parent=1 // pred_check
      _
    $region99: #{mt_param_model.1} parent=1 // pred_check_branch
      %173 = sbr.rel (0) target = $region101
    $region100: #{mt_param_model.1} parent=1 // pred_region
      %174 = dma.done [#allocation5], 256
    $region101: #{mt_param_model.1} parent=1 // pred_fallthru
      _
    // Predicated region
    $region102: #{mt_param_model.1} parent=1 // pred_check
      _
    $region103: #{mt_param_model.1} parent=1 // pred_check_branch
      %176 = sbr.rel (0) target = $region105
    $region104: #{mt_param_model.1} parent=1 // pred_region
      %177 = dma.done [#allocation8], 256
    $region105: #{mt_param_model.1} parent=1 // pred_fallthru
      _
    // Predicated region
    $region106: #{mt_param_model.1} parent=1 // pred_check
      _
    $region107: #{mt_param_model.1} parent=1 // pred_check_branch
      %179 = sbr.rel (0) target = $region109
    $region108: #{mt_param_model.1} parent=1 // pred_region
      %180 = dma.done [#allocation8], 256
    $region109: #{mt_param_model.1} parent=1 // pred_fallthru
      _
    // Predicated region
    $region110: #{mt_param_model.1} parent=1 // pred_check
      _
    $region111: #{mt_param_model.1} parent=1 // pred_check_branch
      %182 = sbr.rel (0) target = $region113
    $region112: #{mt_param_model.1} parent=1 // pred_region
      %183 = dma.done [#allocation11], 256
    $region113: #{mt_param_model.1} parent=1 // pred_fallthru
      _
    // Predicated region
    $region114: #{mt_param_model.1} parent=1 // pred_check
      _
    $region115: #{mt_param_model.1} parent=1 // pred_check_branch
      %185 = sbr.rel (0) target = $region117
    $region116: #{mt_param_model.1} parent=1 // pred_region
      %186 = dma.done [#allocation11], 256
    $region117: #{mt_param_model.1} parent=1 // pred_fallthru
      _
    // Predicated region
    $region118: #{mt_param_model.1} parent=1 // pred_check
      _
    $region119: #{mt_param_model.1} parent=1 // pred_check_branch
      %188 = sbr.rel (0) target = $region121
    $region120: #{mt_param_model.1} parent=1 // pred_region
      %189 = dma.done [#allocation14], 256
    $region121: #{mt_param_model.1} parent=1 // pred_fallthru
      _
    // Predicated region
    $region122: #{mt_param_model.1} parent=1 // pred_check
      _
    $region123: #{mt_param_model.1} parent=1 // pred_check_branch
      %191 = sbr.rel (0) target = $region125
    $region124: #{mt_param_model.1} parent=1 // pred_region
      %192 = dma.done [#allocation14], 74304
    $region125: #{mt_param_model.1} parent=1 // pred_fallthru
      _
    %v194 = vld [vmem:[#allocation2] sm:$0xf]
    %v195 = vld [vmem:[#allocation2 + $0x4] sm:$0xf]
    %v196 = vld [vmem:[#allocation2 + $0x8] sm:$0xf]
    %v197 = vld [vmem:[#allocation2 + $0xc] sm:$0xf]
    %v198 = vld [vmem:[%s4] sm:$0xff]
    %v199 = vld [vmem:[%s4 + $0x8] sm:$0xff]
    %v200 = vld [vmem:[%s4 + $0x10] sm:$0xff]
    %v201 = vld [vmem:[%s4 + $0x18] sm:$0xff]
    %v202 = vld [vmem:[#allocation4] sm:$0xf]
    %v203 = vld [vmem:[#allocation4 + $0x4] sm:$0xf]
    %v204 = vld [vmem:[#allocation4 + $0x8] sm:$0xf]
    %v205 = vld [vmem:[#allocation4 + $0xc] sm:$0xf]
    %v206 = vld [vmem:[%s6] sm:$0xff]
    %v207 = vld [vmem:[%s6 + $0x8] sm:$0xff]
    %v208 = vld [vmem:[%s6 + $0x10] sm:$0xff]
    %v209 = vld [vmem:[%s6 + $0x18] sm:$0xff]
    %v210 = vld [vmem:[#allocation6] sm:$0xf]
    %v211 = vld [vmem:[#allocation6 + $0x4] sm:$0xf]
    %v212 = vld [vmem:[#allocation6 + $0x8] sm:$0xf]
    %v213 = vld [vmem:[#allocation6 + $0xc] sm:$0xf]
    %v214 = vld [vmem:[%s8] sm:$0xff]
    %v215 = vld [vmem:[%s8 + $0x8] sm:$0xff]
    %v216 = vld [vmem:[%s8 + $0x10] sm:$0xff]
    %v217 = vld [vmem:[%s8 + $0x18] sm:$0xff]
    %v218 = vld [vmem:[#allocation7] sm:$0xf]
    %v219 = vld [vmem:[#allocation7 + $0x4] sm:$0xf]
    %v220 = vld [vmem:[#allocation7 + $0x8] sm:$0xf]
    %v221 = vld [vmem:[#allocation7 + $0xc] sm:$0xf]
    %v222 = vld [vmem:[%s10] sm:$0xff]
    %v223 = vld [vmem:[%s10 + $0x8] sm:$0xff]
    %v224 = vld [vmem:[%s10 + $0x10] sm:$0xff]
    %v225 = vld [vmem:[%s10 + $0x18] sm:$0xff]
    %v226 = vld [vmem:[#allocation9] sm:$0xf]
    %v227 = vld [vmem:[#allocation9 + $0x4] sm:$0xf]
    %v228 = vld [vmem:[#allocation9 + $0x8] sm:$0xf]
    %v229 = vld [vmem:[#allocation9 + $0xc] sm:$0xf]
    %v230 = vld [vmem:[%s12] sm:$0xff]
    %v231 = vld [vmem:[%s12 + $0x8] sm:$0xff]
    %v232 = vld [vmem:[%s12 + $0x10] sm:$0xff]
    %v233 = vld [vmem:[%s12 + $0x18] sm:$0xff]
    %v234 = vld [vmem:[#allocation10] sm:$0xf]
    %v235 = vld [vmem:[#allocation10 + $0x4] sm:$0xf]
    %v236 = vld [vmem:[#allocation10 + $0x8] sm:$0xf]
    %v237 = vld [vmem:[#allocation10 + $0xc] sm:$0xf]
    %v238 = vld [vmem:[%s14] sm:$0xff]
    %v239 = vld [vmem:[%s14 + $0x8] sm:$0xff]
    %v240 = vld [vmem:[%s14 + $0x10] sm:$0xff]
    %v241 = vld [vmem:[%s14 + $0x18] sm:$0xff]
    %v242 = vld [vmem:[#allocation12] sm:$0xf]
    %v243 = vld [vmem:[#allocation12 + $0x4] sm:$0xf]
    %v244 = vld [vmem:[#allocation12 + $0x8] sm:$0xf]
    %v245 = vld [vmem:[#allocation12 + $0xc] sm:$0xf]
    %v246 = vld [vmem:[%s16] sm:$0xff]
    %v247 = vld [vmem:[%s16 + $0x8] sm:$0xff]
    %v248 = vld [vmem:[%s16 + $0x10] sm:$0xff]
    %v249 = vld [vmem:[%s16 + $0x18] sm:$0xff]
    %v250 = vld [vmem:[#allocation13] sm:$0xf]
    %v251 = vld [vmem:[#allocation13 + $0x4] sm:$0xf]
    %v252 = vld [vmem:[#allocation13 + $0x8] sm:$0xf]
    %v253 = vld [vmem:[#allocation13 + $0xc] sm:$0xf]
    %v254 = vld [vmem:[%s18] sm:$0xff]
    %v255 = vld [vmem:[%s18 + $0x8] sm:$0xff]
    %v256 = vld [vmem:[%s18 + $0x10] sm:$0xff]
    %v257 = vld [vmem:[%s18 + $0x18] sm:$0xff]
    %v258 = vld [vmem:[%s19] sm:$0xf]
    %v259 = vld [vmem:[%s19 + $0x4] sm:$0xf]
    %v260 = vld [vmem:[%s19 + $0x8] sm:$0xf]
    %v261 = vld [vmem:[%s19 + $0xc] sm:$0xf]
    %v262 = vld [vmem:[%s19 + $0x10] sm:$0xf]
    %v263 = vld [vmem:[%s19 + $0x14] sm:$0xf]
    %v264 = vld [vmem:[%s19 + $0x18] sm:$0xf]
    %v265 = vld [vmem:[%s19 + $0x1c] sm:$0xf]
    %v266 = vld [vmem:[%s19 + $0x20] sm:$0xf]
    %v267 = vld [vmem:[%s19 + $0x24] sm:$0xf]
    %v268 = vld [vmem:[%s19 + $0x28] sm:$0xf]
    %v269 = vld [vmem:[%s19 + $0x2c] sm:$0xf]
    %v270 = vld [vmem:[%s19 + $0x30] sm:$0xf]
    %v271 = vld [vmem:[%s19 + $0x34] sm:$0xf]
    %v272 = vld [vmem:[%s19 + $0x38] sm:$0xf]
    %v273 = vld [vmem:[%s19 + $0x3c] sm:$0xf]
    %v274 = vld [vmem:[%s19 + $0x40] sm:$0xf]
    %v275 = vld [vmem:[%s19 + $0x44] sm:$0xf]
    %v276 = vld [vmem:[%s19 + $0x48] sm:$0xf]
    %v277 = vld [vmem:[%s19 + $0x4c] sm:$0xf]
    %v278 = vld [vmem:[%s19 + $0x50] sm:$0xf]
    %v279 = vld [vmem:[%s19 + $0x54] sm:$0xf]
    %v280 = vld [vmem:[%s19 + $0x58] sm:$0xf]
    %v281 = vld [vmem:[%s19 + $0x5c] sm:$0xf]
    %v282 = vld [vmem:[%s19 + $0x60] sm:$0xf]
    %v283 = vld [vmem:[%s19 + $0x64] sm:$0xf]
    %v284 = vld [vmem:[%s19 + $0x68] sm:$0xf]
    %v285 = vld [vmem:[%s19 + $0x6c] sm:$0xf]
    %v286 = vld [vmem:[%s19 + $0x70] sm:$0xf]
    %v287 = vld [vmem:[%s19 + $0x74] sm:$0xf]
    %v288 = vld [vmem:[%s19 + $0x78] sm:$0xf]
    %v289 = vld [vmem:[%s19 + $0x7c] sm:$0xf]
    %v290 = vld [vmem:[%s19 + $0x80] sm:$0xf]
    %v291 = vld [vmem:[%s19 + $0x84] sm:$0xf]
    %v292 = vld [vmem:[%s19 + $0x88] sm:$0xf]
    %v293 = vld [vmem:[%s19 + $0x8c] sm:$0xf]
    %v294 = vld [vmem:[%s19 + $0x90] sm:$0xf]
    %v295 = vld [vmem:[%s19 + $0x94] sm:$0xf]
    %v296 = vld [vmem:[%s19 + $0x98] sm:$0xf]
    %v297 = vld [vmem:[%s19 + $0x9c] sm:$0xf]
    %v298 = vld [vmem:[%s19 + $0xa0] sm:$0xf]
    %v299 = vld [vmem:[%s19 + $0xa4] sm:$0xf]
    %v300 = vld [vmem:[%s19 + $0xa8] sm:$0xf]
    %v301 = vld [vmem:[%s19 + $0xac] sm:$0xf]
    %v302 = vld [vmem:[%s19 + $0xb0] sm:$0xf]
    %v303 = vld [vmem:[%s19 + $0xb4] sm:$0xf]
    %v304 = vld [vmem:[%s19 + $0xb8] sm:$0xf]
    %v305 = vld [vmem:[%s19 + $0xbc] sm:$0xf]
    %v306 = vld [vmem:[%s19 + $0xc0] sm:$0xf]
    %v307 = vld [vmem:[%s19 + $0xc4] sm:$0xf]
    %v308 = vld [vmem:[%s19 + $0xc8] sm:$0xf]
    %v309 = vld [vmem:[%s19 + $0xcc] sm:$0xf]
    %v310 = vld [vmem:[%s19 + $0xd0] sm:$0xf]
    %v311 = vld [vmem:[%s19 + $0xd4] sm:$0xf]
    %v312 = vld [vmem:[%s19 + $0xd8] sm:$0xf]
    %v313 = vld [vmem:[%s19 + $0xdc] sm:$0xf]
    %v314 = vld [vmem:[%s19 + $0xe0] sm:$0xf]
    %v315 = vld [vmem:[%s19 + $0xe4] sm:$0xf]
    %v316 = vld [vmem:[%s19 + $0xe8] sm:$0xf]
    %v317 = vld [vmem:[%s19 + $0xec] sm:$0xf]
    %v318 = vld [vmem:[%s19 + $0xf0] sm:$0xf]
    %v319 = vld [vmem:[%s19 + $0xf4] sm:$0xf]
    %v320 = vld [vmem:[%s19 + $0xf8] sm:$0xf]
    %v321 = vld [vmem:[%s19 + $0xfc] sm:$0xf]
    %v322 = vld [vmem:[%s19 + $0x100] sm:$0xf]
    %v323 = vld [vmem:[%s19 + $0x104] sm:$0xf]
    %v324 = vld [vmem:[%s19 + $0x108] sm:$0xf]
    %v325 = vld [vmem:[%s19 + $0x10c] sm:$0xf]
    %v326 = vld [vmem:[%s19 + $0x110] sm:$0xf]
    %v327 = vld [vmem:[%s19 + $0x114] sm:$0xf]
    %v328 = vld [vmem:[%s19 + $0x118] sm:$0xf]
    %v329 = vld [vmem:[%s19 + $0x11c] sm:$0xf]
    %v330 = vld [vmem:[%s19 + $0x120] sm:$0xf]
    %v331 = vld [vmem:[%s19 + $0x124] sm:$0xf]
    %v332 = vld [vmem:[%s19 + $0x128] sm:$0xf]
    %v333 = vld [vmem:[%s19 + $0x12c] sm:$0xf]
    %v334 = vld [vmem:[%s19 + $0x130] sm:$0xf]
    %v335 = vld [vmem:[%s19 + $0x134] sm:$0xf]
    %v336 = vld [vmem:[%s19 + $0x138] sm:$0xf]
    %v337 = vld [vmem:[%s19 + $0x13c] sm:$0xf]
    %v338 = vld [vmem:[%s19 + $0x140] sm:$0xf]
    %v339 = vld [vmem:[%s19 + $0x144] sm:$0xf]
    %v340 = vld [vmem:[%s19 + $0x148] sm:$0xf]
    %v341 = vld [vmem:[%s19 + $0x14c] sm:$0xf]
    %v342 = vld [vmem:[%s19 + $0x150] sm:$0xf]
    %v343 = vld [vmem:[%s19 + $0x154] sm:$0xf]
    %v344 = vld [vmem:[%s19 + $0x158] sm:$0xf]
    %v345 = vld [vmem:[%s19 + $0x15c] sm:$0xf]
    %v346 = vld [vmem:[%s19 + $0x160] sm:$0xf]
    %v347 = vld [vmem:[%s19 + $0x164] sm:$0xf]
    %v348 = vld [vmem:[%s19 + $0x168] sm:$0xf]
    %v349 = vld [vmem:[%s19 + $0x16c] sm:$0xf]
    %v350 = vld [vmem:[%s19 + $0x170] sm:$0xf]
    %v351 = vld [vmem:[%s19 + $0x174] sm:$0xf]
    %v352 = vld [vmem:[%s19 + $0x178] sm:$0xf]
    %v353 = vld [vmem:[%s19 + $0x17c] sm:$0xf]
    %v354 = vld [vmem:[%s19 + $0x180] sm:$0xf]
    %v355 = vld [vmem:[%s19 + $0x184] sm:$0xf]
    %v356 = vld [vmem:[%s19 + $0x188] sm:$0xf]
    %v357 = vld [vmem:[%s19 + $0x18c] sm:$0xf]
    %v358 = vld [vmem:[%s19 + $0x190] sm:$0xf]
    %v359 = vld [vmem:[%s19 + $0x194] sm:$0xf]
    %v360 = vld [vmem:[%s19 + $0x198] sm:$0xf]
    %v361 = vld [vmem:[%s19 + $0x19c] sm:$0xf]
    %v362 = vld [vmem:[%s19 + $0x1a0] sm:$0xf]
    %v363 = vld [vmem:[%s19 + $0x1a4] sm:$0xf]
    %v364 = vld [vmem:[%s19 + $0x1a8] sm:$0xf]
    %v365 = vld [vmem:[%s19 + $0x1ac] sm:$0xf]
    %v366 = vld [vmem:[%s19 + $0x1b0] sm:$0xf]
    %v367 = vld [vmem:[%s19 + $0x1b4] sm:$0xf]
    %v368 = vld [vmem:[%s19 + $0x1b8] sm:$0xf]
    %v369 = vld [vmem:[%s19 + $0x1bc] sm:$0xf]
    %v370 = vld [vmem:[%s19 + $0x1c0] sm:$0xf]
    %v371 = vld [vmem:[%s19 + $0x1c4] sm:$0xf]
    %v372 = vld [vmem:[%s19 + $0x1c8] sm:$0xf]
    %v373 = vld [vmem:[%s19 + $0x1cc] sm:$0xf]
    %v374 = vld [vmem:[%s19 + $0x1d0] sm:$0xf]
    %v375 = vld [vmem:[%s19 + $0x1d4] sm:$0xf]
    %v376 = vld [vmem:[%s19 + $0x1d8] sm:$0xf]
    %v377 = vld [vmem:[%s19 + $0x1dc] sm:$0xf]
    %v378 = vld [vmem:[%s19 + $0x1e0] sm:$0xf]
    %v379 = vld [vmem:[%s19 + $0x1e4] sm:$0xf]
    %v380 = vld [vmem:[%s19 + $0x1e8] sm:$0xf]
    %v381 = vld [vmem:[%s19 + $0x1ec] sm:$0xf]
    %v382 = vld [vmem:[%s19 + $0x1f0] sm:$0xf]
    %v383 = vld [vmem:[%s19 + $0x1f4] sm:$0xf]
    %v384 = vld [vmem:[%s19 + $0x1f8] sm:$0xf]
    %v385 = vld [vmem:[%s19 + $0x1fc] sm:$0xf]
    %v386 = vld [vmem:[%s19 + $0x200] sm:$0x1]
    %v387 = vld [vmem:[#allocation15] sm:$0xff]
    %v388 = vld [vmem:[#allocation15 + $0x8] sm:$0xff]
    %v389 = vld [vmem:[#allocation15 + $0x10] sm:$0xff]
    %v390 = vld [vmem:[#allocation15 + $0x18] sm:$0xff]
    %v391 = vld [vmem:[#allocation15 + $0x20] sm:$0xf]
    %v392 = vld [vmem:[#allocation15 + $0x24] sm:$0xff]
    %v393 = vld [vmem:[#allocation15 + $0x2c] sm:$0xff]
    %v394 = vld [vmem:[#allocation15 + $0x34] sm:$0xff]
    %v395 = vld [vmem:[#allocation15 + $0x3c] sm:$0xff]
    %v396 = vld [vmem:[#allocation15 + $0x44] sm:$0xf]
    %v397 = vld [vmem:[#allocation15 + $0x48] sm:$0xff]
    %v398 = vld [vmem:[#allocation15 + $0x50] sm:$0xff]
    %v399 = vld [vmem:[#allocation15 + $0x58] sm:$0xff]
    %v400 = vld [vmem:[#allocation15 + $0x60] sm:$0xff]
    %v401 = vld [vmem:[#allocation15 + $0x68] sm:$0xf]
    %v402 = vld [vmem:[#allocation15 + $0x6c] sm:$0xff]
    %v403 = vld [vmem:[#allocation15 + $0x74] sm:$0xff]
    %v404 = vld [vmem:[#allocation15 + $0x7c] sm:$0xff]
    %v405 = vld [vmem:[#allocation15 + $0x84] sm:$0xff]
    %v406 = vld [vmem:[#allocation15 + $0x8c] sm:$0xf]
    %v407 = vld [vmem:[#allocation15 + $0x90] sm:$0xff]
    %v408 = vld [vmem:[#allocation15 + $0x98] sm:$0xff]
    %v409 = vld [vmem:[#allocation15 + $0xa0] sm:$0xff]
    %v410 = vld [vmem:[#allocation15 + $0xa8] sm:$0xff]
    %v411 = vld [vmem:[#allocation15 + $0xb0] sm:$0xf]
    %v412 = vld [vmem:[#allocation15 + $0xb4] sm:$0xff]
    %v413 = vld [vmem:[#allocation15 + $0xbc] sm:$0xff]
    %v414 = vld [vmem:[#allocation15 + $0xc4] sm:$0xff]
    %v415 = vld [vmem:[#allocation15 + $0xcc] sm:$0xff]
    %v416 = vld [vmem:[#allocation15 + $0xd4] sm:$0xf]
    %v417 = vld [vmem:[#allocation15 + $0xd8] sm:$0xff]
    %v418 = vld [vmem:[#allocation15 + $0xe0] sm:$0xff]
    %v419 = vld [vmem:[#allocation15 + $0xe8] sm:$0xff]
    %v420 = vld [vmem:[#allocation15 + $0xf0] sm:$0xff]
    %v421 = vld [vmem:[#allocation15 + $0xf8] sm:$0xf]
    %v422 = vld [vmem:[#allocation15 + $0xfc] sm:$0xff]
    %v423 = vld [vmem:[#allocation15 + $0x104] sm:$0xff]
    %v424 = vld [vmem:[#allocation15 + $0x10c] sm:$0xff]
    %v425 = vld [vmem:[#allocation15 + $0x114] sm:$0xff]
    %v426 = vld [vmem:[#allocation15 + $0x11c] sm:$0xf]
    %v427 = vld [vmem:[#allocation15 + $0x120] sm:$0xff]
    %v428 = vld [vmem:[#allocation15 + $0x128] sm:$0xff]
    %v429 = vld [vmem:[#allocation15 + $0x130] sm:$0xff]
    %v430 = vld [vmem:[#allocation15 + $0x138] sm:$0xff]
    %v431 = vld [vmem:[#allocation15 + $0x140] sm:$0xf]
    %v432 = vld [vmem:[#allocation15 + $0x144] sm:$0xff]
    %v433 = vld [vmem:[#allocation15 + $0x14c] sm:$0xff]
    %v434 = vld [vmem:[#allocation15 + $0x154] sm:$0xff]
    %v435 = vld [vmem:[#allocation15 + $0x15c] sm:$0xff]
    %v436 = vld [vmem:[#allocation15 + $0x164] sm:$0xf]
    %v437 = vld [vmem:[#allocation15 + $0x168] sm:$0xff]
    %v438 = vld [vmem:[#allocation15 + $0x170] sm:$0xff]
    %v439 = vld [vmem:[#allocation15 + $0x178] sm:$0xff]
    %v440 = vld [vmem:[#allocation15 + $0x180] sm:$0xff]
    %v441 = vld [vmem:[#allocation15 + $0x188] sm:$0xf]
    %v442 = vld [vmem:[#allocation15 + $0x18c] sm:$0xff]
    %v443 = vld [vmem:[#allocation15 + $0x194] sm:$0xff]
    %v444 = vld [vmem:[#allocation15 + $0x19c] sm:$0xff]
    %v445 = vld [vmem:[#allocation15 + $0x1a4] sm:$0xff]
    %v446 = vld [vmem:[#allocation15 + $0x1ac] sm:$0xf]
    %v447 = vld [vmem:[#allocation15 + $0x1b0] sm:$0xff]
    %v448 = vld [vmem:[#allocation15 + $0x1b8] sm:$0xff]
    %v449 = vld [vmem:[#allocation15 + $0x1c0] sm:$0xff]
    %v450 = vld [vmem:[#allocation15 + $0x1c8] sm:$0xff]
    %v451 = vld [vmem:[#allocation15 + $0x1d0] sm:$0xf]
    %v452 = vld [vmem:[#allocation15 + $0x1d4] sm:$0xff]
    %v453 = vld [vmem:[#allocation15 + $0x1dc] sm:$0xff]
    %v454 = vld [vmem:[#allocation15 + $0x1e4] sm:$0xff]
    %v455 = vld [vmem:[#allocation15 + $0x1ec] sm:$0xff]
    %v456 = vld [vmem:[#allocation15 + $0x1f4] sm:$0xf]
    %v457 = vld [vmem:[#allocation15 + $0x1f8] sm:$0xff]
    %v458 = vld [vmem:[#allocation15 + $0x200] sm:$0xff]
    %v459 = vld [vmem:[#allocation15 + $0x208] sm:$0xff]
    %v460 = vld [vmem:[#allocation15 + $0x210] sm:$0xff]
    %v461 = vld [vmem:[#allocation15 + $0x218] sm:$0xf]
    %v462 = vld [vmem:[#allocation15 + $0x21c] sm:$0xff]
    %v463 = vld [vmem:[#allocation15 + $0x224] sm:$0xff]
    %v464 = vld [vmem:[#allocation15 + $0x22c] sm:$0xff]
    %v465 = vld [vmem:[#allocation15 + $0x234] sm:$0xff]
    %v466 = vld [vmem:[#allocation15 + $0x23c] sm:$0xf]
    %v467 = vld [vmem:[#allocation15 + $0x240] sm:$0xff]
    %v468 = vld [vmem:[#allocation15 + $0x248] sm:$0xff]
    %v469 = vld [vmem:[#allocation15 + $0x250] sm:$0xff]
    %v470 = vld [vmem:[#allocation15 + $0x258] sm:$0xff]
    %v471 = vld [vmem:[#allocation15 + $0x260] sm:$0xf]
    %v472 = vld [vmem:[#allocation15 + $0x264] sm:$0xff]
    %v473 = vld [vmem:[#allocation15 + $0x26c] sm:$0xff]
    %v474 = vld [vmem:[#allocation15 + $0x274] sm:$0xff]
    %v475 = vld [vmem:[#allocation15 + $0x27c] sm:$0xff]
    %v476 = vld [vmem:[#allocation15 + $0x284] sm:$0xf]
    %v477 = vld [vmem:[#allocation15 + $0x288] sm:$0xff]
    %v478 = vld [vmem:[#allocation15 + $0x290] sm:$0xff]
    %v479 = vld [vmem:[#allocation15 + $0x298] sm:$0xff]
    %v480 = vld [vmem:[#allocation15 + $0x2a0] sm:$0xff]
    %v481 = vld [vmem:[#allocation15 + $0x2a8] sm:$0xf]
    %v482 = vld [vmem:[#allocation15 + $0x2ac] sm:$0xff]
    %v483 = vld [vmem:[#allocation15 + $0x2b4] sm:$0xff]
    %v484 = vld [vmem:[#allocation15 + $0x2bc] sm:$0xff]
    %v485 = vld [vmem:[#allocation15 + $0x2c4] sm:$0xff]
    %v486 = vld [vmem:[#allocation15 + $0x2cc] sm:$0xf]
    %v487 = vld [vmem:[#allocation15 + $0x2d0] sm:$0xff]
    %v488 = vld [vmem:[#allocation15 + $0x2d8] sm:$0xff]
    %v489 = vld [vmem:[#allocation15 + $0x2e0] sm:$0xff]
    %v490 = vld [vmem:[#allocation15 + $0x2e8] sm:$0xff]
    %v491 = vld [vmem:[#allocation15 + $0x2f0] sm:$0xf]
    %v492 = vld [vmem:[#allocation15 + $0x2f4] sm:$0xff]
    %v493 = vld [vmem:[#allocation15 + $0x2fc] sm:$0xff]
    %v494 = vld [vmem:[#allocation15 + $0x304] sm:$0xff]
    %v495 = vld [vmem:[#allocation15 + $0x30c] sm:$0xff]
    %v496 = vld [vmem:[#allocation15 + $0x314] sm:$0xf]
    %v497 = vld [vmem:[#allocation15 + $0x318] sm:$0xff]
    %v498 = vld [vmem:[#allocation15 + $0x320] sm:$0xff]
    %v499 = vld [vmem:[#allocation15 + $0x328] sm:$0xff]
    %v500 = vld [vmem:[#allocation15 + $0x330] sm:$0xff]
    %v501 = vld [vmem:[#allocation15 + $0x338] sm:$0xf]
    %v502 = vld [vmem:[#allocation15 + $0x33c] sm:$0xff]
    %v503 = vld [vmem:[#allocation15 + $0x344] sm:$0xff]
    %v504 = vld [vmem:[#allocation15 + $0x34c] sm:$0xff]
    %v505 = vld [vmem:[#allocation15 + $0x354] sm:$0xff]
    %v506 = vld [vmem:[#allocation15 + $0x35c] sm:$0xf]
    %v507 = vld [vmem:[#allocation15 + $0x360] sm:$0xff]
    %v508 = vld [vmem:[#allocation15 + $0x368] sm:$0xff]
    %v509 = vld [vmem:[#allocation15 + $0x370] sm:$0xff]
    %v510 = vld [vmem:[#allocation15 + $0x378] sm:$0xff]
    %v511 = vld [vmem:[#allocation15 + $0x380] sm:$0xf]
    %v512 = vld [vmem:[#allocation15 + $0x384] sm:$0xff]
    %v513 = vld [vmem:[#allocation15 + $0x38c] sm:$0xff]
    %v514 = vld [vmem:[#allocation15 + $0x394] sm:$0xff]
    %v515 = vld [vmem:[#allocation15 + $0x39c] sm:$0xff]
    %v516 = vld [vmem:[#allocation15 + $0x3a4] sm:$0xf]
    %v517 = vld [vmem:[#allocation15 + $0x3a8] sm:$0xff]
    %v518 = vld [vmem:[#allocation15 + $0x3b0] sm:$0xff]
    %v519 = vld [vmem:[#allocation15 + $0x3b8] sm:$0xff]
    %v520 = vld [vmem:[#allocation15 + $0x3c0] sm:$0xff]
    %v521 = vld [vmem:[#allocation15 + $0x3c8] sm:$0xf]
    %v522 = vld [vmem:[#allocation15 + $0x3cc] sm:$0xff]
    %v523 = vld [vmem:[#allocation15 + $0x3d4] sm:$0xff]
    %v524 = vld [vmem:[#allocation15 + $0x3dc] sm:$0xff]
    %v525 = vld [vmem:[#allocation15 + $0x3e4] sm:$0xff]
    %v526 = vld [vmem:[#allocation15 + $0x3ec] sm:$0xf]
    %v527 = vld [vmem:[#allocation15 + $0x3f0] sm:$0xff]
    %v528 = vld [vmem:[#allocation15 + $0x3f8] sm:$0xff]
    %v529 = vld [vmem:[#allocation15 + $0x400] sm:$0xff]
    %v530 = vld [vmem:[#allocation15 + $0x408] sm:$0xff]
    %v531 = vld [vmem:[#allocation15 + $0x410] sm:$0xf]
    %v532 = vld [vmem:[#allocation15 + $0x414] sm:$0xff]
    %v533 = vld [vmem:[#allocation15 + $0x41c] sm:$0xff]
    %v534 = vld [vmem:[#allocation15 + $0x424] sm:$0xff]
    %v535 = vld [vmem:[#allocation15 + $0x42c] sm:$0xff]
    %v536 = vld [vmem:[#allocation15 + $0x434] sm:$0xf]
    %v537 = vld [vmem:[#allocation15 + $0x438] sm:$0xff]
    %v538 = vld [vmem:[#allocation15 + $0x440] sm:$0xff]
    %v539 = vld [vmem:[#allocation15 + $0x448] sm:$0xff]
    %v540 = vld [vmem:[#allocation15 + $0x450] sm:$0xff]
    %v541 = vld [vmem:[#allocation15 + $0x458] sm:$0xf]
    %v542 = vld [vmem:[#allocation15 + $0x45c] sm:$0xff]
    %v543 = vld [vmem:[#allocation15 + $0x464] sm:$0xff]
    %v544 = vld [vmem:[#allocation15 + $0x46c] sm:$0xff]
    %v545 = vld [vmem:[#allocation15 + $0x474] sm:$0xff]
    %v546 = vld [vmem:[#allocation15 + $0x47c] sm:$0xf]
    %v547 = vld [vmem:[#allocation15 + $0x480] sm:$0xff]
    %v548 = vld [vmem:[#allocation15 + $0x488] sm:$0xff]
    %v549 = vld [vmem:[#allocation15 + $0x490] sm:$0xff]
    %v550 = vld [vmem:[#allocation15 + $0x498] sm:$0xff]
    %v551 = vld [vmem:[#allocation15 + $0x4a0] sm:$0xf]
    %v552 = vld [vmem:[#allocation15 + $0x4a4] sm:$0xff]
    %v553 = vld [vmem:[#allocation15 + $0x4ac] sm:$0xff]
    %v554 = vld [vmem:[#allocation15 + $0x4b4] sm:$0xff]
    %v555 = vld [vmem:[#allocation15 + $0x4bc] sm:$0xff]
    %v556 = vld [vmem:[#allocation15 + $0x4c4] sm:$0xf]
    %v557 = vld [vmem:[#allocation15 + $0x4c8] sm:$0xff]
    %v558 = vld [vmem:[#allocation15 + $0x4d0] sm:$0xff]
    %v559 = vld [vmem:[#allocation15 + $0x4d8] sm:$0xff]
    %v560 = vld [vmem:[#allocation15 + $0x4e0] sm:$0xff]
    %v561 = vld [vmem:[#allocation15 + $0x4e8] sm:$0xf]
    %v562 = vld [vmem:[#allocation15 + $0x4ec] sm:$0xff]
    %v563 = vld [vmem:[#allocation15 + $0x4f4] sm:$0xff]
    %v564 = vld [vmem:[#allocation15 + $0x4fc] sm:$0xff]
    %v565 = vld [vmem:[#allocation15 + $0x504] sm:$0xff]
    %v566 = vld [vmem:[#allocation15 + $0x50c] sm:$0xf]
    %v567 = vld [vmem:[#allocation15 + $0x510] sm:$0xff]
    %v568 = vld [vmem:[#allocation15 + $0x518] sm:$0xff]
    %v569 = vld [vmem:[#allocation15 + $0x520] sm:$0xff]
    %v570 = vld [vmem:[#allocation15 + $0x528] sm:$0xff]
    %v571 = vld [vmem:[#allocation15 + $0x530] sm:$0xf]
    %v572 = vld [vmem:[#allocation15 + $0x534] sm:$0xff]
    %v573 = vld [vmem:[#allocation15 + $0x53c] sm:$0xff]
    %v574 = vld [vmem:[#allocation15 + $0x544] sm:$0xff]
    %v575 = vld [vmem:[#allocation15 + $0x54c] sm:$0xff]
    %v576 = vld [vmem:[#allocation15 + $0x554] sm:$0xf]
    %v577 = vld [vmem:[#allocation15 + $0x558] sm:$0xff]
    %v578 = vld [vmem:[#allocation15 + $0x560] sm:$0xff]
    %v579 = vld [vmem:[#allocation15 + $0x568] sm:$0xff]
    %v580 = vld [vmem:[#allocation15 + $0x570] sm:$0xff]
    %v581 = vld [vmem:[#allocation15 + $0x578] sm:$0xf]
    %v582 = vld [vmem:[#allocation15 + $0x57c] sm:$0xff]
    %v583 = vld [vmem:[#allocation15 + $0x584] sm:$0xff]
    %v584 = vld [vmem:[#allocation15 + $0x58c] sm:$0xff]
    %v585 = vld [vmem:[#allocation15 + $0x594] sm:$0xff]
    %v586 = vld [vmem:[#allocation15 + $0x59c] sm:$0xf]
    %v587 = vld [vmem:[#allocation15 + $0x5a0] sm:$0xff]
    %v588 = vld [vmem:[#allocation15 + $0x5a8] sm:$0xff]
    %v589 = vld [vmem:[#allocation15 + $0x5b0] sm:$0xff]
    %v590 = vld [vmem:[#allocation15 + $0x5b8] sm:$0xff]
    %v591 = vld [vmem:[#allocation15 + $0x5c0] sm:$0xf]
    %v592 = vld [vmem:[#allocation15 + $0x5c4] sm:$0xff]
    %v593 = vld [vmem:[#allocation15 + $0x5cc] sm:$0xff]
    %v594 = vld [vmem:[#allocation15 + $0x5d4] sm:$0xff]
    %v595 = vld [vmem:[#allocation15 + $0x5dc] sm:$0xff]
    %v596 = vld [vmem:[#allocation15 + $0x5e4] sm:$0xf]
    %v597 = vld [vmem:[#allocation15 + $0x5e8] sm:$0xff]
    %v598 = vld [vmem:[#allocation15 + $0x5f0] sm:$0xff]
    %v599 = vld [vmem:[#allocation15 + $0x5f8] sm:$0xff]
    %v600 = vld [vmem:[#allocation15 + $0x600] sm:$0xff]
    %v601 = vld [vmem:[#allocation15 + $0x608] sm:$0xf]
    %v602 = vld [vmem:[#allocation15 + $0x60c] sm:$0xff]
    %v603 = vld [vmem:[#allocation15 + $0x614] sm:$0xff]
    %v604 = vld [vmem:[#allocation15 + $0x61c] sm:$0xff]
    %v605 = vld [vmem:[#allocation15 + $0x624] sm:$0xff]
    %v606 = vld [vmem:[#allocation15 + $0x62c] sm:$0xf]
    %v607 = vld [vmem:[#allocation15 + $0x630] sm:$0xff]
    %v608 = vld [vmem:[#allocation15 + $0x638] sm:$0xff]
    %v609 = vld [vmem:[#allocation15 + $0x640] sm:$0xff]
    %v610 = vld [vmem:[#allocation15 + $0x648] sm:$0xff]
    %v611 = vld [vmem:[#allocation15 + $0x650] sm:$0xf]
    %v612 = vld [vmem:[#allocation15 + $0x654] sm:$0xff]
    %v613 = vld [vmem:[#allocation15 + $0x65c] sm:$0xff]
    %v614 = vld [vmem:[#allocation15 + $0x664] sm:$0xff]
    %v615 = vld [vmem:[#allocation15 + $0x66c] sm:$0xff]
    %v616 = vld [vmem:[#allocation15 + $0x674] sm:$0xf]
    %v617 = vld [vmem:[#allocation15 + $0x678] sm:$0xff]
    %v618 = vld [vmem:[#allocation15 + $0x680] sm:$0xff]
    %v619 = vld [vmem:[#allocation15 + $0x688] sm:$0xff]
    %v620 = vld [vmem:[#allocation15 + $0x690] sm:$0xff]
    %v621 = vld [vmem:[#allocation15 + $0x698] sm:$0xf]
    %v622 = vld [vmem:[#allocation15 + $0x69c] sm:$0xff]
    %v623 = vld [vmem:[#allocation15 + $0x6a4] sm:$0xff]
    %v624 = vld [vmem:[#allocation15 + $0x6ac] sm:$0xff]
    %v625 = vld [vmem:[#allocation15 + $0x6b4] sm:$0xff]
    %v626 = vld [vmem:[#allocation15 + $0x6bc] sm:$0xf]
    %v627 = vld [vmem:[#allocation15 + $0x6c0] sm:$0xff]
    %v628 = vld [vmem:[#allocation15 + $0x6c8] sm:$0xff]
    %v629 = vld [vmem:[#allocation15 + $0x6d0] sm:$0xff]
    %v630 = vld [vmem:[#allocation15 + $0x6d8] sm:$0xff]
    %v631 = vld [vmem:[#allocation15 + $0x6e0] sm:$0xf]
    %v632 = vld [vmem:[#allocation15 + $0x6e4] sm:$0xff]
    %v633 = vld [vmem:[#allocation15 + $0x6ec] sm:$0xff]
    %v634 = vld [vmem:[#allocation15 + $0x6f4] sm:$0xff]
    %v635 = vld [vmem:[#allocation15 + $0x6fc] sm:$0xff]
    %v636 = vld [vmem:[#allocation15 + $0x704] sm:$0xf]
    %v637 = vld [vmem:[#allocation15 + $0x708] sm:$0xff]
    %v638 = vld [vmem:[#allocation15 + $0x710] sm:$0xff]
    %v639 = vld [vmem:[#allocation15 + $0x718] sm:$0xff]
    %v640 = vld [vmem:[#allocation15 + $0x720] sm:$0xff]
    %v641 = vld [vmem:[#allocation15 + $0x728] sm:$0xf]
    %v642 = vld [vmem:[#allocation15 + $0x72c] sm:$0xff]
    %v643 = vld [vmem:[#allocation15 + $0x734] sm:$0xff]
    %v644 = vld [vmem:[#allocation15 + $0x73c] sm:$0xff]
    %v645 = vld [vmem:[#allocation15 + $0x744] sm:$0xff]
    %v646 = vld [vmem:[#allocation15 + $0x74c] sm:$0xf]
    %v647 = vld [vmem:[#allocation15 + $0x750] sm:$0xff]
    %v648 = vld [vmem:[#allocation15 + $0x758] sm:$0xff]
    %v649 = vld [vmem:[#allocation15 + $0x760] sm:$0xff]
    %v650 = vld [vmem:[#allocation15 + $0x768] sm:$0xff]
    %v651 = vld [vmem:[#allocation15 + $0x770] sm:$0xf]
    %v652 = vld [vmem:[#allocation15 + $0x774] sm:$0xff]
    %v653 = vld [vmem:[#allocation15 + $0x77c] sm:$0xff]
    %v654 = vld [vmem:[#allocation15 + $0x784] sm:$0xff]
    %v655 = vld [vmem:[#allocation15 + $0x78c] sm:$0xff]
    %v656 = vld [vmem:[#allocation15 + $0x794] sm:$0xf]
    %v657 = vld [vmem:[#allocation15 + $0x798] sm:$0xff]
    %v658 = vld [vmem:[#allocation15 + $0x7a0] sm:$0xff]
    %v659 = vld [vmem:[#allocation15 + $0x7a8] sm:$0xff]
    %v660 = vld [vmem:[#allocation15 + $0x7b0] sm:$0xff]
    %v661 = vld [vmem:[#allocation15 + $0x7b8] sm:$0xf]
    %v662 = vld [vmem:[#allocation15 + $0x7bc] sm:$0xff]
    %v663 = vld [vmem:[#allocation15 + $0x7c4] sm:$0xff]
    %v664 = vld [vmem:[#allocation15 + $0x7cc] sm:$0xff]
    %v665 = vld [vmem:[#allocation15 + $0x7d4] sm:$0xff]
    %v666 = vld [vmem:[#allocation15 + $0x7dc] sm:$0xf]
    %v667 = vld [vmem:[#allocation15 + $0x7e0] sm:$0xff]
    %v668 = vld [vmem:[#allocation15 + $0x7e8] sm:$0xff]
    %v669 = vld [vmem:[#allocation15 + $0x7f0] sm:$0xff]
    %v670 = vld [vmem:[#allocation15 + $0x7f8] sm:$0xff]
    %v671 = vld [vmem:[#allocation15 + $0x800] sm:$0xf]
    %v672 = vld [vmem:[#allocation15 + $0x804] sm:$0xff]
    %v673 = vld [vmem:[#allocation15 + $0x80c] sm:$0xff]
    %v674 = vld [vmem:[#allocation15 + $0x814] sm:$0xff]
    %v675 = vld [vmem:[#allocation15 + $0x81c] sm:$0xff]
    %v676 = vld [vmem:[#allocation15 + $0x824] sm:$0xf]
    %v677 = vld [vmem:[#allocation15 + $0x828] sm:$0xff]
    %v678 = vld [vmem:[#allocation15 + $0x830] sm:$0xff]
    %v679 = vld [vmem:[#allocation15 + $0x838] sm:$0xff]
    %v680 = vld [vmem:[#allocation15 + $0x840] sm:$0xff]
    %v681 = vld [vmem:[#allocation15 + $0x848] sm:$0xf]
    %v682 = vld [vmem:[#allocation15 + $0x84c] sm:$0xff]
    %v683 = vld [vmem:[#allocation15 + $0x854] sm:$0xff]
    %v684 = vld [vmem:[#allocation15 + $0x85c] sm:$0xff]
    %v685 = vld [vmem:[#allocation15 + $0x864] sm:$0xff]
    %v686 = vld [vmem:[#allocation15 + $0x86c] sm:$0xf]
    %v687 = vld [vmem:[#allocation15 + $0x870] sm:$0xff]
    %v688 = vld [vmem:[#allocation15 + $0x878] sm:$0xff]
    %v689 = vld [vmem:[#allocation15 + $0x880] sm:$0xff]
    %v690 = vld [vmem:[#allocation15 + $0x888] sm:$0xff]
    %v691 = vld [vmem:[#allocation15 + $0x890] sm:$0xf]
    %v692 = vld [vmem:[#allocation15 + $0x894] sm:$0xff]
    %v693 = vld [vmem:[#allocation15 + $0x89c] sm:$0xff]
    %v694 = vld [vmem:[#allocation15 + $0x8a4] sm:$0xff]
    %v695 = vld [vmem:[#allocation15 + $0x8ac] sm:$0xff]
    %v696 = vld [vmem:[#allocation15 + $0x8b4] sm:$0xf]
    %v697 = vld [vmem:[#allocation15 + $0x8b8] sm:$0xff]
    %v698 = vld [vmem:[#allocation15 + $0x8c0] sm:$0xff]
    %v699 = vld [vmem:[#allocation15 + $0x8c8] sm:$0xff]
    %v700 = vld [vmem:[#allocation15 + $0x8d0] sm:$0xff]
    %v701 = vld [vmem:[#allocation15 + $0x8d8] sm:$0xf]
    %v702 = vld [vmem:[#allocation15 + $0x8dc] sm:$0xff]
    %v703 = vld [vmem:[#allocation15 + $0x8e4] sm:$0xff]
    %v704 = vld [vmem:[#allocation15 + $0x8ec] sm:$0xff]
    %v705 = vld [vmem:[#allocation15 + $0x8f4] sm:$0xff]
    %v706 = vld [vmem:[#allocation15 + $0x8fc] sm:$0xf]
    %v707 = vld [vmem:[#allocation15 + $0x900] sm:$0xff]
    %v708 = vld [vmem:[#allocation15 + $0x908] sm:$0xff]
    %v709 = vld [vmem:[#allocation15 + $0x910] sm:$0xff]
    %v710 = vld [vmem:[#allocation15 + $0x918] sm:$0xff]
    %v711 = vld [vmem:[#allocation15 + $0x920] sm:$0xf]
    %v712 = vld [vmem:[#allocation15 + $0x924] sm:$0xff]
    %v713 = vld [vmem:[#allocation15 + $0x92c] sm:$0xff]
    %v714 = vld [vmem:[#allocation15 + $0x934] sm:$0xff]
    %v715 = vld [vmem:[#allocation15 + $0x93c] sm:$0xff]
    %v716 = vld [vmem:[#allocation15 + $0x944] sm:$0xf]
    %v717 = vld [vmem:[#allocation15 + $0x948] sm:$0xff]
    %v718 = vld [vmem:[#allocation15 + $0x950] sm:$0xff]
    %v719 = vld [vmem:[#allocation15 + $0x958] sm:$0xff]
    %v720 = vld [vmem:[#allocation15 + $0x960] sm:$0xff]
    %v721 = vld [vmem:[#allocation15 + $0x968] sm:$0xf]
    %v722 = vld [vmem:[#allocation15 + $0x96c] sm:$0xff]
    %v723 = vld [vmem:[#allocation15 + $0x974] sm:$0xff]
    %v724 = vld [vmem:[#allocation15 + $0x97c] sm:$0xff]
    %v725 = vld [vmem:[#allocation15 + $0x984] sm:$0xff]
    %v726 = vld [vmem:[#allocation15 + $0x98c] sm:$0xf]
    %v727 = vld [vmem:[#allocation15 + $0x990] sm:$0xff]
    %v728 = vld [vmem:[#allocation15 + $0x998] sm:$0xff]
    %v729 = vld [vmem:[#allocation15 + $0x9a0] sm:$0xff]
    %v730 = vld [vmem:[#allocation15 + $0x9a8] sm:$0xff]
    %v731 = vld [vmem:[#allocation15 + $0x9b0] sm:$0xf]
    %v732 = vld [vmem:[#allocation15 + $0x9b4] sm:$0xff]
    %v733 = vld [vmem:[#allocation15 + $0x9bc] sm:$0xff]
    %v734 = vld [vmem:[#allocation15 + $0x9c4] sm:$0xff]
    %v735 = vld [vmem:[#allocation15 + $0x9cc] sm:$0xff]
    %v736 = vld [vmem:[#allocation15 + $0x9d4] sm:$0xf]
    %v737 = vld [vmem:[#allocation15 + $0x9d8] sm:$0xff]
    %v738 = vld [vmem:[#allocation15 + $0x9e0] sm:$0xff]
    %v739 = vld [vmem:[#allocation15 + $0x9e8] sm:$0xff]
    %v740 = vld [vmem:[#allocation15 + $0x9f0] sm:$0xff]
    %v741 = vld [vmem:[#allocation15 + $0x9f8] sm:$0xf]
    %v742 = vld [vmem:[#allocation15 + $0x9fc] sm:$0xff]
    %v743 = vld [vmem:[#allocation15 + $0xa04] sm:$0xff]
    %v744 = vld [vmem:[#allocation15 + $0xa0c] sm:$0xff]
    %v745 = vld [vmem:[#allocation15 + $0xa14] sm:$0xff]
    %v746 = vld [vmem:[#allocation15 + $0xa1c] sm:$0xf]
    %v747 = vld [vmem:[#allocation15 + $0xa20] sm:$0xff]
    %v748 = vld [vmem:[#allocation15 + $0xa28] sm:$0xff]
    %v749 = vld [vmem:[#allocation15 + $0xa30] sm:$0xff]
    %v750 = vld [vmem:[#allocation15 + $0xa38] sm:$0xff]
    %v751 = vld [vmem:[#allocation15 + $0xa40] sm:$0xf]
    %v752 = vld [vmem:[#allocation15 + $0xa44] sm:$0xff]
    %v753 = vld [vmem:[#allocation15 + $0xa4c] sm:$0xff]
    %v754 = vld [vmem:[#allocation15 + $0xa54] sm:$0xff]
    %v755 = vld [vmem:[#allocation15 + $0xa5c] sm:$0xff]
    %v756 = vld [vmem:[#allocation15 + $0xa64] sm:$0xf]
    %v757 = vld [vmem:[#allocation15 + $0xa68] sm:$0xff]
    %v758 = vld [vmem:[#allocation15 + $0xa70] sm:$0xff]
    %v759 = vld [vmem:[#allocation15 + $0xa78] sm:$0xff]
    %v760 = vld [vmem:[#allocation15 + $0xa80] sm:$0xff]
    %v761 = vld [vmem:[#allocation15 + $0xa88] sm:$0xf]
    %v762 = vld [vmem:[#allocation15 + $0xa8c] sm:$0xff]
    %v763 = vld [vmem:[#allocation15 + $0xa94] sm:$0xff]
    %v764 = vld [vmem:[#allocation15 + $0xa9c] sm:$0xff]
    %v765 = vld [vmem:[#allocation15 + $0xaa4] sm:$0xff]
    %v766 = vld [vmem:[#allocation15 + $0xaac] sm:$0xf]
    %v767 = vld [vmem:[#allocation15 + $0xab0] sm:$0xff]
    %v768 = vld [vmem:[#allocation15 + $0xab8] sm:$0xff]
    %v769 = vld [vmem:[#allocation15 + $0xac0] sm:$0xff]
    %v770 = vld [vmem:[#allocation15 + $0xac8] sm:$0xff]
    %v771 = vld [vmem:[#allocation15 + $0xad0] sm:$0xf]
    %v772 = vld [vmem:[#allocation15 + $0xad4] sm:$0xff]
    %v773 = vld [vmem:[#allocation15 + $0xadc] sm:$0xff]
    %v774 = vld [vmem:[#allocation15 + $0xae4] sm:$0xff]
    %v775 = vld [vmem:[#allocation15 + $0xaec] sm:$0xff]
    %v776 = vld [vmem:[#allocation15 + $0xaf4] sm:$0xf]
    %v777 = vld [vmem:[#allocation15 + $0xaf8] sm:$0xff]
    %v778 = vld [vmem:[#allocation15 + $0xb00] sm:$0xff]
    %v779 = vld [vmem:[#allocation15 + $0xb08] sm:$0xff]
    %v780 = vld [vmem:[#allocation15 + $0xb10] sm:$0xff]
    %v781 = vld [vmem:[#allocation15 + $0xb18] sm:$0xf]
    %v782 = vld [vmem:[#allocation15 + $0xb1c] sm:$0xff]
    %v783 = vld [vmem:[#allocation15 + $0xb24] sm:$0xff]
    %v784 = vld [vmem:[#allocation15 + $0xb2c] sm:$0xff]
    %v785 = vld [vmem:[#allocation15 + $0xb34] sm:$0xff]
    %v786 = vld [vmem:[#allocation15 + $0xb3c] sm:$0xf]
    %v787 = vld [vmem:[#allocation15 + $0xb40] sm:$0xff]
    %v788 = vld [vmem:[#allocation15 + $0xb48] sm:$0xff]
    %v789 = vld [vmem:[#allocation15 + $0xb50] sm:$0xff]
    %v790 = vld [vmem:[#allocation15 + $0xb58] sm:$0xff]
    %v791 = vld [vmem:[#allocation15 + $0xb60] sm:$0xf]
    %v792 = vld [vmem:[#allocation15 + $0xb64] sm:$0xff]
    %v793 = vld [vmem:[#allocation15 + $0xb6c] sm:$0xff]
    %v794 = vld [vmem:[#allocation15 + $0xb74] sm:$0xff]
    %v795 = vld [vmem:[#allocation15 + $0xb7c] sm:$0xff]
    %v796 = vld [vmem:[#allocation15 + $0xb84] sm:$0xf]
    %v797 = vld [vmem:[#allocation15 + $0xb88] sm:$0xff]
    %v798 = vld [vmem:[#allocation15 + $0xb90] sm:$0xff]
    %v799 = vld [vmem:[#allocation15 + $0xb98] sm:$0xff]
    %v800 = vld [vmem:[#allocation15 + $0xba0] sm:$0xff]
    %v801 = vld [vmem:[#allocation15 + $0xba8] sm:$0xf]
    %v802 = vld [vmem:[#allocation15 + $0xbac] sm:$0xff]
    %v803 = vld [vmem:[#allocation15 + $0xbb4] sm:$0xff]
    %v804 = vld [vmem:[#allocation15 + $0xbbc] sm:$0xff]
    %v805 = vld [vmem:[#allocation15 + $0xbc4] sm:$0xff]
    %v806 = vld [vmem:[#allocation15 + $0xbcc] sm:$0xf]
    %v807 = vld [vmem:[#allocation15 + $0xbd0] sm:$0xff]
    %v808 = vld [vmem:[#allocation15 + $0xbd8] sm:$0xff]
    %v809 = vld [vmem:[#allocation15 + $0xbe0] sm:$0xff]
    %v810 = vld [vmem:[#allocation15 + $0xbe8] sm:$0xff]
    %v811 = vld [vmem:[#allocation15 + $0xbf0] sm:$0xf]
    %v812 = vld [vmem:[#allocation15 + $0xbf4] sm:$0xff]
    %v813 = vld [vmem:[#allocation15 + $0xbfc] sm:$0xff]
    %v814 = vld [vmem:[#allocation15 + $0xc04] sm:$0xff]
    %v815 = vld [vmem:[#allocation15 + $0xc0c] sm:$0xff]
    %v816 = vld [vmem:[#allocation15 + $0xc14] sm:$0xf]
    %v817 = vld [vmem:[#allocation15 + $0xc18] sm:$0xff]
    %v818 = vld [vmem:[#allocation15 + $0xc20] sm:$0xff]
    %v819 = vld [vmem:[#allocation15 + $0xc28] sm:$0xff]
    %v820 = vld [vmem:[#allocation15 + $0xc30] sm:$0xff]
    %v821 = vld [vmem:[#allocation15 + $0xc38] sm:$0xf]
    %v822 = vld [vmem:[#allocation15 + $0xc3c] sm:$0xff]
    %v823 = vld [vmem:[#allocation15 + $0xc44] sm:$0xff]
    %v824 = vld [vmem:[#allocation15 + $0xc4c] sm:$0xff]
    %v825 = vld [vmem:[#allocation15 + $0xc54] sm:$0xff]
    %v826 = vld [vmem:[#allocation15 + $0xc5c] sm:$0xf]
    %v827 = vld [vmem:[#allocation15 + $0xc60] sm:$0xff]
    %v828 = vld [vmem:[#allocation15 + $0xc68] sm:$0xff]
    %v829 = vld [vmem:[#allocation15 + $0xc70] sm:$0xff]
    %v830 = vld [vmem:[#allocation15 + $0xc78] sm:$0xff]
    %v831 = vld [vmem:[#allocation15 + $0xc80] sm:$0xf]
    %v832 = vld [vmem:[#allocation15 + $0xc84] sm:$0xff]
    %v833 = vld [vmem:[#allocation15 + $0xc8c] sm:$0xff]
    %v834 = vld [vmem:[#allocation15 + $0xc94] sm:$0xff]
    %v835 = vld [vmem:[#allocation15 + $0xc9c] sm:$0xff]
    %v836 = vld [vmem:[#allocation15 + $0xca4] sm:$0xf]
    %v837 = vld [vmem:[#allocation15 + $0xca8] sm:$0xff]
    %v838 = vld [vmem:[#allocation15 + $0xcb0] sm:$0xff]
    %v839 = vld [vmem:[#allocation15 + $0xcb8] sm:$0xff]
    %v840 = vld [vmem:[#allocation15 + $0xcc0] sm:$0xff]
    %v841 = vld [vmem:[#allocation15 + $0xcc8] sm:$0xf]
    %v842 = vld [vmem:[#allocation15 + $0xccc] sm:$0xff]
    %v843 = vld [vmem:[#allocation15 + $0xcd4] sm:$0xff]
    %v844 = vld [vmem:[#allocation15 + $0xcdc] sm:$0xff]
    %v845 = vld [vmem:[#allocation15 + $0xce4] sm:$0xff]
    %v846 = vld [vmem:[#allocation15 + $0xcec] sm:$0xf]
    %v847 = vld [vmem:[#allocation15 + $0xcf0] sm:$0xff]
    %v848 = vld [vmem:[#allocation15 + $0xcf8] sm:$0xff]
    %v849 = vld [vmem:[#allocation15 + $0xd00] sm:$0xff]
    %v850 = vld [vmem:[#allocation15 + $0xd08] sm:$0xff]
    %v851 = vld [vmem:[#allocation15 + $0xd10] sm:$0xf]
    %v852 = vld [vmem:[#allocation15 + $0xd14] sm:$0xff]
    %v853 = vld [vmem:[#allocation15 + $0xd1c] sm:$0xff]
    %v854 = vld [vmem:[#allocation15 + $0xd24] sm:$0xff]
    %v855 = vld [vmem:[#allocation15 + $0xd2c] sm:$0xff]
    %v856 = vld [vmem:[#allocation15 + $0xd34] sm:$0xf]
    %v857 = vld [vmem:[#allocation15 + $0xd38] sm:$0xff]
    %v858 = vld [vmem:[#allocation15 + $0xd40] sm:$0xff]
    %v859 = vld [vmem:[#allocation15 + $0xd48] sm:$0xff]
    %v860 = vld [vmem:[#allocation15 + $0xd50] sm:$0xff]
    %v861 = vld [vmem:[#allocation15 + $0xd58] sm:$0xf]
    %v862 = vld [vmem:[#allocation15 + $0xd5c] sm:$0xff]
    %v863 = vld [vmem:[#allocation15 + $0xd64] sm:$0xff]
    %v864 = vld [vmem:[#allocation15 + $0xd6c] sm:$0xff]
    %v865 = vld [vmem:[#allocation15 + $0xd74] sm:$0xff]
    %v866 = vld [vmem:[#allocation15 + $0xd7c] sm:$0xf]
    %v867 = vld [vmem:[#allocation15 + $0xd80] sm:$0xff]
    %v868 = vld [vmem:[#allocation15 + $0xd88] sm:$0xff]
    %v869 = vld [vmem:[#allocation15 + $0xd90] sm:$0xff]
    %v870 = vld [vmem:[#allocation15 + $0xd98] sm:$0xff]
    %v871 = vld [vmem:[#allocation15 + $0xda0] sm:$0xf]
    %v872 = vld [vmem:[#allocation15 + $0xda4] sm:$0xff]
    %v873 = vld [vmem:[#allocation15 + $0xdac] sm:$0xff]
    %v874 = vld [vmem:[#allocation15 + $0xdb4] sm:$0xff]
    %v875 = vld [vmem:[#allocation15 + $0xdbc] sm:$0xff]
    %v876 = vld [vmem:[#allocation15 + $0xdc4] sm:$0xf]
    %v877 = vld [vmem:[#allocation15 + $0xdc8] sm:$0xff]
    %v878 = vld [vmem:[#allocation15 + $0xdd0] sm:$0xff]
    %v879 = vld [vmem:[#allocation15 + $0xdd8] sm:$0xff]
    %v880 = vld [vmem:[#allocation15 + $0xde0] sm:$0xff]
    %v881 = vld [vmem:[#allocation15 + $0xde8] sm:$0xf]
    %v882 = vld [vmem:[#allocation15 + $0xdec] sm:$0xff]
    %v883 = vld [vmem:[#allocation15 + $0xdf4] sm:$0xff]
    %v884 = vld [vmem:[#allocation15 + $0xdfc] sm:$0xff]
    %v885 = vld [vmem:[#allocation15 + $0xe04] sm:$0xff]
    %v886 = vld [vmem:[#allocation15 + $0xe0c] sm:$0xf]
    %v887 = vld [vmem:[#allocation15 + $0xe10] sm:$0xff]
    %v888 = vld [vmem:[#allocation15 + $0xe18] sm:$0xff]
    %v889 = vld [vmem:[#allocation15 + $0xe20] sm:$0xff]
    %v890 = vld [vmem:[#allocation15 + $0xe28] sm:$0xff]
    %v891 = vld [vmem:[#allocation15 + $0xe30] sm:$0xf]
    %v892 = vld [vmem:[#allocation15 + $0xe34] sm:$0xff]
    %v893 = vld [vmem:[#allocation15 + $0xe3c] sm:$0xff]
    %v894 = vld [vmem:[#allocation15 + $0xe44] sm:$0xff]
    %v895 = vld [vmem:[#allocation15 + $0xe4c] sm:$0xff]
    %v896 = vld [vmem:[#allocation15 + $0xe54] sm:$0xf]
    %v897 = vld [vmem:[#allocation15 + $0xe58] sm:$0xff]
    %v898 = vld [vmem:[#allocation15 + $0xe60] sm:$0xff]
    %v899 = vld [vmem:[#allocation15 + $0xe68] sm:$0xff]
    %v900 = vld [vmem:[#allocation15 + $0xe70] sm:$0xff]
    %v901 = vld [vmem:[#allocation15 + $0xe78] sm:$0xf]
    %v902 = vld [vmem:[#allocation15 + $0xe7c] sm:$0xff]
    %v903 = vld [vmem:[#allocation15 + $0xe84] sm:$0xff]
    %v904 = vld [vmem:[#allocation15 + $0xe8c] sm:$0xff]
    %v905 = vld [vmem:[#allocation15 + $0xe94] sm:$0xff]
    %v906 = vld [vmem:[#allocation15 + $0xe9c] sm:$0xf]
    %v907 = vld [vmem:[#allocation15 + $0xea0] sm:$0xff]
    %v908 = vld [vmem:[#allocation15 + $0xea8] sm:$0xff]
    %v909 = vld [vmem:[#allocation15 + $0xeb0] sm:$0xff]
    %v910 = vld [vmem:[#allocation15 + $0xeb8] sm:$0xff]
    %v911 = vld [vmem:[#allocation15 + $0xec0] sm:$0xf]
    %v912 = vld [vmem:[#allocation15 + $0xec4] sm:$0xff]
    %v913 = vld [vmem:[#allocation15 + $0xecc] sm:$0xff]
    %v914 = vld [vmem:[#allocation15 + $0xed4] sm:$0xff]
    %v915 = vld [vmem:[#allocation15 + $0xedc] sm:$0xff]
    %v916 = vld [vmem:[#allocation15 + $0xee4] sm:$0xf]
    %v917 = vld [vmem:[#allocation15 + $0xee8] sm:$0xff]
    %v918 = vld [vmem:[#allocation15 + $0xef0] sm:$0xff]
    %v919 = vld [vmem:[#allocation15 + $0xef8] sm:$0xff]
    %v920 = vld [vmem:[#allocation15 + $0xf00] sm:$0xff]
    %v921 = vld [vmem:[#allocation15 + $0xf08] sm:$0xf]
    %v922 = vld [vmem:[#allocation15 + $0xf0c] sm:$0xff]
    %v923 = vld [vmem:[#allocation15 + $0xf14] sm:$0xff]
    %v924 = vld [vmem:[#allocation15 + $0xf1c] sm:$0xff]
    %v925 = vld [vmem:[#allocation15 + $0xf24] sm:$0xff]
    %v926 = vld [vmem:[#allocation15 + $0xf2c] sm:$0xf]
    %v927 = vld [vmem:[#allocation15 + $0xf30] sm:$0xff]
    %v928 = vld [vmem:[#allocation15 + $0xf38] sm:$0xff]
    %v929 = vld [vmem:[#allocation15 + $0xf40] sm:$0xff]
    %v930 = vld [vmem:[#allocation15 + $0xf48] sm:$0xff]
    %v931 = vld [vmem:[#allocation15 + $0xf50] sm:$0xf]
    %v932 = vld [vmem:[#allocation15 + $0xf54] sm:$0xff]
    %v933 = vld [vmem:[#allocation15 + $0xf5c] sm:$0xff]
    %v934 = vld [vmem:[#allocation15 + $0xf64] sm:$0xff]
    %v935 = vld [vmem:[#allocation15 + $0xf6c] sm:$0xff]
    %v936 = vld [vmem:[#allocation15 + $0xf74] sm:$0xf]
    %v937 = vld [vmem:[#allocation15 + $0xf78] sm:$0xff]
    %v938 = vld [vmem:[#allocation15 + $0xf80] sm:$0xff]
    %v939 = vld [vmem:[#allocation15 + $0xf88] sm:$0xff]
    %v940 = vld [vmem:[#allocation15 + $0xf90] sm:$0xff]
    %v941 = vld [vmem:[#allocation15 + $0xf98] sm:$0xf]
    %v942 = vld [vmem:[#allocation15 + $0xf9c] sm:$0xff]
    %v943 = vld [vmem:[#allocation15 + $0xfa4] sm:$0xff]
    %v944 = vld [vmem:[#allocation15 + $0xfac] sm:$0xff]
    %v945 = vld [vmem:[#allocation15 + $0xfb4] sm:$0xff]
    %v946 = vld [vmem:[#allocation15 + $0xfbc] sm:$0xf]
    %v947 = vld [vmem:[#allocation15 + $0xfc0] sm:$0xff]
    %v948 = vld [vmem:[#allocation15 + $0xfc8] sm:$0xff]
    %v949 = vld [vmem:[#allocation15 + $0xfd0] sm:$0xff]
    %v950 = vld [vmem:[#allocation15 + $0xfd8] sm:$0xff]
    %v951 = vld [vmem:[#allocation15 + $0xfe0] sm:$0xf]
    %v952 = vld [vmem:[#allocation15 + $0xfe4] sm:$0xff]
    %v953 = vld [vmem:[#allocation15 + $0xfec] sm:$0xff]
    %v954 = vld [vmem:[#allocation15 + $0xff4] sm:$0xff]
    %v955 = vld [vmem:[#allocation15 + $0xffc] sm:$0xff]
    %v956 = vld [vmem:[#allocation15 + $0x1004] sm:$0xf]
    %v957 = vld [vmem:[#allocation15 + $0x1008] sm:$0xff]
    %v958 = vld [vmem:[#allocation15 + $0x1010] sm:$0xff]
    %v959 = vld [vmem:[#allocation15 + $0x1018] sm:$0xff]
    %v960 = vld [vmem:[#allocation15 + $0x1020] sm:$0xff]
    %v961 = vld [vmem:[#allocation15 + $0x1028] sm:$0xf]
    %v962 = vld [vmem:[#allocation15 + $0x102c] sm:$0xff]
    %v963 = vld [vmem:[#allocation15 + $0x1034] sm:$0xff]
    %v964 = vld [vmem:[#allocation15 + $0x103c] sm:$0xff]
    %v965 = vld [vmem:[#allocation15 + $0x1044] sm:$0xff]
    %v966 = vld [vmem:[#allocation15 + $0x104c] sm:$0xf]
    %v967 = vld [vmem:[#allocation15 + $0x1050] sm:$0xff]
    %v968 = vld [vmem:[#allocation15 + $0x1058] sm:$0xff]
    %v969 = vld [vmem:[#allocation15 + $0x1060] sm:$0xff]
    %v970 = vld [vmem:[#allocation15 + $0x1068] sm:$0xff]
    %v971 = vld [vmem:[#allocation15 + $0x1070] sm:$0xf]
    %v972 = vld [vmem:[#allocation15 + $0x1074] sm:$0xff]
    %v973 = vld [vmem:[#allocation15 + $0x107c] sm:$0xff]
    %v974 = vld [vmem:[#allocation15 + $0x1084] sm:$0xff]
    %v975 = vld [vmem:[#allocation15 + $0x108c] sm:$0xff]
    %v976 = vld [vmem:[#allocation15 + $0x1094] sm:$0xf]
    %v977 = vld [vmem:[#allocation15 + $0x1098] sm:$0xff]
    %v978 = vld [vmem:[#allocation15 + $0x10a0] sm:$0xff]
    %v979 = vld [vmem:[#allocation15 + $0x10a8] sm:$0xff]
    %v980 = vld [vmem:[#allocation15 + $0x10b0] sm:$0xff]
    %v981 = vld [vmem:[#allocation15 + $0x10b8] sm:$0xf]
    %v982 = vld [vmem:[#allocation15 + $0x10bc] sm:$0xff]
    %v983 = vld [vmem:[#allocation15 + $0x10c4] sm:$0xff]
    %v984 = vld [vmem:[#allocation15 + $0x10cc] sm:$0xff]
    %v985 = vld [vmem:[#allocation15 + $0x10d4] sm:$0xff]
    %v986 = vld [vmem:[#allocation15 + $0x10dc] sm:$0xf]
    %v987 = vld [vmem:[#allocation15 + $0x10e0] sm:$0xff]
    %v988 = vld [vmem:[#allocation15 + $0x10e8] sm:$0xff]
    %v989 = vld [vmem:[#allocation15 + $0x10f0] sm:$0xff]
    %v990 = vld [vmem:[#allocation15 + $0x10f8] sm:$0xff]
    %v991 = vld [vmem:[#allocation15 + $0x1100] sm:$0xf]
    %v992 = vld [vmem:[#allocation15 + $0x1104] sm:$0xff]
    %v993 = vld [vmem:[#allocation15 + $0x110c] sm:$0xff]
    %v994 = vld [vmem:[#allocation15 + $0x1114] sm:$0xff]
    %v995 = vld [vmem:[#allocation15 + $0x111c] sm:$0xff]
    %v996 = vld [vmem:[#allocation15 + $0x1124] sm:$0xf]
    %v997 = vld [vmem:[#allocation15 + $0x1128] sm:$0xff]
    %v998 = vld [vmem:[#allocation15 + $0x1130] sm:$0xff]
    %v999 = vld [vmem:[#allocation15 + $0x1138] sm:$0xff]
    %v1000 = vld [vmem:[#allocation15 + $0x1140] sm:$0xff]
    %v1001 = vld [vmem:[#allocation15 + $0x1148] sm:$0xf]
    %v1002 = vld [vmem:[#allocation15 + $0x114c] sm:$0xff]
    %v1003 = vld [vmem:[#allocation15 + $0x1154] sm:$0xff]
    %v1004 = vld [vmem:[#allocation15 + $0x115c] sm:$0xff]
    %v1005 = vld [vmem:[#allocation15 + $0x1164] sm:$0xff]
    %v1006 = vld [vmem:[#allocation15 + $0x116c] sm:$0xf]
    %v1007 = vld [vmem:[#allocation15 + $0x1170] sm:$0xff]
    %v1008 = vld [vmem:[#allocation15 + $0x1178] sm:$0xff]
    %v1009 = vld [vmem:[#allocation15 + $0x1180] sm:$0xff]
    %v1010 = vld [vmem:[#allocation15 + $0x1188] sm:$0xff]
    %v1011 = vld [vmem:[#allocation15 + $0x1190] sm:$0xf]
    %v1012 = vld [vmem:[#allocation15 + $0x1194] sm:$0xff]
    %v1013 = vld [vmem:[#allocation15 + $0x119c] sm:$0xff]
    %v1014 = vld [vmem:[#allocation15 + $0x11a4] sm:$0xff]
    %v1015 = vld [vmem:[#allocation15 + $0x11ac] sm:$0xff]
    %v1016 = vld [vmem:[#allocation15 + $0x11b4] sm:$0xf]
    %v1017 = vld [vmem:[#allocation15 + $0x11b8] sm:$0xff]
    %v1018 = vld [vmem:[#allocation15 + $0x11c0] sm:$0xff]
    %v1019 = vld [vmem:[#allocation15 + $0x11c8] sm:$0xff]
    %v1020 = vld [vmem:[#allocation15 + $0x11d0] sm:$0xff]
    %v1021 = vld [vmem:[#allocation15 + $0x11d8] sm:$0xf]
    %v1022 = vld [vmem:[#allocation15 + $0x11dc] sm:$0xff]
    %v1023 = vld [vmem:[#allocation15 + $0x11e4] sm:$0xff]
    %v1024 = vld [vmem:[#allocation15 + $0x11ec] sm:$0xff]
    %v1025 = vld [vmem:[#allocation15 + $0x11f4] sm:$0xff]
    %v1026 = vld [vmem:[#allocation15 + $0x11fc] sm:$0xf]
    %v1027 = vld [vmem:[#allocation15 + $0x1200] sm:$0x11]
    %v1028 = vld [vmem:[#allocation15 + $0x1208] sm:$0x11]
    %v1029 = vld [vmem:[#allocation15 + $0x1210] sm:$0x11]
    %v1030 = vld [vmem:[#allocation15 + $0x1218] sm:$0x11]
    %v1031 = vld [vmem:[#allocation15 + $0x1220] sm:$0x1]
    %v1032 = vld [vmem:[%s21] sm:$0xff]
    %v1033 = vld [vmem:[%s21 + $0x8] sm:$0xff]
    %v1034 = vld [vmem:[%s21 + $0x10] sm:$0xff]
    %v1035 = vld [vmem:[%s21 + $0x18] sm:$0xff]
    %v1036 = vld [vmem:[%s21 + $0x20] sm:$0xf]
    %v1037 = vld [vmem:[%s21 + $0x24] sm:$0xff]
    %v1038 = vld [vmem:[%s21 + $0x2c] sm:$0xff]
    %v1039 = vld [vmem:[%s21 + $0x34] sm:$0xff]
    %v1040 = vld [vmem:[%s21 + $0x3c] sm:$0xff]
    %v1041 = vld [vmem:[%s21 + $0x44] sm:$0xf]
    %v1042 = vld [vmem:[%s21 + $0x48] sm:$0xff]
    %v1043 = vld [vmem:[%s21 + $0x50] sm:$0xff]
    %v1044 = vld [vmem:[%s21 + $0x58] sm:$0xff]
    %v1045 = vld [vmem:[%s21 + $0x60] sm:$0xff]
    %v1046 = vld [vmem:[%s21 + $0x68] sm:$0xf]
    %v1047 = vld [vmem:[%s21 + $0x6c] sm:$0xff]
    %v1048 = vld [vmem:[%s21 + $0x74] sm:$0xff]
    %v1049 = vld [vmem:[%s21 + $0x7c] sm:$0xff]
    %v1050 = vld [vmem:[%s21 + $0x84] sm:$0xff]
    %v1051 = vld [vmem:[%s21 + $0x8c] sm:$0xf]
    %v1052 = vld [vmem:[%s21 + $0x90] sm:$0xff]
    %v1053 = vld [vmem:[%s21 + $0x98] sm:$0xff]
    %v1054 = vld [vmem:[%s21 + $0xa0] sm:$0xff]
    %v1055 = vld [vmem:[%s21 + $0xa8] sm:$0xff]
    %v1056 = vld [vmem:[%s21 + $0xb0] sm:$0xf]
    %v1057 = vld [vmem:[%s21 + $0xb4] sm:$0xff]
    %v1058 = vld [vmem:[%s21 + $0xbc] sm:$0xff]
    %v1059 = vld [vmem:[%s21 + $0xc4] sm:$0xff]
    %v1060 = vld [vmem:[%s21 + $0xcc] sm:$0xff]
    %v1061 = vld [vmem:[%s21 + $0xd4] sm:$0xf]
    %v1062 = vld [vmem:[%s21 + $0xd8] sm:$0xff]
    %v1063 = vld [vmem:[%s21 + $0xe0] sm:$0xff]
    %v1064 = vld [vmem:[%s21 + $0xe8] sm:$0xff]
    %v1065 = vld [vmem:[%s21 + $0xf0] sm:$0xff]
    %v1066 = vld [vmem:[%s21 + $0xf8] sm:$0xf]
    %v1067 = vld [vmem:[%s21 + $0xfc] sm:$0xff]
    %v1068 = vld [vmem:[%s21 + $0x104] sm:$0xff]
    %v1069 = vld [vmem:[%s21 + $0x10c] sm:$0xff]
    %v1070 = vld [vmem:[%s21 + $0x114] sm:$0xff]
    %v1071 = vld [vmem:[%s21 + $0x11c] sm:$0xf]
    %v1072 = vld [vmem:[%s21 + $0x120] sm:$0xff]
    %v1073 = vld [vmem:[%s21 + $0x128] sm:$0xff]
    %v1074 = vld [vmem:[%s21 + $0x130] sm:$0xff]
    %v1075 = vld [vmem:[%s21 + $0x138] sm:$0xff]
    %v1076 = vld [vmem:[%s21 + $0x140] sm:$0xf]
    %v1077 = vld [vmem:[%s21 + $0x144] sm:$0xff]
    %v1078 = vld [vmem:[%s21 + $0x14c] sm:$0xff]
    %v1079 = vld [vmem:[%s21 + $0x154] sm:$0xff]
    %v1080 = vld [vmem:[%s21 + $0x15c] sm:$0xff]
    %v1081 = vld [vmem:[%s21 + $0x164] sm:$0xf]
    %v1082 = vld [vmem:[%s21 + $0x168] sm:$0xff]
    %v1083 = vld [vmem:[%s21 + $0x170] sm:$0xff]
    %v1084 = vld [vmem:[%s21 + $0x178] sm:$0xff]
    %v1085 = vld [vmem:[%s21 + $0x180] sm:$0xff]
    %v1086 = vld [vmem:[%s21 + $0x188] sm:$0xf]
    %v1087 = vld [vmem:[%s21 + $0x18c] sm:$0xff]
    %v1088 = vld [vmem:[%s21 + $0x194] sm:$0xff]
    %v1089 = vld [vmem:[%s21 + $0x19c] sm:$0xff]
    %v1090 = vld [vmem:[%s21 + $0x1a4] sm:$0xff]
    %v1091 = vld [vmem:[%s21 + $0x1ac] sm:$0xf]
    %v1092 = vld [vmem:[%s21 + $0x1b0] sm:$0xff]
    %v1093 = vld [vmem:[%s21 + $0x1b8] sm:$0xff]
    %v1094 = vld [vmem:[%s21 + $0x1c0] sm:$0xff]
    %v1095 = vld [vmem:[%s21 + $0x1c8] sm:$0xff]
    %v1096 = vld [vmem:[%s21 + $0x1d0] sm:$0xf]
    %v1097 = vld [vmem:[%s21 + $0x1d4] sm:$0xff]
    %v1098 = vld [vmem:[%s21 + $0x1dc] sm:$0xff]
    %v1099 = vld [vmem:[%s21 + $0x1e4] sm:$0xff]
    %v1100 = vld [vmem:[%s21 + $0x1ec] sm:$0xff]
    %v1101 = vld [vmem:[%s21 + $0x1f4] sm:$0xf]
    %v1102 = vld [vmem:[%s21 + $0x1f8] sm:$0xff]
    %v1103 = vld [vmem:[%s21 + $0x200] sm:$0xff]
    %v1104 = vld [vmem:[%s21 + $0x208] sm:$0xff]
    %v1105 = vld [vmem:[%s21 + $0x210] sm:$0xff]
    %v1106 = vld [vmem:[%s21 + $0x218] sm:$0xf]
    %v1107 = vld [vmem:[%s21 + $0x21c] sm:$0xff]
    %v1108 = vld [vmem:[%s21 + $0x224] sm:$0xff]
    %v1109 = vld [vmem:[%s21 + $0x22c] sm:$0xff]
    %v1110 = vld [vmem:[%s21 + $0x234] sm:$0xff]
    %v1111 = vld [vmem:[%s21 + $0x23c] sm:$0xf]
    %v1112 = vld [vmem:[%s21 + $0x240] sm:$0xff]
    %v1113 = vld [vmem:[%s21 + $0x248] sm:$0xff]
    %v1114 = vld [vmem:[%s21 + $0x250] sm:$0xff]
    %v1115 = vld [vmem:[%s21 + $0x258] sm:$0xff]
    %v1116 = vld [vmem:[%s21 + $0x260] sm:$0xf]
    %v1117 = vld [vmem:[%s21 + $0x264] sm:$0xff]
    %v1118 = vld [vmem:[%s21 + $0x26c] sm:$0xff]
    %v1119 = vld [vmem:[%s21 + $0x274] sm:$0xff]
    %v1120 = vld [vmem:[%s21 + $0x27c] sm:$0xff]
    %v1121 = vld [vmem:[%s21 + $0x284] sm:$0xf]
    %v1122 = vld [vmem:[%s21 + $0x288] sm:$0xff]
    %v1123 = vld [vmem:[%s21 + $0x290] sm:$0xff]
    %v1124 = vld [vmem:[%s21 + $0x298] sm:$0xff]
    %v1125 = vld [vmem:[%s21 + $0x2a0] sm:$0xff]
    %v1126 = vld [vmem:[%s21 + $0x2a8] sm:$0xf]
    %v1127 = vld [vmem:[%s21 + $0x2ac] sm:$0xff]
    %v1128 = vld [vmem:[%s21 + $0x2b4] sm:$0xff]
    %v1129 = vld [vmem:[%s21 + $0x2bc] sm:$0xff]
    %v1130 = vld [vmem:[%s21 + $0x2c4] sm:$0xff]
    %v1131 = vld [vmem:[%s21 + $0x2cc] sm:$0xf]
    %v1132 = vld [vmem:[%s21 + $0x2d0] sm:$0xff]
    %v1133 = vld [vmem:[%s21 + $0x2d8] sm:$0xff]
    %v1134 = vld [vmem:[%s21 + $0x2e0] sm:$0xff]
    %v1135 = vld [vmem:[%s21 + $0x2e8] sm:$0xff]
    %v1136 = vld [vmem:[%s21 + $0x2f0] sm:$0xf]
    %v1137 = vld [vmem:[%s21 + $0x2f4] sm:$0xff]
    %v1138 = vld [vmem:[%s21 + $0x2fc] sm:$0xff]
    %v1139 = vld [vmem:[%s21 + $0x304] sm:$0xff]
    %v1140 = vld [vmem:[%s21 + $0x30c] sm:$0xff]
    %v1141 = vld [vmem:[%s21 + $0x314] sm:$0xf]
    %v1142 = vld [vmem:[%s21 + $0x318] sm:$0xff]
    %v1143 = vld [vmem:[%s21 + $0x320] sm:$0xff]
    %v1144 = vld [vmem:[%s21 + $0x328] sm:$0xff]
    %v1145 = vld [vmem:[%s21 + $0x330] sm:$0xff]
    %v1146 = vld [vmem:[%s21 + $0x338] sm:$0xf]
    %v1147 = vld [vmem:[%s21 + $0x33c] sm:$0xff]
    %v1148 = vld [vmem:[%s21 + $0x344] sm:$0xff]
    %v1149 = vld [vmem:[%s21 + $0x34c] sm:$0xff]
    %v1150 = vld [vmem:[%s21 + $0x354] sm:$0xff]
    %v1151 = vld [vmem:[%s21 + $0x35c] sm:$0xf]
    %v1152 = vld [vmem:[%s21 + $0x360] sm:$0xff]
    %v1153 = vld [vmem:[%s21 + $0x368] sm:$0xff]
    %v1154 = vld [vmem:[%s21 + $0x370] sm:$0xff]
    %v1155 = vld [vmem:[%s21 + $0x378] sm:$0xff]
    %v1156 = vld [vmem:[%s21 + $0x380] sm:$0xf]
    %v1157 = vld [vmem:[%s21 + $0x384] sm:$0xff]
    %v1158 = vld [vmem:[%s21 + $0x38c] sm:$0xff]
    %v1159 = vld [vmem:[%s21 + $0x394] sm:$0xff]
    %v1160 = vld [vmem:[%s21 + $0x39c] sm:$0xff]
    %v1161 = vld [vmem:[%s21 + $0x3a4] sm:$0xf]
    %v1162 = vld [vmem:[%s21 + $0x3a8] sm:$0xff]
    %v1163 = vld [vmem:[%s21 + $0x3b0] sm:$0xff]
    %v1164 = vld [vmem:[%s21 + $0x3b8] sm:$0xff]
    %v1165 = vld [vmem:[%s21 + $0x3c0] sm:$0xff]
    %v1166 = vld [vmem:[%s21 + $0x3c8] sm:$0xf]
    %v1167 = vld [vmem:[%s21 + $0x3cc] sm:$0xff]
    %v1168 = vld [vmem:[%s21 + $0x3d4] sm:$0xff]
    %v1169 = vld [vmem:[%s21 + $0x3dc] sm:$0xff]
    %v1170 = vld [vmem:[%s21 + $0x3e4] sm:$0xff]
    %v1171 = vld [vmem:[%s21 + $0x3ec] sm:$0xf]
    %v1172 = vld [vmem:[%s21 + $0x3f0] sm:$0xff]
    %v1173 = vld [vmem:[%s21 + $0x3f8] sm:$0xff]
    %v1174 = vld [vmem:[%s21 + $0x400] sm:$0xff]
    %v1175 = vld [vmem:[%s21 + $0x408] sm:$0xff]
    %v1176 = vld [vmem:[%s21 + $0x410] sm:$0xf]
    %v1177 = vld [vmem:[%s21 + $0x414] sm:$0xff]
    %v1178 = vld [vmem:[%s21 + $0x41c] sm:$0xff]
    %v1179 = vld [vmem:[%s21 + $0x424] sm:$0xff]
    %v1180 = vld [vmem:[%s21 + $0x42c] sm:$0xff]
    %v1181 = vld [vmem:[%s21 + $0x434] sm:$0xf]
    %v1182 = vld [vmem:[%s21 + $0x438] sm:$0xff]
    %v1183 = vld [vmem:[%s21 + $0x440] sm:$0xff]
    %v1184 = vld [vmem:[%s21 + $0x448] sm:$0xff]
    %v1185 = vld [vmem:[%s21 + $0x450] sm:$0xff]
    %v1186 = vld [vmem:[%s21 + $0x458] sm:$0xf]
    %v1187 = vld [vmem:[%s21 + $0x45c] sm:$0xff]
    %v1188 = vld [vmem:[%s21 + $0x464] sm:$0xff]
    %v1189 = vld [vmem:[%s21 + $0x46c] sm:$0xff]
    %v1190 = vld [vmem:[%s21 + $0x474] sm:$0xff]
    %v1191 = vld [vmem:[%s21 + $0x47c] sm:$0xf]
    %v1192 = vld [vmem:[%s0] sm:$0xff]
    %v1193 = vld [vmem:[%s0 + $0x8] sm:$0xff]
    %v1194 = vld [vmem:[%s0 + $0x10] sm:$0xff]
    %v1195 = vld [vmem:[%s0 + $0x18] sm:$0x3]
    %v1196 = vpack.c.bf16 %v1193, %v1192
    %v1197 = vpack.c.bf16 %v1195, %v1194
    %1199 = vset.pattern.permute.xlu0 0
    %1200 = vperm.xlu0 %1199, %v198
    %v1201 = vpop.permute.xlu0 %1200
    %1204 = vset.pattern.permute.xlu0 0
    %1205 = vperm.xlu0 %1204, %v199
    %v1206 = vpop.permute.xlu0 %1205
    %1209 = vset.pattern.permute.xlu0 0
    %1210 = vperm.xlu0 %1209, %v200
    %v1211 = vpop.permute.xlu0 %1210
    %1214 = vset.pattern.permute.xlu0 0
    %1215 = vperm.xlu0 %1214, %v201
    %v1216 = vpop.permute.xlu0 %1215
    %v1222 = vunpack.c.l.b16 %v194
    %v1223 = vunpack.c.l.b16 %v195
    %v1224 = vunpack.c.l.b16 %v196
    %v1225 = vunpack.c.l.b16 %v197
    %v1226 = vpack.c.b16 %v1223, %v1222
    %v1227 = vpack.c.b16 %v1225, %v1224
    %vm1228 = vcmask 211968
    %v1230 = vsel %vm1228, %v1226, 0
    %v1233 = vsel %vm1228, %v1227, 0
    %vm1235 = vcmask 1044480
    %v1237 = vsel %vm1235, %v1197, 0
    %1239 = vmatprep.subr.bf16.mxu0 0
    %1240 = vmatpush1.bf16.msra.mxu0 %v1196
    %1241 = vmatprep.subr.bf16.mxu0 0
    %1242 = vmatpush1.bf16.msra.mxu0 %v1237
    %1243 = vmatprep.subr.bf16.mxu0 0
    %1244 = vmatpush1.bf16.msra.mxu0 0
    %1245 = vmatprep.subr.bf16.mxu0 0
    %1246 = vmatpush1.bf16.msra.mxu0 0
    %1247 = vmatprep.subr.bf16.mxu0 0
    %1248 = vmatpush1.bf16.msra.mxu0 0
    %1249 = vmatprep.subr.bf16.mxu0 0
    %1250 = vmatpush1.bf16.msra.mxu0 0
    %1251 = vmatprep.subr.bf16.mxu0 0
    %1252 = vmatpush1.bf16.msra.mxu0 0
    %1253 = vmatprep.subr.bf16.mxu0 0
    %1254 = vmatpush1.bf16.msra.mxu0 0
    %1255 = vmatprep.subr.bf16.mxu0 0
    %1256 = vmatpush1.bf16.msra.mxu0 0
    %1257 = vmatprep.subr.bf16.mxu0 0
    %1258 = vmatpush1.bf16.msra.mxu0 0
    %1259 = vmatprep.subr.bf16.mxu0 0
    %1260 = vmatpush1.bf16.msra.mxu0 0
    %1261 = vmatprep.subr.bf16.mxu0 0
    %1262 = vmatpush1.bf16.msra.mxu0 0
    %1263 = vmatprep.subr.bf16.mxu0 0
    %1264 = vmatpush1.bf16.msra.mxu0 0
    %1265 = vmatprep.subr.bf16.mxu0 0
    %1266 = vmatpush1.bf16.msra.mxu0 0
    %1267 = vmatprep.subr.bf16.mxu0 0
    %1268 = vmatpush1.bf16.msra.mxu0 0
    %1269 = vmatprep.subr.bf16.mxu0 0
    %1270 = vmatpush1.bf16.msra.mxu0 0
    %1271 = vmatprep.mubr.bf16.mxu0 0
    %1272 = vmatmul.mubr.bf16.gmra.mrb[0].mxu0 %v1230
    %v1273 = vpop.f32.mrb[0].mxu0
    %v1274 = vadd.f32 %v1201, %v1273
    %v1275 = vpop.f32.mrb[0].mxu0
    %v1276 = vpop.f32.mrb[0].mxu0
    %v1277 = vadd.f32 %v1206, %v1276
    %v1278 = vpop.f32.mrb[0].mxu0
    %1279 = vmatprep.mubr.bf16.mxu0 0
    %1280 = vmatmul.mubr.bf16.gmra.mrb[0].mxu0 %v1233
    %v1281 = vpop.f32.mrb[0].mxu0
    %v1282 = vadd.f32 %v1211, %v1281
    %v1283 = vpop.f32.mrb[0].mxu0
    %v1284 = vpop.f32.mrb[0].mxu0
    %v1285 = vadd.f32 %v1216, %v1284
    %v1286 = vpop.f32.mrb[0].mxu0
    %1287 = vdwg.mxu0
    %v1288 = vmul.f32 %v1274, 0.2
    %v1289 = vmul.f32 %v1277, 0.2
    %v1290 = vmul.f32 %v1282, 0.2
    %v1291 = vmul.f32 %v1285, 0.2
    %v1292 = vmax.f32 %v1274, %v1288
    %v1293 = vmax.f32 %v1277, %v1289
    %v1294 = vmax.f32 %v1282, %v1290
    %v1295 = vmax.f32 %v1285, %v1291
    %v1296 = vpack.c.bf16 %v1293, %v1292
    %v1297 = vpack.c.bf16 %v1295, %v1294
    %1299 = vset.pattern.permute.xlu0 0
    %1300 = vperm.xlu0 %1299, %v206
    %v1301 = vpop.permute.xlu0 %1300
    %1304 = vset.pattern.permute.xlu0 0
    %1305 = vperm.xlu0 %1304, %v207
    %v1306 = vpop.permute.xlu0 %1305
    %1309 = vset.pattern.permute.xlu0 0
    %1310 = vperm.xlu0 %1309, %v208
    %v1311 = vpop.permute.xlu0 %1310
    %1314 = vset.pattern.permute.xlu0 0
    %1315 = vperm.xlu0 %1314, %v209
    %v1316 = vpop.permute.xlu0 %1315
    %v1322 = vunpack.c.l.b16 %v202
    %v1323 = vunpack.c.l.b16 %v203
    %v1324 = vunpack.c.l.b16 %v204
    %v1325 = vunpack.c.l.b16 %v205
    %v1326 = vpack.c.b16 %v1323, %v1322
    %v1327 = vpack.c.b16 %v1325, %v1324
    %vm1328 = vcmask 261120
    %v1330 = vsel %vm1328, %v1326, 0
    %v1333 = vsel %vm1328, %v1327, 0
    %1335 = vmatprep.subr.bf16.mxu0 0
    %1336 = vmatpush1.bf16.msra.mxu0 %v1296
    %1337 = vmatprep.subr.bf16.mxu0 0
    %1338 = vmatpush1.bf16.msra.mxu0 %v1297
    %1339 = vmatprep.subr.bf16.mxu0 0
    %1340 = vmatpush1.bf16.msra.mxu0 0
    %1341 = vmatprep.subr.bf16.mxu0 0
    %1342 = vmatpush1.bf16.msra.mxu0 0
    %1343 = vmatprep.subr.bf16.mxu0 0
    %1344 = vmatpush1.bf16.msra.mxu0 0
    %1345 = vmatprep.subr.bf16.mxu0 0
    %1346 = vmatpush1.bf16.msra.mxu0 0
    %1347 = vmatprep.subr.bf16.mxu0 0
    %1348 = vmatpush1.bf16.msra.mxu0 0
    %1349 = vmatprep.subr.bf16.mxu0 0
    %1350 = vmatpush1.bf16.msra.mxu0 0
    %1351 = vmatprep.subr.bf16.mxu0 0
    %1352 = vmatpush1.bf16.msra.mxu0 0
    %1353 = vmatprep.subr.bf16.mxu0 0
    %1354 = vmatpush1.bf16.msra.mxu0 0
    %1355 = vmatprep.subr.bf16.mxu0 0
    %1356 = vmatpush1.bf16.msra.mxu0 0
    %1357 = vmatprep.subr.bf16.mxu0 0
    %1358 = vmatpush1.bf16.msra.mxu0 0
    %1359 = vmatprep.subr.bf16.mxu0 0
    %1360 = vmatpush1.bf16.msra.mxu0 0
    %1361 = vmatprep.subr.bf16.mxu0 0
    %1362 = vmatpush1.bf16.msra.mxu0 0
    %1363 = vmatprep.subr.bf16.mxu0 0
    %1364 = vmatpush1.bf16.msra.mxu0 0
    %1365 = vmatprep.subr.bf16.mxu0 0
    %1366 = vmatpush1.bf16.msra.mxu0 0
    %1367 = vmatprep.mubr.bf16.mxu0 0
    %1368 = vmatmul.mubr.bf16.gmra.mrb[0].mxu0 %v1330
    %v1369 = vpop.f32.mrb[0].mxu0
    %v1370 = vadd.f32 %v1301, %v1369
    %v1371 = vpop.f32.mrb[0].mxu0
    %v1372 = vpop.f32.mrb[0].mxu0
    %v1373 = vadd.f32 %v1306, %v1372
    %v1374 = vpop.f32.mrb[0].mxu0
    %1375 = vmatprep.mubr.bf16.mxu0 0
    %1376 = vmatmul.mubr.bf16.gmra.mrb[0].mxu0 %v1333
    %v1377 = vpop.f32.mrb[0].mxu0
    %v1378 = vadd.f32 %v1311, %v1377
    %v1379 = vpop.f32.mrb[0].mxu0
    %v1380 = vpop.f32.mrb[0].mxu0
    %v1381 = vadd.f32 %v1316, %v1380
    %v1382 = vpop.f32.mrb[0].mxu0
    %1383 = vdwg.mxu0
    %v1384 = vmul.f32 %v1370, 0.2
    %v1385 = vmul.f32 %v1373, 0.2
    %v1386 = vmul.f32 %v1378, 0.2
    %v1387 = vmul.f32 %v1381, 0.2
    %v1388 = vmax.f32 %v1370, %v1384
    %v1389 = vmax.f32 %v1373, %v1385
    %v1390 = vmax.f32 %v1378, %v1386
    %v1391 = vmax.f32 %v1381, %v1387
    %v1392 = vpack.c.bf16 %v1389, %v1388
    %v1393 = vpack.c.bf16 %v1391, %v1390
    %1395 = vset.pattern.permute.xlu0 0
    %1396 = vperm.xlu0 %1395, %v214
    %v1397 = vpop.permute.xlu0 %1396
    %1400 = vset.pattern.permute.xlu0 0
    %1401 = vperm.xlu0 %1400, %v215
    %v1402 = vpop.permute.xlu0 %1401
    %1405 = vset.pattern.permute.xlu0 0
    %1406 = vperm.xlu0 %1405, %v216
    %v1407 = vpop.permute.xlu0 %1406
    %1410 = vset.pattern.permute.xlu0 0
    %1411 = vperm.xlu0 %1410, %v217
    %v1412 = vpop.permute.xlu0 %1411
    %v1418 = vunpack.c.l.b16 %v210
    %v1419 = vunpack.c.l.b16 %v211
    %v1420 = vunpack.c.l.b16 %v212
    %v1421 = vunpack.c.l.b16 %v213
    %v1422 = vpack.c.b16 %v1419, %v1418
    %v1423 = vpack.c.b16 %v1421, %v1420
    %v1425 = vsel %vm1328, %v1422, 0
    %v1428 = vsel %vm1328, %v1423, 0
    %1430 = vmatprep.subr.bf16.mxu0 0
    %1431 = vmatpush1.bf16.msra.mxu0 %v1392
    %1432 = vmatprep.subr.bf16.mxu0 0
    %1433 = vmatpush1.bf16.msra.mxu0 %v1393
    %1434 = vmatprep.subr.bf16.mxu0 0
    %1435 = vmatpush1.bf16.msra.mxu0 0
    %1436 = vmatprep.subr.bf16.mxu0 0
    %1437 = vmatpush1.bf16.msra.mxu0 0
    %1438 = vmatprep.subr.bf16.mxu0 0
    %1439 = vmatpush1.bf16.msra.mxu0 0
    %1440 = vmatprep.subr.bf16.mxu0 0
    %1441 = vmatpush1.bf16.msra.mxu0 0
    %1442 = vmatprep.subr.bf16.mxu0 0
    %1443 = vmatpush1.bf16.msra.mxu0 0
    %1444 = vmatprep.subr.bf16.mxu0 0
    %1445 = vmatpush1.bf16.msra.mxu0 0
    %1446 = vmatprep.subr.bf16.mxu0 0
    %1447 = vmatpush1.bf16.msra.mxu0 0
    %1448 = vmatprep.subr.bf16.mxu0 0
    %1449 = vmatpush1.bf16.msra.mxu0 0
    %1450 = vmatprep.subr.bf16.mxu0 0
    %1451 = vmatpush1.bf16.msra.mxu0 0
    %1452 = vmatprep.subr.bf16.mxu0 0
    %1453 = vmatpush1.bf16.msra.mxu0 0
    %1454 = vmatprep.subr.bf16.mxu0 0
    %1455 = vmatpush1.bf16.msra.mxu0 0
    %1456 = vmatprep.subr.bf16.mxu0 0
    %1457 = vmatpush1.bf16.msra.mxu0 0
    %1458 = vmatprep.subr.bf16.mxu0 0
    %1459 = vmatpush1.bf16.msra.mxu0 0
    %1460 = vmatprep.subr.bf16.mxu0 0
    %1461 = vmatpush1.bf16.msra.mxu0 0
    %1462 = vmatprep.mubr.bf16.mxu0 0
    %1463 = vmatmul.mubr.bf16.gmra.mrb[0].mxu0 %v1425
    %v1464 = vpop.f32.mrb[0].mxu0
    %v1465 = vadd.f32 %v1397, %v1464
    %v1466 = vpop.f32.mrb[0].mxu0
    %v1467 = vpop.f32.mrb[0].mxu0
    %v1468 = vadd.f32 %v1402, %v1467
    %v1469 = vpop.f32.mrb[0].mxu0
    %1470 = vmatprep.mubr.bf16.mxu0 0
    %1471 = vmatmul.mubr.bf16.gmra.mrb[0].mxu0 %v1428
    %v1472 = vpop.f32.mrb[0].mxu0
    %v1473 = vadd.f32 %v1407, %v1472
    %v1474 = vpop.f32.mrb[0].mxu0
    %v1475 = vpop.f32.mrb[0].mxu0
    %v1476 = vadd.f32 %v1412, %v1475
    %v1477 = vpop.f32.mrb[0].mxu0
    %1478 = vdwg.mxu0
    %v1479 = vadd.f32 %v1292, %v1465
    %v1480 = vadd.f32 %v1293, %v1468
    %v1481 = vadd.f32 %v1294, %v1473
    %v1482 = vadd.f32 %v1295, %v1476
    %v1483 = vmul.f32 %v1479, 0.2
    %v1484 = vmul.f32 %v1480, 0.2
    %v1485 = vmul.f32 %v1481, 0.2
    %v1486 = vmul.f32 %v1482, 0.2
    %v1487 = vmax.f32 %v1479, %v1483
    %v1488 = vmax.f32 %v1480, %v1484
    %v1489 = vmax.f32 %v1481, %v1485
    %v1490 = vmax.f32 %v1482, %v1486
    %v1491 = vpack.c.bf16 %v1488, %v1487
    %v1492 = vpack.c.bf16 %v1490, %v1489
    %1494 = vset.pattern.permute.xlu0 0
    %1495 = vperm.xlu0 %1494, %v222
    %v1496 = vpop.permute.xlu0 %1495
    %1499 = vset.pattern.permute.xlu0 0
    %1500 = vperm.xlu0 %1499, %v223
    %v1501 = vpop.permute.xlu0 %1500
    %1504 = vset.pattern.permute.xlu0 0
    %1505 = vperm.xlu0 %1504, %v224
    %v1506 = vpop.permute.xlu0 %1505
    %1509 = vset.pattern.permute.xlu0 0
    %1510 = vperm.xlu0 %1509, %v225
    %v1511 = vpop.permute.xlu0 %1510
    %v1517 = vunpack.c.l.b16 %v218
    %v1518 = vunpack.c.l.b16 %v219
    %v1519 = vunpack.c.l.b16 %v220
    %v1520 = vunpack.c.l.b16 %v221
    %v1521 = vpack.c.b16 %v1518, %v1517
    %v1522 = vpack.c.b16 %v1520, %v1519
    %v1524 = vsel %vm1328, %v1521, 0
    %v1527 = vsel %vm1328, %v1522, 0
    %1529 = vmatprep.subr.bf16.mxu0 0
    %1530 = vmatpush1.bf16.msra.mxu0 %v1491
    %1531 = vmatprep.subr.bf16.mxu0 0
    %1532 = vmatpush1.bf16.msra.mxu0 %v1492
    %1533 = vmatprep.subr.bf16.mxu0 0
    %1534 = vmatpush1.bf16.msra.mxu0 0
    %1535 = vmatprep.subr.bf16.mxu0 0
    %1536 = vmatpush1.bf16.msra.mxu0 0
    %1537 = vmatprep.subr.bf16.mxu0 0
    %1538 = vmatpush1.bf16.msra.mxu0 0
    %1539 = vmatprep.subr.bf16.mxu0 0
    %1540 = vmatpush1.bf16.msra.mxu0 0
    %1541 = vmatprep.subr.bf16.mxu0 0
    %1542 = vmatpush1.bf16.msra.mxu0 0
    %1543 = vmatprep.subr.bf16.mxu0 0
    %1544 = vmatpush1.bf16.msra.mxu0 0
    %1545 = vmatprep.subr.bf16.mxu0 0
    %1546 = vmatpush1.bf16.msra.mxu0 0
    %1547 = vmatprep.subr.bf16.mxu0 0
    %1548 = vmatpush1.bf16.msra.mxu0 0
    %1549 = vmatprep.subr.bf16.mxu0 0
    %1550 = vmatpush1.bf16.msra.mxu0 0
    %1551 = vmatprep.subr.bf16.mxu0 0
    %1552 = vmatpush1.bf16.msra.mxu0 0
    %1553 = vmatprep.subr.bf16.mxu0 0
    %1554 = vmatpush1.bf16.msra.mxu0 0
    %1555 = vmatprep.subr.bf16.mxu0 0
    %1556 = vmatpush1.bf16.msra.mxu0 0
    %1557 = vmatprep.subr.bf16.mxu0 0
    %1558 = vmatpush1.bf16.msra.mxu0 0
    %1559 = vmatprep.subr.bf16.mxu0 0
    %1560 = vmatpush1.bf16.msra.mxu0 0
    %1561 = vmatprep.mubr.bf16.mxu0 0
    %1562 = vmatmul.mubr.bf16.gmra.mrb[0].mxu0 %v1524
    %v1563 = vpop.f32.mrb[0].mxu0
    %v1564 = vadd.f32 %v1496, %v1563
    %v1565 = vpop.f32.mrb[0].mxu0
    %v1566 = vpop.f32.mrb[0].mxu0
    %v1567 = vadd.f32 %v1501, %v1566
    %v1568 = vpop.f32.mrb[0].mxu0
    %1569 = vmatprep.mubr.bf16.mxu0 0
    %1570 = vmatmul.mubr.bf16.gmra.mrb[0].mxu0 %v1527
    %v1571 = vpop.f32.mrb[0].mxu0
    %v1572 = vadd.f32 %v1506, %v1571
    %v1573 = vpop.f32.mrb[0].mxu0
    %v1574 = vpop.f32.mrb[0].mxu0
    %v1575 = vadd.f32 %v1511, %v1574
    %v1576 = vpop.f32.mrb[0].mxu0
    %1577 = vdwg.mxu0
    %v1578 = vld [vmem:[%s1] sm:$0xff]
    %v1579 = vld [vmem:[%s1 + $0x8] sm:$0xff]
    %v1580 = vld [vmem:[%s1 + $0x10] sm:$0xff]
    %v1581 = vld [vmem:[%s1 + $0x18] sm:$0x3]
    %v1582 = vpack.c.bf16 %v1579, %v1578
    %v1583 = vpack.c.bf16 %v1581, %v1580
    %1585 = vset.pattern.permute.xlu0 0
    %1586 = vperm.xlu0 %1585, %v230
    %v1587 = vpop.permute.xlu0 %1586
    %1590 = vset.pattern.permute.xlu0 0
    %1591 = vperm.xlu0 %1590, %v231
    %v1592 = vpop.permute.xlu0 %1591
    %1595 = vset.pattern.permute.xlu0 0
    %1596 = vperm.xlu0 %1595, %v232
    %v1597 = vpop.permute.xlu0 %1596
    %1600 = vset.pattern.permute.xlu0 0
    %1601 = vperm.xlu0 %1600, %v233
    %v1602 = vpop.permute.xlu0 %1601
    %v1608 = vunpack.c.l.b16 %v226
    %v1609 = vunpack.c.l.b16 %v227
    %v1610 = vunpack.c.l.b16 %v228
    %v1611 = vunpack.c.l.b16 %v229
    %v1612 = vpack.c.b16 %v1609, %v1608
    %v1613 = vpack.c.b16 %v1611, %v1610
    %v1615 = vsel %vm1228, %v1612, 0
    %v1618 = vsel %vm1228, %v1613, 0
    %v1621 = vsel %vm1235, %v1583, 0
    %1623 = vmatprep.subr.bf16.mxu0 0
    %1624 = vmatpush1.bf16.msra.mxu0 %v1582
    %1625 = vmatprep.subr.bf16.mxu0 0
    %1626 = vmatpush1.bf16.msra.mxu0 %v1621
    %1627 = vmatprep.subr.bf16.mxu0 0
    %1628 = vmatpush1.bf16.msra.mxu0 0
    %1629 = vmatprep.subr.bf16.mxu0 0
    %1630 = vmatpush1.bf16.msra.mxu0 0
    %1631 = vmatprep.subr.bf16.mxu0 0
    %1632 = vmatpush1.bf16.msra.mxu0 0
    %1633 = vmatprep.subr.bf16.mxu0 0
    %1634 = vmatpush1.bf16.msra.mxu0 0
    %1635 = vmatprep.subr.bf16.mxu0 0
    %1636 = vmatpush1.bf16.msra.mxu0 0
    %1637 = vmatprep.subr.bf16.mxu0 0
    %1638 = vmatpush1.bf16.msra.mxu0 0
    %1639 = vmatprep.subr.bf16.mxu0 0
    %1640 = vmatpush1.bf16.msra.mxu0 0
    %1641 = vmatprep.subr.bf16.mxu0 0
    %1642 = vmatpush1.bf16.msra.mxu0 0
    %1643 = vmatprep.subr.bf16.mxu0 0
    %1644 = vmatpush1.bf16.msra.mxu0 0
    %1645 = vmatprep.subr.bf16.mxu0 0
    %1646 = vmatpush1.bf16.msra.mxu0 0
    %1647 = vmatprep.subr.bf16.mxu0 0
    %1648 = vmatpush1.bf16.msra.mxu0 0
    %1649 = vmatprep.subr.bf16.mxu0 0
    %1650 = vmatpush1.bf16.msra.mxu0 0
    %1651 = vmatprep.subr.bf16.mxu0 0
    %1652 = vmatpush1.bf16.msra.mxu0 0
    %1653 = vmatprep.subr.bf16.mxu0 0
    %1654 = vmatpush1.bf16.msra.mxu0 0
    %1655 = vmatprep.mubr.bf16.mxu0 0
    %1656 = vmatmul.mubr.bf16.gmra.mrb[0].mxu0 %v1615
    %v1657 = vpop.f32.mrb[0].mxu0
    %v1658 = vadd.f32 %v1587, %v1657
    %v1659 = vpop.f32.mrb[0].mxu0
    %v1660 = vpop.f32.mrb[0].mxu0
    %v1661 = vadd.f32 %v1592, %v1660
    %v1662 = vpop.f32.mrb[0].mxu0
    %1663 = vmatprep.mubr.bf16.mxu0 0
    %1664 = vmatmul.mubr.bf16.gmra.mrb[0].mxu0 %v1618
    %v1665 = vpop.f32.mrb[0].mxu0
    %v1666 = vadd.f32 %v1597, %v1665
    %v1667 = vpop.f32.mrb[0].mxu0
    %v1668 = vpop.f32.mrb[0].mxu0
    %v1669 = vadd.f32 %v1602, %v1668
    %v1670 = vpop.f32.mrb[0].mxu0
    %1671 = vdwg.mxu0
    %v1672 = vmul.f32 %v1658, 0.2
    %v1673 = vmul.f32 %v1661, 0.2
    %v1674 = vmul.f32 %v1666, 0.2
    %v1675 = vmul.f32 %v1669, 0.2
    %v1676 = vmax.f32 %v1658, %v1672
    %v1677 = vmax.f32 %v1661, %v1673
    %v1678 = vmax.f32 %v1666, %v1674
    %v1679 = vmax.f32 %v1669, %v1675
    %v1680 = vpack.c.bf16 %v1677, %v1676
    %v1681 = vpack.c.bf16 %v1679, %v1678
    %1683 = vset.pattern.permute.xlu0 0
    %1684 = vperm.xlu0 %1683, %v238
    %v1685 = vpop.permute.xlu0 %1684
    %1688 = vset.pattern.permute.xlu0 0
    %1689 = vperm.xlu0 %1688, %v239
    %v1690 = vpop.permute.xlu0 %1689
    %1693 = vset.pattern.permute.xlu0 0
    %1694 = vperm.xlu0 %1693, %v240
    %v1695 = vpop.permute.xlu0 %1694
    %1698 = vset.pattern.permute.xlu0 0
    %1699 = vperm.xlu0 %1698, %v241
    %v1700 = vpop.permute.xlu0 %1699
    %v1706 = vunpack.c.l.b16 %v234
    %v1707 = vunpack.c.l.b16 %v235
    %v1708 = vunpack.c.l.b16 %v236
    %v1709 = vunpack.c.l.b16 %v237
    %v1710 = vpack.c.b16 %v1707, %v1706
    %v1711 = vpack.c.b16 %v1709, %v1708
    %v1713 = vsel %vm1328, %v1710, 0
    %v1716 = vsel %vm1328, %v1711, 0
    %1718 = vmatprep.subr.bf16.mxu0 0
    %1719 = vmatpush1.bf16.msra.mxu0 %v1680
    %1720 = vmatprep.subr.bf16.mxu0 0
    %1721 = vmatpush1.bf16.msra.mxu0 %v1681
    %1722 = vmatprep.subr.bf16.mxu0 0
    %1723 = vmatpush1.bf16.msra.mxu0 0
    %1724 = vmatprep.subr.bf16.mxu0 0
    %1725 = vmatpush1.bf16.msra.mxu0 0
    %1726 = vmatprep.subr.bf16.mxu0 0
    %1727 = vmatpush1.bf16.msra.mxu0 0
    %1728 = vmatprep.subr.bf16.mxu0 0
    %1729 = vmatpush1.bf16.msra.mxu0 0
    %1730 = vmatprep.subr.bf16.mxu0 0
    %1731 = vmatpush1.bf16.msra.mxu0 0
    %1732 = vmatprep.subr.bf16.mxu0 0
    %1733 = vmatpush1.bf16.msra.mxu0 0
    %1734 = vmatprep.subr.bf16.mxu0 0
    %1735 = vmatpush1.bf16.msra.mxu0 0
    %1736 = vmatprep.subr.bf16.mxu0 0
    %1737 = vmatpush1.bf16.msra.mxu0 0
    %1738 = vmatprep.subr.bf16.mxu0 0
    %1739 = vmatpush1.bf16.msra.mxu0 0
    %1740 = vmatprep.subr.bf16.mxu0 0
    %1741 = vmatpush1.bf16.msra.mxu0 0
    %1742 = vmatprep.subr.bf16.mxu0 0
    %1743 = vmatpush1.bf16.msra.mxu0 0
    %1744 = vmatprep.subr.bf16.mxu0 0
    %1745 = vmatpush1.bf16.msra.mxu0 0
    %1746 = vmatprep.subr.bf16.mxu0 0
    %1747 = vmatpush1.bf16.msra.mxu0 0
    %1748 = vmatprep.subr.bf16.mxu0 0
    %1749 = vmatpush1.bf16.msra.mxu0 0
    %1750 = vmatprep.mubr.bf16.mxu0 0
    %1751 = vmatmul.mubr.bf16.gmra.mrb[0].mxu0 %v1713
    %v1752 = vpop.f32.mrb[0].mxu0
    %v1753 = vadd.f32 %v1685, %v1752
    %v1754 = vpop.f32.mrb[0].mxu0
    %v1755 = vpop.f32.mrb[0].mxu0
    %v1756 = vadd.f32 %v1690, %v1755
    %v1757 = vpop.f32.mrb[0].mxu0
    %1758 = vmatprep.mubr.bf16.mxu0 0
    %1759 = vmatmul.mubr.bf16.gmra.mrb[0].mxu0 %v1716
    %v1760 = vpop.f32.mrb[0].mxu0
    %v1761 = vadd.f32 %v1695, %v1760
    %v1762 = vpop.f32.mrb[0].mxu0
    %v1763 = vpop.f32.mrb[0].mxu0
    %v1764 = vadd.f32 %v1700, %v1763
    %v1765 = vpop.f32.mrb[0].mxu0
    %1766 = vdwg.mxu0
    %v1767 = vmul.f32 %v1753, 0.2
    %v1768 = vmul.f32 %v1756, 0.2
    %v1769 = vmul.f32 %v1761, 0.2
    %v1770 = vmul.f32 %v1764, 0.2
    %v1771 = vmax.f32 %v1753, %v1767
    %v1772 = vmax.f32 %v1756, %v1768
    %v1773 = vmax.f32 %v1761, %v1769
    %v1774 = vmax.f32 %v1764, %v1770
    %v1775 = vpack.c.bf16 %v1772, %v1771
    %v1776 = vpack.c.bf16 %v1774, %v1773
    %1778 = vset.pattern.permute.xlu0 0
    %1779 = vperm.xlu0 %1778, %v246
    %v1780 = vpop.permute.xlu0 %1779
    %1783 = vset.pattern.permute.xlu0 0
    %1784 = vperm.xlu0 %1783, %v247
    %v1785 = vpop.permute.xlu0 %1784
    %1788 = vset.pattern.permute.xlu0 0
    %1789 = vperm.xlu0 %1788, %v248
    %v1790 = vpop.permute.xlu0 %1789
    %1793 = vset.pattern.permute.xlu0 0
    %1794 = vperm.xlu0 %1793, %v249
    %v1795 = vpop.permute.xlu0 %1794
    %v1801 = vunpack.c.l.b16 %v242
    %v1802 = vunpack.c.l.b16 %v243
    %v1803 = vunpack.c.l.b16 %v244
    %v1804 = vunpack.c.l.b16 %v245
    %v1805 = vpack.c.b16 %v1802, %v1801
    %v1806 = vpack.c.b16 %v1804, %v1803
    %v1808 = vsel %vm1328, %v1805, 0
    %v1811 = vsel %vm1328, %v1806, 0
    %1813 = vmatprep.subr.bf16.mxu0 0
    %1814 = vmatpush1.bf16.msra.mxu0 %v1775
    %1815 = vmatprep.subr.bf16.mxu0 0
    %1816 = vmatpush1.bf16.msra.mxu0 %v1776
    %1817 = vmatprep.subr.bf16.mxu0 0
    %1818 = vmatpush1.bf16.msra.mxu0 0
    %1819 = vmatprep.subr.bf16.mxu0 0
    %1820 = vmatpush1.bf16.msra.mxu0 0
    %1821 = vmatprep.subr.bf16.mxu0 0
    %1822 = vmatpush1.bf16.msra.mxu0 0
    %1823 = vmatprep.subr.bf16.mxu0 0
    %1824 = vmatpush1.bf16.msra.mxu0 0
    %1825 = vmatprep.subr.bf16.mxu0 0
    %1826 = vmatpush1.bf16.msra.mxu0 0
    %1827 = vmatprep.subr.bf16.mxu0 0
    %1828 = vmatpush1.bf16.msra.mxu0 0
    %1829 = vmatprep.subr.bf16.mxu0 0
    %1830 = vmatpush1.bf16.msra.mxu0 0
    %1831 = vmatprep.subr.bf16.mxu0 0
    %1832 = vmatpush1.bf16.msra.mxu0 0
    %1833 = vmatprep.subr.bf16.mxu0 0
    %1834 = vmatpush1.bf16.msra.mxu0 0
    %1835 = vmatprep.subr.bf16.mxu0 0
    %1836 = vmatpush1.bf16.msra.mxu0 0
    %1837 = vmatprep.subr.bf16.mxu0 0
    %1838 = vmatpush1.bf16.msra.mxu0 0
    %1839 = vmatprep.subr.bf16.mxu0 0
    %1840 = vmatpush1.bf16.msra.mxu0 0
    %1841 = vmatprep.subr.bf16.mxu0 0
    %1842 = vmatpush1.bf16.msra.mxu0 0
    %1843 = vmatprep.subr.bf16.mxu0 0
    %1844 = vmatpush1.bf16.msra.mxu0 0
    %1845 = vmatprep.mubr.bf16.mxu0 0
    %1846 = vmatmul.mubr.bf16.gmra.mrb[0].mxu0 %v1808
    %v1847 = vpop.f32.mrb[0].mxu0
    %v1848 = vadd.f32 %v1780, %v1847
    %v1849 = vpop.f32.mrb[0].mxu0
    %v1850 = vpop.f32.mrb[0].mxu0
    %v1851 = vadd.f32 %v1785, %v1850
    %v1852 = vpop.f32.mrb[0].mxu0
    %1853 = vmatprep.mubr.bf16.mxu0 0
    %1854 = vmatmul.mubr.bf16.gmra.mrb[0].mxu0 %v1811
    %v1855 = vpop.f32.mrb[0].mxu0
    %v1856 = vadd.f32 %v1790, %v1855
    %v1857 = vpop.f32.mrb[0].mxu0
    %v1858 = vpop.f32.mrb[0].mxu0
    %v1859 = vadd.f32 %v1795, %v1858
    %v1860 = vpop.f32.mrb[0].mxu0
    %1861 = vdwg.mxu0
    %v1862 = vadd.f32 %v1676, %v1848
    %v1863 = vadd.f32 %v1677, %v1851
    %v1864 = vadd.f32 %v1678, %v1856
    %v1865 = vadd.f32 %v1679, %v1859
    %v1866 = vmul.f32 %v1862, 0.2
    %v1867 = vmul.f32 %v1863, 0.2
    %v1868 = vmul.f32 %v1864, 0.2
    %v1869 = vmul.f32 %v1865, 0.2
    %v1870 = vmax.f32 %v1862, %v1866
    %v1871 = vmax.f32 %v1863, %v1867
    %v1872 = vmax.f32 %v1864, %v1868
    %v1873 = vmax.f32 %v1865, %v1869
    %v1874 = vpack.c.bf16 %v1871, %v1870
    %v1875 = vpack.c.bf16 %v1873, %v1872
    %1877 = vset.pattern.permute.xlu0 0
    %1878 = vperm.xlu0 %1877, %v254
    %v1879 = vpop.permute.xlu0 %1878
    %1882 = vset.pattern.permute.xlu0 0
    %1883 = vperm.xlu0 %1882, %v255
    %v1884 = vpop.permute.xlu0 %1883
    %1887 = vset.pattern.permute.xlu0 0
    %1888 = vperm.xlu0 %1887, %v256
    %v1889 = vpop.permute.xlu0 %1888
    %1892 = vset.pattern.permute.xlu0 0
    %1893 = vperm.xlu0 %1892, %v257
    %v1894 = vpop.permute.xlu0 %1893
    %v1900 = vunpack.c.l.b16 %v250
    %v1901 = vunpack.c.l.b16 %v251
    %v1902 = vunpack.c.l.b16 %v252
    %v1903 = vunpack.c.l.b16 %v253
    %v1904 = vpack.c.b16 %v1901, %v1900
    %v1905 = vpack.c.b16 %v1903, %v1902
    %v1907 = vsel %vm1328, %v1904, 0
    %v1910 = vsel %vm1328, %v1905, 0
    %1912 = vmatprep.subr.bf16.mxu0 0
    %1913 = vmatpush1.bf16.msra.mxu0 %v1874
    %1914 = vmatprep.subr.bf16.mxu0 0
    %1915 = vmatpush1.bf16.msra.mxu0 %v1875
    %1916 = vmatprep.subr.bf16.mxu0 0
    %1917 = vmatpush1.bf16.msra.mxu0 0
    %1918 = vmatprep.subr.bf16.mxu0 0
    %1919 = vmatpush1.bf16.msra.mxu0 0
    %1920 = vmatprep.subr.bf16.mxu0 0
    %1921 = vmatpush1.bf16.msra.mxu0 0
    %1922 = vmatprep.subr.bf16.mxu0 0
    %1923 = vmatpush1.bf16.msra.mxu0 0
    %1924 = vmatprep.subr.bf16.mxu0 0
    %1925 = vmatpush1.bf16.msra.mxu0 0
    %1926 = vmatprep.subr.bf16.mxu0 0
    %1927 = vmatpush1.bf16.msra.mxu0 0
    %1928 = vmatprep.subr.bf16.mxu0 0
    %1929 = vmatpush1.bf16.msra.mxu0 0
    %1930 = vmatprep.subr.bf16.mxu0 0
    %1931 = vmatpush1.bf16.msra.mxu0 0
    %1932 = vmatprep.subr.bf16.mxu0 0
    %1933 = vmatpush1.bf16.msra.mxu0 0
    %1934 = vmatprep.subr.bf16.mxu0 0
    %1935 = vmatpush1.bf16.msra.mxu0 0
    %1936 = vmatprep.subr.bf16.mxu0 0
    %1937 = vmatpush1.bf16.msra.mxu0 0
    %1938 = vmatprep.subr.bf16.mxu0 0
    %1939 = vmatpush1.bf16.msra.mxu0 0
    %1940 = vmatprep.subr.bf16.mxu0 0
    %1941 = vmatpush1.bf16.msra.mxu0 0
    %1942 = vmatprep.subr.bf16.mxu0 0
    %1943 = vmatpush1.bf16.msra.mxu0 0
    %1944 = vmatprep.mubr.bf16.mxu0 0
    %1945 = vmatmul.mubr.bf16.gmra.mrb[0].mxu0 %v1907
    %v1946 = vpop.f32.mrb[0].mxu0
    %v1947 = vadd.f32 %v1879, %v1946
    %v1948 = vpop.f32.mrb[0].mxu0
    %v1949 = vpop.f32.mrb[0].mxu0
    %v1950 = vadd.f32 %v1884, %v1949
    %v1951 = vpop.f32.mrb[0].mxu0
    %1952 = vmatprep.mubr.bf16.mxu0 0
    %1953 = vmatmul.mubr.bf16.gmra.mrb[0].mxu0 %v1910
    %v1954 = vpop.f32.mrb[0].mxu0
    %v1955 = vadd.f32 %v1889, %v1954
    %v1956 = vpop.f32.mrb[0].mxu0
    %v1957 = vpop.f32.mrb[0].mxu0
    %v1958 = vadd.f32 %v1894, %v1957
    %v1959 = vpop.f32.mrb[0].mxu0
    %1960 = vdwg.mxu0
    %v1961 = vadd.f32 %v1564, %v1947
    %v1962 = vadd.f32 %v1567, %v1950
    %v1963 = vadd.f32 %v1572, %v1955
    %v1964 = vadd.f32 %v1575, %v1958
    %v1965 = vld [vmem:[%s2] sm:$0xff]
    %v1966 = vld [vmem:[%s2 + $0x8] sm:$0xff]
    %v1967 = vld [vmem:[%s2 + $0x10] sm:$0xff]
    %v1968 = vld [vmem:[%s2 + $0x18] sm:$0xff]
    %v1970 = vsel %vm1328, %v1961, 0
    %v1973 = vsel %vm1328, %v1962, 0
    %v1976 = vsel %vm1328, %v1963, 0
    %v1979 = vsel %vm1328, %v1964, 0
    %1981 = vmatprep.subr.mxu0 0.0
    %1982 = vmatpush1.msra.mxu0 %v1965
    %1983 = vmatprep.subr.mxu0 0.0
    %1984 = vmatpush1.msra.mxu0 %v1966
    %1985 = vmatprep.subr.mxu0 0.0
    %1986 = vmatpush1.msra.mxu0 %v1967
    %1987 = vmatprep.subr.mxu0 0.0
    %1988 = vmatpush1.msra.mxu0 %v1968
    %1989 = vmatprep.subr.mxu0 0.0
    %1990 = vmatpush1.msra.mxu0 0.0
    %1991 = vmatprep.subr.mxu0 0.0
    %1992 = vmatpush1.msra.mxu0 0.0
    %1993 = vmatprep.subr.mxu0 0.0
    %1994 = vmatpush1.msra.mxu0 0.0
    %1995 = vmatprep.subr.mxu0 0.0
    %1996 = vmatpush1.msra.mxu0 0.0
    %1997 = vmatprep.subr.mxu0 0.0
    %1998 = vmatpush1.msra.mxu0 0.0
    %1999 = vmatprep.subr.mxu0 0.0
    %2000 = vmatpush1.msra.mxu0 0.0
    %2001 = vmatprep.subr.mxu0 0.0
    %2002 = vmatpush1.msra.mxu0 0.0
    %2003 = vmatprep.subr.mxu0 0.0
    %2004 = vmatpush1.msra.mxu0 0.0
    %2005 = vmatprep.subr.mxu0 0.0
    %2006 = vmatpush1.msra.mxu0 0.0
    %2007 = vmatprep.subr.mxu0 0.0
    %2008 = vmatpush1.msra.mxu0 0.0
    %2009 = vmatprep.subr.mxu0 0.0
    %2010 = vmatpush1.msra.mxu0 0.0
    %2011 = vmatprep.subr.mxu0 0.0
    %2012 = vmatpush1.msra.mxu0 0.0
    %2013 = vmatprep.subr.mxu0 0.0
    %2014 = vmatpush1.msra.mxu0 0.0
    %2015 = vmatprep.subr.mxu0 0.0
    %2016 = vmatpush1.msra.mxu0 0.0
    %2017 = vmatprep.subr.mxu0 0.0
    %2018 = vmatpush1.msra.mxu0 0.0
    %2019 = vmatprep.subr.mxu0 0.0
    %2020 = vmatpush1.msra.mxu0 0.0
    %2021 = vmatprep.subr.mxu0 0.0
    %2022 = vmatpush1.msra.mxu0 0.0
    %2023 = vmatprep.subr.mxu0 0.0
    %2024 = vmatpush1.msra.mxu0 0.0
    %2025 = vmatprep.subr.mxu0 0.0
    %2026 = vmatpush1.msra.mxu0 0.0
    %2027 = vmatprep.subr.mxu0 0.0
    %2028 = vmatpush1.msra.mxu0 0.0
    %2029 = vmatprep.subr.mxu0 0.0
    %2030 = vmatpush1.msra.mxu0 0.0
    %2031 = vmatprep.subr.mxu0 0.0
    %2032 = vmatpush1.msra.mxu0 0.0
    %2033 = vmatprep.subr.mxu0 0.0
    %2034 = vmatpush1.msra.mxu0 0.0
    %2035 = vmatprep.subr.mxu0 0.0
    %2036 = vmatpush1.msra.mxu0 0.0
    %2037 = vmatprep.subr.mxu0 0.0
    %2038 = vmatpush1.msra.mxu0 0.0
    %2039 = vmatprep.subr.mxu0 0.0
    %2040 = vmatpush1.msra.mxu0 0.0
    %2041 = vmatprep.subr.mxu0 0.0
    %2042 = vmatpush1.msra.mxu0 0.0
    %2043 = vmatprep.subr.mxu0 0.0
    %2044 = vmatpush1.msra.mxu0 0.0
    %2045 = vmatprep.mubr.f32.mxu0 0.0
    %2046 = vmatmul.mubr.f32.gmra.mrb[0].mxu0 %v1970
    %v2047 = vpop.f32.mrb[0].mxu0
    %v2048 = vadd.f32 0.0, %v2047
    %v2049 = vpop.f32.mrb[0].mxu0
    %2050 = vmatprep.mubr.f32.mxu0 0.0
    %2051 = vmatmul.mubr.f32.gmra.mrb[0].mxu0 %v1973
    %v2052 = vpop.f32.mrb[0].mxu0
    %v2053 = vadd.f32 0.0, %v2052
    %v2054 = vpop.f32.mrb[0].mxu0
    %2055 = vmatprep.mubr.f32.mxu0 0.0
    %2056 = vmatmul.mubr.f32.gmra.mrb[0].mxu0 %v1976
    %v2057 = vpop.f32.mrb[0].mxu0
    %v2058 = vadd.f32 0.0, %v2057
    %v2059 = vpop.f32.mrb[0].mxu0
    %2060 = vmatprep.mubr.f32.mxu0 0.0
    %2061 = vmatmul.mubr.f32.gmra.mrb[0].mxu0 %v1979
    %v2062 = vpop.f32.mrb[0].mxu0
    %v2063 = vadd.f32 0.0, %v2062
    %v2064 = vpop.f32.mrb[0].mxu0
    %2065 = vdwg.mxu0
    %v2066 = vmul.f32 %v1961, %v1961
    %v2067 = vmul.f32 %v1962, %v1962
    %v2068 = vmul.f32 %v1963, %v1963
    %v2069 = vmul.f32 %v1964, %v1964
    %v2071 = vsel %vm1328, %v2066, 0
    %v2074 = vsel %vm1328, %v2067, 0
    %v2077 = vsel %vm1328, %v2068, 0
    %v2080 = vsel %vm1328, %v2069, 0
    %2082 = vmatprep.subr.mxu0 0.0
    %2083 = vmatpush1.msra.mxu0 %v1965
    %2084 = vmatprep.subr.mxu0 0.0
    %2085 = vmatpush1.msra.mxu0 %v1966
    %2086 = vmatprep.subr.mxu0 0.0
    %2087 = vmatpush1.msra.mxu0 %v1967
    %2088 = vmatprep.subr.mxu0 0.0
    %2089 = vmatpush1.msra.mxu0 %v1968
    %2090 = vmatprep.subr.mxu0 0.0
    %2091 = vmatpush1.msra.mxu0 0.0
    %2092 = vmatprep.subr.mxu0 0.0
    %2093 = vmatpush1.msra.mxu0 0.0
    %2094 = vmatprep.subr.mxu0 0.0
    %2095 = vmatpush1.msra.mxu0 0.0
    %2096 = vmatprep.subr.mxu0 0.0
    %2097 = vmatpush1.msra.mxu0 0.0
    %2098 = vmatprep.subr.mxu0 0.0
    %2099 = vmatpush1.msra.mxu0 0.0
    %2100 = vmatprep.subr.mxu0 0.0
    %2101 = vmatpush1.msra.mxu0 0.0
    %2102 = vmatprep.subr.mxu0 0.0
    %2103 = vmatpush1.msra.mxu0 0.0
    %2104 = vmatprep.subr.mxu0 0.0
    %2105 = vmatpush1.msra.mxu0 0.0
    %2106 = vmatprep.subr.mxu0 0.0
    %2107 = vmatpush1.msra.mxu0 0.0
    %2108 = vmatprep.subr.mxu0 0.0
    %2109 = vmatpush1.msra.mxu0 0.0
    %2110 = vmatprep.subr.mxu0 0.0
    %2111 = vmatpush1.msra.mxu0 0.0
    %2112 = vmatprep.subr.mxu0 0.0
    %2113 = vmatpush1.msra.mxu0 0.0
    %2114 = vmatprep.subr.mxu0 0.0
    %2115 = vmatpush1.msra.mxu0 0.0
    %2116 = vmatprep.subr.mxu0 0.0
    %2117 = vmatpush1.msra.mxu0 0.0
    %2118 = vmatprep.subr.mxu0 0.0
    %2119 = vmatpush1.msra.mxu0 0.0
    %2120 = vmatprep.subr.mxu0 0.0
    %2121 = vmatpush1.msra.mxu0 0.0
    %2122 = vmatprep.subr.mxu0 0.0
    %2123 = vmatpush1.msra.mxu0 0.0
    %2124 = vmatprep.subr.mxu0 0.0
    %2125 = vmatpush1.msra.mxu0 0.0
    %2126 = vmatprep.subr.mxu0 0.0
    %2127 = vmatpush1.msra.mxu0 0.0
    %2128 = vmatprep.subr.mxu0 0.0
    %2129 = vmatpush1.msra.mxu0 0.0
    %2130 = vmatprep.subr.mxu0 0.0
    %2131 = vmatpush1.msra.mxu0 0.0
    %2132 = vmatprep.subr.mxu0 0.0
    %2133 = vmatpush1.msra.mxu0 0.0
    %2134 = vmatprep.subr.mxu0 0.0
    %2135 = vmatpush1.msra.mxu0 0.0
    %2136 = vmatprep.subr.mxu0 0.0
    %2137 = vmatpush1.msra.mxu0 0.0
    %2138 = vmatprep.subr.mxu0 0.0
    %2139 = vmatpush1.msra.mxu0 0.0
    %2140 = vmatprep.subr.mxu0 0.0
    %2141 = vmatpush1.msra.mxu0 0.0
    %2142 = vmatprep.subr.mxu0 0.0
    %2143 = vmatpush1.msra.mxu0 0.0
    %2144 = vmatprep.subr.mxu0 0.0
    %2145 = vmatpush1.msra.mxu0 0.0
    %2146 = vmatprep.mubr.f32.mxu0 0.0
    %2147 = vmatmul.mubr.f32.gmra.mrb[0].mxu0 %v2071
    %v2148 = vpop.f32.mrb[0].mxu0
    %v2149 = vadd.f32 0.0, %v2148
    %v2150 = vpop.f32.mrb[0].mxu0
    %2151 = vmatprep.mubr.f32.mxu0 0.0
    %2152 = vmatmul.mubr.f32.gmra.mrb[0].mxu0 %v2074
    %v2153 = vpop.f32.mrb[0].mxu0
    %v2154 = vadd.f32 0.0, %v2153
    %v2155 = vpop.f32.mrb[0].mxu0
    %2156 = vmatprep.mubr.f32.mxu0 0.0
    %2157 = vmatmul.mubr.f32.gmra.mrb[0].mxu0 %v2077
    %v2158 = vpop.f32.mrb[0].mxu0
    %v2159 = vadd.f32 0.0, %v2158
    %v2160 = vpop.f32.mrb[0].mxu0
    %2161 = vmatprep.mubr.f32.mxu0 0.0
    %2162 = vmatmul.mubr.f32.gmra.mrb[0].mxu0 %v2080
    %v2163 = vpop.f32.mrb[0].mxu0
    %v2164 = vadd.f32 0.0, %v2163
    %v2165 = vpop.f32.mrb[0].mxu0
    %2166 = vdwg.mxu0
    %v2167 = vmul.f32 %v2048, 0.0625
    %v2168 = vmul.f32 %v2053, 0.0625
    %v2169 = vmul.f32 %v2058, 0.0625
    %v2170 = vmul.f32 %v2063, 0.0625
    %v2171 = vmul.f32 %v2149, 0.0625
    %v2172 = vmul.f32 %v2154, 0.0625
    %v2173 = vmul.f32 %v2159, 0.0625
    %v2174 = vmul.f32 %v2164, 0.0625
    %v2175 = vmul.f32 %v2167, %v2167
    %v2176 = vmul.f32 %v2168, %v2168
    %v2177 = vmul.f32 %v2169, %v2169
    %v2178 = vmul.f32 %v2170, %v2170
    %v2179 = vsub.f32 %v2171, %v2175
    %v2180 = vsub.f32 %v2172, %v2176
    %v2181 = vsub.f32 %v2173, %v2177
    %v2182 = vsub.f32 %v2174, %v2178
    %v2183 = vmul.f32 %v2179, %v2179
    %v2184 = vmul.f32 %v2180, %v2180
    %v2185 = vmul.f32 %v2181, %v2181
    %v2186 = vmul.f32 %v2182, %v2182
    %v2187 = vpack.c.bf16 %v2180, %v2179
    %v2188 = vpack.c.bf16 %v2182, %v2181
    %v2189 = vpack.c.bf16 %v2184, %v2183
    %v2190 = vpack.c.bf16 %v2186, %v2185
    %v2191 = vpack.c.bf16 %v2168, %v2167
    %v2192 = vpack.c.bf16 %v2170, %v2169
    %v2193 = vpack.c.bf16 1.0, 1.0
    %v2323 = vunpack.c.l.b16 %v258
    %v2324 = vunpack.c.l.b16 %v259
    %v2325 = vunpack.c.l.b16 %v260
    %v2326 = vunpack.c.l.b16 %v261
    %v2327 = vunpack.c.l.b16 %v262
    %v2328 = vunpack.c.l.b16 %v263
    %v2329 = vunpack.c.l.b16 %v264
    %v2330 = vunpack.c.l.b16 %v265
    %v2331 = vunpack.c.l.b16 %v266
    %v2332 = vunpack.c.l.b16 %v267
    %v2333 = vunpack.c.l.b16 %v268
    %v2334 = vunpack.c.l.b16 %v269
    %v2335 = vunpack.c.l.b16 %v270
    %v2336 = vunpack.c.l.b16 %v271
    %v2337 = vunpack.c.l.b16 %v272
    %v2338 = vunpack.c.l.b16 %v273
    %v2339 = vunpack.c.l.b16 %v274
    %v2340 = vunpack.c.l.b16 %v275
    %v2341 = vunpack.c.l.b16 %v276
    %v2342 = vunpack.c.l.b16 %v277
    %v2343 = vunpack.c.l.b16 %v278
    %v2344 = vunpack.c.l.b16 %v279
    %v2345 = vunpack.c.l.b16 %v280
    %v2346 = vunpack.c.l.b16 %v281
    %v2347 = vunpack.c.l.b16 %v282
    %v2348 = vunpack.c.l.b16 %v283
    %v2349 = vunpack.c.l.b16 %v284
    %v2350 = vunpack.c.l.b16 %v285
    %v2351 = vunpack.c.l.b16 %v286
    %v2352 = vunpack.c.l.b16 %v287
    %v2353 = vunpack.c.l.b16 %v288
    %v2354 = vunpack.c.l.b16 %v289
    %v2355 = vunpack.c.l.b16 %v290
    %v2356 = vunpack.c.l.b16 %v291
    %v2357 = vunpack.c.l.b16 %v292
    %v2358 = vunpack.c.l.b16 %v293
    %v2359 = vunpack.c.l.b16 %v294
    %v2360 = vunpack.c.l.b16 %v295
    %v2361 = vunpack.c.l.b16 %v296
    %v2362 = vunpack.c.l.b16 %v297
    %v2363 = vunpack.c.l.b16 %v298
    %v2364 = vunpack.c.l.b16 %v299
    %v2365 = vunpack.c.l.b16 %v300
    %v2366 = vunpack.c.l.b16 %v301
    %v2367 = vunpack.c.l.b16 %v302
    %v2368 = vunpack.c.l.b16 %v303
    %v2369 = vunpack.c.l.b16 %v304
    %v2370 = vunpack.c.l.b16 %v305
    %v2371 = vunpack.c.l.b16 %v306
    %v2372 = vunpack.c.l.b16 %v307
    %v2373 = vunpack.c.l.b16 %v308
    %v2374 = vunpack.c.l.b16 %v309
    %v2375 = vunpack.c.l.b16 %v310
    %v2376 = vunpack.c.l.b16 %v311
    %v2377 = vunpack.c.l.b16 %v312
    %v2378 = vunpack.c.l.b16 %v313
    %v2379 = vunpack.c.l.b16 %v314
    %v2380 = vunpack.c.l.b16 %v315
    %v2381 = vunpack.c.l.b16 %v316
    %v2382 = vunpack.c.l.b16 %v317
    %v2383 = vunpack.c.l.b16 %v318
    %v2384 = vunpack.c.l.b16 %v319
    %v2385 = vunpack.c.l.b16 %v320
    %v2386 = vunpack.c.l.b16 %v321
    %v2387 = vunpack.c.l.b16 %v322
    %v2388 = vunpack.c.l.b16 %v323
    %v2389 = vunpack.c.l.b16 %v324
    %v2390 = vunpack.c.l.b16 %v325
    %v2391 = vunpack.c.l.b16 %v326
    %v2392 = vunpack.c.l.b16 %v327
    %v2393 = vunpack.c.l.b16 %v328
    %v2394 = vunpack.c.l.b16 %v329
    %v2395 = vunpack.c.l.b16 %v330
    %v2396 = vunpack.c.l.b16 %v331
    %v2397 = vunpack.c.l.b16 %v332
    %v2398 = vunpack.c.l.b16 %v333
    %v2399 = vunpack.c.l.b16 %v334
    %v2400 = vunpack.c.l.b16 %v335
    %v2401 = vunpack.c.l.b16 %v336
    %v2402 = vunpack.c.l.b16 %v337
    %v2403 = vunpack.c.l.b16 %v338
    %v2404 = vunpack.c.l.b16 %v339
    %v2405 = vunpack.c.l.b16 %v340
    %v2406 = vunpack.c.l.b16 %v341
    %v2407 = vunpack.c.l.b16 %v342
    %v2408 = vunpack.c.l.b16 %v343
    %v2409 = vunpack.c.l.b16 %v344
    %v2410 = vunpack.c.l.b16 %v345
    %v2411 = vunpack.c.l.b16 %v346
    %v2412 = vunpack.c.l.b16 %v347
    %v2413 = vunpack.c.l.b16 %v348
    %v2414 = vunpack.c.l.b16 %v349
    %v2415 = vunpack.c.l.b16 %v350
    %v2416 = vunpack.c.l.b16 %v351
    %v2417 = vunpack.c.l.b16 %v352
    %v2418 = vunpack.c.l.b16 %v353
    %v2419 = vunpack.c.l.b16 %v354
    %v2420 = vunpack.c.l.b16 %v355
    %v2421 = vunpack.c.l.b16 %v356
    %v2422 = vunpack.c.l.b16 %v357
    %v2423 = vunpack.c.l.b16 %v358
    %v2424 = vunpack.c.l.b16 %v359
    %v2425 = vunpack.c.l.b16 %v360
    %v2426 = vunpack.c.l.b16 %v361
    %v2427 = vunpack.c.l.b16 %v362
    %v2428 = vunpack.c.l.b16 %v363
    %v2429 = vunpack.c.l.b16 %v364
    %v2430 = vunpack.c.l.b16 %v365
    %v2431 = vunpack.c.l.b16 %v366
    %v2432 = vunpack.c.l.b16 %v367
    %v2433 = vunpack.c.l.b16 %v368
    %v2434 = vunpack.c.l.b16 %v369
    %v2435 = vunpack.c.l.b16 %v370
    %v2436 = vunpack.c.l.b16 %v371
    %v2437 = vunpack.c.l.b16 %v372
    %v2438 = vunpack.c.l.b16 %v373
    %v2439 = vunpack.c.l.b16 %v374
    %v2440 = vunpack.c.l.b16 %v375
    %v2441 = vunpack.c.l.b16 %v376
    %v2442 = vunpack.c.l.b16 %v377
    %v2443 = vunpack.c.l.b16 %v378
    %v2444 = vunpack.c.l.b16 %v379
    %v2445 = vunpack.c.l.b16 %v380
    %v2446 = vunpack.c.l.b16 %v381
    %v2447 = vunpack.c.l.b16 %v382
    %v2448 = vunpack.c.l.b16 %v383
    %v2449 = vunpack.c.l.b16 %v384
    %v2450 = vunpack.c.l.b16 %v385
    %v2451 = vunpack.c.l.b16 %v386
    %v2452 = vpack.c.b16 %v2324, %v2323
    %v2453 = vpack.c.b16 %v2326, %v2325
    %v2454 = vpack.c.b16 %v2328, %v2327
    %v2455 = vpack.c.b16 %v2330, %v2329
    %v2456 = vpack.c.b16 %v2332, %v2331
    %v2457 = vpack.c.b16 %v2334, %v2333
    %v2458 = vpack.c.b16 %v2336, %v2335
    %v2459 = vpack.c.b16 %v2338, %v2337
    %v2460 = vpack.c.b16 %v2340, %v2339
    %v2461 = vpack.c.b16 %v2342, %v2341
    %v2462 = vpack.c.b16 %v2344, %v2343
    %v2463 = vpack.c.b16 %v2346, %v2345
    %v2464 = vpack.c.b16 %v2348, %v2347
    %v2465 = vpack.c.b16 %v2350, %v2349
    %v2466 = vpack.c.b16 %v2352, %v2351
    %v2467 = vpack.c.b16 %v2354, %v2353
    %v2468 = vpack.c.b16 %v2356, %v2355
    %v2469 = vpack.c.b16 %v2358, %v2357
    %v2470 = vpack.c.b16 %v2360, %v2359
    %v2471 = vpack.c.b16 %v2362, %v2361
    %v2472 = vpack.c.b16 %v2364, %v2363
    %v2473 = vpack.c.b16 %v2366, %v2365
    %v2474 = vpack.c.b16 %v2368, %v2367
    %v2475 = vpack.c.b16 %v2370, %v2369
    %v2476 = vpack.c.b16 %v2372, %v2371
    %v2477 = vpack.c.b16 %v2374, %v2373
    %v2478 = vpack.c.b16 %v2376, %v2375
    %v2479 = vpack.c.b16 %v2378, %v2377
    %v2480 = vpack.c.b16 %v2380, %v2379
    %v2481 = vpack.c.b16 %v2382, %v2381
    %v2482 = vpack.c.b16 %v2384, %v2383
    %v2483 = vpack.c.b16 %v2386, %v2385
    %v2484 = vpack.c.b16 %v2388, %v2387
    %v2485 = vpack.c.b16 %v2390, %v2389
    %v2486 = vpack.c.b16 %v2392, %v2391
    %v2487 = vpack.c.b16 %v2394, %v2393
    %v2488 = vpack.c.b16 %v2396, %v2395
    %v2489 = vpack.c.b16 %v2398, %v2397
    %v2490 = vpack.c.b16 %v2400, %v2399
    %v2491 = vpack.c.b16 %v2402, %v2401
    %v2492 = vpack.c.b16 %v2404, %v2403
    %v2493 = vpack.c.b16 %v2406, %v2405
    %v2494 = vpack.c.b16 %v2408, %v2407
    %v2495 = vpack.c.b16 %v2410, %v2409
    %v2496 = vpack.c.b16 %v2412, %v2411
    %v2497 = vpack.c.b16 %v2414, %v2413
    %v2498 = vpack.c.b16 %v2416, %v2415
    %v2499 = vpack.c.b16 %v2418, %v2417
    %v2500 = vpack.c.b16 %v2420, %v2419
    %v2501 = vpack.c.b16 %v2422, %v2421
    %v2502 = vpack.c.b16 %v2424, %v2423
    %v2503 = vpack.c.b16 %v2426, %v2425
    %v2504 = vpack.c.b16 %v2428, %v2427
    %v2505 = vpack.c.b16 %v2430, %v2429
    %v2506 = vpack.c.b16 %v2432, %v2431
    %v2507 = vpack.c.b16 %v2434, %v2433
    %v2508 = vpack.c.b16 %v2436, %v2435
    %v2509 = vpack.c.b16 %v2438, %v2437
    %v2510 = vpack.c.b16 %v2440, %v2439
    %v2511 = vpack.c.b16 %v2442, %v2441
    %v2512 = vpack.c.b16 %v2444, %v2443
    %v2513 = vpack.c.b16 %v2446, %v2445
    %v2514 = vpack.c.b16 %v2448, %v2447
    %v2515 = vpack.c.b16 %v2450, %v2449
    %v2516 = vpack.c.b16 %v2451, %v2451
    %vm2517 = vcmask 793600
    %v2519 = vsel %vm2517, %v2452, 0
    %v2522 = vsel %vm2517, %v2453, 0
    %v2525 = vsel %vm2517, %v2454, 0
    %v2528 = vsel %vm2517, %v2455, 0
    %v2531 = vsel %vm2517, %v2456, 0
    %v2534 = vsel %vm2517, %v2457, 0
    %v2537 = vsel %vm2517, %v2458, 0
    %v2540 = vsel %vm2517, %v2459, 0
    %v2543 = vsel %vm2517, %v2460, 0
    %v2546 = vsel %vm2517, %v2461, 0
    %v2549 = vsel %vm2517, %v2462, 0
    %v2552 = vsel %vm2517, %v2463, 0
    %v2555 = vsel %vm2517, %v2464, 0
    %v2558 = vsel %vm2517, %v2465, 0
    %v2561 = vsel %vm2517, %v2466, 0
    %v2564 = vsel %vm2517, %v2467, 0
    %v2567 = vsel %vm2517, %v2468, 0
    %v2570 = vsel %vm2517, %v2469, 0
    %v2573 = vsel %vm2517, %v2470, 0
    %v2576 = vsel %vm2517, %v2471, 0
    %v2579 = vsel %vm2517, %v2472, 0
    %v2582 = vsel %vm2517, %v2473, 0
    %v2585 = vsel %vm2517, %v2474, 0
    %v2588 = vsel %vm2517, %v2475, 0
    %v2591 = vsel %vm2517, %v2476, 0
    %v2594 = vsel %vm2517, %v2477, 0
    %v2597 = vsel %vm2517, %v2478, 0
    %v2600 = vsel %vm2517, %v2479, 0
    %v2603 = vsel %vm2517, %v2480, 0
    %v2606 = vsel %vm2517, %v2481, 0
    %v2609 = vsel %vm2517, %v2482, 0
    %v2612 = vsel %vm2517, %v2483, 0
    %v2615 = vsel %vm2517, %v2484, 0
    %v2618 = vsel %vm2517, %v2485, 0
    %v2621 = vsel %vm2517, %v2486, 0
    %v2624 = vsel %vm2517, %v2487, 0
    %v2627 = vsel %vm2517, %v2488, 0
    %v2630 = vsel %vm2517, %v2489, 0
    %v2633 = vsel %vm2517, %v2490, 0
    %v2636 = vsel %vm2517, %v2491, 0
    %v2639 = vsel %vm2517, %v2492, 0
    %v2642 = vsel %vm2517, %v2493, 0
    %v2645 = vsel %vm2517, %v2494, 0
    %v2648 = vsel %vm2517, %v2495, 0
    %v2651 = vsel %vm2517, %v2496, 0
    %v2654 = vsel %vm2517, %v2497, 0
    %v2657 = vsel %vm2517, %v2498, 0
    %v2660 = vsel %vm2517, %v2499, 0
    %v2663 = vsel %vm2517, %v2500, 0
    %v2666 = vsel %vm2517, %v2501, 0
    %v2669 = vsel %vm2517, %v2502, 0
    %v2672 = vsel %vm2517, %v2503, 0
    %v2675 = vsel %vm2517, %v2504, 0
    %v2678 = vsel %vm2517, %v2505, 0
    %v2681 = vsel %vm2517, %v2506, 0
    %v2684 = vsel %vm2517, %v2507, 0
    %v2687 = vsel %vm2517, %v2508, 0
    %v2690 = vsel %vm2517, %v2509, 0
    %v2693 = vsel %vm2517, %v2510, 0
    %v2696 = vsel %vm2517, %v2511, 0
    %v2699 = vsel %vm2517, %v2512, 0
    %v2702 = vsel %vm2517, %v2513, 0
    %v2705 = vsel %vm2517, %v2514, 0
    %v2708 = vsel %vm2517, %v2515, 0
    %v2711 = vsel %vm2517, %v2516, 0
    %vm2713 = vcmask 1040384
    %v2714 = vsel 0, 4294967295, 65535
    %v2715 = vsel %vm2713, %v2714, 0
    %v2717 = vand.u32 %v2193, %v2715
    %2719 = vmatprep.subr.bf16.mxu0 0
    %2720 = vmatpush1.bf16.msra.mxu0 %v2187
    %2721 = vmatprep.subr.bf16.mxu0 0
    %2722 = vmatpush1.bf16.msra.mxu0 %v2188
    %2723 = vmatprep.subr.bf16.mxu0 0
    %2724 = vmatpush1.bf16.msra.mxu0 %v2189
    %2725 = vmatprep.subr.bf16.mxu0 0
    %2726 = vmatpush1.bf16.msra.mxu0 %v2190
    %2727 = vmatprep.subr.bf16.mxu0 0
    %2728 = vmatpush1.bf16.msra.mxu0 %v2191
    %2729 = vmatprep.subr.bf16.mxu0 0
    %2730 = vmatpush1.bf16.msra.mxu0 %v2192
    %2731 = vmatprep.subr.bf16.mxu0 0
    %2732 = vmatpush1.bf16.msra.mxu0 %v2717
    %2733 = vmatprep.subr.bf16.mxu0 0
    %2734 = vmatpush1.bf16.msra.mxu0 0
    %2735 = vmatprep.subr.bf16.mxu0 0
    %2736 = vmatpush1.bf16.msra.mxu0 0
    %2737 = vmatprep.subr.bf16.mxu0 0
    %2738 = vmatpush1.bf16.msra.mxu0 0
    %2739 = vmatprep.subr.bf16.mxu0 0
    %2740 = vmatpush1.bf16.msra.mxu0 0
    %2741 = vmatprep.subr.bf16.mxu0 0
    %2742 = vmatpush1.bf16.msra.mxu0 0
    %2743 = vmatprep.subr.bf16.mxu0 0
    %2744 = vmatpush1.bf16.msra.mxu0 0
    %2745 = vmatprep.subr.bf16.mxu0 0
    %2746 = vmatpush1.bf16.msra.mxu0 0
    %2747 = vmatprep.subr.bf16.mxu0 0
    %2748 = vmatpush1.bf16.msra.mxu0 0
    %2749 = vmatprep.subr.bf16.mxu0 0
    %2750 = vmatpush1.bf16.msra.mxu0 0
    %2751 = vmatprep.mubr.bf16.mxu0 0
    %2752 = vmatmul.mubr.bf16.gmra.mrb[0].mxu0 %v2519
    %v2753 = vpop.f32.mrb[0].mxu0
    %v2754 = vadd.f32 0.0, %v2753
    %v2755 = vpop.f32.mrb[0].mxu0
    %v2756 = vpop.f32.mrb[0].mxu0
    %v2757 = vadd.f32 0.0, %v2756
    %v2758 = vpop.f32.mrb[0].mxu0
    %2759 = vmatprep.mubr.bf16.mxu0 0
    %2760 = vmatmul.mubr.bf16.gmra.mrb[0].mxu0 %v2522
    %v2761 = vpop.f32.mrb[0].mxu0
    %v2762 = vadd.f32 0.0, %v2761
    %v2763 = vpop.f32.mrb[0].mxu0
    %v2764 = vpop.f32.mrb[0].mxu0
    %v2765 = vadd.f32 0.0, %v2764
    %v2766 = vpop.f32.mrb[0].mxu0
    %2767 = vmatprep.mubr.bf16.mxu0 0
    %2768 = vmatmul.mubr.bf16.gmra.mrb[0].mxu0 %v2525
    %v2769 = vpop.f32.mrb[0].mxu0
    %v2770 = vadd.f32 0.0, %v2769
    %v2771 = vpop.f32.mrb[0].mxu0
    %v2772 = vpop.f32.mrb[0].mxu0
    %v2773 = vadd.f32 0.0, %v2772
    %v2774 = vpop.f32.mrb[0].mxu0
    %2775 = vmatprep.mubr.bf16.mxu0 0
    %2776 = vmatmul.mubr.bf16.gmra.mrb[0].mxu0 %v2528
    %v2777 = vpop.f32.mrb[0].mxu0
    %v2778 = vadd.f32 0.0, %v2777
    %v2779 = vpop.f32.mrb[0].mxu0
    %v2780 = vpop.f32.mrb[0].mxu0
    %v2781 = vadd.f32 0.0, %v2780
    %v2782 = vpop.f32.mrb[0].mxu0
    %2783 = vmatprep.mubr.bf16.mxu0 0
    %2784 = vmatmul.mubr.bf16.gmra.mrb[0].mxu0 %v2531
    %v2785 = vpop.f32.mrb[0].mxu0
    %v2786 = vadd.f32 0.0, %v2785
    %v2787 = vpop.f32.mrb[0].mxu0
    %v2788 = vpop.f32.mrb[0].mxu0
    %v2789 = vadd.f32 0.0, %v2788
    %v2790 = vpop.f32.mrb[0].mxu0
    %2791 = vmatprep.mubr.bf16.mxu0 0
    %2792 = vmatmul.mubr.bf16.gmra.mrb[0].mxu0 %v2534
    %v2793 = vpop.f32.mrb[0].mxu0
    %v2794 = vadd.f32 0.0, %v2793
    %v2795 = vpop.f32.mrb[0].mxu0
    %v2796 = vpop.f32.mrb[0].mxu0
    %v2797 = vadd.f32 0.0, %v2796
    %v2798 = vpop.f32.mrb[0].mxu0
    %2799 = vmatprep.mubr.bf16.mxu0 0
    %2800 = vmatmul.mubr.bf16.gmra.mrb[0].mxu0 %v2537
    %v2801 = vpop.f32.mrb[0].mxu0
    %v2802 = vadd.f32 0.0, %v2801
    %v2803 = vpop.f32.mrb[0].mxu0
    %v2804 = vpop.f32.mrb[0].mxu0
    %v2805 = vadd.f32 0.0, %v2804
    %v2806 = vpop.f32.mrb[0].mxu0
    %2807 = vmatprep.mubr.bf16.mxu0 0
    %2808 = vmatmul.mubr.bf16.gmra.mrb[0].mxu0 %v2540
    %v2809 = vpop.f32.mrb[0].mxu0
    %v2810 = vadd.f32 0.0, %v2809
    %v2811 = vpop.f32.mrb[0].mxu0
    %v2812 = vpop.f32.mrb[0].mxu0
    %v2813 = vadd.f32 0.0, %v2812
    %v2814 = vpop.f32.mrb[0].mxu0
    %2815 = vmatprep.mubr.bf16.mxu0 0
    %2816 = vmatmul.mubr.bf16.gmra.mrb[0].mxu0 %v2543
    %v2817 = vpop.f32.mrb[0].mxu0
    %v2818 = vadd.f32 0.0, %v2817
    %v2819 = vpop.f32.mrb[0].mxu0
    %v2820 = vpop.f32.mrb[0].mxu0
    %v2821 = vadd.f32 0.0, %v2820
    %v2822 = vpop.f32.mrb[0].mxu0
    %2823 = vmatprep.mubr.bf16.mxu0 0
    %2824 = vmatmul.mubr.bf16.gmra.mrb[0].mxu0 %v2546
    %v2825 = vpop.f32.mrb[0].mxu0
    %v2826 = vadd.f32 0.0, %v2825
    %v2827 = vpop.f32.mrb[0].mxu0
    %v2828 = vpop.f32.mrb[0].mxu0
    %v2829 = vadd.f32 0.0, %v2828
    %v2830 = vpop.f32.mrb[0].mxu0
    %2831 = vmatprep.mubr.bf16.mxu0 0
    %2832 = vmatmul.mubr.bf16.gmra.mrb[0].mxu0 %v2549
    %v2833 = vpop.f32.mrb[0].mxu0
    %v2834 = vadd.f32 0.0, %v2833
    %v2835 = vpop.f32.mrb[0].mxu0
    %v2836 = vpop.f32.mrb[0].mxu0
    %v2837 = vadd.f32 0.0, %v2836
    %v2838 = vpop.f32.mrb[0].mxu0
    %2839 = vmatprep.mubr.bf16.mxu0 0
    %2840 = vmatmul.mubr.bf16.gmra.mrb[0].mxu0 %v2552
    %v2841 = vpop.f32.mrb[0].mxu0
    %v2842 = vadd.f32 0.0, %v2841
    %v2843 = vpop.f32.mrb[0].mxu0
    %v2844 = vpop.f32.mrb[0].mxu0
    %v2845 = vadd.f32 0.0, %v2844
    %v2846 = vpop.f32.mrb[0].mxu0
    %2847 = vmatprep.mubr.bf16.mxu0 0
    %2848 = vmatmul.mubr.bf16.gmra.mrb[0].mxu0 %v2555
    %v2849 = vpop.f32.mrb[0].mxu0
    %v2850 = vadd.f32 0.0, %v2849
    %v2851 = vpop.f32.mrb[0].mxu0
    %v2852 = vpop.f32.mrb[0].mxu0
    %v2853 = vadd.f32 0.0, %v2852
    %v2854 = vpop.f32.mrb[0].mxu0
    %2855 = vmatprep.mubr.bf16.mxu0 0
    %2856 = vmatmul.mubr.bf16.gmra.mrb[0].mxu0 %v2558
    %v2857 = vpop.f32.mrb[0].mxu0
    %v2858 = vadd.f32 0.0, %v2857
    %v2859 = vpop.f32.mrb[0].mxu0
    %v2860 = vpop.f32.mrb[0].mxu0
    %v2861 = vadd.f32 0.0, %v2860
    %v2862 = vpop.f32.mrb[0].mxu0
    %2863 = vmatprep.mubr.bf16.mxu0 0
    %2864 = vmatmul.mubr.bf16.gmra.mrb[0].mxu0 %v2561
    %v2865 = vpop.f32.mrb[0].mxu0
    %v2866 = vadd.f32 0.0, %v2865
    %v2867 = vpop.f32.mrb[0].mxu0
    %v2868 = vpop.f32.mrb[0].mxu0
    %v2869 = vadd.f32 0.0, %v2868
    %v2870 = vpop.f32.mrb[0].mxu0
    %2871 = vmatprep.mubr.bf16.mxu0 0
    %2872 = vmatmul.mubr.bf16.gmra.mrb[0].mxu0 %v2564
    %v2873 = vpop.f32.mrb[0].mxu0
    %v2874 = vadd.f32 0.0, %v2873
    %v2875 = vpop.f32.mrb[0].mxu0
    %v2876 = vpop.f32.mrb[0].mxu0
    %v2877 = vadd.f32 0.0, %v2876
    %v2878 = vpop.f32.mrb[0].mxu0
    %2879 = vmatprep.mubr.bf16.mxu0 0
    %2880 = vmatmul.mubr.bf16.gmra.mrb[0].mxu0 %v2567
    %v2881 = vpop.f32.mrb[0].mxu0
    %v2882 = vadd.f32 0.0, %v2881
    %v2883 = vpop.f32.mrb[0].mxu0
    %v2884 = vpop.f32.mrb[0].mxu0
    %v2885 = vadd.f32 0.0, %v2884
    %v2886 = vpop.f32.mrb[0].mxu0
    %2887 = vmatprep.mubr.bf16.mxu0 0
    %2888 = vmatmul.mubr.bf16.gmra.mrb[0].mxu0 %v2570
    %v2889 = vpop.f32.mrb[0].mxu0
    %v2890 = vadd.f32 0.0, %v2889
    %v2891 = vpop.f32.mrb[0].mxu0
    %v2892 = vpop.f32.mrb[0].mxu0
    %v2893 = vadd.f32 0.0, %v2892
    %v2894 = vpop.f32.mrb[0].mxu0
    %2895 = vmatprep.mubr.bf16.mxu0 0
    %2896 = vmatmul.mubr.bf16.gmra.mrb[0].mxu0 %v2573
    %v2897 = vpop.f32.mrb[0].mxu0
    %v2898 = vadd.f32 0.0, %v2897
    %v2899 = vpop.f32.mrb[0].mxu0
    %v2900 = vpop.f32.mrb[0].mxu0
    %v2901 = vadd.f32 0.0, %v2900
    %v2902 = vpop.f32.mrb[0].mxu0
    %2903 = vmatprep.mubr.bf16.mxu0 0
    %2904 = vmatmul.mubr.bf16.gmra.mrb[0].mxu0 %v2576
    %v2905 = vpop.f32.mrb[0].mxu0
    %v2906 = vadd.f32 0.0, %v2905
    %v2907 = vpop.f32.mrb[0].mxu0
    %v2908 = vpop.f32.mrb[0].mxu0
    %v2909 = vadd.f32 0.0, %v2908
    %v2910 = vpop.f32.mrb[0].mxu0
    %2911 = vmatprep.mubr.bf16.mxu0 0
    %2912 = vmatmul.mubr.bf16.gmra.mrb[0].mxu0 %v2579
    %v2913 = vpop.f32.mrb[0].mxu0
    %v2914 = vadd.f32 0.0, %v2913
    %v2915 = vpop.f32.mrb[0].mxu0
    %v2916 = vpop.f32.mrb[0].mxu0
    %v2917 = vadd.f32 0.0, %v2916
    %v2918 = vpop.f32.mrb[0].mxu0
    %2919 = vmatprep.mubr.bf16.mxu0 0
    %2920 = vmatmul.mubr.bf16.gmra.mrb[0].mxu0 %v2582
    %v2921 = vpop.f32.mrb[0].mxu0
    %v2922 = vadd.f32 0.0, %v2921
    %v2923 = vpop.f32.mrb[0].mxu0
    %v2924 = vpop.f32.mrb[0].mxu0
    %v2925 = vadd.f32 0.0, %v2924
    %v2926 = vpop.f32.mrb[0].mxu0
    %2927 = vmatprep.mubr.bf16.mxu0 0
    %2928 = vmatmul.mubr.bf16.gmra.mrb[0].mxu0 %v2585
    %v2929 = vpop.f32.mrb[0].mxu0
    %v2930 = vadd.f32 0.0, %v2929
    %v2931 = vpop.f32.mrb[0].mxu0
    %v2932 = vpop.f32.mrb[0].mxu0
    %v2933 = vadd.f32 0.0, %v2932
    %v2934 = vpop.f32.mrb[0].mxu0
    %2935 = vmatprep.mubr.bf16.mxu0 0
    %2936 = vmatmul.mubr.bf16.gmra.mrb[0].mxu0 %v2588
    %v2937 = vpop.f32.mrb[0].mxu0
    %v2938 = vadd.f32 0.0, %v2937
    %v2939 = vpop.f32.mrb[0].mxu0
    %v2940 = vpop.f32.mrb[0].mxu0
    %v2941 = vadd.f32 0.0, %v2940
    %v2942 = vpop.f32.mrb[0].mxu0
    %2943 = vmatprep.mubr.bf16.mxu0 0
    %2944 = vmatmul.mubr.bf16.gmra.mrb[0].mxu0 %v2591
    %v2945 = vpop.f32.mrb[0].mxu0
    %v2946 = vadd.f32 0.0, %v2945
    %v2947 = vpop.f32.mrb[0].mxu0
    %v2948 = vpop.f32.mrb[0].mxu0
    %v2949 = vadd.f32 0.0, %v2948
    %v2950 = vpop.f32.mrb[0].mxu0
    %2951 = vmatprep.mubr.bf16.mxu0 0
    %2952 = vmatmul.mubr.bf16.gmra.mrb[0].mxu0 %v2594
    %v2953 = vpop.f32.mrb[0].mxu0
    %v2954 = vadd.f32 0.0, %v2953
    %v2955 = vpop.f32.mrb[0].mxu0
    %v2956 = vpop.f32.mrb[0].mxu0
    %v2957 = vadd.f32 0.0, %v2956
    %v2958 = vpop.f32.mrb[0].mxu0
    %2959 = vmatprep.mubr.bf16.mxu0 0
    %2960 = vmatmul.mubr.bf16.gmra.mrb[0].mxu0 %v2597
    %v2961 = vpop.f32.mrb[0].mxu0
    %v2962 = vadd.f32 0.0, %v2961
    %v2963 = vpop.f32.mrb[0].mxu0
    %v2964 = vpop.f32.mrb[0].mxu0
    %v2965 = vadd.f32 0.0, %v2964
    %v2966 = vpop.f32.mrb[0].mxu0
    %2967 = vmatprep.mubr.bf16.mxu0 0
    %2968 = vmatmul.mubr.bf16.gmra.mrb[0].mxu0 %v2600
    %v2969 = vpop.f32.mrb[0].mxu0
    %v2970 = vadd.f32 0.0, %v2969
    %v2971 = vpop.f32.mrb[0].mxu0
    %v2972 = vpop.f32.mrb[0].mxu0
    %v2973 = vadd.f32 0.0, %v2972
    %v2974 = vpop.f32.mrb[0].mxu0
    %2975 = vmatprep.mubr.bf16.mxu0 0
    %2976 = vmatmul.mubr.bf16.gmra.mrb[0].mxu0 %v2603
    %v2977 = vpop.f32.mrb[0].mxu0
    %v2978 = vadd.f32 0.0, %v2977
    %v2979 = vpop.f32.mrb[0].mxu0
    %v2980 = vpop.f32.mrb[0].mxu0
    %v2981 = vadd.f32 0.0, %v2980
    %v2982 = vpop.f32.mrb[0].mxu0
    %2983 = vmatprep.mubr.bf16.mxu0 0
    %2984 = vmatmul.mubr.bf16.gmra.mrb[0].mxu0 %v2606
    %v2985 = vpop.f32.mrb[0].mxu0
    %v2986 = vadd.f32 0.0, %v2985
    %v2987 = vpop.f32.mrb[0].mxu0
    %v2988 = vpop.f32.mrb[0].mxu0
    %v2989 = vadd.f32 0.0, %v2988
    %v2990 = vpop.f32.mrb[0].mxu0
    %2991 = vmatprep.mubr.bf16.mxu0 0
    %2992 = vmatmul.mubr.bf16.gmra.mrb[0].mxu0 %v2609
    %v2993 = vpop.f32.mrb[0].mxu0
    %v2994 = vadd.f32 0.0, %v2993
    %v2995 = vpop.f32.mrb[0].mxu0
    %v2996 = vpop.f32.mrb[0].mxu0
    %v2997 = vadd.f32 0.0, %v2996
    %v2998 = vpop.f32.mrb[0].mxu0
    %2999 = vmatprep.mubr.bf16.mxu0 0
    %3000 = vmatmul.mubr.bf16.gmra.mrb[0].mxu0 %v2612
    %v3001 = vpop.f32.mrb[0].mxu0
    %v3002 = vadd.f32 0.0, %v3001
    %v3003 = vpop.f32.mrb[0].mxu0
    %v3004 = vpop.f32.mrb[0].mxu0
    %v3005 = vadd.f32 0.0, %v3004
    %v3006 = vpop.f32.mrb[0].mxu0
    %3007 = vmatprep.mubr.bf16.mxu0 0
    %3008 = vmatmul.mubr.bf16.gmra.mrb[0].mxu0 %v2615
    %v3009 = vpop.f32.mrb[0].mxu0
    %v3010 = vadd.f32 0.0, %v3009
    %v3011 = vpop.f32.mrb[0].mxu0
    %v3012 = vpop.f32.mrb[0].mxu0
    %v3013 = vadd.f32 0.0, %v3012
    %v3014 = vpop.f32.mrb[0].mxu0
    %3015 = vmatprep.mubr.bf16.mxu0 0
    %3016 = vmatmul.mubr.bf16.gmra.mrb[0].mxu0 %v2618
    %v3017 = vpop.f32.mrb[0].mxu0
    %v3018 = vadd.f32 0.0, %v3017
    %v3019 = vpop.f32.mrb[0].mxu0
    %v3020 = vpop.f32.mrb[0].mxu0
    %v3021 = vadd.f32 0.0, %v3020
    %v3022 = vpop.f32.mrb[0].mxu0
    %3023 = vmatprep.mubr.bf16.mxu0 0
    %3024 = vmatmul.mubr.bf16.gmra.mrb[0].mxu0 %v2621
    %v3025 = vpop.f32.mrb[0].mxu0
    %v3026 = vadd.f32 0.0, %v3025
    %v3027 = vpop.f32.mrb[0].mxu0
    %v3028 = vpop.f32.mrb[0].mxu0
    %v3029 = vadd.f32 0.0, %v3028
    %v3030 = vpop.f32.mrb[0].mxu0
    %3031 = vmatprep.mubr.bf16.mxu0 0
    %3032 = vmatmul.mubr.bf16.gmra.mrb[0].mxu0 %v2624
    %v3033 = vpop.f32.mrb[0].mxu0
    %v3034 = vadd.f32 0.0, %v3033
    %v3035 = vpop.f32.mrb[0].mxu0
    %v3036 = vpop.f32.mrb[0].mxu0
    %v3037 = vadd.f32 0.0, %v3036
    %v3038 = vpop.f32.mrb[0].mxu0
    %3039 = vmatprep.mubr.bf16.mxu0 0
    %3040 = vmatmul.mubr.bf16.gmra.mrb[0].mxu0 %v2627
    %v3041 = vpop.f32.mrb[0].mxu0
    %v3042 = vadd.f32 0.0, %v3041
    %v3043 = vpop.f32.mrb[0].mxu0
    %v3044 = vpop.f32.mrb[0].mxu0
    %v3045 = vadd.f32 0.0, %v3044
    %v3046 = vpop.f32.mrb[0].mxu0
    %3047 = vmatprep.mubr.bf16.mxu0 0
    %3048 = vmatmul.mubr.bf16.gmra.mrb[0].mxu0 %v2630
    %v3049 = vpop.f32.mrb[0].mxu0
    %v3050 = vadd.f32 0.0, %v3049
    %v3051 = vpop.f32.mrb[0].mxu0
    %v3052 = vpop.f32.mrb[0].mxu0
    %v3053 = vadd.f32 0.0, %v3052
    %v3054 = vpop.f32.mrb[0].mxu0
    %3055 = vmatprep.mubr.bf16.mxu0 0
    %3056 = vmatmul.mubr.bf16.gmra.mrb[0].mxu0 %v2633
    %v3057 = vpop.f32.mrb[0].mxu0
    %v3058 = vadd.f32 0.0, %v3057
    %v3059 = vpop.f32.mrb[0].mxu0
    %v3060 = vpop.f32.mrb[0].mxu0
    %v3061 = vadd.f32 0.0, %v3060
    %v3062 = vpop.f32.mrb[0].mxu0
    %3063 = vmatprep.mubr.bf16.mxu0 0
    %3064 = vmatmul.mubr.bf16.gmra.mrb[0].mxu0 %v2636
    %v3065 = vpop.f32.mrb[0].mxu0
    %v3066 = vadd.f32 0.0, %v3065
    %v3067 = vpop.f32.mrb[0].mxu0
    %v3068 = vpop.f32.mrb[0].mxu0
    %v3069 = vadd.f32 0.0, %v3068
    %v3070 = vpop.f32.mrb[0].mxu0
    %3071 = vmatprep.mubr.bf16.mxu0 0
    %3072 = vmatmul.mubr.bf16.gmra.mrb[0].mxu0 %v2639
    %v3073 = vpop.f32.mrb[0].mxu0
    %v3074 = vadd.f32 0.0, %v3073
    %v3075 = vpop.f32.mrb[0].mxu0
    %v3076 = vpop.f32.mrb[0].mxu0
    %v3077 = vadd.f32 0.0, %v3076
    %v3078 = vpop.f32.mrb[0].mxu0
    %3079 = vmatprep.mubr.bf16.mxu0 0
    %3080 = vmatmul.mubr.bf16.gmra.mrb[0].mxu0 %v2642
    %v3081 = vpop.f32.mrb[0].mxu0
    %v3082 = vadd.f32 0.0, %v3081
    %v3083 = vpop.f32.mrb[0].mxu0
    %v3084 = vpop.f32.mrb[0].mxu0
    %v3085 = vadd.f32 0.0, %v3084
    %v3086 = vpop.f32.mrb[0].mxu0
    %3087 = vmatprep.mubr.bf16.mxu0 0
    %3088 = vmatmul.mubr.bf16.gmra.mrb[0].mxu0 %v2645
    %v3089 = vpop.f32.mrb[0].mxu0
    %v3090 = vadd.f32 0.0, %v3089
    %v3091 = vpop.f32.mrb[0].mxu0
    %v3092 = vpop.f32.mrb[0].mxu0
    %v3093 = vadd.f32 0.0, %v3092
    %v3094 = vpop.f32.mrb[0].mxu0
    %3095 = vmatprep.mubr.bf16.mxu0 0
    %3096 = vmatmul.mubr.bf16.gmra.mrb[0].mxu0 %v2648
    %v3097 = vpop.f32.mrb[0].mxu0
    %v3098 = vadd.f32 0.0, %v3097
    %v3099 = vpop.f32.mrb[0].mxu0
    %v3100 = vpop.f32.mrb[0].mxu0
    %v3101 = vadd.f32 0.0, %v3100
    %v3102 = vpop.f32.mrb[0].mxu0
    %3103 = vmatprep.mubr.bf16.mxu0 0
    %3104 = vmatmul.mubr.bf16.gmra.mrb[0].mxu0 %v2651
    %v3105 = vpop.f32.mrb[0].mxu0
    %v3106 = vadd.f32 0.0, %v3105
    %v3107 = vpop.f32.mrb[0].mxu0
    %v3108 = vpop.f32.mrb[0].mxu0
    %v3109 = vadd.f32 0.0, %v3108
    %v3110 = vpop.f32.mrb[0].mxu0
    %3111 = vmatprep.mubr.bf16.mxu0 0
    %3112 = vmatmul.mubr.bf16.gmra.mrb[0].mxu0 %v2654
    %v3113 = vpop.f32.mrb[0].mxu0
    %v3114 = vadd.f32 0.0, %v3113
    %v3115 = vpop.f32.mrb[0].mxu0
    %v3116 = vpop.f32.mrb[0].mxu0
    %v3117 = vadd.f32 0.0, %v3116
    %v3118 = vpop.f32.mrb[0].mxu0
    %3119 = vmatprep.mubr.bf16.mxu0 0
    %3120 = vmatmul.mubr.bf16.gmra.mrb[0].mxu0 %v2657
    %v3121 = vpop.f32.mrb[0].mxu0
    %v3122 = vadd.f32 0.0, %v3121
    %v3123 = vpop.f32.mrb[0].mxu0
    %v3124 = vpop.f32.mrb[0].mxu0
    %v3125 = vadd.f32 0.0, %v3124
    %v3126 = vpop.f32.mrb[0].mxu0
    %3127 = vmatprep.mubr.bf16.mxu0 0
    %3128 = vmatmul.mubr.bf16.gmra.mrb[0].mxu0 %v2660
    %v3129 = vpop.f32.mrb[0].mxu0
    %v3130 = vadd.f32 0.0, %v3129
    %v3131 = vpop.f32.mrb[0].mxu0
    %v3132 = vpop.f32.mrb[0].mxu0
    %v3133 = vadd.f32 0.0, %v3132
    %v3134 = vpop.f32.mrb[0].mxu0
    %3135 = vmatprep.mubr.bf16.mxu0 0
    %3136 = vmatmul.mubr.bf16.gmra.mrb[0].mxu0 %v2663
    %v3137 = vpop.f32.mrb[0].mxu0
    %v3138 = vadd.f32 0.0, %v3137
    %v3139 = vpop.f32.mrb[0].mxu0
    %v3140 = vpop.f32.mrb[0].mxu0
    %v3141 = vadd.f32 0.0, %v3140
    %v3142 = vpop.f32.mrb[0].mxu0
    %3143 = vmatprep.mubr.bf16.mxu0 0
    %3144 = vmatmul.mubr.bf16.gmra.mrb[0].mxu0 %v2666
    %v3145 = vpop.f32.mrb[0].mxu0
    %v3146 = vadd.f32 0.0, %v3145
    %v3147 = vpop.f32.mrb[0].mxu0
    %v3148 = vpop.f32.mrb[0].mxu0
    %v3149 = vadd.f32 0.0, %v3148
    %v3150 = vpop.f32.mrb[0].mxu0
    %3151 = vmatprep.mubr.bf16.mxu0 0
    %3152 = vmatmul.mubr.bf16.gmra.mrb[0].mxu0 %v2669
    %v3153 = vpop.f32.mrb[0].mxu0
    %v3154 = vadd.f32 0.0, %v3153
    %v3155 = vpop.f32.mrb[0].mxu0
    %v3156 = vpop.f32.mrb[0].mxu0
    %v3157 = vadd.f32 0.0, %v3156
    %v3158 = vpop.f32.mrb[0].mxu0
    %3159 = vmatprep.mubr.bf16.mxu0 0
    %3160 = vmatmul.mubr.bf16.gmra.mrb[0].mxu0 %v2672
    %v3161 = vpop.f32.mrb[0].mxu0
    %v3162 = vadd.f32 0.0, %v3161
    %v3163 = vpop.f32.mrb[0].mxu0
    %v3164 = vpop.f32.mrb[0].mxu0
    %v3165 = vadd.f32 0.0, %v3164
    %v3166 = vpop.f32.mrb[0].mxu0
    %3167 = vmatprep.mubr.bf16.mxu0 0
    %3168 = vmatmul.mubr.bf16.gmra.mrb[0].mxu0 %v2675
    %v3169 = vpop.f32.mrb[0].mxu0
    %v3170 = vadd.f32 0.0, %v3169
    %v3171 = vpop.f32.mrb[0].mxu0
    %v3172 = vpop.f32.mrb[0].mxu0
    %v3173 = vadd.f32 0.0, %v3172
    %v3174 = vpop.f32.mrb[0].mxu0
    %3175 = vmatprep.mubr.bf16.mxu0 0
    %3176 = vmatmul.mubr.bf16.gmra.mrb[0].mxu0 %v2678
    %v3177 = vpop.f32.mrb[0].mxu0
    %v3178 = vadd.f32 0.0, %v3177
    %v3179 = vpop.f32.mrb[0].mxu0
    %v3180 = vpop.f32.mrb[0].mxu0
    %v3181 = vadd.f32 0.0, %v3180
    %v3182 = vpop.f32.mrb[0].mxu0
    %3183 = vmatprep.mubr.bf16.mxu0 0
    %3184 = vmatmul.mubr.bf16.gmra.mrb[0].mxu0 %v2681
    %v3185 = vpop.f32.mrb[0].mxu0
    %v3186 = vadd.f32 0.0, %v3185
    %v3187 = vpop.f32.mrb[0].mxu0
    %v3188 = vpop.f32.mrb[0].mxu0
    %v3189 = vadd.f32 0.0, %v3188
    %v3190 = vpop.f32.mrb[0].mxu0
    %3191 = vmatprep.mubr.bf16.mxu0 0
    %3192 = vmatmul.mubr.bf16.gmra.mrb[0].mxu0 %v2684
    %v3193 = vpop.f32.mrb[0].mxu0
    %v3194 = vadd.f32 0.0, %v3193
    %v3195 = vpop.f32.mrb[0].mxu0
    %v3196 = vpop.f32.mrb[0].mxu0
    %v3197 = vadd.f32 0.0, %v3196
    %v3198 = vpop.f32.mrb[0].mxu0
    %3199 = vmatprep.mubr.bf16.mxu0 0
    %3200 = vmatmul.mubr.bf16.gmra.mrb[0].mxu0 %v2687
    %v3201 = vpop.f32.mrb[0].mxu0
    %v3202 = vadd.f32 0.0, %v3201
    %v3203 = vpop.f32.mrb[0].mxu0
    %v3204 = vpop.f32.mrb[0].mxu0
    %v3205 = vadd.f32 0.0, %v3204
    %v3206 = vpop.f32.mrb[0].mxu0
    %3207 = vmatprep.mubr.bf16.mxu0 0
    %3208 = vmatmul.mubr.bf16.gmra.mrb[0].mxu0 %v2690
    %v3209 = vpop.f32.mrb[0].mxu0
    %v3210 = vadd.f32 0.0, %v3209
    %v3211 = vpop.f32.mrb[0].mxu0
    %v3212 = vpop.f32.mrb[0].mxu0
    %v3213 = vadd.f32 0.0, %v3212
    %v3214 = vpop.f32.mrb[0].mxu0
    %3215 = vmatprep.mubr.bf16.mxu0 0
    %3216 = vmatmul.mubr.bf16.gmra.mrb[0].mxu0 %v2693
    %v3217 = vpop.f32.mrb[0].mxu0
    %v3218 = vadd.f32 0.0, %v3217
    %v3219 = vpop.f32.mrb[0].mxu0
    %v3220 = vpop.f32.mrb[0].mxu0
    %v3221 = vadd.f32 0.0, %v3220
    %v3222 = vpop.f32.mrb[0].mxu0
    %3223 = vmatprep.mubr.bf16.mxu0 0
    %3224 = vmatmul.mubr.bf16.gmra.mrb[0].mxu0 %v2696
    %v3225 = vpop.f32.mrb[0].mxu0
    %v3226 = vadd.f32 0.0, %v3225
    %v3227 = vpop.f32.mrb[0].mxu0
    %v3228 = vpop.f32.mrb[0].mxu0
    %v3229 = vadd.f32 0.0, %v3228
    %v3230 = vpop.f32.mrb[0].mxu0
    %3231 = vmatprep.mubr.bf16.mxu0 0
    %3232 = vmatmul.mubr.bf16.gmra.mrb[0].mxu0 %v2699
    %v3233 = vpop.f32.mrb[0].mxu0
    %v3234 = vadd.f32 0.0, %v3233
    %v3235 = vpop.f32.mrb[0].mxu0
    %v3236 = vpop.f32.mrb[0].mxu0
    %v3237 = vadd.f32 0.0, %v3236
    %v3238 = vpop.f32.mrb[0].mxu0
    %3239 = vmatprep.mubr.bf16.mxu0 0
    %3240 = vmatmul.mubr.bf16.gmra.mrb[0].mxu0 %v2702
    %v3241 = vpop.f32.mrb[0].mxu0
    %v3242 = vadd.f32 0.0, %v3241
    %v3243 = vpop.f32.mrb[0].mxu0
    %v3244 = vpop.f32.mrb[0].mxu0
    %v3245 = vadd.f32 0.0, %v3244
    %v3246 = vpop.f32.mrb[0].mxu0
    %3247 = vmatprep.mubr.bf16.mxu0 0
    %3248 = vmatmul.mubr.bf16.gmra.mrb[0].mxu0 %v2705
    %v3249 = vpop.f32.mrb[0].mxu0
    %v3250 = vadd.f32 0.0, %v3249
    %v3251 = vpop.f32.mrb[0].mxu0
    %v3252 = vpop.f32.mrb[0].mxu0
    %v3253 = vadd.f32 0.0, %v3252
    %v3254 = vpop.f32.mrb[0].mxu0
    %3255 = vmatprep.mubr.bf16.mxu0 0
    %3256 = vmatmul.mubr.bf16.gmra.mrb[0].mxu0 %v2708
    %v3257 = vpop.f32.mrb[0].mxu0
    %v3258 = vadd.f32 0.0, %v3257
    %v3259 = vpop.f32.mrb[0].mxu0
    %v3260 = vpop.f32.mrb[0].mxu0
    %v3261 = vadd.f32 0.0, %v3260
    %v3262 = vpop.f32.mrb[0].mxu0
    %3263 = vmatprep.mubr.bf16.mxu0 0
    %3264 = vmatmul.mubr.bf16.gmra.mrb[0].mxu0 %v2711
    %v3265 = vpop.f32.mrb[0].mxu0
    %v3266 = vadd.f32 0.0, %v3265
    %v3267 = vpop.f32.mrb[0].mxu0
    %v3268 = vpop.f32.mrb[0].mxu0
    %v3269 = vpop.f32.mrb[0].mxu0
    %3270 = vdwg.mxu0
    %v3271 = vmul.f32 %v2754, 0.2
    %v3272 = vmul.f32 %v2757, 0.2
    %v3273 = vmul.f32 %v2762, 0.2
    %v3274 = vmul.f32 %v2765, 0.2
    %v3275 = vmul.f32 %v2770, 0.2
    %v3276 = vmul.f32 %v2773, 0.2
    %v3277 = vmul.f32 %v2778, 0.2
    %v3278 = vmul.f32 %v2781, 0.2
    %v3279 = vmul.f32 %v2786, 0.2
    %v3280 = vmul.f32 %v2789, 0.2
    %v3281 = vmul.f32 %v2794, 0.2
    %v3282 = vmul.f32 %v2797, 0.2
    %v3283 = vmul.f32 %v2802, 0.2
    %v3284 = vmul.f32 %v2805, 0.2
    %v3285 = vmul.f32 %v2810, 0.2
    %v3286 = vmul.f32 %v2813, 0.2
    %v3287 = vmul.f32 %v2818, 0.2
    %v3288 = vmul.f32 %v2821, 0.2
    %v3289 = vmul.f32 %v2826, 0.2
    %v3290 = vmul.f32 %v2829, 0.2
    %v3291 = vmul.f32 %v2834, 0.2
    %v3292 = vmul.f32 %v2837, 0.2
    %v3293 = vmul.f32 %v2842, 0.2
    %v3294 = vmul.f32 %v2845, 0.2
    %v3295 = vmul.f32 %v2850, 0.2
    %v3296 = vmul.f32 %v2853, 0.2
    %v3297 = vmul.f32 %v2858, 0.2
    %v3298 = vmul.f32 %v2861, 0.2
    %v3299 = vmul.f32 %v2866, 0.2
    %v3300 = vmul.f32 %v2869, 0.2
    %v3301 = vmul.f32 %v2874, 0.2
    %v3302 = vmul.f32 %v2877, 0.2
    %v3303 = vmul.f32 %v2882, 0.2
    %v3304 = vmul.f32 %v2885, 0.2
    %v3305 = vmul.f32 %v2890, 0.2
    %v3306 = vmul.f32 %v2893, 0.2
    %v3307 = vmul.f32 %v2898, 0.2
    %v3308 = vmul.f32 %v2901, 0.2
    %v3309 = vmul.f32 %v2906, 0.2
    %v3310 = vmul.f32 %v2909, 0.2
    %v3311 = vmul.f32 %v2914, 0.2
    %v3312 = vmul.f32 %v2917, 0.2
    %v3313 = vmul.f32 %v2922, 0.2
    %v3314 = vmul.f32 %v2925, 0.2
    %v3315 = vmul.f32 %v2930, 0.2
    %v3316 = vmul.f32 %v2933, 0.2
    %v3317 = vmul.f32 %v2938, 0.2
    %v3318 = vmul.f32 %v2941, 0.2
    %v3319 = vmul.f32 %v2946, 0.2
    %v3320 = vmul.f32 %v2949, 0.2
    %v3321 = vmul.f32 %v2954, 0.2
    %v3322 = vmul.f32 %v2957, 0.2
    %v3323 = vmul.f32 %v2962, 0.2
    %v3324 = vmul.f32 %v2965, 0.2
    %v3325 = vmul.f32 %v2970, 0.2
    %v3326 = vmul.f32 %v2973, 0.2
    %v3327 = vmul.f32 %v2978, 0.2
    %v3328 = vmul.f32 %v2981, 0.2
    %v3329 = vmul.f32 %v2986, 0.2
    %v3330 = vmul.f32 %v2989, 0.2
    %v3331 = vmul.f32 %v2994, 0.2
    %v3332 = vmul.f32 %v2997, 0.2
    %v3333 = vmul.f32 %v3002, 0.2
    %v3334 = vmul.f32 %v3005, 0.2
    %v3335 = vmul.f32 %v3010, 0.2
    %v3336 = vmul.f32 %v3013, 0.2
    %v3337 = vmul.f32 %v3018, 0.2
    %v3338 = vmul.f32 %v3021, 0.2
    %v3339 = vmul.f32 %v3026, 0.2
    %v3340 = vmul.f32 %v3029, 0.2
    %v3341 = vmul.f32 %v3034, 0.2
    %v3342 = vmul.f32 %v3037, 0.2
    %v3343 = vmul.f32 %v3042, 0.2
    %v3344 = vmul.f32 %v3045, 0.2
    %v3345 = vmul.f32 %v3050, 0.2
    %v3346 = vmul.f32 %v3053, 0.2
    %v3347 = vmul.f32 %v3058, 0.2
    %v3348 = vmul.f32 %v3061, 0.2
    %v3349 = vmul.f32 %v3066, 0.2
    %v3350 = vmul.f32 %v3069, 0.2
    %v3351 = vmul.f32 %v3074, 0.2
    %v3352 = vmul.f32 %v3077, 0.2
    %v3353 = vmul.f32 %v3082, 0.2
    %v3354 = vmul.f32 %v3085, 0.2
    %v3355 = vmul.f32 %v3090, 0.2
    %v3356 = vmul.f32 %v3093, 0.2
    %v3357 = vmul.f32 %v3098, 0.2
    %v3358 = vmul.f32 %v3101, 0.2
    %v3359 = vmul.f32 %v3106, 0.2
    %v3360 = vmul.f32 %v3109, 0.2
    %v3361 = vmul.f32 %v3114, 0.2
    %v3362 = vmul.f32 %v3117, 0.2
    %v3363 = vmul.f32 %v3122, 0.2
    %v3364 = vmul.f32 %v3125, 0.2
    %v3365 = vmul.f32 %v3130, 0.2
    %v3366 = vmul.f32 %v3133, 0.2
    %v3367 = vmul.f32 %v3138, 0.2
    %v3368 = vmul.f32 %v3141, 0.2
    %v3369 = vmul.f32 %v3146, 0.2
    %v3370 = vmul.f32 %v3149, 0.2
    %v3371 = vmul.f32 %v3154, 0.2
    %v3372 = vmul.f32 %v3157, 0.2
    %v3373 = vmul.f32 %v3162, 0.2
    %v3374 = vmul.f32 %v3165, 0.2
    %v3375 = vmul.f32 %v3170, 0.2
    %v3376 = vmul.f32 %v3173, 0.2
    %v3377 = vmul.f32 %v3178, 0.2
    %v3378 = vmul.f32 %v3181, 0.2
    %v3379 = vmul.f32 %v3186, 0.2
    %v3380 = vmul.f32 %v3189, 0.2
    %v3381 = vmul.f32 %v3194, 0.2
    %v3382 = vmul.f32 %v3197, 0.2
    %v3383 = vmul.f32 %v3202, 0.2
    %v3384 = vmul.f32 %v3205, 0.2
    %v3385 = vmul.f32 %v3210, 0.2
    %v3386 = vmul.f32 %v3213, 0.2
    %v3387 = vmul.f32 %v3218, 0.2
    %v3388 = vmul.f32 %v3221, 0.2
    %v3389 = vmul.f32 %v3226, 0.2
    %v3390 = vmul.f32 %v3229, 0.2
    %v3391 = vmul.f32 %v3234, 0.2
    %v3392 = vmul.f32 %v3237, 0.2
    %v3393 = vmul.f32 %v3242, 0.2
    %v3394 = vmul.f32 %v3245, 0.2
    %v3395 = vmul.f32 %v3250, 0.2
    %v3396 = vmul.f32 %v3253, 0.2
    %v3397 = vmul.f32 %v3258, 0.2
    %v3398 = vmul.f32 %v3261, 0.2
    %v3399 = vmul.f32 %v3266, 0.2
    %v3400 = vmax.f32 %v2754, %v3271
    %v3401 = vmax.f32 %v2757, %v3272
    %v3402 = vmax.f32 %v2762, %v3273
    %v3403 = vmax.f32 %v2765, %v3274
    %v3404 = vmax.f32 %v2770, %v3275
    %v3405 = vmax.f32 %v2773, %v3276
    %v3406 = vmax.f32 %v2778, %v3277
    %v3407 = vmax.f32 %v2781, %v3278
    %v3408 = vmax.f32 %v2786, %v3279
    %v3409 = vmax.f32 %v2789, %v3280
    %v3410 = vmax.f32 %v2794, %v3281
    %v3411 = vmax.f32 %v2797, %v3282
    %v3412 = vmax.f32 %v2802, %v3283
    %v3413 = vmax.f32 %v2805, %v3284
    %v3414 = vmax.f32 %v2810, %v3285
    %v3415 = vmax.f32 %v2813, %v3286
    %v3416 = vmax.f32 %v2818, %v3287
    %v3417 = vmax.f32 %v2821, %v3288
    %v3418 = vmax.f32 %v2826, %v3289
    %v3419 = vmax.f32 %v2829, %v3290
    %v3420 = vmax.f32 %v2834, %v3291
    %v3421 = vmax.f32 %v2837, %v3292
    %v3422 = vmax.f32 %v2842, %v3293
    %v3423 = vmax.f32 %v2845, %v3294
    %v3424 = vmax.f32 %v2850, %v3295
    %v3425 = vmax.f32 %v2853, %v3296
    %v3426 = vmax.f32 %v2858, %v3297
    %v3427 = vmax.f32 %v2861, %v3298
    %v3428 = vmax.f32 %v2866, %v3299
    %v3429 = vmax.f32 %v2869, %v3300
    %v3430 = vmax.f32 %v2874, %v3301
    %v3431 = vmax.f32 %v2877, %v3302
    %v3432 = vmax.f32 %v2882, %v3303
    %v3433 = vmax.f32 %v2885, %v3304
    %v3434 = vmax.f32 %v2890, %v3305
    %v3435 = vmax.f32 %v2893, %v3306
    %v3436 = vmax.f32 %v2898, %v3307
    %v3437 = vmax.f32 %v2901, %v3308
    %v3438 = vmax.f32 %v2906, %v3309
    %v3439 = vmax.f32 %v2909, %v3310
    %v3440 = vmax.f32 %v2914, %v3311
    %v3441 = vmax.f32 %v2917, %v3312
    %v3442 = vmax.f32 %v2922, %v3313
    %v3443 = vmax.f32 %v2925, %v3314
    %v3444 = vmax.f32 %v2930, %v3315
    %v3445 = vmax.f32 %v2933, %v3316
    %v3446 = vmax.f32 %v2938, %v3317
    %v3447 = vmax.f32 %v2941, %v3318
    %v3448 = vmax.f32 %v2946, %v3319
    %v3449 = vmax.f32 %v2949, %v3320
    %v3450 = vmax.f32 %v2954, %v3321
    %v3451 = vmax.f32 %v2957, %v3322
    %v3452 = vmax.f32 %v2962, %v3323
    %v3453 = vmax.f32 %v2965, %v3324
    %v3454 = vmax.f32 %v2970, %v3325
    %v3455 = vmax.f32 %v2973, %v3326
    %v3456 = vmax.f32 %v2978, %v3327
    %v3457 = vmax.f32 %v2981, %v3328
    %v3458 = vmax.f32 %v2986, %v3329
    %v3459 = vmax.f32 %v2989, %v3330
    %v3460 = vmax.f32 %v2994, %v3331
    %v3461 = vmax.f32 %v2997, %v3332
    %v3462 = vmax.f32 %v3002, %v3333
    %v3463 = vmax.f32 %v3005, %v3334
    %v3464 = vmax.f32 %v3010, %v3335
    %v3465 = vmax.f32 %v3013, %v3336
    %v3466 = vmax.f32 %v3018, %v3337
    %v3467 = vmax.f32 %v3021, %v3338
    %v3468 = vmax.f32 %v3026, %v3339
    %v3469 = vmax.f32 %v3029, %v3340
    %v3470 = vmax.f32 %v3034, %v3341
    %v3471 = vmax.f32 %v3037, %v3342
    %v3472 = vmax.f32 %v3042, %v3343
    %v3473 = vmax.f32 %v3045, %v3344
    %v3474 = vmax.f32 %v3050, %v3345
    %v3475 = vmax.f32 %v3053, %v3346
    %v3476 = vmax.f32 %v3058, %v3347
    %v3477 = vmax.f32 %v3061, %v3348
    %v3478 = vmax.f32 %v3066, %v3349
    %v3479 = vmax.f32 %v3069, %v3350
    %v3480 = vmax.f32 %v3074, %v3351
    %v3481 = vmax.f32 %v3077, %v3352
    %v3482 = vmax.f32 %v3082, %v3353
    %v3483 = vmax.f32 %v3085, %v3354
    %v3484 = vmax.f32 %v3090, %v3355
    %v3485 = vmax.f32 %v3093, %v3356
    %v3486 = vmax.f32 %v3098, %v3357
    %v3487 = vmax.f32 %v3101, %v3358
    %v3488 = vmax.f32 %v3106, %v3359
    %v3489 = vmax.f32 %v3109, %v3360
    %v3490 = vmax.f32 %v3114, %v3361
    %v3491 = vmax.f32 %v3117, %v3362
    %v3492 = vmax.f32 %v3122, %v3363
    %v3493 = vmax.f32 %v3125, %v3364
    %v3494 = vmax.f32 %v3130, %v3365
    %v3495 = vmax.f32 %v3133, %v3366
    %v3496 = vmax.f32 %v3138, %v3367
    %v3497 = vmax.f32 %v3141, %v3368
    %v3498 = vmax.f32 %v3146, %v3369
    %v3499 = vmax.f32 %v3149, %v3370
    %v3500 = vmax.f32 %v3154, %v3371
    %v3501 = vmax.f32 %v3157, %v3372
    %v3502 = vmax.f32 %v3162, %v3373
    %v3503 = vmax.f32 %v3165, %v3374
    %v3504 = vmax.f32 %v3170, %v3375
    %v3505 = vmax.f32 %v3173, %v3376
    %v3506 = vmax.f32 %v3178, %v3377
    %v3507 = vmax.f32 %v3181, %v3378
    %v3508 = vmax.f32 %v3186, %v3379
    %v3509 = vmax.f32 %v3189, %v3380
    %v3510 = vmax.f32 %v3194, %v3381
    %v3511 = vmax.f32 %v3197, %v3382
    %v3512 = vmax.f32 %v3202, %v3383
    %v3513 = vmax.f32 %v3205, %v3384
    %v3514 = vmax.f32 %v3210, %v3385
    %v3515 = vmax.f32 %v3213, %v3386
    %v3516 = vmax.f32 %v3218, %v3387
    %v3517 = vmax.f32 %v3221, %v3388
    %v3518 = vmax.f32 %v3226, %v3389
    %v3519 = vmax.f32 %v3229, %v3390
    %v3520 = vmax.f32 %v3234, %v3391
    %v3521 = vmax.f32 %v3237, %v3392
    %v3522 = vmax.f32 %v3242, %v3393
    %v3523 = vmax.f32 %v3245, %v3394
    %v3524 = vmax.f32 %v3250, %v3395
    %v3525 = vmax.f32 %v3253, %v3396
    %v3526 = vmax.f32 %v3258, %v3397
    %v3527 = vmax.f32 %v3261, %v3398
    %v3528 = vmax.f32 %v3266, %v3399
    %v3529 = vpack.c.bf16 %v3401, %v3400
    %v3530 = vpack.c.bf16 %v3403, %v3402
    %v3531 = vpack.c.bf16 %v3405, %v3404
    %v3532 = vpack.c.bf16 %v3407, %v3406
    %v3533 = vpack.c.bf16 %v3409, %v3408
    %v3534 = vpack.c.bf16 %v3411, %v3410
    %v3535 = vpack.c.bf16 %v3413, %v3412
    %v3536 = vpack.c.bf16 %v3415, %v3414
    %v3537 = vpack.c.bf16 %v3417, %v3416
    %v3538 = vpack.c.bf16 %v3419, %v3418
    %v3539 = vpack.c.bf16 %v3421, %v3420
    %v3540 = vpack.c.bf16 %v3423, %v3422
    %v3541 = vpack.c.bf16 %v3425, %v3424
    %v3542 = vpack.c.bf16 %v3427, %v3426
    %v3543 = vpack.c.bf16 %v3429, %v3428
    %v3544 = vpack.c.bf16 %v3431, %v3430
    %v3545 = vpack.c.bf16 %v3433, %v3432
    %v3546 = vpack.c.bf16 %v3435, %v3434
    %v3547 = vpack.c.bf16 %v3437, %v3436
    %v3548 = vpack.c.bf16 %v3439, %v3438
    %v3549 = vpack.c.bf16 %v3441, %v3440
    %v3550 = vpack.c.bf16 %v3443, %v3442
    %v3551 = vpack.c.bf16 %v3445, %v3444
    %v3552 = vpack.c.bf16 %v3447, %v3446
    %v3553 = vpack.c.bf16 %v3449, %v3448
    %v3554 = vpack.c.bf16 %v3451, %v3450
    %v3555 = vpack.c.bf16 %v3453, %v3452
    %v3556 = vpack.c.bf16 %v3455, %v3454
    %v3557 = vpack.c.bf16 %v3457, %v3456
    %v3558 = vpack.c.bf16 %v3459, %v3458
    %v3559 = vpack.c.bf16 %v3461, %v3460
    %v3560 = vpack.c.bf16 %v3463, %v3462
    %v3561 = vpack.c.bf16 %v3465, %v3464
    %v3562 = vpack.c.bf16 %v3467, %v3466
    %v3563 = vpack.c.bf16 %v3469, %v3468
    %v3564 = vpack.c.bf16 %v3471, %v3470
    %v3565 = vpack.c.bf16 %v3473, %v3472
    %v3566 = vpack.c.bf16 %v3475, %v3474
    %v3567 = vpack.c.bf16 %v3477, %v3476
    %v3568 = vpack.c.bf16 %v3479, %v3478
    %v3569 = vpack.c.bf16 %v3481, %v3480
    %v3570 = vpack.c.bf16 %v3483, %v3482
    %v3571 = vpack.c.bf16 %v3485, %v3484
    %v3572 = vpack.c.bf16 %v3487, %v3486
    %v3573 = vpack.c.bf16 %v3489, %v3488
    %v3574 = vpack.c.bf16 %v3491, %v3490
    %v3575 = vpack.c.bf16 %v3493, %v3492
    %v3576 = vpack.c.bf16 %v3495, %v3494
    %v3577 = vpack.c.bf16 %v3497, %v3496
    %v3578 = vpack.c.bf16 %v3499, %v3498
    %v3579 = vpack.c.bf16 %v3501, %v3500
    %v3580 = vpack.c.bf16 %v3503, %v3502
    %v3581 = vpack.c.bf16 %v3505, %v3504
    %v3582 = vpack.c.bf16 %v3507, %v3506
    %v3583 = vpack.c.bf16 %v3509, %v3508
    %v3584 = vpack.c.bf16 %v3511, %v3510
    %v3585 = vpack.c.bf16 %v3513, %v3512
    %v3586 = vpack.c.bf16 %v3515, %v3514
    %v3587 = vpack.c.bf16 %v3517, %v3516
    %v3588 = vpack.c.bf16 %v3519, %v3518
    %v3589 = vpack.c.bf16 %v3521, %v3520
    %v3590 = vpack.c.bf16 %v3523, %v3522
    %v3591 = vpack.c.bf16 %v3525, %v3524
    %v3592 = vpack.c.bf16 %v3527, %v3526
    %v3593 = vpack.c.bf16 %v3528, %v3528
    %v4239 = vunpack.c.l.b16 %v387
    %v4240 = vunpack.c.h.b16 %v387
    %v4241 = vunpack.c.l.b16 %v388
    %v4242 = vunpack.c.h.b16 %v388
    %v4243 = vunpack.c.l.b16 %v389
    %v4244 = vunpack.c.h.b16 %v389
    %v4245 = vunpack.c.l.b16 %v390
    %v4246 = vunpack.c.h.b16 %v390
    %v4247 = vunpack.c.l.b16 %v391
    %v4248 = vunpack.c.l.b16 %v392
    %v4249 = vunpack.c.h.b16 %v392
    %v4250 = vunpack.c.l.b16 %v393
    %v4251 = vunpack.c.h.b16 %v393
    %v4252 = vunpack.c.l.b16 %v394
    %v4253 = vunpack.c.h.b16 %v394
    %v4254 = vunpack.c.l.b16 %v395
    %v4255 = vunpack.c.h.b16 %v395
    %v4256 = vunpack.c.l.b16 %v396
    %v4257 = vunpack.c.l.b16 %v397
    %v4258 = vunpack.c.h.b16 %v397
    %v4259 = vunpack.c.l.b16 %v398
    %v4260 = vunpack.c.h.b16 %v398
    %v4261 = vunpack.c.l.b16 %v399
    %v4262 = vunpack.c.h.b16 %v399
    %v4263 = vunpack.c.l.b16 %v400
    %v4264 = vunpack.c.h.b16 %v400
    %v4265 = vunpack.c.l.b16 %v401
    %v4266 = vunpack.c.l.b16 %v402
    %v4267 = vunpack.c.h.b16 %v402
    %v4268 = vunpack.c.l.b16 %v403
    %v4269 = vunpack.c.h.b16 %v403
    %v4270 = vunpack.c.l.b16 %v404
    %v4271 = vunpack.c.h.b16 %v404
    %v4272 = vunpack.c.l.b16 %v405
    %v4273 = vunpack.c.h.b16 %v405
    %v4274 = vunpack.c.l.b16 %v406
    %v4275 = vunpack.c.l.b16 %v407
    %v4276 = vunpack.c.h.b16 %v407
    %v4277 = vunpack.c.l.b16 %v408
    %v4278 = vunpack.c.h.b16 %v408
    %v4279 = vunpack.c.l.b16 %v409
    %v4280 = vunpack.c.h.b16 %v409
    %v4281 = vunpack.c.l.b16 %v410
    %v4282 = vunpack.c.h.b16 %v410
    %v4283 = vunpack.c.l.b16 %v411
    %v4284 = vunpack.c.l.b16 %v412
    %v4285 = vunpack.c.h.b16 %v412
    %v4286 = vunpack.c.l.b16 %v413
    %v4287 = vunpack.c.h.b16 %v413
    %v4288 = vunpack.c.l.b16 %v414
    %v4289 = vunpack.c.h.b16 %v414
    %v4290 = vunpack.c.l.b16 %v415
    %v4291 = vunpack.c.h.b16 %v415
    %v4292 = vunpack.c.l.b16 %v416
    %v4293 = vunpack.c.l.b16 %v417
    %v4294 = vunpack.c.h.b16 %v417
    %v4295 = vunpack.c.l.b16 %v418
    %v4296 = vunpack.c.h.b16 %v418
    %v4297 = vunpack.c.l.b16 %v419
    %v4298 = vunpack.c.h.b16 %v419
    %v4299 = vunpack.c.l.b16 %v420
    %v4300 = vunpack.c.h.b16 %v420
    %v4301 = vunpack.c.l.b16 %v421
    %v4302 = vunpack.c.l.b16 %v422
    %v4303 = vunpack.c.h.b16 %v422
    %v4304 = vunpack.c.l.b16 %v423
    %v4305 = vunpack.c.h.b16 %v423
    %v4306 = vunpack.c.l.b16 %v424
    %v4307 = vunpack.c.h.b16 %v424
    %v4308 = vunpack.c.l.b16 %v425
    %v4309 = vunpack.c.h.b16 %v425
    %v4310 = vunpack.c.l.b16 %v426
    %v4311 = vunpack.c.l.b16 %v427
    %v4312 = vunpack.c.h.b16 %v427
    %v4313 = vunpack.c.l.b16 %v428
    %v4314 = vunpack.c.h.b16 %v428
    %v4315 = vunpack.c.l.b16 %v429
    %v4316 = vunpack.c.h.b16 %v429
    %v4317 = vunpack.c.l.b16 %v430
    %v4318 = vunpack.c.h.b16 %v430
    %v4319 = vunpack.c.l.b16 %v431
    %v4320 = vunpack.c.l.b16 %v432
    %v4321 = vunpack.c.h.b16 %v432
    %v4322 = vunpack.c.l.b16 %v433
    %v4323 = vunpack.c.h.b16 %v433
    %v4324 = vunpack.c.l.b16 %v434
    %v4325 = vunpack.c.h.b16 %v434
    %v4326 = vunpack.c.l.b16 %v435
    %v4327 = vunpack.c.h.b16 %v435
    %v4328 = vunpack.c.l.b16 %v436
    %v4329 = vunpack.c.l.b16 %v437
    %v4330 = vunpack.c.h.b16 %v437
    %v4331 = vunpack.c.l.b16 %v438
    %v4332 = vunpack.c.h.b16 %v438
    %v4333 = vunpack.c.l.b16 %v439
    %v4334 = vunpack.c.h.b16 %v439
    %v4335 = vunpack.c.l.b16 %v440
    %v4336 = vunpack.c.h.b16 %v440
    %v4337 = vunpack.c.l.b16 %v441
    %v4338 = vunpack.c.l.b16 %v442
    %v4339 = vunpack.c.h.b16 %v442
    %v4340 = vunpack.c.l.b16 %v443
    %v4341 = vunpack.c.h.b16 %v443
    %v4342 = vunpack.c.l.b16 %v444
    %v4343 = vunpack.c.h.b16 %v444
    %v4344 = vunpack.c.l.b16 %v445
    %v4345 = vunpack.c.h.b16 %v445
    %v4346 = vunpack.c.l.b16 %v446
    %v4347 = vunpack.c.l.b16 %v447
    %v4348 = vunpack.c.h.b16 %v447
    %v4349 = vunpack.c.l.b16 %v448
    %v4350 = vunpack.c.h.b16 %v448
    %v4351 = vunpack.c.l.b16 %v449
    %v4352 = vunpack.c.h.b16 %v449
    %v4353 = vunpack.c.l.b16 %v450
    %v4354 = vunpack.c.h.b16 %v450
    %v4355 = vunpack.c.l.b16 %v451
    %v4356 = vunpack.c.l.b16 %v452
    %v4357 = vunpack.c.h.b16 %v452
    %v4358 = vunpack.c.l.b16 %v453
    %v4359 = vunpack.c.h.b16 %v453
    %v4360 = vunpack.c.l.b16 %v454
    %v4361 = vunpack.c.h.b16 %v454
    %v4362 = vunpack.c.l.b16 %v455
    %v4363 = vunpack.c.h.b16 %v455
    %v4364 = vunpack.c.l.b16 %v456
    %v4365 = vunpack.c.l.b16 %v457
    %v4366 = vunpack.c.h.b16 %v457
    %v4367 = vunpack.c.l.b16 %v458
    %v4368 = vunpack.c.h.b16 %v458
    %v4369 = vunpack.c.l.b16 %v459
    %v4370 = vunpack.c.h.b16 %v459
    %v4371 = vunpack.c.l.b16 %v460
    %v4372 = vunpack.c.h.b16 %v460
    %v4373 = vunpack.c.l.b16 %v461
    %v4374 = vunpack.c.l.b16 %v462
    %v4375 = vunpack.c.h.b16 %v462
    %v4376 = vunpack.c.l.b16 %v463
    %v4377 = vunpack.c.h.b16 %v463
    %v4378 = vunpack.c.l.b16 %v464
    %v4379 = vunpack.c.h.b16 %v464
    %v4380 = vunpack.c.l.b16 %v465
    %v4381 = vunpack.c.h.b16 %v465
    %v4382 = vunpack.c.l.b16 %v466
    %v4383 = vunpack.c.l.b16 %v467
    %v4384 = vunpack.c.h.b16 %v467
    %v4385 = vunpack.c.l.b16 %v468
    %v4386 = vunpack.c.h.b16 %v468
    %v4387 = vunpack.c.l.b16 %v469
    %v4388 = vunpack.c.h.b16 %v469
    %v4389 = vunpack.c.l.b16 %v470
    %v4390 = vunpack.c.h.b16 %v470
    %v4391 = vunpack.c.l.b16 %v471
    %v4392 = vunpack.c.l.b16 %v472
    %v4393 = vunpack.c.h.b16 %v472
    %v4394 = vunpack.c.l.b16 %v473
    %v4395 = vunpack.c.h.b16 %v473
    %v4396 = vunpack.c.l.b16 %v474
    %v4397 = vunpack.c.h.b16 %v474
    %v4398 = vunpack.c.l.b16 %v475
    %v4399 = vunpack.c.h.b16 %v475
    %v4400 = vunpack.c.l.b16 %v476
    %v4401 = vunpack.c.l.b16 %v477
    %v4402 = vunpack.c.h.b16 %v477
    %v4403 = vunpack.c.l.b16 %v478
    %v4404 = vunpack.c.h.b16 %v478
    %v4405 = vunpack.c.l.b16 %v479
    %v4406 = vunpack.c.h.b16 %v479
    %v4407 = vunpack.c.l.b16 %v480
    %v4408 = vunpack.c.h.b16 %v480
    %v4409 = vunpack.c.l.b16 %v481
    %v4410 = vunpack.c.l.b16 %v482
    %v4411 = vunpack.c.h.b16 %v482
    %v4412 = vunpack.c.l.b16 %v483
    %v4413 = vunpack.c.h.b16 %v483
    %v4414 = vunpack.c.l.b16 %v484
    %v4415 = vunpack.c.h.b16 %v484
    %v4416 = vunpack.c.l.b16 %v485
    %v4417 = vunpack.c.h.b16 %v485
    %v4418 = vunpack.c.l.b16 %v486
    %v4419 = vunpack.c.l.b16 %v487
    %v4420 = vunpack.c.h.b16 %v487
    %v4421 = vunpack.c.l.b16 %v488
    %v4422 = vunpack.c.h.b16 %v488
    %v4423 = vunpack.c.l.b16 %v489
    %v4424 = vunpack.c.h.b16 %v489
    %v4425 = vunpack.c.l.b16 %v490
    %v4426 = vunpack.c.h.b16 %v490
    %v4427 = vunpack.c.l.b16 %v491
    %v4428 = vunpack.c.l.b16 %v492
    %v4429 = vunpack.c.h.b16 %v492
    %v4430 = vunpack.c.l.b16 %v493
    %v4431 = vunpack.c.h.b16 %v493
    %v4432 = vunpack.c.l.b16 %v494
    %v4433 = vunpack.c.h.b16 %v494
    %v4434 = vunpack.c.l.b16 %v495
    %v4435 = vunpack.c.h.b16 %v495
    %v4436 = vunpack.c.l.b16 %v496
    %v4437 = vunpack.c.l.b16 %v497
    %v4438 = vunpack.c.h.b16 %v497
    %v4439 = vunpack.c.l.b16 %v498
    %v4440 = vunpack.c.h.b16 %v498
    %v4441 = vunpack.c.l.b16 %v499
    %v4442 = vunpack.c.h.b16 %v499
    %v4443 = vunpack.c.l.b16 %v500
    %v4444 = vunpack.c.h.b16 %v500
    %v4445 = vunpack.c.l.b16 %v501
    %v4446 = vunpack.c.l.b16 %v502
    %v4447 = vunpack.c.h.b16 %v502
    %v4448 = vunpack.c.l.b16 %v503
    %v4449 = vunpack.c.h.b16 %v503
    %v4450 = vunpack.c.l.b16 %v504
    %v4451 = vunpack.c.h.b16 %v504
    %v4452 = vunpack.c.l.b16 %v505
    %v4453 = vunpack.c.h.b16 %v505
    %v4454 = vunpack.c.l.b16 %v506
    %v4455 = vunpack.c.l.b16 %v507
    %v4456 = vunpack.c.h.b16 %v507
    %v4457 = vunpack.c.l.b16 %v508
    %v4458 = vunpack.c.h.b16 %v508
    %v4459 = vunpack.c.l.b16 %v509
    %v4460 = vunpack.c.h.b16 %v509
    %v4461 = vunpack.c.l.b16 %v510
    %v4462 = vunpack.c.h.b16 %v510
    %v4463 = vunpack.c.l.b16 %v511
    %v4464 = vunpack.c.l.b16 %v512
    %v4465 = vunpack.c.h.b16 %v512
    %v4466 = vunpack.c.l.b16 %v513
    %v4467 = vunpack.c.h.b16 %v513
    %v4468 = vunpack.c.l.b16 %v514
    %v4469 = vunpack.c.h.b16 %v514
    %v4470 = vunpack.c.l.b16 %v515
    %v4471 = vunpack.c.h.b16 %v515
    %v4472 = vunpack.c.l.b16 %v516
    %v4473 = vunpack.c.l.b16 %v517
    %v4474 = vunpack.c.h.b16 %v517
    %v4475 = vunpack.c.l.b16 %v518
    %v4476 = vunpack.c.h.b16 %v518
    %v4477 = vunpack.c.l.b16 %v519
    %v4478 = vunpack.c.h.b16 %v519
    %v4479 = vunpack.c.l.b16 %v520
    %v4480 = vunpack.c.h.b16 %v520
    %v4481 = vunpack.c.l.b16 %v521
    %v4482 = vunpack.c.l.b16 %v522
    %v4483 = vunpack.c.h.b16 %v522
    %v4484 = vunpack.c.l.b16 %v523
    %v4485 = vunpack.c.h.b16 %v523
    %v4486 = vunpack.c.l.b16 %v524
    %v4487 = vunpack.c.h.b16 %v524
    %v4488 = vunpack.c.l.b16 %v525
    %v4489 = vunpack.c.h.b16 %v525
    %v4490 = vunpack.c.l.b16 %v526
    %v4491 = vunpack.c.l.b16 %v527
    %v4492 = vunpack.c.h.b16 %v527
    %v4493 = vunpack.c.l.b16 %v528
    %v4494 = vunpack.c.h.b16 %v528
    %v4495 = vunpack.c.l.b16 %v529
    %v4496 = vunpack.c.h.b16 %v529
    %v4497 = vunpack.c.l.b16 %v530
    %v4498 = vunpack.c.h.b16 %v530
    %v4499 = vunpack.c.l.b16 %v531
    %v4500 = vunpack.c.l.b16 %v532
    %v4501 = vunpack.c.h.b16 %v532
    %v4502 = vunpack.c.l.b16 %v533
    %v4503 = vunpack.c.h.b16 %v533
    %v4504 = vunpack.c.l.b16 %v534
    %v4505 = vunpack.c.h.b16 %v534
    %v4506 = vunpack.c.l.b16 %v535
    %v4507 = vunpack.c.h.b16 %v535
    %v4508 = vunpack.c.l.b16 %v536
    %v4509 = vunpack.c.l.b16 %v537
    %v4510 = vunpack.c.h.b16 %v537
    %v4511 = vunpack.c.l.b16 %v538
    %v4512 = vunpack.c.h.b16 %v538
    %v4513 = vunpack.c.l.b16 %v539
    %v4514 = vunpack.c.h.b16 %v539
    %v4515 = vunpack.c.l.b16 %v540
    %v4516 = vunpack.c.h.b16 %v540
    %v4517 = vunpack.c.l.b16 %v541
    %v4518 = vunpack.c.l.b16 %v542
    %v4519 = vunpack.c.h.b16 %v542
    %v4520 = vunpack.c.l.b16 %v543
    %v4521 = vunpack.c.h.b16 %v543
    %v4522 = vunpack.c.l.b16 %v544
    %v4523 = vunpack.c.h.b16 %v544
    %v4524 = vunpack.c.l.b16 %v545
    %v4525 = vunpack.c.h.b16 %v545
    %v4526 = vunpack.c.l.b16 %v546
    %v4527 = vunpack.c.l.b16 %v547
    %v4528 = vunpack.c.h.b16 %v547
    %v4529 = vunpack.c.l.b16 %v548
    %v4530 = vunpack.c.h.b16 %v548
    %v4531 = vunpack.c.l.b16 %v549
    %v4532 = vunpack.c.h.b16 %v549
    %v4533 = vunpack.c.l.b16 %v550
    %v4534 = vunpack.c.h.b16 %v550
    %v4535 = vunpack.c.l.b16 %v551
    %v4536 = vunpack.c.l.b16 %v552
    %v4537 = vunpack.c.h.b16 %v552
    %v4538 = vunpack.c.l.b16 %v553
    %v4539 = vunpack.c.h.b16 %v553
    %v4540 = vunpack.c.l.b16 %v554
    %v4541 = vunpack.c.h.b16 %v554
    %v4542 = vunpack.c.l.b16 %v555
    %v4543 = vunpack.c.h.b16 %v555
    %v4544 = vunpack.c.l.b16 %v556
    %v4545 = vunpack.c.l.b16 %v557
    %v4546 = vunpack.c.h.b16 %v557
    %v4547 = vunpack.c.l.b16 %v558
    %v4548 = vunpack.c.h.b16 %v558
    %v4549 = vunpack.c.l.b16 %v559
    %v4550 = vunpack.c.h.b16 %v559
    %v4551 = vunpack.c.l.b16 %v560
    %v4552 = vunpack.c.h.b16 %v560
    %v4553 = vunpack.c.l.b16 %v561
    %v4554 = vunpack.c.l.b16 %v562
    %v4555 = vunpack.c.h.b16 %v562
    %v4556 = vunpack.c.l.b16 %v563
    %v4557 = vunpack.c.h.b16 %v563
    %v4558 = vunpack.c.l.b16 %v564
    %v4559 = vunpack.c.h.b16 %v564
    %v4560 = vunpack.c.l.b16 %v565
    %v4561 = vunpack.c.h.b16 %v565
    %v4562 = vunpack.c.l.b16 %v566
    %v4563 = vunpack.c.l.b16 %v567
    %v4564 = vunpack.c.h.b16 %v567
    %v4565 = vunpack.c.l.b16 %v568
    %v4566 = vunpack.c.h.b16 %v568
    %v4567 = vunpack.c.l.b16 %v569
    %v4568 = vunpack.c.h.b16 %v569
    %v4569 = vunpack.c.l.b16 %v570
    %v4570 = vunpack.c.h.b16 %v570
    %v4571 = vunpack.c.l.b16 %v571
    %v4572 = vunpack.c.l.b16 %v572
    %v4573 = vunpack.c.h.b16 %v572
    %v4574 = vunpack.c.l.b16 %v573
    %v4575 = vunpack.c.h.b16 %v573
    %v4576 = vunpack.c.l.b16 %v574
    %v4577 = vunpack.c.h.b16 %v574
    %v4578 = vunpack.c.l.b16 %v575
    %v4579 = vunpack.c.h.b16 %v575
    %v4580 = vunpack.c.l.b16 %v576
    %v4581 = vunpack.c.l.b16 %v577
    %v4582 = vunpack.c.h.b16 %v577
    %v4583 = vunpack.c.l.b16 %v578
    %v4584 = vunpack.c.h.b16 %v578
    %v4585 = vunpack.c.l.b16 %v579
    %v4586 = vunpack.c.h.b16 %v579
    %v4587 = vunpack.c.l.b16 %v580
    %v4588 = vunpack.c.h.b16 %v580
    %v4589 = vunpack.c.l.b16 %v581
    %v4590 = vunpack.c.l.b16 %v582
    %v4591 = vunpack.c.h.b16 %v582
    %v4592 = vunpack.c.l.b16 %v583
    %v4593 = vunpack.c.h.b16 %v583
    %v4594 = vunpack.c.l.b16 %v584
    %v4595 = vunpack.c.h.b16 %v584
    %v4596 = vunpack.c.l.b16 %v585
    %v4597 = vunpack.c.h.b16 %v585
    %v4598 = vunpack.c.l.b16 %v586
    %v4599 = vunpack.c.l.b16 %v587
    %v4600 = vunpack.c.h.b16 %v587
    %v4601 = vunpack.c.l.b16 %v588
    %v4602 = vunpack.c.h.b16 %v588
    %v4603 = vunpack.c.l.b16 %v589
    %v4604 = vunpack.c.h.b16 %v589
    %v4605 = vunpack.c.l.b16 %v590
    %v4606 = vunpack.c.h.b16 %v590
    %v4607 = vunpack.c.l.b16 %v591
    %v4608 = vunpack.c.l.b16 %v592
    %v4609 = vunpack.c.h.b16 %v592
    %v4610 = vunpack.c.l.b16 %v593
    %v4611 = vunpack.c.h.b16 %v593
    %v4612 = vunpack.c.l.b16 %v594
    %v4613 = vunpack.c.h.b16 %v594
    %v4614 = vunpack.c.l.b16 %v595
    %v4615 = vunpack.c.h.b16 %v595
    %v4616 = vunpack.c.l.b16 %v596
    %v4617 = vunpack.c.l.b16 %v597
    %v4618 = vunpack.c.h.b16 %v597
    %v4619 = vunpack.c.l.b16 %v598
    %v4620 = vunpack.c.h.b16 %v598
    %v4621 = vunpack.c.l.b16 %v599
    %v4622 = vunpack.c.h.b16 %v599
    %v4623 = vunpack.c.l.b16 %v600
    %v4624 = vunpack.c.h.b16 %v600
    %v4625 = vunpack.c.l.b16 %v601
    %v4626 = vunpack.c.l.b16 %v602
    %v4627 = vunpack.c.h.b16 %v602
    %v4628 = vunpack.c.l.b16 %v603
    %v4629 = vunpack.c.h.b16 %v603
    %v4630 = vunpack.c.l.b16 %v604
    %v4631 = vunpack.c.h.b16 %v604
    %v4632 = vunpack.c.l.b16 %v605
    %v4633 = vunpack.c.h.b16 %v605
    %v4634 = vunpack.c.l.b16 %v606
    %v4635 = vunpack.c.l.b16 %v607
    %v4636 = vunpack.c.h.b16 %v607
    %v4637 = vunpack.c.l.b16 %v608
    %v4638 = vunpack.c.h.b16 %v608
    %v4639 = vunpack.c.l.b16 %v609
    %v4640 = vunpack.c.h.b16 %v609
    %v4641 = vunpack.c.l.b16 %v610
    %v4642 = vunpack.c.h.b16 %v610
    %v4643 = vunpack.c.l.b16 %v611
    %v4644 = vunpack.c.l.b16 %v612
    %v4645 = vunpack.c.h.b16 %v612
    %v4646 = vunpack.c.l.b16 %v613
    %v4647 = vunpack.c.h.b16 %v613
    %v4648 = vunpack.c.l.b16 %v614
    %v4649 = vunpack.c.h.b16 %v614
    %v4650 = vunpack.c.l.b16 %v615
    %v4651 = vunpack.c.h.b16 %v615
    %v4652 = vunpack.c.l.b16 %v616
    %v4653 = vunpack.c.l.b16 %v617
    %v4654 = vunpack.c.h.b16 %v617
    %v4655 = vunpack.c.l.b16 %v618
    %v4656 = vunpack.c.h.b16 %v618
    %v4657 = vunpack.c.l.b16 %v619
    %v4658 = vunpack.c.h.b16 %v619
    %v4659 = vunpack.c.l.b16 %v620
    %v4660 = vunpack.c.h.b16 %v620
    %v4661 = vunpack.c.l.b16 %v621
    %v4662 = vunpack.c.l.b16 %v622
    %v4663 = vunpack.c.h.b16 %v622
    %v4664 = vunpack.c.l.b16 %v623
    %v4665 = vunpack.c.h.b16 %v623
    %v4666 = vunpack.c.l.b16 %v624
    %v4667 = vunpack.c.h.b16 %v624
    %v4668 = vunpack.c.l.b16 %v625
    %v4669 = vunpack.c.h.b16 %v625
    %v4670 = vunpack.c.l.b16 %v626
    %v4671 = vunpack.c.l.b16 %v627
    %v4672 = vunpack.c.h.b16 %v627
    %v4673 = vunpack.c.l.b16 %v628
    %v4674 = vunpack.c.h.b16 %v628
    %v4675 = vunpack.c.l.b16 %v629
    %v4676 = vunpack.c.h.b16 %v629
    %v4677 = vunpack.c.l.b16 %v630
    %v4678 = vunpack.c.h.b16 %v630
    %v4679 = vunpack.c.l.b16 %v631
    %v4680 = vunpack.c.l.b16 %v632
    %v4681 = vunpack.c.h.b16 %v632
    %v4682 = vunpack.c.l.b16 %v633
    %v4683 = vunpack.c.h.b16 %v633
    %v4684 = vunpack.c.l.b16 %v634
    %v4685 = vunpack.c.h.b16 %v634
    %v4686 = vunpack.c.l.b16 %v635
    %v4687 = vunpack.c.h.b16 %v635
    %v4688 = vunpack.c.l.b16 %v636
    %v4689 = vunpack.c.l.b16 %v637
    %v4690 = vunpack.c.h.b16 %v637
    %v4691 = vunpack.c.l.b16 %v638
    %v4692 = vunpack.c.h.b16 %v638
    %v4693 = vunpack.c.l.b16 %v639
    %v4694 = vunpack.c.h.b16 %v639
    %v4695 = vunpack.c.l.b16 %v640
    %v4696 = vunpack.c.h.b16 %v640
    %v4697 = vunpack.c.l.b16 %v641
    %v4698 = vunpack.c.l.b16 %v642
    %v4699 = vunpack.c.h.b16 %v642
    %v4700 = vunpack.c.l.b16 %v643
    %v4701 = vunpack.c.h.b16 %v643
    %v4702 = vunpack.c.l.b16 %v644
    %v4703 = vunpack.c.h.b16 %v644
    %v4704 = vunpack.c.l.b16 %v645
    %v4705 = vunpack.c.h.b16 %v645
    %v4706 = vunpack.c.l.b16 %v646
    %v4707 = vunpack.c.l.b16 %v647
    %v4708 = vunpack.c.h.b16 %v647
    %v4709 = vunpack.c.l.b16 %v648
    %v4710 = vunpack.c.h.b16 %v648
    %v4711 = vunpack.c.l.b16 %v649
    %v4712 = vunpack.c.h.b16 %v649
    %v4713 = vunpack.c.l.b16 %v650
    %v4714 = vunpack.c.h.b16 %v650
    %v4715 = vunpack.c.l.b16 %v651
    %v4716 = vunpack.c.l.b16 %v652
    %v4717 = vunpack.c.h.b16 %v652
    %v4718 = vunpack.c.l.b16 %v653
    %v4719 = vunpack.c.h.b16 %v653
    %v4720 = vunpack.c.l.b16 %v654
    %v4721 = vunpack.c.h.b16 %v654
    %v4722 = vunpack.c.l.b16 %v655
    %v4723 = vunpack.c.h.b16 %v655
    %v4724 = vunpack.c.l.b16 %v656
    %v4725 = vunpack.c.l.b16 %v657
    %v4726 = vunpack.c.h.b16 %v657
    %v4727 = vunpack.c.l.b16 %v658
    %v4728 = vunpack.c.h.b16 %v658
    %v4729 = vunpack.c.l.b16 %v659
    %v4730 = vunpack.c.h.b16 %v659
    %v4731 = vunpack.c.l.b16 %v660
    %v4732 = vunpack.c.h.b16 %v660
    %v4733 = vunpack.c.l.b16 %v661
    %v4734 = vunpack.c.l.b16 %v662
    %v4735 = vunpack.c.h.b16 %v662
    %v4736 = vunpack.c.l.b16 %v663
    %v4737 = vunpack.c.h.b16 %v663
    %v4738 = vunpack.c.l.b16 %v664
    %v4739 = vunpack.c.h.b16 %v664
    %v4740 = vunpack.c.l.b16 %v665
    %v4741 = vunpack.c.h.b16 %v665
    %v4742 = vunpack.c.l.b16 %v666
    %v4743 = vunpack.c.l.b16 %v667
    %v4744 = vunpack.c.h.b16 %v667
    %v4745 = vunpack.c.l.b16 %v668
    %v4746 = vunpack.c.h.b16 %v668
    %v4747 = vunpack.c.l.b16 %v669
    %v4748 = vunpack.c.h.b16 %v669
    %v4749 = vunpack.c.l.b16 %v670
    %v4750 = vunpack.c.h.b16 %v670
    %v4751 = vunpack.c.l.b16 %v671
    %v4752 = vunpack.c.l.b16 %v672
    %v4753 = vunpack.c.h.b16 %v672
    %v4754 = vunpack.c.l.b16 %v673
    %v4755 = vunpack.c.h.b16 %v673
    %v4756 = vunpack.c.l.b16 %v674
    %v4757 = vunpack.c.h.b16 %v674
    %v4758 = vunpack.c.l.b16 %v675
    %v4759 = vunpack.c.h.b16 %v675
    %v4760 = vunpack.c.l.b16 %v676
    %v4761 = vunpack.c.l.b16 %v677
    %v4762 = vunpack.c.h.b16 %v677
    %v4763 = vunpack.c.l.b16 %v678
    %v4764 = vunpack.c.h.b16 %v678
    %v4765 = vunpack.c.l.b16 %v679
    %v4766 = vunpack.c.h.b16 %v679
    %v4767 = vunpack.c.l.b16 %v680
    %v4768 = vunpack.c.h.b16 %v680
    %v4769 = vunpack.c.l.b16 %v681
    %v4770 = vunpack.c.l.b16 %v682
    %v4771 = vunpack.c.h.b16 %v682
    %v4772 = vunpack.c.l.b16 %v683
    %v4773 = vunpack.c.h.b16 %v683
    %v4774 = vunpack.c.l.b16 %v684
    %v4775 = vunpack.c.h.b16 %v684
    %v4776 = vunpack.c.l.b16 %v685
    %v4777 = vunpack.c.h.b16 %v685
    %v4778 = vunpack.c.l.b16 %v686
    %v4779 = vunpack.c.l.b16 %v687
    %v4780 = vunpack.c.h.b16 %v687
    %v4781 = vunpack.c.l.b16 %v688
    %v4782 = vunpack.c.h.b16 %v688
    %v4783 = vunpack.c.l.b16 %v689
    %v4784 = vunpack.c.h.b16 %v689
    %v4785 = vunpack.c.l.b16 %v690
    %v4786 = vunpack.c.h.b16 %v690
    %v4787 = vunpack.c.l.b16 %v691
    %v4788 = vunpack.c.l.b16 %v692
    %v4789 = vunpack.c.h.b16 %v692
    %v4790 = vunpack.c.l.b16 %v693
    %v4791 = vunpack.c.h.b16 %v693
    %v4792 = vunpack.c.l.b16 %v694
    %v4793 = vunpack.c.h.b16 %v694
    %v4794 = vunpack.c.l.b16 %v695
    %v4795 = vunpack.c.h.b16 %v695
    %v4796 = vunpack.c.l.b16 %v696
    %v4797 = vunpack.c.l.b16 %v697
    %v4798 = vunpack.c.h.b16 %v697
    %v4799 = vunpack.c.l.b16 %v698
    %v4800 = vunpack.c.h.b16 %v698
    %v4801 = vunpack.c.l.b16 %v699
    %v4802 = vunpack.c.h.b16 %v699
    %v4803 = vunpack.c.l.b16 %v700
    %v4804 = vunpack.c.h.b16 %v700
    %v4805 = vunpack.c.l.b16 %v701
    %v4806 = vunpack.c.l.b16 %v702
    %v4807 = vunpack.c.h.b16 %v702
    %v4808 = vunpack.c.l.b16 %v703
    %v4809 = vunpack.c.h.b16 %v703
    %v4810 = vunpack.c.l.b16 %v704
    %v4811 = vunpack.c.h.b16 %v704
    %v4812 = vunpack.c.l.b16 %v705
    %v4813 = vunpack.c.h.b16 %v705
    %v4814 = vunpack.c.l.b16 %v706
    %v4815 = vunpack.c.l.b16 %v707
    %v4816 = vunpack.c.h.b16 %v707
    %v4817 = vunpack.c.l.b16 %v708
    %v4818 = vunpack.c.h.b16 %v708
    %v4819 = vunpack.c.l.b16 %v709
    %v4820 = vunpack.c.h.b16 %v709
    %v4821 = vunpack.c.l.b16 %v710
    %v4822 = vunpack.c.h.b16 %v710
    %v4823 = vunpack.c.l.b16 %v711
    %v4824 = vunpack.c.l.b16 %v712
    %v4825 = vunpack.c.h.b16 %v712
    %v4826 = vunpack.c.l.b16 %v713
    %v4827 = vunpack.c.h.b16 %v713
    %v4828 = vunpack.c.l.b16 %v714
    %v4829 = vunpack.c.h.b16 %v714
    %v4830 = vunpack.c.l.b16 %v715
    %v4831 = vunpack.c.h.b16 %v715
    %v4832 = vunpack.c.l.b16 %v716
    %v4833 = vunpack.c.l.b16 %v717
    %v4834 = vunpack.c.h.b16 %v717
    %v4835 = vunpack.c.l.b16 %v718
    %v4836 = vunpack.c.h.b16 %v718
    %v4837 = vunpack.c.l.b16 %v719
    %v4838 = vunpack.c.h.b16 %v719
    %v4839 = vunpack.c.l.b16 %v720
    %v4840 = vunpack.c.h.b16 %v720
    %v4841 = vunpack.c.l.b16 %v721
    %v4842 = vunpack.c.l.b16 %v722
    %v4843 = vunpack.c.h.b16 %v722
    %v4844 = vunpack.c.l.b16 %v723
    %v4845 = vunpack.c.h.b16 %v723
    %v4846 = vunpack.c.l.b16 %v724
    %v4847 = vunpack.c.h.b16 %v724
    %v4848 = vunpack.c.l.b16 %v725
    %v4849 = vunpack.c.h.b16 %v725
    %v4850 = vunpack.c.l.b16 %v726
    %v4851 = vunpack.c.l.b16 %v727
    %v4852 = vunpack.c.h.b16 %v727
    %v4853 = vunpack.c.l.b16 %v728
    %v4854 = vunpack.c.h.b16 %v728
    %v4855 = vunpack.c.l.b16 %v729
    %v4856 = vunpack.c.h.b16 %v729
    %v4857 = vunpack.c.l.b16 %v730
    %v4858 = vunpack.c.h.b16 %v730
    %v4859 = vunpack.c.l.b16 %v731
    %v4860 = vunpack.c.l.b16 %v732
    %v4861 = vunpack.c.h.b16 %v732
    %v4862 = vunpack.c.l.b16 %v733
    %v4863 = vunpack.c.h.b16 %v733
    %v4864 = vunpack.c.l.b16 %v734
    %v4865 = vunpack.c.h.b16 %v734
    %v4866 = vunpack.c.l.b16 %v735
    %v4867 = vunpack.c.h.b16 %v735
    %v4868 = vunpack.c.l.b16 %v736
    %v4869 = vunpack.c.l.b16 %v737
    %v4870 = vunpack.c.h.b16 %v737
    %v4871 = vunpack.c.l.b16 %v738
    %v4872 = vunpack.c.h.b16 %v738
    %v4873 = vunpack.c.l.b16 %v739
    %v4874 = vunpack.c.h.b16 %v739
    %v4875 = vunpack.c.l.b16 %v740
    %v4876 = vunpack.c.h.b16 %v740
    %v4877 = vunpack.c.l.b16 %v741
    %v4878 = vunpack.c.l.b16 %v742
    %v4879 = vunpack.c.h.b16 %v742
    %v4880 = vunpack.c.l.b16 %v743
    %v4881 = vunpack.c.h.b16 %v743
    %v4882 = vunpack.c.l.b16 %v744
    %v4883 = vunpack.c.h.b16 %v744
    %v4884 = vunpack.c.l.b16 %v745
    %v4885 = vunpack.c.h.b16 %v745
    %v4886 = vunpack.c.l.b16 %v746
    %v4887 = vunpack.c.l.b16 %v747
    %v4888 = vunpack.c.h.b16 %v747
    %v4889 = vunpack.c.l.b16 %v748
    %v4890 = vunpack.c.h.b16 %v748
    %v4891 = vunpack.c.l.b16 %v749
    %v4892 = vunpack.c.h.b16 %v749
    %v4893 = vunpack.c.l.b16 %v750
    %v4894 = vunpack.c.h.b16 %v750
    %v4895 = vunpack.c.l.b16 %v751
    %v4896 = vunpack.c.l.b16 %v752
    %v4897 = vunpack.c.h.b16 %v752
    %v4898 = vunpack.c.l.b16 %v753
    %v4899 = vunpack.c.h.b16 %v753
    %v4900 = vunpack.c.l.b16 %v754
    %v4901 = vunpack.c.h.b16 %v754
    %v4902 = vunpack.c.l.b16 %v755
    %v4903 = vunpack.c.h.b16 %v755
    %v4904 = vunpack.c.l.b16 %v756
    %v4905 = vunpack.c.l.b16 %v757
    %v4906 = vunpack.c.h.b16 %v757
    %v4907 = vunpack.c.l.b16 %v758
    %v4908 = vunpack.c.h.b16 %v758
    %v4909 = vunpack.c.l.b16 %v759
    %v4910 = vunpack.c.h.b16 %v759
    %v4911 = vunpack.c.l.b16 %v760
    %v4912 = vunpack.c.h.b16 %v760
    %v4913 = vunpack.c.l.b16 %v761
    %v4914 = vunpack.c.l.b16 %v762
    %v4915 = vunpack.c.h.b16 %v762
    %v4916 = vunpack.c.l.b16 %v763
    %v4917 = vunpack.c.h.b16 %v763
    %v4918 = vunpack.c.l.b16 %v764
    %v4919 = vunpack.c.h.b16 %v764
    %v4920 = vunpack.c.l.b16 %v765
    %v4921 = vunpack.c.h.b16 %v765
    %v4922 = vunpack.c.l.b16 %v766
    %v4923 = vunpack.c.l.b16 %v767
    %v4924 = vunpack.c.h.b16 %v767
    %v4925 = vunpack.c.l.b16 %v768
    %v4926 = vunpack.c.h.b16 %v768
    %v4927 = vunpack.c.l.b16 %v769
    %v4928 = vunpack.c.h.b16 %v769
    %v4929 = vunpack.c.l.b16 %v770
    %v4930 = vunpack.c.h.b16 %v770
    %v4931 = vunpack.c.l.b16 %v771
    %v4932 = vunpack.c.l.b16 %v772
    %v4933 = vunpack.c.h.b16 %v772
    %v4934 = vunpack.c.l.b16 %v773
    %v4935 = vunpack.c.h.b16 %v773
    %v4936 = vunpack.c.l.b16 %v774
    %v4937 = vunpack.c.h.b16 %v774
    %v4938 = vunpack.c.l.b16 %v775
    %v4939 = vunpack.c.h.b16 %v775
    %v4940 = vunpack.c.l.b16 %v776
    %v4941 = vunpack.c.l.b16 %v777
    %v4942 = vunpack.c.h.b16 %v777
    %v4943 = vunpack.c.l.b16 %v778
    %v4944 = vunpack.c.h.b16 %v778
    %v4945 = vunpack.c.l.b16 %v779
    %v4946 = vunpack.c.h.b16 %v779
    %v4947 = vunpack.c.l.b16 %v780
    %v4948 = vunpack.c.h.b16 %v780
    %v4949 = vunpack.c.l.b16 %v781
    %v4950 = vunpack.c.l.b16 %v782
    %v4951 = vunpack.c.h.b16 %v782
    %v4952 = vunpack.c.l.b16 %v783
    %v4953 = vunpack.c.h.b16 %v783
    %v4954 = vunpack.c.l.b16 %v784
    %v4955 = vunpack.c.h.b16 %v784
    %v4956 = vunpack.c.l.b16 %v785
    %v4957 = vunpack.c.h.b16 %v785
    %v4958 = vunpack.c.l.b16 %v786
    %v4959 = vunpack.c.l.b16 %v787
    %v4960 = vunpack.c.h.b16 %v787
    %v4961 = vunpack.c.l.b16 %v788
    %v4962 = vunpack.c.h.b16 %v788
    %v4963 = vunpack.c.l.b16 %v789
    %v4964 = vunpack.c.h.b16 %v789
    %v4965 = vunpack.c.l.b16 %v790
    %v4966 = vunpack.c.h.b16 %v790
    %v4967 = vunpack.c.l.b16 %v791
    %v4968 = vunpack.c.l.b16 %v792
    %v4969 = vunpack.c.h.b16 %v792
    %v4970 = vunpack.c.l.b16 %v793
    %v4971 = vunpack.c.h.b16 %v793
    %v4972 = vunpack.c.l.b16 %v794
    %v4973 = vunpack.c.h.b16 %v794
    %v4974 = vunpack.c.l.b16 %v795
    %v4975 = vunpack.c.h.b16 %v795
    %v4976 = vunpack.c.l.b16 %v796
    %v4977 = vunpack.c.l.b16 %v797
    %v4978 = vunpack.c.h.b16 %v797
    %v4979 = vunpack.c.l.b16 %v798
    %v4980 = vunpack.c.h.b16 %v798
    %v4981 = vunpack.c.l.b16 %v799
    %v4982 = vunpack.c.h.b16 %v799
    %v4983 = vunpack.c.l.b16 %v800
    %v4984 = vunpack.c.h.b16 %v800
    %v4985 = vunpack.c.l.b16 %v801
    %v4986 = vunpack.c.l.b16 %v802
    %v4987 = vunpack.c.h.b16 %v802
    %v4988 = vunpack.c.l.b16 %v803
    %v4989 = vunpack.c.h.b16 %v803
    %v4990 = vunpack.c.l.b16 %v804
    %v4991 = vunpack.c.h.b16 %v804
    %v4992 = vunpack.c.l.b16 %v805
    %v4993 = vunpack.c.h.b16 %v805
    %v4994 = vunpack.c.l.b16 %v806
    %v4995 = vunpack.c.l.b16 %v807
    %v4996 = vunpack.c.h.b16 %v807
    %v4997 = vunpack.c.l.b16 %v808
    %v4998 = vunpack.c.h.b16 %v808
    %v4999 = vunpack.c.l.b16 %v809
    %v5000 = vunpack.c.h.b16 %v809
    %v5001 = vunpack.c.l.b16 %v810
    %v5002 = vunpack.c.h.b16 %v810
    %v5003 = vunpack.c.l.b16 %v811
    %v5004 = vunpack.c.l.b16 %v812
    %v5005 = vunpack.c.h.b16 %v812
    %v5006 = vunpack.c.l.b16 %v813
    %v5007 = vunpack.c.h.b16 %v813
    %v5008 = vunpack.c.l.b16 %v814
    %v5009 = vunpack.c.h.b16 %v814
    %v5010 = vunpack.c.l.b16 %v815
    %v5011 = vunpack.c.h.b16 %v815
    %v5012 = vunpack.c.l.b16 %v816
    %v5013 = vunpack.c.l.b16 %v817
    %v5014 = vunpack.c.h.b16 %v817
    %v5015 = vunpack.c.l.b16 %v818
    %v5016 = vunpack.c.h.b16 %v818
    %v5017 = vunpack.c.l.b16 %v819
    %v5018 = vunpack.c.h.b16 %v819
    %v5019 = vunpack.c.l.b16 %v820
    %v5020 = vunpack.c.h.b16 %v820
    %v5021 = vunpack.c.l.b16 %v821
    %v5022 = vunpack.c.l.b16 %v822
    %v5023 = vunpack.c.h.b16 %v822
    %v5024 = vunpack.c.l.b16 %v823
    %v5025 = vunpack.c.h.b16 %v823
    %v5026 = vunpack.c.l.b16 %v824
    %v5027 = vunpack.c.h.b16 %v824
    %v5028 = vunpack.c.l.b16 %v825
    %v5029 = vunpack.c.h.b16 %v825
    %v5030 = vunpack.c.l.b16 %v826
    %v5031 = vunpack.c.l.b16 %v827
    %v5032 = vunpack.c.h.b16 %v827
    %v5033 = vunpack.c.l.b16 %v828
    %v5034 = vunpack.c.h.b16 %v828
    %v5035 = vunpack.c.l.b16 %v829
    %v5036 = vunpack.c.h.b16 %v829
    %v5037 = vunpack.c.l.b16 %v830
    %v5038 = vunpack.c.h.b16 %v830
    %v5039 = vunpack.c.l.b16 %v831
    %v5040 = vunpack.c.l.b16 %v832
    %v5041 = vunpack.c.h.b16 %v832
    %v5042 = vunpack.c.l.b16 %v833
    %v5043 = vunpack.c.h.b16 %v833
    %v5044 = vunpack.c.l.b16 %v834
    %v5045 = vunpack.c.h.b16 %v834
    %v5046 = vunpack.c.l.b16 %v835
    %v5047 = vunpack.c.h.b16 %v835
    %v5048 = vunpack.c.l.b16 %v836
    %v5049 = vunpack.c.l.b16 %v837
    %v5050 = vunpack.c.h.b16 %v837
    %v5051 = vunpack.c.l.b16 %v838
    %v5052 = vunpack.c.h.b16 %v838
    %v5053 = vunpack.c.l.b16 %v839
    %v5054 = vunpack.c.h.b16 %v839
    %v5055 = vunpack.c.l.b16 %v840
    %v5056 = vunpack.c.h.b16 %v840
    %v5057 = vunpack.c.l.b16 %v841
    %v5058 = vunpack.c.l.b16 %v842
    %v5059 = vunpack.c.h.b16 %v842
    %v5060 = vunpack.c.l.b16 %v843
    %v5061 = vunpack.c.h.b16 %v843
    %v5062 = vunpack.c.l.b16 %v844
    %v5063 = vunpack.c.h.b16 %v844
    %v5064 = vunpack.c.l.b16 %v845
    %v5065 = vunpack.c.h.b16 %v845
    %v5066 = vunpack.c.l.b16 %v846
    %v5067 = vunpack.c.l.b16 %v847
    %v5068 = vunpack.c.h.b16 %v847
    %v5069 = vunpack.c.l.b16 %v848
    %v5070 = vunpack.c.h.b16 %v848
    %v5071 = vunpack.c.l.b16 %v849
    %v5072 = vunpack.c.h.b16 %v849
    %v5073 = vunpack.c.l.b16 %v850
    %v5074 = vunpack.c.h.b16 %v850
    %v5075 = vunpack.c.l.b16 %v851
    %v5076 = vunpack.c.l.b16 %v852
    %v5077 = vunpack.c.h.b16 %v852
    %v5078 = vunpack.c.l.b16 %v853
    %v5079 = vunpack.c.h.b16 %v853
    %v5080 = vunpack.c.l.b16 %v854
    %v5081 = vunpack.c.h.b16 %v854
    %v5082 = vunpack.c.l.b16 %v855
    %v5083 = vunpack.c.h.b16 %v855
    %v5084 = vunpack.c.l.b16 %v856
    %v5085 = vunpack.c.l.b16 %v857
    %v5086 = vunpack.c.h.b16 %v857
    %v5087 = vunpack.c.l.b16 %v858
    %v5088 = vunpack.c.h.b16 %v858
    %v5089 = vunpack.c.l.b16 %v859
    %v5090 = vunpack.c.h.b16 %v859
    %v5091 = vunpack.c.l.b16 %v860
    %v5092 = vunpack.c.h.b16 %v860
    %v5093 = vunpack.c.l.b16 %v861
    %v5094 = vunpack.c.l.b16 %v862
    %v5095 = vunpack.c.h.b16 %v862
    %v5096 = vunpack.c.l.b16 %v863
    %v5097 = vunpack.c.h.b16 %v863
    %v5098 = vunpack.c.l.b16 %v864
    %v5099 = vunpack.c.h.b16 %v864
    %v5100 = vunpack.c.l.b16 %v865
    %v5101 = vunpack.c.h.b16 %v865
    %v5102 = vunpack.c.l.b16 %v866
    %v5103 = vunpack.c.l.b16 %v867
    %v5104 = vunpack.c.h.b16 %v867
    %v5105 = vunpack.c.l.b16 %v868
    %v5106 = vunpack.c.h.b16 %v868
    %v5107 = vunpack.c.l.b16 %v869
    %v5108 = vunpack.c.h.b16 %v869
    %v5109 = vunpack.c.l.b16 %v870
    %v5110 = vunpack.c.h.b16 %v870
    %v5111 = vunpack.c.l.b16 %v871
    %v5112 = vunpack.c.l.b16 %v872
    %v5113 = vunpack.c.h.b16 %v872
    %v5114 = vunpack.c.l.b16 %v873
    %v5115 = vunpack.c.h.b16 %v873
    %v5116 = vunpack.c.l.b16 %v874
    %v5117 = vunpack.c.h.b16 %v874
    %v5118 = vunpack.c.l.b16 %v875
    %v5119 = vunpack.c.h.b16 %v875
    %v5120 = vunpack.c.l.b16 %v876
    %v5121 = vunpack.c.l.b16 %v877
    %v5122 = vunpack.c.h.b16 %v877
    %v5123 = vunpack.c.l.b16 %v878
    %v5124 = vunpack.c.h.b16 %v878
    %v5125 = vunpack.c.l.b16 %v879
    %v5126 = vunpack.c.h.b16 %v879
    %v5127 = vunpack.c.l.b16 %v880
    %v5128 = vunpack.c.h.b16 %v880
    %v5129 = vunpack.c.l.b16 %v881
    %v5130 = vunpack.c.l.b16 %v882
    %v5131 = vunpack.c.h.b16 %v882
    %v5132 = vunpack.c.l.b16 %v883
    %v5133 = vunpack.c.h.b16 %v883
    %v5134 = vunpack.c.l.b16 %v884
    %v5135 = vunpack.c.h.b16 %v884
    %v5136 = vunpack.c.l.b16 %v885
    %v5137 = vunpack.c.h.b16 %v885
    %v5138 = vunpack.c.l.b16 %v886
    %v5139 = vunpack.c.l.b16 %v887
    %v5140 = vunpack.c.h.b16 %v887
    %v5141 = vunpack.c.l.b16 %v888
    %v5142 = vunpack.c.h.b16 %v888
    %v5143 = vunpack.c.l.b16 %v889
    %v5144 = vunpack.c.h.b16 %v889
    %v5145 = vunpack.c.l.b16 %v890
    %v5146 = vunpack.c.h.b16 %v890
    %v5147 = vunpack.c.l.b16 %v891
    %v5148 = vunpack.c.l.b16 %v892
    %v5149 = vunpack.c.h.b16 %v892
    %v5150 = vunpack.c.l.b16 %v893
    %v5151 = vunpack.c.h.b16 %v893
    %v5152 = vunpack.c.l.b16 %v894
    %v5153 = vunpack.c.h.b16 %v894
    %v5154 = vunpack.c.l.b16 %v895
    %v5155 = vunpack.c.h.b16 %v895
    %v5156 = vunpack.c.l.b16 %v896
    %v5157 = vunpack.c.l.b16 %v897
    %v5158 = vunpack.c.h.b16 %v897
    %v5159 = vunpack.c.l.b16 %v898
    %v5160 = vunpack.c.h.b16 %v898
    %v5161 = vunpack.c.l.b16 %v899
    %v5162 = vunpack.c.h.b16 %v899
    %v5163 = vunpack.c.l.b16 %v900
    %v5164 = vunpack.c.h.b16 %v900
    %v5165 = vunpack.c.l.b16 %v901
    %v5166 = vunpack.c.l.b16 %v902
    %v5167 = vunpack.c.h.b16 %v902
    %v5168 = vunpack.c.l.b16 %v903
    %v5169 = vunpack.c.h.b16 %v903
    %v5170 = vunpack.c.l.b16 %v904
    %v5171 = vunpack.c.h.b16 %v904
    %v5172 = vunpack.c.l.b16 %v905
    %v5173 = vunpack.c.h.b16 %v905
    %v5174 = vunpack.c.l.b16 %v906
    %v5175 = vunpack.c.l.b16 %v907
    %v5176 = vunpack.c.h.b16 %v907
    %v5177 = vunpack.c.l.b16 %v908
    %v5178 = vunpack.c.h.b16 %v908
    %v5179 = vunpack.c.l.b16 %v909
    %v5180 = vunpack.c.h.b16 %v909
    %v5181 = vunpack.c.l.b16 %v910
    %v5182 = vunpack.c.h.b16 %v910
    %v5183 = vunpack.c.l.b16 %v911
    %v5184 = vunpack.c.l.b16 %v912
    %v5185 = vunpack.c.h.b16 %v912
    %v5186 = vunpack.c.l.b16 %v913
    %v5187 = vunpack.c.h.b16 %v913
    %v5188 = vunpack.c.l.b16 %v914
    %v5189 = vunpack.c.h.b16 %v914
    %v5190 = vunpack.c.l.b16 %v915
    %v5191 = vunpack.c.h.b16 %v915
    %v5192 = vunpack.c.l.b16 %v916
    %v5193 = vunpack.c.l.b16 %v917
    %v5194 = vunpack.c.h.b16 %v917
    %v5195 = vunpack.c.l.b16 %v918
    %v5196 = vunpack.c.h.b16 %v918
    %v5197 = vunpack.c.l.b16 %v919
    %v5198 = vunpack.c.h.b16 %v919
    %v5199 = vunpack.c.l.b16 %v920
    %v5200 = vunpack.c.h.b16 %v920
    %v5201 = vunpack.c.l.b16 %v921
    %v5202 = vunpack.c.l.b16 %v922
    %v5203 = vunpack.c.h.b16 %v922
    %v5204 = vunpack.c.l.b16 %v923
    %v5205 = vunpack.c.h.b16 %v923
    %v5206 = vunpack.c.l.b16 %v924
    %v5207 = vunpack.c.h.b16 %v924
    %v5208 = vunpack.c.l.b16 %v925
    %v5209 = vunpack.c.h.b16 %v925
    %v5210 = vunpack.c.l.b16 %v926
    %v5211 = vunpack.c.l.b16 %v927
    %v5212 = vunpack.c.h.b16 %v927
    %v5213 = vunpack.c.l.b16 %v928
    %v5214 = vunpack.c.h.b16 %v928
    %v5215 = vunpack.c.l.b16 %v929
    %v5216 = vunpack.c.h.b16 %v929
    %v5217 = vunpack.c.l.b16 %v930
    %v5218 = vunpack.c.h.b16 %v930
    %v5219 = vunpack.c.l.b16 %v931
    %v5220 = vunpack.c.l.b16 %v932
    %v5221 = vunpack.c.h.b16 %v932
    %v5222 = vunpack.c.l.b16 %v933
    %v5223 = vunpack.c.h.b16 %v933
    %v5224 = vunpack.c.l.b16 %v934
    %v5225 = vunpack.c.h.b16 %v934
    %v5226 = vunpack.c.l.b16 %v935
    %v5227 = vunpack.c.h.b16 %v935
    %v5228 = vunpack.c.l.b16 %v936
    %v5229 = vunpack.c.l.b16 %v937
    %v5230 = vunpack.c.h.b16 %v937
    %v5231 = vunpack.c.l.b16 %v938
    %v5232 = vunpack.c.h.b16 %v938
    %v5233 = vunpack.c.l.b16 %v939
    %v5234 = vunpack.c.h.b16 %v939
    %v5235 = vunpack.c.l.b16 %v940
    %v5236 = vunpack.c.h.b16 %v940
    %v5237 = vunpack.c.l.b16 %v941
    %v5238 = vunpack.c.l.b16 %v942
    %v5239 = vunpack.c.h.b16 %v942
    %v5240 = vunpack.c.l.b16 %v943
    %v5241 = vunpack.c.h.b16 %v943
    %v5242 = vunpack.c.l.b16 %v944
    %v5243 = vunpack.c.h.b16 %v944
    %v5244 = vunpack.c.l.b16 %v945
    %v5245 = vunpack.c.h.b16 %v945
    %v5246 = vunpack.c.l.b16 %v946
    %v5247 = vunpack.c.l.b16 %v947
    %v5248 = vunpack.c.h.b16 %v947
    %v5249 = vunpack.c.l.b16 %v948
    %v5250 = vunpack.c.h.b16 %v948
    %v5251 = vunpack.c.l.b16 %v949
    %v5252 = vunpack.c.h.b16 %v949
    %v5253 = vunpack.c.l.b16 %v950
    %v5254 = vunpack.c.h.b16 %v950
    %v5255 = vunpack.c.l.b16 %v951
    %v5256 = vunpack.c.l.b16 %v952
    %v5257 = vunpack.c.h.b16 %v952
    %v5258 = vunpack.c.l.b16 %v953
    %v5259 = vunpack.c.h.b16 %v953
    %v5260 = vunpack.c.l.b16 %v954
    %v5261 = vunpack.c.h.b16 %v954
    %v5262 = vunpack.c.l.b16 %v955
    %v5263 = vunpack.c.h.b16 %v955
    %v5264 = vunpack.c.l.b16 %v956
    %v5265 = vunpack.c.l.b16 %v957
    %v5266 = vunpack.c.h.b16 %v957
    %v5267 = vunpack.c.l.b16 %v958
    %v5268 = vunpack.c.h.b16 %v958
    %v5269 = vunpack.c.l.b16 %v959
    %v5270 = vunpack.c.h.b16 %v959
    %v5271 = vunpack.c.l.b16 %v960
    %v5272 = vunpack.c.h.b16 %v960
    %v5273 = vunpack.c.l.b16 %v961
    %v5274 = vunpack.c.l.b16 %v962
    %v5275 = vunpack.c.h.b16 %v962
    %v5276 = vunpack.c.l.b16 %v963
    %v5277 = vunpack.c.h.b16 %v963
    %v5278 = vunpack.c.l.b16 %v964
    %v5279 = vunpack.c.h.b16 %v964
    %v5280 = vunpack.c.l.b16 %v965
    %v5281 = vunpack.c.h.b16 %v965
    %v5282 = vunpack.c.l.b16 %v966
    %v5283 = vunpack.c.l.b16 %v967
    %v5284 = vunpack.c.h.b16 %v967
    %v5285 = vunpack.c.l.b16 %v968
    %v5286 = vunpack.c.h.b16 %v968
    %v5287 = vunpack.c.l.b16 %v969
    %v5288 = vunpack.c.h.b16 %v969
    %v5289 = vunpack.c.l.b16 %v970
    %v5290 = vunpack.c.h.b16 %v970
    %v5291 = vunpack.c.l.b16 %v971
    %v5292 = vunpack.c.l.b16 %v972
    %v5293 = vunpack.c.h.b16 %v972
    %v5294 = vunpack.c.l.b16 %v973
    %v5295 = vunpack.c.h.b16 %v973
    %v5296 = vunpack.c.l.b16 %v974
    %v5297 = vunpack.c.h.b16 %v974
    %v5298 = vunpack.c.l.b16 %v975
    %v5299 = vunpack.c.h.b16 %v975
    %v5300 = vunpack.c.l.b16 %v976
    %v5301 = vunpack.c.l.b16 %v977
    %v5302 = vunpack.c.h.b16 %v977
    %v5303 = vunpack.c.l.b16 %v978
    %v5304 = vunpack.c.h.b16 %v978
    %v5305 = vunpack.c.l.b16 %v979
    %v5306 = vunpack.c.h.b16 %v979
    %v5307 = vunpack.c.l.b16 %v980
    %v5308 = vunpack.c.h.b16 %v980
    %v5309 = vunpack.c.l.b16 %v981
    %v5310 = vunpack.c.l.b16 %v982
    %v5311 = vunpack.c.h.b16 %v982
    %v5312 = vunpack.c.l.b16 %v983
    %v5313 = vunpack.c.h.b16 %v983
    %v5314 = vunpack.c.l.b16 %v984
    %v5315 = vunpack.c.h.b16 %v984
    %v5316 = vunpack.c.l.b16 %v985
    %v5317 = vunpack.c.h.b16 %v985
    %v5318 = vunpack.c.l.b16 %v986
    %v5319 = vunpack.c.l.b16 %v987
    %v5320 = vunpack.c.h.b16 %v987
    %v5321 = vunpack.c.l.b16 %v988
    %v5322 = vunpack.c.h.b16 %v988
    %v5323 = vunpack.c.l.b16 %v989
    %v5324 = vunpack.c.h.b16 %v989
    %v5325 = vunpack.c.l.b16 %v990
    %v5326 = vunpack.c.h.b16 %v990
    %v5327 = vunpack.c.l.b16 %v991
    %v5328 = vunpack.c.l.b16 %v992
    %v5329 = vunpack.c.h.b16 %v992
    %v5330 = vunpack.c.l.b16 %v993
    %v5331 = vunpack.c.h.b16 %v993
    %v5332 = vunpack.c.l.b16 %v994
    %v5333 = vunpack.c.h.b16 %v994
    %v5334 = vunpack.c.l.b16 %v995
    %v5335 = vunpack.c.h.b16 %v995
    %v5336 = vunpack.c.l.b16 %v996
    %v5337 = vunpack.c.l.b16 %v997
    %v5338 = vunpack.c.h.b16 %v997
    %v5339 = vunpack.c.l.b16 %v998
    %v5340 = vunpack.c.h.b16 %v998
    %v5341 = vunpack.c.l.b16 %v999
    %v5342 = vunpack.c.h.b16 %v999
    %v5343 = vunpack.c.l.b16 %v1000
    %v5344 = vunpack.c.h.b16 %v1000
    %v5345 = vunpack.c.l.b16 %v1001
    %v5346 = vunpack.c.l.b16 %v1002
    %v5347 = vunpack.c.h.b16 %v1002
    %v5348 = vunpack.c.l.b16 %v1003
    %v5349 = vunpack.c.h.b16 %v1003
    %v5350 = vunpack.c.l.b16 %v1004
    %v5351 = vunpack.c.h.b16 %v1004
    %v5352 = vunpack.c.l.b16 %v1005
    %v5353 = vunpack.c.h.b16 %v1005
    %v5354 = vunpack.c.l.b16 %v1006
    %v5355 = vunpack.c.l.b16 %v1007
    %v5356 = vunpack.c.h.b16 %v1007
    %v5357 = vunpack.c.l.b16 %v1008
    %v5358 = vunpack.c.h.b16 %v1008
    %v5359 = vunpack.c.l.b16 %v1009
    %v5360 = vunpack.c.h.b16 %v1009
    %v5361 = vunpack.c.l.b16 %v1010
    %v5362 = vunpack.c.h.b16 %v1010
    %v5363 = vunpack.c.l.b16 %v1011
    %v5364 = vunpack.c.l.b16 %v1012
    %v5365 = vunpack.c.h.b16 %v1012
    %v5366 = vunpack.c.l.b16 %v1013
    %v5367 = vunpack.c.h.b16 %v1013
    %v5368 = vunpack.c.l.b16 %v1014
    %v5369 = vunpack.c.h.b16 %v1014
    %v5370 = vunpack.c.l.b16 %v1015
    %v5371 = vunpack.c.h.b16 %v1015
    %v5372 = vunpack.c.l.b16 %v1016
    %v5373 = vunpack.c.l.b16 %v1017
    %v5374 = vunpack.c.h.b16 %v1017
    %v5375 = vunpack.c.l.b16 %v1018
    %v5376 = vunpack.c.h.b16 %v1018
    %v5377 = vunpack.c.l.b16 %v1019
    %v5378 = vunpack.c.h.b16 %v1019
    %v5379 = vunpack.c.l.b16 %v1020
    %v5380 = vunpack.c.h.b16 %v1020
    %v5381 = vunpack.c.l.b16 %v1021
    %v5382 = vunpack.c.l.b16 %v1022
    %v5383 = vunpack.c.h.b16 %v1022
    %v5384 = vunpack.c.l.b16 %v1023
    %v5385 = vunpack.c.h.b16 %v1023
    %v5386 = vunpack.c.l.b16 %v1024
    %v5387 = vunpack.c.h.b16 %v1024
    %v5388 = vunpack.c.l.b16 %v1025
    %v5389 = vunpack.c.h.b16 %v1025
    %v5390 = vunpack.c.l.b16 %v1026
    %v5391 = vunpack.c.l.b16 %v1027
    %v5392 = vunpack.c.h.b16 %v1027
    %v5393 = vunpack.c.l.b16 %v1028
    %v5394 = vunpack.c.h.b16 %v1028
    %v5395 = vunpack.c.l.b16 %v1029
    %v5396 = vunpack.c.h.b16 %v1029
    %v5397 = vunpack.c.l.b16 %v1030
    %v5398 = vunpack.c.h.b16 %v1030
    %v5399 = vunpack.c.l.b16 %v1031
    %v5400 = vpack.c.b16 %v4248, %v4239
    %v5401 = vpack.c.b16 %v4249, %v4240
    %v5402 = vpack.c.b16 %v4250, %v4241
    %v5403 = vpack.c.b16 %v4251, %v4242
    %v5404 = vpack.c.b16 %v4252, %v4243
    %v5405 = vpack.c.b16 %v4253, %v4244
    %v5406 = vpack.c.b16 %v4254, %v4245
    %v5407 = vpack.c.b16 %v4255, %v4246
    %v5408 = vpack.c.b16 %v4256, %v4247
    %v5409 = vpack.c.b16 %v4266, %v4257
    %v5410 = vpack.c.b16 %v4267, %v4258
    %v5411 = vpack.c.b16 %v4268, %v4259
    %v5412 = vpack.c.b16 %v4269, %v4260
    %v5413 = vpack.c.b16 %v4270, %v4261
    %v5414 = vpack.c.b16 %v4271, %v4262
    %v5415 = vpack.c.b16 %v4272, %v4263
    %v5416 = vpack.c.b16 %v4273, %v4264
    %v5417 = vpack.c.b16 %v4274, %v4265
    %v5418 = vpack.c.b16 %v4284, %v4275
    %v5419 = vpack.c.b16 %v4285, %v4276
    %v5420 = vpack.c.b16 %v4286, %v4277
    %v5421 = vpack.c.b16 %v4287, %v4278
    %v5422 = vpack.c.b16 %v4288, %v4279
    %v5423 = vpack.c.b16 %v4289, %v4280
    %v5424 = vpack.c.b16 %v4290, %v4281
    %v5425 = vpack.c.b16 %v4291, %v4282
    %v5426 = vpack.c.b16 %v4292, %v4283
    %v5427 = vpack.c.b16 %v4302, %v4293
    %v5428 = vpack.c.b16 %v4303, %v4294
    %v5429 = vpack.c.b16 %v4304, %v4295
    %v5430 = vpack.c.b16 %v4305, %v4296
    %v5431 = vpack.c.b16 %v4306, %v4297
    %v5432 = vpack.c.b16 %v4307, %v4298
    %v5433 = vpack.c.b16 %v4308, %v4299
    %v5434 = vpack.c.b16 %v4309, %v4300
    %v5435 = vpack.c.b16 %v4310, %v4301
    %v5436 = vpack.c.b16 %v4320, %v4311
    %v5437 = vpack.c.b16 %v4321, %v4312
    %v5438 = vpack.c.b16 %v4322, %v4313
    %v5439 = vpack.c.b16 %v4323, %v4314
    %v5440 = vpack.c.b16 %v4324, %v4315
    %v5441 = vpack.c.b16 %v4325, %v4316
    %v5442 = vpack.c.b16 %v4326, %v4317
    %v5443 = vpack.c.b16 %v4327, %v4318
    %v5444 = vpack.c.b16 %v4328, %v4319
    %v5445 = vpack.c.b16 %v4338, %v4329
    %v5446 = vpack.c.b16 %v4339, %v4330
    %v5447 = vpack.c.b16 %v4340, %v4331
    %v5448 = vpack.c.b16 %v4341, %v4332
    %v5449 = vpack.c.b16 %v4342, %v4333
    %v5450 = vpack.c.b16 %v4343, %v4334
    %v5451 = vpack.c.b16 %v4344, %v4335
    %v5452 = vpack.c.b16 %v4345, %v4336
    %v5453 = vpack.c.b16 %v4346, %v4337
    %v5454 = vpack.c.b16 %v4356, %v4347
    %v5455 = vpack.c.b16 %v4357, %v4348
    %v5456 = vpack.c.b16 %v4358, %v4349
    %v5457 = vpack.c.b16 %v4359, %v4350
    %v5458 = vpack.c.b16 %v4360, %v4351
    %v5459 = vpack.c.b16 %v4361, %v4352
    %v5460 = vpack.c.b16 %v4362, %v4353
    %v5461 = vpack.c.b16 %v4363, %v4354
    %v5462 = vpack.c.b16 %v4364, %v4355
    %v5463 = vpack.c.b16 %v4374, %v4365
    %v5464 = vpack.c.b16 %v4375, %v4366
    %v5465 = vpack.c.b16 %v4376, %v4367
    %v5466 = vpack.c.b16 %v4377, %v4368
    %v5467 = vpack.c.b16 %v4378, %v4369
    %v5468 = vpack.c.b16 %v4379, %v4370
    %v5469 = vpack.c.b16 %v4380, %v4371
    %v5470 = vpack.c.b16 %v4381, %v4372
    %v5471 = vpack.c.b16 %v4382, %v4373
    %v5472 = vpack.c.b16 %v4392, %v4383
    %v5473 = vpack.c.b16 %v4393, %v4384
    %v5474 = vpack.c.b16 %v4394, %v4385
    %v5475 = vpack.c.b16 %v4395, %v4386
    %v5476 = vpack.c.b16 %v4396, %v4387
    %v5477 = vpack.c.b16 %v4397, %v4388
    %v5478 = vpack.c.b16 %v4398, %v4389
    %v5479 = vpack.c.b16 %v4399, %v4390
    %v5480 = vpack.c.b16 %v4400, %v4391
    %v5481 = vpack.c.b16 %v4410, %v4401
    %v5482 = vpack.c.b16 %v4411, %v4402
    %v5483 = vpack.c.b16 %v4412, %v4403
    %v5484 = vpack.c.b16 %v4413, %v4404
    %v5485 = vpack.c.b16 %v4414, %v4405
    %v5486 = vpack.c.b16 %v4415, %v4406
    %v5487 = vpack.c.b16 %v4416, %v4407
    %v5488 = vpack.c.b16 %v4417, %v4408
    %v5489 = vpack.c.b16 %v4418, %v4409
    %v5490 = vpack.c.b16 %v4428, %v4419
    %v5491 = vpack.c.b16 %v4429, %v4420
    %v5492 = vpack.c.b16 %v4430, %v4421
    %v5493 = vpack.c.b16 %v4431, %v4422
    %v5494 = vpack.c.b16 %v4432, %v4423
    %v5495 = vpack.c.b16 %v4433, %v4424
    %v5496 = vpack.c.b16 %v4434, %v4425
    %v5497 = vpack.c.b16 %v4435, %v4426
    %v5498 = vpack.c.b16 %v4436, %v4427
    %v5499 = vpack.c.b16 %v4446, %v4437
    %v5500 = vpack.c.b16 %v4447, %v4438
    %v5501 = vpack.c.b16 %v4448, %v4439
    %v5502 = vpack.c.b16 %v4449, %v4440
    %v5503 = vpack.c.b16 %v4450, %v4441
    %v5504 = vpack.c.b16 %v4451, %v4442
    %v5505 = vpack.c.b16 %v4452, %v4443
    %v5506 = vpack.c.b16 %v4453, %v4444
    %v5507 = vpack.c.b16 %v4454, %v4445
    %v5508 = vpack.c.b16 %v4464, %v4455
    %v5509 = vpack.c.b16 %v4465, %v4456
    %v5510 = vpack.c.b16 %v4466, %v4457
    %v5511 = vpack.c.b16 %v4467, %v4458
    %v5512 = vpack.c.b16 %v4468, %v4459
    %v5513 = vpack.c.b16 %v4469, %v4460
    %v5514 = vpack.c.b16 %v4470, %v4461
    %v5515 = vpack.c.b16 %v4471, %v4462
    %v5516 = vpack.c.b16 %v4472, %v4463
    %v5517 = vpack.c.b16 %v4482, %v4473
    %v5518 = vpack.c.b16 %v4483, %v4474
    %v5519 = vpack.c.b16 %v4484, %v4475
    %v5520 = vpack.c.b16 %v4485, %v4476
    %v5521 = vpack.c.b16 %v4486, %v4477
    %v5522 = vpack.c.b16 %v4487, %v4478
    %v5523 = vpack.c.b16 %v4488, %v4479
    %v5524 = vpack.c.b16 %v4489, %v4480
    %v5525 = vpack.c.b16 %v4490, %v4481
    %v5526 = vpack.c.b16 %v4500, %v4491
    %v5527 = vpack.c.b16 %v4501, %v4492
    %v5528 = vpack.c.b16 %v4502, %v4493
    %v5529 = vpack.c.b16 %v4503, %v4494
    %v5530 = vpack.c.b16 %v4504, %v4495
    %v5531 = vpack.c.b16 %v4505, %v4496
    %v5532 = vpack.c.b16 %v4506, %v4497
    %v5533 = vpack.c.b16 %v4507, %v4498
    %v5534 = vpack.c.b16 %v4508, %v4499
    %v5535 = vpack.c.b16 %v4518, %v4509
    %v5536 = vpack.c.b16 %v4519, %v4510
    %v5537 = vpack.c.b16 %v4520, %v4511
    %v5538 = vpack.c.b16 %v4521, %v4512
    %v5539 = vpack.c.b16 %v4522, %v4513
    %v5540 = vpack.c.b16 %v4523, %v4514
    %v5541 = vpack.c.b16 %v4524, %v4515
    %v5542 = vpack.c.b16 %v4525, %v4516
    %v5543 = vpack.c.b16 %v4526, %v4517
    %v5544 = vpack.c.b16 %v4536, %v4527
    %v5545 = vpack.c.b16 %v4537, %v4528
    %v5546 = vpack.c.b16 %v4538, %v4529
    %v5547 = vpack.c.b16 %v4539, %v4530
    %v5548 = vpack.c.b16 %v4540, %v4531
    %v5549 = vpack.c.b16 %v4541, %v4532
    %v5550 = vpack.c.b16 %v4542, %v4533
    %v5551 = vpack.c.b16 %v4543, %v4534
    %v5552 = vpack.c.b16 %v4544, %v4535
    %v5553 = vpack.c.b16 %v4554, %v4545
    %v5554 = vpack.c.b16 %v4555, %v4546
    %v5555 = vpack.c.b16 %v4556, %v4547
    %v5556 = vpack.c.b16 %v4557, %v4548
    %v5557 = vpack.c.b16 %v4558, %v4549
    %v5558 = vpack.c.b16 %v4559, %v4550
    %v5559 = vpack.c.b16 %v4560, %v4551
    %v5560 = vpack.c.b16 %v4561, %v4552
    %v5561 = vpack.c.b16 %v4562, %v4553
    %v5562 = vpack.c.b16 %v4572, %v4563
    %v5563 = vpack.c.b16 %v4573, %v4564
    %v5564 = vpack.c.b16 %v4574, %v4565
    %v5565 = vpack.c.b16 %v4575, %v4566
    %v5566 = vpack.c.b16 %v4576, %v4567
    %v5567 = vpack.c.b16 %v4577, %v4568
    %v5568 = vpack.c.b16 %v4578, %v4569
    %v5569 = vpack.c.b16 %v4579, %v4570
    %v5570 = vpack.c.b16 %v4580, %v4571
    %v5571 = vpack.c.b16 %v4590, %v4581
    %v5572 = vpack.c.b16 %v4591, %v4582
    %v5573 = vpack.c.b16 %v4592, %v4583
    %v5574 = vpack.c.b16 %v4593, %v4584
    %v5575 = vpack.c.b16 %v4594, %v4585
    %v5576 = vpack.c.b16 %v4595, %v4586
    %v5577 = vpack.c.b16 %v4596, %v4587
    %v5578 = vpack.c.b16 %v4597, %v4588
    %v5579 = vpack.c.b16 %v4598, %v4589
    %v5580 = vpack.c.b16 %v4608, %v4599
    %v5581 = vpack.c.b16 %v4609, %v4600
    %v5582 = vpack.c.b16 %v4610, %v4601
    %v5583 = vpack.c.b16 %v4611, %v4602
    %v5584 = vpack.c.b16 %v4612, %v4603
    %v5585 = vpack.c.b16 %v4613, %v4604
    %v5586 = vpack.c.b16 %v4614, %v4605
    %v5587 = vpack.c.b16 %v4615, %v4606
    %v5588 = vpack.c.b16 %v4616, %v4607
    %v5589 = vpack.c.b16 %v4626, %v4617
    %v5590 = vpack.c.b16 %v4627, %v4618
    %v5591 = vpack.c.b16 %v4628, %v4619
    %v5592 = vpack.c.b16 %v4629, %v4620
    %v5593 = vpack.c.b16 %v4630, %v4621
    %v5594 = vpack.c.b16 %v4631, %v4622
    %v5595 = vpack.c.b16 %v4632, %v4623
    %v5596 = vpack.c.b16 %v4633, %v4624
    %v5597 = vpack.c.b16 %v4634, %v4625
    %v5598 = vpack.c.b16 %v4644, %v4635
    %v5599 = vpack.c.b16 %v4645, %v4636
    %v5600 = vpack.c.b16 %v4646, %v4637
    %v5601 = vpack.c.b16 %v4647, %v4638
    %v5602 = vpack.c.b16 %v4648, %v4639
    %v5603 = vpack.c.b16 %v4649, %v4640
    %v5604 = vpack.c.b16 %v4650, %v4641
    %v5605 = vpack.c.b16 %v4651, %v4642
    %v5606 = vpack.c.b16 %v4652, %v4643
    %v5607 = vpack.c.b16 %v4662, %v4653
    %v5608 = vpack.c.b16 %v4663, %v4654
    %v5609 = vpack.c.b16 %v4664, %v4655
    %v5610 = vpack.c.b16 %v4665, %v4656
    %v5611 = vpack.c.b16 %v4666, %v4657
    %v5612 = vpack.c.b16 %v4667, %v4658
    %v5613 = vpack.c.b16 %v4668, %v4659
    %v5614 = vpack.c.b16 %v4669, %v4660
    %v5615 = vpack.c.b16 %v4670, %v4661
    %v5616 = vpack.c.b16 %v4680, %v4671
    %v5617 = vpack.c.b16 %v4681, %v4672
    %v5618 = vpack.c.b16 %v4682, %v4673
    %v5619 = vpack.c.b16 %v4683, %v4674
    %v5620 = vpack.c.b16 %v4684, %v4675
    %v5621 = vpack.c.b16 %v4685, %v4676
    %v5622 = vpack.c.b16 %v4686, %v4677
    %v5623 = vpack.c.b16 %v4687, %v4678
    %v5624 = vpack.c.b16 %v4688, %v4679
    %v5625 = vpack.c.b16 %v4698, %v4689
    %v5626 = vpack.c.b16 %v4699, %v4690
    %v5627 = vpack.c.b16 %v4700, %v4691
    %v5628 = vpack.c.b16 %v4701, %v4692
    %v5629 = vpack.c.b16 %v4702, %v4693
    %v5630 = vpack.c.b16 %v4703, %v4694
    %v5631 = vpack.c.b16 %v4704, %v4695
    %v5632 = vpack.c.b16 %v4705, %v4696
    %v5633 = vpack.c.b16 %v4706, %v4697
    %v5634 = vpack.c.b16 %v4716, %v4707
    %v5635 = vpack.c.b16 %v4717, %v4708
    %v5636 = vpack.c.b16 %v4718, %v4709
    %v5637 = vpack.c.b16 %v4719, %v4710
    %v5638 = vpack.c.b16 %v4720, %v4711
    %v5639 = vpack.c.b16 %v4721, %v4712
    %v5640 = vpack.c.b16 %v4722, %v4713
    %v5641 = vpack.c.b16 %v4723, %v4714
    %v5642 = vpack.c.b16 %v4724, %v4715
    %v5643 = vpack.c.b16 %v4734, %v4725
    %v5644 = vpack.c.b16 %v4735, %v4726
    %v5645 = vpack.c.b16 %v4736, %v4727
    %v5646 = vpack.c.b16 %v4737, %v4728
    %v5647 = vpack.c.b16 %v4738, %v4729
    %v5648 = vpack.c.b16 %v4739, %v4730
    %v5649 = vpack.c.b16 %v4740, %v4731
    %v5650 = vpack.c.b16 %v4741, %v4732
    %v5651 = vpack.c.b16 %v4742, %v4733
    %v5652 = vpack.c.b16 %v4752, %v4743
    %v5653 = vpack.c.b16 %v4753, %v4744
    %v5654 = vpack.c.b16 %v4754, %v4745
    %v5655 = vpack.c.b16 %v4755, %v4746
    %v5656 = vpack.c.b16 %v4756, %v4747
    %v5657 = vpack.c.b16 %v4757, %v4748
    %v5658 = vpack.c.b16 %v4758, %v4749
    %v5659 = vpack.c.b16 %v4759, %v4750
    %v5660 = vpack.c.b16 %v4760, %v4751
    %v5661 = vpack.c.b16 %v4770, %v4761
    %v5662 = vpack.c.b16 %v4771, %v4762
    %v5663 = vpack.c.b16 %v4772, %v4763
    %v5664 = vpack.c.b16 %v4773, %v4764
    %v5665 = vpack.c.b16 %v4774, %v4765
    %v5666 = vpack.c.b16 %v4775, %v4766
    %v5667 = vpack.c.b16 %v4776, %v4767
    %v5668 = vpack.c.b16 %v4777, %v4768
    %v5669 = vpack.c.b16 %v4778, %v4769
    %v5670 = vpack.c.b16 %v4788, %v4779
    %v5671 = vpack.c.b16 %v4789, %v4780
    %v5672 = vpack.c.b16 %v4790, %v4781
    %v5673 = vpack.c.b16 %v4791, %v4782
    %v5674 = vpack.c.b16 %v4792, %v4783
    %v5675 = vpack.c.b16 %v4793, %v4784
    %v5676 = vpack.c.b16 %v4794, %v4785
    %v5677 = vpack.c.b16 %v4795, %v4786
    %v5678 = vpack.c.b16 %v4796, %v4787
    %v5679 = vpack.c.b16 %v4806, %v4797
    %v5680 = vpack.c.b16 %v4807, %v4798
    %v5681 = vpack.c.b16 %v4808, %v4799
    %v5682 = vpack.c.b16 %v4809, %v4800
    %v5683 = vpack.c.b16 %v4810, %v4801
    %v5684 = vpack.c.b16 %v4811, %v4802
    %v5685 = vpack.c.b16 %v4812, %v4803
    %v5686 = vpack.c.b16 %v4813, %v4804
    %v5687 = vpack.c.b16 %v4814, %v4805
    %v5688 = vpack.c.b16 %v4824, %v4815
    %v5689 = vpack.c.b16 %v4825, %v4816
    %v5690 = vpack.c.b16 %v4826, %v4817
    %v5691 = vpack.c.b16 %v4827, %v4818
    %v5692 = vpack.c.b16 %v4828, %v4819
    %v5693 = vpack.c.b16 %v4829, %v4820
    %v5694 = vpack.c.b16 %v4830, %v4821
    %v5695 = vpack.c.b16 %v4831, %v4822
    %v5696 = vpack.c.b16 %v4832, %v4823
    %v5697 = vpack.c.b16 %v4842, %v4833
    %v5698 = vpack.c.b16 %v4843, %v4834
    %v5699 = vpack.c.b16 %v4844, %v4835
    %v5700 = vpack.c.b16 %v4845, %v4836
    %v5701 = vpack.c.b16 %v4846, %v4837
    %v5702 = vpack.c.b16 %v4847, %v4838
    %v5703 = vpack.c.b16 %v4848, %v4839
    %v5704 = vpack.c.b16 %v4849, %v4840
    %v5705 = vpack.c.b16 %v4850, %v4841
    %v5706 = vpack.c.b16 %v4860, %v4851
    %v5707 = vpack.c.b16 %v4861, %v4852
    %v5708 = vpack.c.b16 %v4862, %v4853
    %v5709 = vpack.c.b16 %v4863, %v4854
    %v5710 = vpack.c.b16 %v4864, %v4855
    %v5711 = vpack.c.b16 %v4865, %v4856
    %v5712 = vpack.c.b16 %v4866, %v4857
    %v5713 = vpack.c.b16 %v4867, %v4858
    %v5714 = vpack.c.b16 %v4868, %v4859
    %v5715 = vpack.c.b16 %v4878, %v4869
    %v5716 = vpack.c.b16 %v4879, %v4870
    %v5717 = vpack.c.b16 %v4880, %v4871
    %v5718 = vpack.c.b16 %v4881, %v4872
    %v5719 = vpack.c.b16 %v4882, %v4873
    %v5720 = vpack.c.b16 %v4883, %v4874
    %v5721 = vpack.c.b16 %v4884, %v4875
    %v5722 = vpack.c.b16 %v4885, %v4876
    %v5723 = vpack.c.b16 %v4886, %v4877
    %v5724 = vpack.c.b16 %v4896, %v4887
    %v5725 = vpack.c.b16 %v4897, %v4888
    %v5726 = vpack.c.b16 %v4898, %v4889
    %v5727 = vpack.c.b16 %v4899, %v4890
    %v5728 = vpack.c.b16 %v4900, %v4891
    %v5729 = vpack.c.b16 %v4901, %v4892
    %v5730 = vpack.c.b16 %v4902, %v4893
    %v5731 = vpack.c.b16 %v4903, %v4894
    %v5732 = vpack.c.b16 %v4904, %v4895
    %v5733 = vpack.c.b16 %v4914, %v4905
    %v5734 = vpack.c.b16 %v4915, %v4906
    %v5735 = vpack.c.b16 %v4916, %v4907
    %v5736 = vpack.c.b16 %v4917, %v4908
    %v5737 = vpack.c.b16 %v4918, %v4909
    %v5738 = vpack.c.b16 %v4919, %v4910
    %v5739 = vpack.c.b16 %v4920, %v4911
    %v5740 = vpack.c.b16 %v4921, %v4912
    %v5741 = vpack.c.b16 %v4922, %v4913
    %v5742 = vpack.c.b16 %v4932, %v4923
    %v5743 = vpack.c.b16 %v4933, %v4924
    %v5744 = vpack.c.b16 %v4934, %v4925
    %v5745 = vpack.c.b16 %v4935, %v4926
    %v5746 = vpack.c.b16 %v4936, %v4927
    %v5747 = vpack.c.b16 %v4937, %v4928
    %v5748 = vpack.c.b16 %v4938, %v4929
    %v5749 = vpack.c.b16 %v4939, %v4930
    %v5750 = vpack.c.b16 %v4940, %v4931
    %v5751 = vpack.c.b16 %v4950, %v4941
    %v5752 = vpack.c.b16 %v4951, %v4942
    %v5753 = vpack.c.b16 %v4952, %v4943
    %v5754 = vpack.c.b16 %v4953, %v4944
    %v5755 = vpack.c.b16 %v4954, %v4945
    %v5756 = vpack.c.b16 %v4955, %v4946
    %v5757 = vpack.c.b16 %v4956, %v4947
    %v5758 = vpack.c.b16 %v4957, %v4948
    %v5759 = vpack.c.b16 %v4958, %v4949
    %v5760 = vpack.c.b16 %v4968, %v4959
    %v5761 = vpack.c.b16 %v4969, %v4960
    %v5762 = vpack.c.b16 %v4970, %v4961
    %v5763 = vpack.c.b16 %v4971, %v4962
    %v5764 = vpack.c.b16 %v4972, %v4963
    %v5765 = vpack.c.b16 %v4973, %v4964
    %v5766 = vpack.c.b16 %v4974, %v4965
    %v5767 = vpack.c.b16 %v4975, %v4966
    %v5768 = vpack.c.b16 %v4976, %v4967
    %v5769 = vpack.c.b16 %v4986, %v4977
    %v5770 = vpack.c.b16 %v4987, %v4978
    %v5771 = vpack.c.b16 %v4988, %v4979
    %v5772 = vpack.c.b16 %v4989, %v4980
    %v5773 = vpack.c.b16 %v4990, %v4981
    %v5774 = vpack.c.b16 %v4991, %v4982
    %v5775 = vpack.c.b16 %v4992, %v4983
    %v5776 = vpack.c.b16 %v4993, %v4984
    %v5777 = vpack.c.b16 %v4994, %v4985
    %v5778 = vpack.c.b16 %v5004, %v4995
    %v5779 = vpack.c.b16 %v5005, %v4996
    %v5780 = vpack.c.b16 %v5006, %v4997
    %v5781 = vpack.c.b16 %v5007, %v4998
    %v5782 = vpack.c.b16 %v5008, %v4999
    %v5783 = vpack.c.b16 %v5009, %v5000
    %v5784 = vpack.c.b16 %v5010, %v5001
    %v5785 = vpack.c.b16 %v5011, %v5002
    %v5786 = vpack.c.b16 %v5012, %v5003
    %v5787 = vpack.c.b16 %v5022, %v5013
    %v5788 = vpack.c.b16 %v5023, %v5014
    %v5789 = vpack.c.b16 %v5024, %v5015
    %v5790 = vpack.c.b16 %v5025, %v5016
    %v5791 = vpack.c.b16 %v5026, %v5017
    %v5792 = vpack.c.b16 %v5027, %v5018
    %v5793 = vpack.c.b16 %v5028, %v5019
    %v5794 = vpack.c.b16 %v5029, %v5020
    %v5795 = vpack.c.b16 %v5030, %v5021
    %v5796 = vpack.c.b16 %v5040, %v5031
    %v5797 = vpack.c.b16 %v5041, %v5032
    %v5798 = vpack.c.b16 %v5042, %v5033
    %v5799 = vpack.c.b16 %v5043, %v5034
    %v5800 = vpack.c.b16 %v5044, %v5035
    %v5801 = vpack.c.b16 %v5045, %v5036
    %v5802 = vpack.c.b16 %v5046, %v5037
    %v5803 = vpack.c.b16 %v5047, %v5038
    %v5804 = vpack.c.b16 %v5048, %v5039
    %v5805 = vpack.c.b16 %v5058, %v5049
    %v5806 = vpack.c.b16 %v5059, %v5050
    %v5807 = vpack.c.b16 %v5060, %v5051
    %v5808 = vpack.c.b16 %v5061, %v5052
    %v5809 = vpack.c.b16 %v5062, %v5053
    %v5810 = vpack.c.b16 %v5063, %v5054
    %v5811 = vpack.c.b16 %v5064, %v5055
    %v5812 = vpack.c.b16 %v5065, %v5056
    %v5813 = vpack.c.b16 %v5066, %v5057
    %v5814 = vpack.c.b16 %v5076, %v5067
    %v5815 = vpack.c.b16 %v5077, %v5068
    %v5816 = vpack.c.b16 %v5078, %v5069
    %v5817 = vpack.c.b16 %v5079, %v5070
    %v5818 = vpack.c.b16 %v5080, %v5071
    %v5819 = vpack.c.b16 %v5081, %v5072
    %v5820 = vpack.c.b16 %v5082, %v5073
    %v5821 = vpack.c.b16 %v5083, %v5074
    %v5822 = vpack.c.b16 %v5084, %v5075
    %v5823 = vpack.c.b16 %v5094, %v5085
    %v5824 = vpack.c.b16 %v5095, %v5086
    %v5825 = vpack.c.b16 %v5096, %v5087
    %v5826 = vpack.c.b16 %v5097, %v5088
    %v5827 = vpack.c.b16 %v5098, %v5089
    %v5828 = vpack.c.b16 %v5099, %v5090
    %v5829 = vpack.c.b16 %v5100, %v5091
    %v5830 = vpack.c.b16 %v5101, %v5092
    %v5831 = vpack.c.b16 %v5102, %v5093
    %v5832 = vpack.c.b16 %v5112, %v5103
    %v5833 = vpack.c.b16 %v5113, %v5104
    %v5834 = vpack.c.b16 %v5114, %v5105
    %v5835 = vpack.c.b16 %v5115, %v5106
    %v5836 = vpack.c.b16 %v5116, %v5107
    %v5837 = vpack.c.b16 %v5117, %v5108
    %v5838 = vpack.c.b16 %v5118, %v5109
    %v5839 = vpack.c.b16 %v5119, %v5110
    %v5840 = vpack.c.b16 %v5120, %v5111
    %v5841 = vpack.c.b16 %v5130, %v5121
    %v5842 = vpack.c.b16 %v5131, %v5122
    %v5843 = vpack.c.b16 %v5132, %v5123
    %v5844 = vpack.c.b16 %v5133, %v5124
    %v5845 = vpack.c.b16 %v5134, %v5125
    %v5846 = vpack.c.b16 %v5135, %v5126
    %v5847 = vpack.c.b16 %v5136, %v5127
    %v5848 = vpack.c.b16 %v5137, %v5128
    %v5849 = vpack.c.b16 %v5138, %v5129
    %v5850 = vpack.c.b16 %v5148, %v5139
    %v5851 = vpack.c.b16 %v5149, %v5140
    %v5852 = vpack.c.b16 %v5150, %v5141
    %v5853 = vpack.c.b16 %v5151, %v5142
    %v5854 = vpack.c.b16 %v5152, %v5143
    %v5855 = vpack.c.b16 %v5153, %v5144
    %v5856 = vpack.c.b16 %v5154, %v5145
    %v5857 = vpack.c.b16 %v5155, %v5146
    %v5858 = vpack.c.b16 %v5156, %v5147
    %v5859 = vpack.c.b16 %v5166, %v5157
    %v5860 = vpack.c.b16 %v5167, %v5158
    %v5861 = vpack.c.b16 %v5168, %v5159
    %v5862 = vpack.c.b16 %v5169, %v5160
    %v5863 = vpack.c.b16 %v5170, %v5161
    %v5864 = vpack.c.b16 %v5171, %v5162
    %v5865 = vpack.c.b16 %v5172, %v5163
    %v5866 = vpack.c.b16 %v5173, %v5164
    %v5867 = vpack.c.b16 %v5174, %v5165
    %v5868 = vpack.c.b16 %v5184, %v5175
    %v5869 = vpack.c.b16 %v5185, %v5176
    %v5870 = vpack.c.b16 %v5186, %v5177
    %v5871 = vpack.c.b16 %v5187, %v5178
    %v5872 = vpack.c.b16 %v5188, %v5179
    %v5873 = vpack.c.b16 %v5189, %v5180
    %v5874 = vpack.c.b16 %v5190, %v5181
    %v5875 = vpack.c.b16 %v5191, %v5182
    %v5876 = vpack.c.b16 %v5192, %v5183
    %v5877 = vpack.c.b16 %v5202, %v5193
    %v5878 = vpack.c.b16 %v5203, %v5194
    %v5879 = vpack.c.b16 %v5204, %v5195
    %v5880 = vpack.c.b16 %v5205, %v5196
    %v5881 = vpack.c.b16 %v5206, %v5197
    %v5882 = vpack.c.b16 %v5207, %v5198
    %v5883 = vpack.c.b16 %v5208, %v5199
    %v5884 = vpack.c.b16 %v5209, %v5200
    %v5885 = vpack.c.b16 %v5210, %v5201
    %v5886 = vpack.c.b16 %v5220, %v5211
    %v5887 = vpack.c.b16 %v5221, %v5212
    %v5888 = vpack.c.b16 %v5222, %v5213
    %v5889 = vpack.c.b16 %v5223, %v5214
    %v5890 = vpack.c.b16 %v5224, %v5215
    %v5891 = vpack.c.b16 %v5225, %v5216
    %v5892 = vpack.c.b16 %v5226, %v5217
    %v5893 = vpack.c.b16 %v5227, %v5218
    %v5894 = vpack.c.b16 %v5228, %v5219
    %v5895 = vpack.c.b16 %v5238, %v5229
    %v5896 = vpack.c.b16 %v5239, %v5230
    %v5897 = vpack.c.b16 %v5240, %v5231
    %v5898 = vpack.c.b16 %v5241, %v5232
    %v5899 = vpack.c.b16 %v5242, %v5233
    %v5900 = vpack.c.b16 %v5243, %v5234
    %v5901 = vpack.c.b16 %v5244, %v5235
    %v5902 = vpack.c.b16 %v5245, %v5236
    %v5903 = vpack.c.b16 %v5246, %v5237
    %v5904 = vpack.c.b16 %v5256, %v5247
    %v5905 = vpack.c.b16 %v5257, %v5248
    %v5906 = vpack.c.b16 %v5258, %v5249
    %v5907 = vpack.c.b16 %v5259, %v5250
    %v5908 = vpack.c.b16 %v5260, %v5251
    %v5909 = vpack.c.b16 %v5261, %v5252
    %v5910 = vpack.c.b16 %v5262, %v5253
    %v5911 = vpack.c.b16 %v5263, %v5254
    %v5912 = vpack.c.b16 %v5264, %v5255
    %v5913 = vpack.c.b16 %v5274, %v5265
    %v5914 = vpack.c.b16 %v5275, %v5266
    %v5915 = vpack.c.b16 %v5276, %v5267
    %v5916 = vpack.c.b16 %v5277, %v5268
    %v5917 = vpack.c.b16 %v5278, %v5269
    %v5918 = vpack.c.b16 %v5279, %v5270
    %v5919 = vpack.c.b16 %v5280, %v5271
    %v5920 = vpack.c.b16 %v5281, %v5272
    %v5921 = vpack.c.b16 %v5282, %v5273
    %v5922 = vpack.c.b16 %v5292, %v5283
    %v5923 = vpack.c.b16 %v5293, %v5284
    %v5924 = vpack.c.b16 %v5294, %v5285
    %v5925 = vpack.c.b16 %v5295, %v5286
    %v5926 = vpack.c.b16 %v5296, %v5287
    %v5927 = vpack.c.b16 %v5297, %v5288
    %v5928 = vpack.c.b16 %v5298, %v5289
    %v5929 = vpack.c.b16 %v5299, %v5290
    %v5930 = vpack.c.b16 %v5300, %v5291
    %v5931 = vpack.c.b16 %v5310, %v5301
    %v5932 = vpack.c.b16 %v5311, %v5302
    %v5933 = vpack.c.b16 %v5312, %v5303
    %v5934 = vpack.c.b16 %v5313, %v5304
    %v5935 = vpack.c.b16 %v5314, %v5305
    %v5936 = vpack.c.b16 %v5315, %v5306
    %v5937 = vpack.c.b16 %v5316, %v5307
    %v5938 = vpack.c.b16 %v5317, %v5308
    %v5939 = vpack.c.b16 %v5318, %v5309
    %v5940 = vpack.c.b16 %v5328, %v5319
    %v5941 = vpack.c.b16 %v5329, %v5320
    %v5942 = vpack.c.b16 %v5330, %v5321
    %v5943 = vpack.c.b16 %v5331, %v5322
    %v5944 = vpack.c.b16 %v5332, %v5323
    %v5945 = vpack.c.b16 %v5333, %v5324
    %v5946 = vpack.c.b16 %v5334, %v5325
    %v5947 = vpack.c.b16 %v5335, %v5326
    %v5948 = vpack.c.b16 %v5336, %v5327
    %v5949 = vpack.c.b16 %v5346, %v5337
    %v5950 = vpack.c.b16 %v5347, %v5338
    %v5951 = vpack.c.b16 %v5348, %v5339
    %v5952 = vpack.c.b16 %v5349, %v5340
    %v5953 = vpack.c.b16 %v5350, %v5341
    %v5954 = vpack.c.b16 %v5351, %v5342
    %v5955 = vpack.c.b16 %v5352, %v5343
    %v5956 = vpack.c.b16 %v5353, %v5344
    %v5957 = vpack.c.b16 %v5354, %v5345
    %v5958 = vpack.c.b16 %v5364, %v5355
    %v5959 = vpack.c.b16 %v5365, %v5356
    %v5960 = vpack.c.b16 %v5366, %v5357
    %v5961 = vpack.c.b16 %v5367, %v5358
    %v5962 = vpack.c.b16 %v5368, %v5359
    %v5963 = vpack.c.b16 %v5369, %v5360
    %v5964 = vpack.c.b16 %v5370, %v5361
    %v5965 = vpack.c.b16 %v5371, %v5362
    %v5966 = vpack.c.b16 %v5372, %v5363
    %v5967 = vpack.c.b16 %v5382, %v5373
    %v5968 = vpack.c.b16 %v5383, %v5374
    %v5969 = vpack.c.b16 %v5384, %v5375
    %v5970 = vpack.c.b16 %v5385, %v5376
    %v5971 = vpack.c.b16 %v5386, %v5377
    %v5972 = vpack.c.b16 %v5387, %v5378
    %v5973 = vpack.c.b16 %v5388, %v5379
    %v5974 = vpack.c.b16 %v5389, %v5380
    %v5975 = vpack.c.b16 %v5390, %v5381
    %v5976 = vpack.c.b16 %v5391, %v5391
    %v5977 = vpack.c.b16 %v5392, %v5392
    %v5978 = vpack.c.b16 %v5393, %v5393
    %v5979 = vpack.c.b16 %v5394, %v5394
    %v5980 = vpack.c.b16 %v5395, %v5395
    %v5981 = vpack.c.b16 %v5396, %v5396
    %v5982 = vpack.c.b16 %v5397, %v5397
    %v5983 = vpack.c.b16 %v5398, %v5398
    %v5984 = vpack.c.b16 %v5399, %v5399
    %vm6505 = vcmask 7168
    %v6507 = vsel %vm6505, %v5408, 0
    %v6510 = vsel %vm6505, %v5417, 0
    %v6513 = vsel %vm6505, %v5426, 0
    %v6516 = vsel %vm6505, %v5435, 0
    %v6519 = vsel %vm6505, %v5444, 0
    %v6522 = vsel %vm6505, %v5453, 0
    %v6525 = vsel %vm6505, %v5462, 0
    %v6528 = vsel %vm6505, %v5471, 0
    %v6531 = vsel %vm6505, %v5480, 0
    %v6534 = vsel %vm6505, %v5489, 0
    %v6537 = vsel %vm6505, %v5498, 0
    %v6540 = vsel %vm6505, %v5507, 0
    %v6543 = vsel %vm6505, %v5516, 0
    %v6546 = vsel %vm6505, %v5525, 0
    %v6549 = vsel %vm6505, %v5534, 0
    %v6552 = vsel %vm6505, %v5543, 0
    %v6555 = vsel %vm6505, %v5552, 0
    %v6558 = vsel %vm6505, %v5561, 0
    %v6561 = vsel %vm6505, %v5570, 0
    %v6564 = vsel %vm6505, %v5579, 0
    %v6567 = vsel %vm6505, %v5588, 0
    %v6570 = vsel %vm6505, %v5597, 0
    %v6573 = vsel %vm6505, %v5606, 0
    %v6576 = vsel %vm6505, %v5615, 0
    %v6579 = vsel %vm6505, %v5624, 0
    %v6582 = vsel %vm6505, %v5633, 0
    %v6585 = vsel %vm6505, %v5642, 0
    %v6588 = vsel %vm6505, %v5651, 0
    %v6591 = vsel %vm6505, %v5660, 0
    %v6594 = vsel %vm6505, %v5669, 0
    %v6597 = vsel %vm6505, %v5678, 0
    %v6600 = vsel %vm6505, %v5687, 0
    %v6603 = vsel %vm6505, %v5696, 0
    %v6606 = vsel %vm6505, %v5705, 0
    %v6609 = vsel %vm6505, %v5714, 0
    %v6612 = vsel %vm6505, %v5723, 0
    %v6615 = vsel %vm6505, %v5732, 0
    %v6618 = vsel %vm6505, %v5741, 0
    %v6621 = vsel %vm6505, %v5750, 0
    %v6624 = vsel %vm6505, %v5759, 0
    %v6627 = vsel %vm6505, %v5768, 0
    %v6630 = vsel %vm6505, %v5777, 0
    %v6633 = vsel %vm6505, %v5786, 0
    %v6636 = vsel %vm6505, %v5795, 0
    %v6639 = vsel %vm6505, %v5804, 0
    %v6642 = vsel %vm6505, %v5813, 0
    %v6645 = vsel %vm6505, %v5822, 0
    %v6648 = vsel %vm6505, %v5831, 0
    %v6651 = vsel %vm6505, %v5840, 0
    %v6654 = vsel %vm6505, %v5849, 0
    %v6657 = vsel %vm6505, %v5858, 0
    %v6660 = vsel %vm6505, %v5867, 0
    %v6663 = vsel %vm6505, %v5876, 0
    %v6666 = vsel %vm6505, %v5885, 0
    %v6669 = vsel %vm6505, %v5894, 0
    %v6672 = vsel %vm6505, %v5903, 0
    %v6675 = vsel %vm6505, %v5912, 0
    %v6678 = vsel %vm6505, %v5921, 0
    %v6681 = vsel %vm6505, %v5930, 0
    %v6684 = vsel %vm6505, %v5939, 0
    %v6687 = vsel %vm6505, %v5948, 0
    %v6690 = vsel %vm6505, %v5957, 0
    %v6693 = vsel %vm6505, %v5966, 0
    %v6696 = vsel %vm6505, %v5975, 0
    %v6699 = vsel %vm6505, %v5984, 0
    %v6702 = vand.u32 %v3593, %v2715
    %6704 = vmatprep.subr.bf16.mxu0 0
    %6705 = vmatpush1.bf16.msra.mxu0 %v3529
    %6706 = vmatprep.subr.bf16.mxu0 0
    %6707 = vmatpush1.bf16.msra.mxu0 %v3530
    %6708 = vmatprep.subr.bf16.mxu0 0
    %6709 = vmatpush1.bf16.msra.mxu0 %v3531
    %6710 = vmatprep.subr.bf16.mxu0 0
    %6711 = vmatpush1.bf16.msra.mxu0 %v3532
    %6712 = vmatprep.subr.bf16.mxu0 0
    %6713 = vmatpush1.bf16.msra.mxu0 %v3533
    %6714 = vmatprep.subr.bf16.mxu0 0
    %6715 = vmatpush1.bf16.msra.mxu0 %v3534
    %6716 = vmatprep.subr.bf16.mxu0 0
    %6717 = vmatpush1.bf16.msra.mxu0 %v3535
    %6718 = vmatprep.subr.bf16.mxu0 0
    %6719 = vmatpush1.bf16.msra.mxu0 %v3536
    %6720 = vmatprep.subr.bf16.mxu0 0
    %6721 = vmatpush1.bf16.msra.mxu0 %v3537
    %6722 = vmatprep.subr.bf16.mxu0 0
    %6723 = vmatpush1.bf16.msra.mxu0 %v3538
    %6724 = vmatprep.subr.bf16.mxu0 0
    %6725 = vmatpush1.bf16.msra.mxu0 %v3539
    %6726 = vmatprep.subr.bf16.mxu0 0
    %6727 = vmatpush1.bf16.msra.mxu0 %v3540
    %6728 = vmatprep.subr.bf16.mxu0 0
    %6729 = vmatpush1.bf16.msra.mxu0 %v3541
    %6730 = vmatprep.subr.bf16.mxu0 0
    %6731 = vmatpush1.bf16.msra.mxu0 %v3542
    %6732 = vmatprep.subr.bf16.mxu0 0
    %6733 = vmatpush1.bf16.msra.mxu0 %v3543
    %6734 = vmatprep.subr.bf16.mxu0 0
    %6735 = vmatpush1.bf16.msra.mxu0 %v3544
    %6736 = vmatprep.mubr.bf16.mxu0 %v5401
    %6737 = vmatmul.mubr.bf16.gmra.mrb[0].mxu0 %v5400
    %v6738 = vpop.f32.mrb[0].mxu0
    %v6739 = vadd.f32 0.0, %v6738
    %v6740 = vpop.f32.mrb[0].mxu0
    %v6741 = vpop.f32.mrb[0].mxu0
    %v6742 = vadd.f32 0.0, %v6741
    %v6743 = vpop.f32.mrb[0].mxu0
    %6744 = vmatprep.mubr.bf16.mxu0 %v5410
    %6745 = vmatmul.mubr.bf16.gmra.mrb[0].mxu0 %v5409
    %v6746 = vpop.f32.mrb[0].mxu0
    %v6747 = vadd.f32 0.0, %v6746
    %v6748 = vpop.f32.mrb[0].mxu0
    %v6749 = vpop.f32.mrb[0].mxu0
    %v6750 = vadd.f32 0.0, %v6749
    %v6751 = vpop.f32.mrb[0].mxu0
    %6752 = vmatprep.mubr.bf16.mxu0 %v5419
    %6753 = vmatmul.mubr.bf16.gmra.mrb[0].mxu0 %v5418
    %v6754 = vpop.f32.mrb[0].mxu0
    %v6755 = vadd.f32 0.0, %v6754
    %v6756 = vpop.f32.mrb[0].mxu0
    %v6757 = vpop.f32.mrb[0].mxu0
    %v6758 = vadd.f32 0.0, %v6757
    %v6759 = vpop.f32.mrb[0].mxu0
    %6760 = vmatprep.mubr.bf16.mxu0 %v5428
    %6761 = vmatmul.mubr.bf16.gmra.mrb[0].mxu0 %v5427
    %v6762 = vpop.f32.mrb[0].mxu0
    %v6763 = vadd.f32 0.0, %v6762
    %v6764 = vpop.f32.mrb[0].mxu0
    %v6765 = vpop.f32.mrb[0].mxu0
    %v6766 = vadd.f32 0.0, %v6765
    %v6767 = vpop.f32.mrb[0].mxu0
    %6768 = vmatprep.mubr.bf16.mxu0 %v5437
    %6769 = vmatmul.mubr.bf16.gmra.mrb[0].mxu0 %v5436
    %v6770 = vpop.f32.mrb[0].mxu0
    %v6771 = vadd.f32 0.0, %v6770
    %v6772 = vpop.f32.mrb[0].mxu0
    %v6773 = vpop.f32.mrb[0].mxu0
    %v6774 = vadd.f32 0.0, %v6773
    %v6775 = vpop.f32.mrb[0].mxu0
    %6776 = vmatprep.mubr.bf16.mxu0 %v5446
    %6777 = vmatmul.mubr.bf16.gmra.mrb[0].mxu0 %v5445
    %v6778 = vpop.f32.mrb[0].mxu0
    %v6779 = vadd.f32 0.0, %v6778
    %v6780 = vpop.f32.mrb[0].mxu0
    %v6781 = vpop.f32.mrb[0].mxu0
    %v6782 = vadd.f32 0.0, %v6781
    %v6783 = vpop.f32.mrb[0].mxu0
    %6784 = vmatprep.mubr.bf16.mxu0 %v5455
    %6785 = vmatmul.mubr.bf16.gmra.mrb[0].mxu0 %v5454
    %v6786 = vpop.f32.mrb[0].mxu0
    %v6787 = vadd.f32 0.0, %v6786
    %v6788 = vpop.f32.mrb[0].mxu0
    %v6789 = vpop.f32.mrb[0].mxu0
    %v6790 = vadd.f32 0.0, %v6789
    %v6791 = vpop.f32.mrb[0].mxu0
    %6792 = vmatprep.mubr.bf16.mxu0 %v5464
    %6793 = vmatmul.mubr.bf16.gmra.mrb[0].mxu0 %v5463
    %v6794 = vpop.f32.mrb[0].mxu0
    %v6795 = vadd.f32 0.0, %v6794
    %v6796 = vpop.f32.mrb[0].mxu0
    %v6797 = vpop.f32.mrb[0].mxu0
    %v6798 = vadd.f32 0.0, %v6797
    %v6799 = vpop.f32.mrb[0].mxu0
    %6800 = vmatprep.mubr.bf16.mxu0 %v5473
    %6801 = vmatmul.mubr.bf16.gmra.mrb[0].mxu0 %v5472
    %v6802 = vpop.f32.mrb[0].mxu0
    %v6803 = vadd.f32 0.0, %v6802
    %v6804 = vpop.f32.mrb[0].mxu0
    %v6805 = vpop.f32.mrb[0].mxu0
    %v6806 = vadd.f32 0.0, %v6805
    %v6807 = vpop.f32.mrb[0].mxu0
    %6808 = vmatprep.mubr.bf16.mxu0 %v5482
    %6809 = vmatmul.mubr.bf16.gmra.mrb[0].mxu0 %v5481
    %v6810 = vpop.f32.mrb[0].mxu0
    %v6811 = vadd.f32 0.0, %v6810
    %v6812 = vpop.f32.mrb[0].mxu0
    %v6813 = vpop.f32.mrb[0].mxu0
    %v6814 = vadd.f32 0.0, %v6813
    %v6815 = vpop.f32.mrb[0].mxu0
    %6816 = vmatprep.mubr.bf16.mxu0 %v5491
    %6817 = vmatmul.mubr.bf16.gmra.mrb[0].mxu0 %v5490
    %v6818 = vpop.f32.mrb[0].mxu0
    %v6819 = vadd.f32 0.0, %v6818
    %v6820 = vpop.f32.mrb[0].mxu0
    %v6821 = vpop.f32.mrb[0].mxu0
    %v6822 = vadd.f32 0.0, %v6821
    %v6823 = vpop.f32.mrb[0].mxu0
    %6824 = vmatprep.mubr.bf16.mxu0 %v5500
    %6825 = vmatmul.mubr.bf16.gmra.mrb[0].mxu0 %v5499
    %v6826 = vpop.f32.mrb[0].mxu0
    %v6827 = vadd.f32 0.0, %v6826
    %v6828 = vpop.f32.mrb[0].mxu0
    %v6829 = vpop.f32.mrb[0].mxu0
    %v6830 = vadd.f32 0.0, %v6829
    %v6831 = vpop.f32.mrb[0].mxu0
    %6832 = vmatprep.mubr.bf16.mxu0 %v5509
    %6833 = vmatmul.mubr.bf16.gmra.mrb[0].mxu0 %v5508
    %v6834 = vpop.f32.mrb[0].mxu0
    %v6835 = vadd.f32 0.0, %v6834
    %v6836 = vpop.f32.mrb[0].mxu0
    %v6837 = vpop.f32.mrb[0].mxu0
    %v6838 = vadd.f32 0.0, %v6837
    %v6839 = vpop.f32.mrb[0].mxu0
    %6840 = vmatprep.mubr.bf16.mxu0 %v5518
    %6841 = vmatmul.mubr.bf16.gmra.mrb[0].mxu0 %v5517
    %v6842 = vpop.f32.mrb[0].mxu0
    %v6843 = vadd.f32 0.0, %v6842
    %v6844 = vpop.f32.mrb[0].mxu0
    %v6845 = vpop.f32.mrb[0].mxu0
    %v6846 = vadd.f32 0.0, %v6845
    %v6847 = vpop.f32.mrb[0].mxu0
    %6848 = vmatprep.mubr.bf16.mxu0 %v5527
    %6849 = vmatmul.mubr.bf16.gmra.mrb[0].mxu0 %v5526
    %v6850 = vpop.f32.mrb[0].mxu0
    %v6851 = vadd.f32 0.0, %v6850
    %v6852 = vpop.f32.mrb[0].mxu0
    %v6853 = vpop.f32.mrb[0].mxu0
    %v6854 = vadd.f32 0.0, %v6853
    %v6855 = vpop.f32.mrb[0].mxu0
    %6856 = vmatprep.mubr.bf16.mxu0 %v5536
    %6857 = vmatmul.mubr.bf16.gmra.mrb[0].mxu0 %v5535
    %v6858 = vpop.f32.mrb[0].mxu0
    %v6859 = vadd.f32 0.0, %v6858
    %v6860 = vpop.f32.mrb[0].mxu0
    %v6861 = vpop.f32.mrb[0].mxu0
    %v6862 = vadd.f32 0.0, %v6861
    %v6863 = vpop.f32.mrb[0].mxu0
    %6864 = vmatprep.mubr.bf16.mxu0 %v5545
    %6865 = vmatmul.mubr.bf16.gmra.mrb[0].mxu0 %v5544
    %v6866 = vpop.f32.mrb[0].mxu0
    %v6867 = vadd.f32 0.0, %v6866
    %v6868 = vpop.f32.mrb[0].mxu0
    %v6869 = vpop.f32.mrb[0].mxu0
    %v6870 = vadd.f32 0.0, %v6869
    %v6871 = vpop.f32.mrb[0].mxu0
    %6872 = vmatprep.mubr.bf16.mxu0 %v5554
    %6873 = vmatmul.mubr.bf16.gmra.mrb[0].mxu0 %v5553
    %v6874 = vpop.f32.mrb[0].mxu0
    %v6875 = vadd.f32 0.0, %v6874
    %v6876 = vpop.f32.mrb[0].mxu0
    %v6877 = vpop.f32.mrb[0].mxu0
    %v6878 = vadd.f32 0.0, %v6877
    %v6879 = vpop.f32.mrb[0].mxu0
    %6880 = vmatprep.mubr.bf16.mxu0 %v5563
    %6881 = vmatmul.mubr.bf16.gmra.mrb[0].mxu0 %v5562
    %v6882 = vpop.f32.mrb[0].mxu0
    %v6883 = vadd.f32 0.0, %v6882
    %v6884 = vpop.f32.mrb[0].mxu0
    %v6885 = vpop.f32.mrb[0].mxu0
    %v6886 = vadd.f32 0.0, %v6885
    %v6887 = vpop.f32.mrb[0].mxu0
    %6888 = vmatprep.mubr.bf16.mxu0 %v5572
    %6889 = vmatmul.mubr.bf16.gmra.mrb[0].mxu0 %v5571
    %v6890 = vpop.f32.mrb[0].mxu0
    %v6891 = vadd.f32 0.0, %v6890
    %v6892 = vpop.f32.mrb[0].mxu0
    %v6893 = vpop.f32.mrb[0].mxu0
    %v6894 = vadd.f32 0.0, %v6893
    %v6895 = vpop.f32.mrb[0].mxu0
    %6896 = vmatprep.mubr.bf16.mxu0 %v5581
    %6897 = vmatmul.mubr.bf16.gmra.mrb[0].mxu0 %v5580
    %v6898 = vpop.f32.mrb[0].mxu0
    %v6899 = vadd.f32 0.0, %v6898
    %v6900 = vpop.f32.mrb[0].mxu0
    %v6901 = vpop.f32.mrb[0].mxu0
    %v6902 = vadd.f32 0.0, %v6901
    %v6903 = vpop.f32.mrb[0].mxu0
    %6904 = vmatprep.mubr.bf16.mxu0 %v5590
    %6905 = vmatmul.mubr.bf16.gmra.mrb[0].mxu0 %v5589
    %v6906 = vpop.f32.mrb[0].mxu0
    %v6907 = vadd.f32 0.0, %v6906
    %v6908 = vpop.f32.mrb[0].mxu0
    %v6909 = vpop.f32.mrb[0].mxu0
    %v6910 = vadd.f32 0.0, %v6909
    %v6911 = vpop.f32.mrb[0].mxu0
    %6912 = vmatprep.mubr.bf16.mxu0 %v5599
    %6913 = vmatmul.mubr.bf16.gmra.mrb[0].mxu0 %v5598
    %v6914 = vpop.f32.mrb[0].mxu0
    %v6915 = vadd.f32 0.0, %v6914
    %v6916 = vpop.f32.mrb[0].mxu0
    %v6917 = vpop.f32.mrb[0].mxu0
    %v6918 = vadd.f32 0.0, %v6917
    %v6919 = vpop.f32.mrb[0].mxu0
    %6920 = vmatprep.mubr.bf16.mxu0 %v5608
    %6921 = vmatmul.mubr.bf16.gmra.mrb[0].mxu0 %v5607
    %v6922 = vpop.f32.mrb[0].mxu0
    %v6923 = vadd.f32 0.0, %v6922
    %v6924 = vpop.f32.mrb[0].mxu0
    %v6925 = vpop.f32.mrb[0].mxu0
    %v6926 = vadd.f32 0.0, %v6925
    %v6927 = vpop.f32.mrb[0].mxu0
    %6928 = vmatprep.mubr.bf16.mxu0 %v5617
    %6929 = vmatmul.mubr.bf16.gmra.mrb[0].mxu0 %v5616
    %v6930 = vpop.f32.mrb[0].mxu0
    %v6931 = vadd.f32 0.0, %v6930
    %v6932 = vpop.f32.mrb[0].mxu0
    %v6933 = vpop.f32.mrb[0].mxu0
    %v6934 = vadd.f32 0.0, %v6933
    %v6935 = vpop.f32.mrb[0].mxu0
    %6936 = vmatprep.mubr.bf16.mxu0 %v5626
    %6937 = vmatmul.mubr.bf16.gmra.mrb[0].mxu0 %v5625
    %v6938 = vpop.f32.mrb[0].mxu0
    %v6939 = vadd.f32 0.0, %v6938
    %v6940 = vpop.f32.mrb[0].mxu0
    %v6941 = vpop.f32.mrb[0].mxu0
    %v6942 = vadd.f32 0.0, %v6941
    %v6943 = vpop.f32.mrb[0].mxu0
    %6944 = vmatprep.mubr.bf16.mxu0 %v5635
    %6945 = vmatmul.mubr.bf16.gmra.mrb[0].mxu0 %v5634
    %v6946 = vpop.f32.mrb[0].mxu0
    %v6947 = vadd.f32 0.0, %v6946
    %v6948 = vpop.f32.mrb[0].mxu0
    %v6949 = vpop.f32.mrb[0].mxu0
    %v6950 = vadd.f32 0.0, %v6949
    %v6951 = vpop.f32.mrb[0].mxu0
    %6952 = vmatprep.mubr.bf16.mxu0 %v5644
    %6953 = vmatmul.mubr.bf16.gmra.mrb[0].mxu0 %v5643
    %v6954 = vpop.f32.mrb[0].mxu0
    %v6955 = vadd.f32 0.0, %v6954
    %v6956 = vpop.f32.mrb[0].mxu0
    %v6957 = vpop.f32.mrb[0].mxu0
    %v6958 = vadd.f32 0.0, %v6957
    %v6959 = vpop.f32.mrb[0].mxu0
    %6960 = vmatprep.mubr.bf16.mxu0 %v5653
    %6961 = vmatmul.mubr.bf16.gmra.mrb[0].mxu0 %v5652
    %v6962 = vpop.f32.mrb[0].mxu0
    %v6963 = vadd.f32 0.0, %v6962
    %v6964 = vpop.f32.mrb[0].mxu0
    %v6965 = vpop.f32.mrb[0].mxu0
    %v6966 = vadd.f32 0.0, %v6965
    %v6967 = vpop.f32.mrb[0].mxu0
    %6968 = vmatprep.mubr.bf16.mxu0 %v5662
    %6969 = vmatmul.mubr.bf16.gmra.mrb[0].mxu0 %v5661
    %v6970 = vpop.f32.mrb[0].mxu0
    %v6971 = vadd.f32 0.0, %v6970
    %v6972 = vpop.f32.mrb[0].mxu0
    %v6973 = vpop.f32.mrb[0].mxu0
    %v6974 = vadd.f32 0.0, %v6973
    %v6975 = vpop.f32.mrb[0].mxu0
    %6976 = vmatprep.mubr.bf16.mxu0 %v5671
    %6977 = vmatmul.mubr.bf16.gmra.mrb[0].mxu0 %v5670
    %v6978 = vpop.f32.mrb[0].mxu0
    %v6979 = vadd.f32 0.0, %v6978
    %v6980 = vpop.f32.mrb[0].mxu0
    %v6981 = vpop.f32.mrb[0].mxu0
    %v6982 = vadd.f32 0.0, %v6981
    %v6983 = vpop.f32.mrb[0].mxu0
    %6984 = vmatprep.mubr.bf16.mxu0 %v5680
    %6985 = vmatmul.mubr.bf16.gmra.mrb[0].mxu0 %v5679
    %v6986 = vpop.f32.mrb[0].mxu0
    %v6987 = vadd.f32 0.0, %v6986
    %v6988 = vpop.f32.mrb[0].mxu0
    %v6989 = vpop.f32.mrb[0].mxu0
    %v6990 = vadd.f32 0.0, %v6989
    %v6991 = vpop.f32.mrb[0].mxu0
    %6992 = vmatprep.mubr.bf16.mxu0 %v5689
    %6993 = vmatmul.mubr.bf16.gmra.mrb[0].mxu0 %v5688
    %v6994 = vpop.f32.mrb[0].mxu0
    %v6995 = vadd.f32 0.0, %v6994
    %v6996 = vpop.f32.mrb[0].mxu0
    %v6997 = vpop.f32.mrb[0].mxu0
    %v6998 = vadd.f32 0.0, %v6997
    %v6999 = vpop.f32.mrb[0].mxu0
    %7000 = vmatprep.mubr.bf16.mxu0 %v5698
    %7001 = vmatmul.mubr.bf16.gmra.mrb[0].mxu0 %v5697
    %v7002 = vpop.f32.mrb[0].mxu0
    %v7003 = vadd.f32 0.0, %v7002
    %v7004 = vpop.f32.mrb[0].mxu0
    %v7005 = vpop.f32.mrb[0].mxu0
    %v7006 = vadd.f32 0.0, %v7005
    %v7007 = vpop.f32.mrb[0].mxu0
    %7008 = vmatprep.mubr.bf16.mxu0 %v5707
    %7009 = vmatmul.mubr.bf16.gmra.mrb[0].mxu0 %v5706
    %v7010 = vpop.f32.mrb[0].mxu0
    %v7011 = vadd.f32 0.0, %v7010
    %v7012 = vpop.f32.mrb[0].mxu0
    %v7013 = vpop.f32.mrb[0].mxu0
    %v7014 = vadd.f32 0.0, %v7013
    %v7015 = vpop.f32.mrb[0].mxu0
    %7016 = vmatprep.mubr.bf16.mxu0 %v5716
    %7017 = vmatmul.mubr.bf16.gmra.mrb[0].mxu0 %v5715
    %v7018 = vpop.f32.mrb[0].mxu0
    %v7019 = vadd.f32 0.0, %v7018
    %v7020 = vpop.f32.mrb[0].mxu0
    %v7021 = vpop.f32.mrb[0].mxu0
    %v7022 = vadd.f32 0.0, %v7021
    %v7023 = vpop.f32.mrb[0].mxu0
    %7024 = vmatprep.mubr.bf16.mxu0 %v5725
    %7025 = vmatmul.mubr.bf16.gmra.mrb[0].mxu0 %v5724
    %v7026 = vpop.f32.mrb[0].mxu0
    %v7027 = vadd.f32 0.0, %v7026
    %v7028 = vpop.f32.mrb[0].mxu0
    %v7029 = vpop.f32.mrb[0].mxu0
    %v7030 = vadd.f32 0.0, %v7029
    %v7031 = vpop.f32.mrb[0].mxu0
    %7032 = vmatprep.mubr.bf16.mxu0 %v5734
    %7033 = vmatmul.mubr.bf16.gmra.mrb[0].mxu0 %v5733
    %v7034 = vpop.f32.mrb[0].mxu0
    %v7035 = vadd.f32 0.0, %v7034
    %v7036 = vpop.f32.mrb[0].mxu0
    %v7037 = vpop.f32.mrb[0].mxu0
    %v7038 = vadd.f32 0.0, %v7037
    %v7039 = vpop.f32.mrb[0].mxu0
    %7040 = vmatprep.mubr.bf16.mxu0 %v5743
    %7041 = vmatmul.mubr.bf16.gmra.mrb[0].mxu0 %v5742
    %v7042 = vpop.f32.mrb[0].mxu0
    %v7043 = vadd.f32 0.0, %v7042
    %v7044 = vpop.f32.mrb[0].mxu0
    %v7045 = vpop.f32.mrb[0].mxu0
    %v7046 = vadd.f32 0.0, %v7045
    %v7047 = vpop.f32.mrb[0].mxu0
    %7048 = vmatprep.mubr.bf16.mxu0 %v5752
    %7049 = vmatmul.mubr.bf16.gmra.mrb[0].mxu0 %v5751
    %v7050 = vpop.f32.mrb[0].mxu0
    %v7051 = vadd.f32 0.0, %v7050
    %v7052 = vpop.f32.mrb[0].mxu0
    %v7053 = vpop.f32.mrb[0].mxu0
    %v7054 = vadd.f32 0.0, %v7053
    %v7055 = vpop.f32.mrb[0].mxu0
    %7056 = vmatprep.mubr.bf16.mxu0 %v5761
    %7057 = vmatmul.mubr.bf16.gmra.mrb[0].mxu0 %v5760
    %v7058 = vpop.f32.mrb[0].mxu0
    %v7059 = vadd.f32 0.0, %v7058
    %v7060 = vpop.f32.mrb[0].mxu0
    %v7061 = vpop.f32.mrb[0].mxu0
    %v7062 = vadd.f32 0.0, %v7061
    %v7063 = vpop.f32.mrb[0].mxu0
    %7064 = vmatprep.mubr.bf16.mxu0 %v5770
    %7065 = vmatmul.mubr.bf16.gmra.mrb[0].mxu0 %v5769
    %v7066 = vpop.f32.mrb[0].mxu0
    %v7067 = vadd.f32 0.0, %v7066
    %v7068 = vpop.f32.mrb[0].mxu0
    %v7069 = vpop.f32.mrb[0].mxu0
    %v7070 = vadd.f32 0.0, %v7069
    %v7071 = vpop.f32.mrb[0].mxu0
    %7072 = vmatprep.mubr.bf16.mxu0 %v5779
    %7073 = vmatmul.mubr.bf16.gmra.mrb[0].mxu0 %v5778
    %v7074 = vpop.f32.mrb[0].mxu0
    %v7075 = vadd.f32 0.0, %v7074
    %v7076 = vpop.f32.mrb[0].mxu0
    %v7077 = vpop.f32.mrb[0].mxu0
    %v7078 = vadd.f32 0.0, %v7077
    %v7079 = vpop.f32.mrb[0].mxu0
    %7080 = vmatprep.mubr.bf16.mxu0 %v5788
    %7081 = vmatmul.mubr.bf16.gmra.mrb[0].mxu0 %v5787
    %v7082 = vpop.f32.mrb[0].mxu0
    %v7083 = vadd.f32 0.0, %v7082
    %v7084 = vpop.f32.mrb[0].mxu0
    %v7085 = vpop.f32.mrb[0].mxu0
    %v7086 = vadd.f32 0.0, %v7085
    %v7087 = vpop.f32.mrb[0].mxu0
    %7088 = vmatprep.mubr.bf16.mxu0 %v5797
    %7089 = vmatmul.mubr.bf16.gmra.mrb[0].mxu0 %v5796
    %v7090 = vpop.f32.mrb[0].mxu0
    %v7091 = vadd.f32 0.0, %v7090
    %v7092 = vpop.f32.mrb[0].mxu0
    %v7093 = vpop.f32.mrb[0].mxu0
    %v7094 = vadd.f32 0.0, %v7093
    %v7095 = vpop.f32.mrb[0].mxu0
    %7096 = vmatprep.mubr.bf16.mxu0 %v5806
    %7097 = vmatmul.mubr.bf16.gmra.mrb[0].mxu0 %v5805
    %v7098 = vpop.f32.mrb[0].mxu0
    %v7099 = vadd.f32 0.0, %v7098
    %v7100 = vpop.f32.mrb[0].mxu0
    %v7101 = vpop.f32.mrb[0].mxu0
    %v7102 = vadd.f32 0.0, %v7101
    %v7103 = vpop.f32.mrb[0].mxu0
    %7104 = vmatprep.mubr.bf16.mxu0 %v5815
    %7105 = vmatmul.mubr.bf16.gmra.mrb[0].mxu0 %v5814
    %v7106 = vpop.f32.mrb[0].mxu0
    %v7107 = vadd.f32 0.0, %v7106
    %v7108 = vpop.f32.mrb[0].mxu0
    %v7109 = vpop.f32.mrb[0].mxu0
    %v7110 = vadd.f32 0.0, %v7109
    %v7111 = vpop.f32.mrb[0].mxu0
    %7112 = vmatprep.mubr.bf16.mxu0 %v5824
    %7113 = vmatmul.mubr.bf16.gmra.mrb[0].mxu0 %v5823
    %v7114 = vpop.f32.mrb[0].mxu0
    %v7115 = vadd.f32 0.0, %v7114
    %v7116 = vpop.f32.mrb[0].mxu0
    %v7117 = vpop.f32.mrb[0].mxu0
    %v7118 = vadd.f32 0.0, %v7117
    %v7119 = vpop.f32.mrb[0].mxu0
    %7120 = vmatprep.mubr.bf16.mxu0 %v5833
    %7121 = vmatmul.mubr.bf16.gmra.mrb[0].mxu0 %v5832
    %v7122 = vpop.f32.mrb[0].mxu0
    %v7123 = vadd.f32 0.0, %v7122
    %v7124 = vpop.f32.mrb[0].mxu0
    %v7125 = vpop.f32.mrb[0].mxu0
    %v7126 = vadd.f32 0.0, %v7125
    %v7127 = vpop.f32.mrb[0].mxu0
    %7128 = vmatprep.mubr.bf16.mxu0 %v5842
    %7129 = vmatmul.mubr.bf16.gmra.mrb[0].mxu0 %v5841
    %v7130 = vpop.f32.mrb[0].mxu0
    %v7131 = vadd.f32 0.0, %v7130
    %v7132 = vpop.f32.mrb[0].mxu0
    %v7133 = vpop.f32.mrb[0].mxu0
    %v7134 = vadd.f32 0.0, %v7133
    %v7135 = vpop.f32.mrb[0].mxu0
    %7136 = vmatprep.mubr.bf16.mxu0 %v5851
    %7137 = vmatmul.mubr.bf16.gmra.mrb[0].mxu0 %v5850
    %v7138 = vpop.f32.mrb[0].mxu0
    %v7139 = vadd.f32 0.0, %v7138
    %v7140 = vpop.f32.mrb[0].mxu0
    %v7141 = vpop.f32.mrb[0].mxu0
    %v7142 = vadd.f32 0.0, %v7141
    %v7143 = vpop.f32.mrb[0].mxu0
    %7144 = vmatprep.mubr.bf16.mxu0 %v5860
    %7145 = vmatmul.mubr.bf16.gmra.mrb[0].mxu0 %v5859
    %v7146 = vpop.f32.mrb[0].mxu0
    %v7147 = vadd.f32 0.0, %v7146
    %v7148 = vpop.f32.mrb[0].mxu0
    %v7149 = vpop.f32.mrb[0].mxu0
    %v7150 = vadd.f32 0.0, %v7149
    %v7151 = vpop.f32.mrb[0].mxu0
    %7152 = vmatprep.mubr.bf16.mxu0 %v5869
    %7153 = vmatmul.mubr.bf16.gmra.mrb[0].mxu0 %v5868
    %v7154 = vpop.f32.mrb[0].mxu0
    %v7155 = vadd.f32 0.0, %v7154
    %v7156 = vpop.f32.mrb[0].mxu0
    %v7157 = vpop.f32.mrb[0].mxu0
    %v7158 = vadd.f32 0.0, %v7157
    %v7159 = vpop.f32.mrb[0].mxu0
    %7160 = vmatprep.mubr.bf16.mxu0 %v5878
    %7161 = vmatmul.mubr.bf16.gmra.mrb[0].mxu0 %v5877
    %v7162 = vpop.f32.mrb[0].mxu0
    %v7163 = vadd.f32 0.0, %v7162
    %v7164 = vpop.f32.mrb[0].mxu0
    %v7165 = vpop.f32.mrb[0].mxu0
    %v7166 = vadd.f32 0.0, %v7165
    %v7167 = vpop.f32.mrb[0].mxu0
    %7168 = vmatprep.mubr.bf16.mxu0 %v5887
    %7169 = vmatmul.mubr.bf16.gmra.mrb[0].mxu0 %v5886
    %v7170 = vpop.f32.mrb[0].mxu0
    %v7171 = vadd.f32 0.0, %v7170
    %v7172 = vpop.f32.mrb[0].mxu0
    %v7173 = vpop.f32.mrb[0].mxu0
    %v7174 = vadd.f32 0.0, %v7173
    %v7175 = vpop.f32.mrb[0].mxu0
    %7176 = vmatprep.mubr.bf16.mxu0 %v5896
    %7177 = vmatmul.mubr.bf16.gmra.mrb[0].mxu0 %v5895
    %v7178 = vpop.f32.mrb[0].mxu0
    %v7179 = vadd.f32 0.0, %v7178
    %v7180 = vpop.f32.mrb[0].mxu0
    %v7181 = vpop.f32.mrb[0].mxu0
    %v7182 = vadd.f32 0.0, %v7181
    %v7183 = vpop.f32.mrb[0].mxu0
    %7184 = vmatprep.mubr.bf16.mxu0 %v5905
    %7185 = vmatmul.mubr.bf16.gmra.mrb[0].mxu0 %v5904
    %v7186 = vpop.f32.mrb[0].mxu0
    %v7187 = vadd.f32 0.0, %v7186
    %v7188 = vpop.f32.mrb[0].mxu0
    %v7189 = vpop.f32.mrb[0].mxu0
    %v7190 = vadd.f32 0.0, %v7189
    %v7191 = vpop.f32.mrb[0].mxu0
    %7192 = vmatprep.mubr.bf16.mxu0 %v5914
    %7193 = vmatmul.mubr.bf16.gmra.mrb[0].mxu0 %v5913
    %v7194 = vpop.f32.mrb[0].mxu0
    %v7195 = vadd.f32 0.0, %v7194
    %v7196 = vpop.f32.mrb[0].mxu0
    %v7197 = vpop.f32.mrb[0].mxu0
    %v7198 = vadd.f32 0.0, %v7197
    %v7199 = vpop.f32.mrb[0].mxu0
    %7200 = vmatprep.mubr.bf16.mxu0 %v5923
    %7201 = vmatmul.mubr.bf16.gmra.mrb[0].mxu0 %v5922
    %v7202 = vpop.f32.mrb[0].mxu0
    %v7203 = vadd.f32 0.0, %v7202
    %v7204 = vpop.f32.mrb[0].mxu0
    %v7205 = vpop.f32.mrb[0].mxu0
    %v7206 = vadd.f32 0.0, %v7205
    %v7207 = vpop.f32.mrb[0].mxu0
    %7208 = vmatprep.mubr.bf16.mxu0 %v5932
    %7209 = vmatmul.mubr.bf16.gmra.mrb[0].mxu0 %v5931
    %v7210 = vpop.f32.mrb[0].mxu0
    %v7211 = vadd.f32 0.0, %v7210
    %v7212 = vpop.f32.mrb[0].mxu0
    %v7213 = vpop.f32.mrb[0].mxu0
    %v7214 = vadd.f32 0.0, %v7213
    %v7215 = vpop.f32.mrb[0].mxu0
    %7216 = vmatprep.mubr.bf16.mxu0 %v5941
    %7217 = vmatmul.mubr.bf16.gmra.mrb[0].mxu0 %v5940
    %v7218 = vpop.f32.mrb[0].mxu0
    %v7219 = vadd.f32 0.0, %v7218
    %v7220 = vpop.f32.mrb[0].mxu0
    %v7221 = vpop.f32.mrb[0].mxu0
    %v7222 = vadd.f32 0.0, %v7221
    %v7223 = vpop.f32.mrb[0].mxu0
    %7224 = vmatprep.mubr.bf16.mxu0 %v5950
    %7225 = vmatmul.mubr.bf16.gmra.mrb[0].mxu0 %v5949
    %v7226 = vpop.f32.mrb[0].mxu0
    %v7227 = vadd.f32 0.0, %v7226
    %v7228 = vpop.f32.mrb[0].mxu0
    %v7229 = vpop.f32.mrb[0].mxu0
    %v7230 = vadd.f32 0.0, %v7229
    %v7231 = vpop.f32.mrb[0].mxu0
    %7232 = vmatprep.mubr.bf16.mxu0 %v5959
    %7233 = vmatmul.mubr.bf16.gmra.mrb[0].mxu0 %v5958
    %v7234 = vpop.f32.mrb[0].mxu0
    %v7235 = vadd.f32 0.0, %v7234
    %v7236 = vpop.f32.mrb[0].mxu0
    %v7237 = vpop.f32.mrb[0].mxu0
    %v7238 = vadd.f32 0.0, %v7237
    %v7239 = vpop.f32.mrb[0].mxu0
    %7240 = vmatprep.mubr.bf16.mxu0 %v5968
    %7241 = vmatmul.mubr.bf16.gmra.mrb[0].mxu0 %v5967
    %v7242 = vpop.f32.mrb[0].mxu0
    %v7243 = vadd.f32 0.0, %v7242
    %v7244 = vpop.f32.mrb[0].mxu0
    %v7245 = vpop.f32.mrb[0].mxu0
    %v7246 = vadd.f32 0.0, %v7245
    %v7247 = vpop.f32.mrb[0].mxu0
    %7248 = vmatprep.mubr.bf16.mxu0 %v5977
    %7249 = vmatmul.mubr.bf16.gmra.mrb[0].mxu0 %v5976
    %v7250 = vpop.f32.mrb[0].mxu0
    %v7251 = vadd.f32 0.0, %v7250
    %v7252 = vpop.f32.mrb[0].mxu0
    %v7253 = vpop.f32.mrb[0].mxu0
    %v7254 = vpop.f32.mrb[0].mxu0
    %7255 = vdwg.mxu0
    %7256 = vmatprep.subr.bf16.mxu0 0
    %7257 = vmatpush1.bf16.msra.mxu0 %v3545
    %7258 = vmatprep.subr.bf16.mxu0 0
    %7259 = vmatpush1.bf16.msra.mxu0 %v3546
    %7260 = vmatprep.subr.bf16.mxu0 0
    %7261 = vmatpush1.bf16.msra.mxu0 %v3547
    %7262 = vmatprep.subr.bf16.mxu0 0
    %7263 = vmatpush1.bf16.msra.mxu0 %v3548
    %7264 = vmatprep.subr.bf16.mxu0 0
    %7265 = vmatpush1.bf16.msra.mxu0 %v3549
    %7266 = vmatprep.subr.bf16.mxu0 0
    %7267 = vmatpush1.bf16.msra.mxu0 %v3550
    %7268 = vmatprep.subr.bf16.mxu0 0
    %7269 = vmatpush1.bf16.msra.mxu0 %v3551
    %7270 = vmatprep.subr.bf16.mxu0 0
    %7271 = vmatpush1.bf16.msra.mxu0 %v3552
    %7272 = vmatprep.subr.bf16.mxu0 0
    %7273 = vmatpush1.bf16.msra.mxu0 %v3553
    %7274 = vmatprep.subr.bf16.mxu0 0
    %7275 = vmatpush1.bf16.msra.mxu0 %v3554
    %7276 = vmatprep.subr.bf16.mxu0 0
    %7277 = vmatpush1.bf16.msra.mxu0 %v3555
    %7278 = vmatprep.subr.bf16.mxu0 0
    %7279 = vmatpush1.bf16.msra.mxu0 %v3556
    %7280 = vmatprep.subr.bf16.mxu0 0
    %7281 = vmatpush1.bf16.msra.mxu0 %v3557
    %7282 = vmatprep.subr.bf16.mxu0 0
    %7283 = vmatpush1.bf16.msra.mxu0 %v3558
    %7284 = vmatprep.subr.bf16.mxu0 0
    %7285 = vmatpush1.bf16.msra.mxu0 %v3559
    %7286 = vmatprep.subr.bf16.mxu0 0
    %7287 = vmatpush1.bf16.msra.mxu0 %v3560
    %7288 = vmatprep.mubr.bf16.mxu0 %v5403
    %7289 = vmatmul.mubr.bf16.gmra.mrb[0].mxu0 %v5402
    %v7290 = vpop.f32.mrb[0].mxu0
    %v7291 = vadd.f32 %v6739, %v7290
    %v7292 = vpop.f32.mrb[0].mxu0
    %v7293 = vpop.f32.mrb[0].mxu0
    %v7294 = vadd.f32 %v6742, %v7293
    %v7295 = vpop.f32.mrb[0].mxu0
    %7296 = vmatprep.mubr.bf16.mxu0 %v5412
    %7297 = vmatmul.mubr.bf16.gmra.mrb[0].mxu0 %v5411
    %v7298 = vpop.f32.mrb[0].mxu0
    %v7299 = vadd.f32 %v6747, %v7298
    %v7300 = vpop.f32.mrb[0].mxu0
    %v7301 = vpop.f32.mrb[0].mxu0
    %v7302 = vadd.f32 %v6750, %v7301
    %v7303 = vpop.f32.mrb[0].mxu0
    %7304 = vmatprep.mubr.bf16.mxu0 %v5421
    %7305 = vmatmul.mubr.bf16.gmra.mrb[0].mxu0 %v5420
    %v7306 = vpop.f32.mrb[0].mxu0
    %v7307 = vadd.f32 %v6755, %v7306
    %v7308 = vpop.f32.mrb[0].mxu0
    %v7309 = vpop.f32.mrb[0].mxu0
    %v7310 = vadd.f32 %v6758, %v7309
    %v7311 = vpop.f32.mrb[0].mxu0
    %7312 = vmatprep.mubr.bf16.mxu0 %v5430
    %7313 = vmatmul.mubr.bf16.gmra.mrb[0].mxu0 %v5429
    %v7314 = vpop.f32.mrb[0].mxu0
    %v7315 = vadd.f32 %v6763, %v7314
    %v7316 = vpop.f32.mrb[0].mxu0
    %v7317 = vpop.f32.mrb[0].mxu0
    %v7318 = vadd.f32 %v6766, %v7317
    %v7319 = vpop.f32.mrb[0].mxu0
    %7320 = vmatprep.mubr.bf16.mxu0 %v5439
    %7321 = vmatmul.mubr.bf16.gmra.mrb[0].mxu0 %v5438
    %v7322 = vpop.f32.mrb[0].mxu0
    %v7323 = vadd.f32 %v6771, %v7322
    %v7324 = vpop.f32.mrb[0].mxu0
    %v7325 = vpop.f32.mrb[0].mxu0
    %v7326 = vadd.f32 %v6774, %v7325
    %v7327 = vpop.f32.mrb[0].mxu0
    %7328 = vmatprep.mubr.bf16.mxu0 %v5448
    %7329 = vmatmul.mubr.bf16.gmra.mrb[0].mxu0 %v5447
    %v7330 = vpop.f32.mrb[0].mxu0
    %v7331 = vadd.f32 %v6779, %v7330
    %v7332 = vpop.f32.mrb[0].mxu0
    %v7333 = vpop.f32.mrb[0].mxu0
    %v7334 = vadd.f32 %v6782, %v7333
    %v7335 = vpop.f32.mrb[0].mxu0
    %7336 = vmatprep.mubr.bf16.mxu0 %v5457
    %7337 = vmatmul.mubr.bf16.gmra.mrb[0].mxu0 %v5456
    %v7338 = vpop.f32.mrb[0].mxu0
    %v7339 = vadd.f32 %v6787, %v7338
    %v7340 = vpop.f32.mrb[0].mxu0
    %v7341 = vpop.f32.mrb[0].mxu0
    %v7342 = vadd.f32 %v6790, %v7341
    %v7343 = vpop.f32.mrb[0].mxu0
    %7344 = vmatprep.mubr.bf16.mxu0 %v5466
    %7345 = vmatmul.mubr.bf16.gmra.mrb[0].mxu0 %v5465
    %v7346 = vpop.f32.mrb[0].mxu0
    %v7347 = vadd.f32 %v6795, %v7346
    %v7348 = vpop.f32.mrb[0].mxu0
    %v7349 = vpop.f32.mrb[0].mxu0
    %v7350 = vadd.f32 %v6798, %v7349
    %v7351 = vpop.f32.mrb[0].mxu0
    %7352 = vmatprep.mubr.bf16.mxu0 %v5475
    %7353 = vmatmul.mubr.bf16.gmra.mrb[0].mxu0 %v5474
    %v7354 = vpop.f32.mrb[0].mxu0
    %v7355 = vadd.f32 %v6803, %v7354
    %v7356 = vpop.f32.mrb[0].mxu0
    %v7357 = vpop.f32.mrb[0].mxu0
    %v7358 = vadd.f32 %v6806, %v7357
    %v7359 = vpop.f32.mrb[0].mxu0
    %7360 = vmatprep.mubr.bf16.mxu0 %v5484
    %7361 = vmatmul.mubr.bf16.gmra.mrb[0].mxu0 %v5483
    %v7362 = vpop.f32.mrb[0].mxu0
    %v7363 = vadd.f32 %v6811, %v7362
    %v7364 = vpop.f32.mrb[0].mxu0
    %v7365 = vpop.f32.mrb[0].mxu0
    %v7366 = vadd.f32 %v6814, %v7365
    %v7367 = vpop.f32.mrb[0].mxu0
    %7368 = vmatprep.mubr.bf16.mxu0 %v5493
    %7369 = vmatmul.mubr.bf16.gmra.mrb[0].mxu0 %v5492
    %v7370 = vpop.f32.mrb[0].mxu0
    %v7371 = vadd.f32 %v6819, %v7370
    %v7372 = vpop.f32.mrb[0].mxu0
    %v7373 = vpop.f32.mrb[0].mxu0
    %v7374 = vadd.f32 %v6822, %v7373
    %v7375 = vpop.f32.mrb[0].mxu0
    %7376 = vmatprep.mubr.bf16.mxu0 %v5502
    %7377 = vmatmul.mubr.bf16.gmra.mrb[0].mxu0 %v5501
    %v7378 = vpop.f32.mrb[0].mxu0
    %v7379 = vadd.f32 %v6827, %v7378
    %v7380 = vpop.f32.mrb[0].mxu0
    %v7381 = vpop.f32.mrb[0].mxu0
    %v7382 = vadd.f32 %v6830, %v7381
    %v7383 = vpop.f32.mrb[0].mxu0
    %7384 = vmatprep.mubr.bf16.mxu0 %v5511
    %7385 = vmatmul.mubr.bf16.gmra.mrb[0].mxu0 %v5510
    %v7386 = vpop.f32.mrb[0].mxu0
    %v7387 = vadd.f32 %v6835, %v7386
    %v7388 = vpop.f32.mrb[0].mxu0
    %v7389 = vpop.f32.mrb[0].mxu0
    %v7390 = vadd.f32 %v6838, %v7389
    %v7391 = vpop.f32.mrb[0].mxu0
    %7392 = vmatprep.mubr.bf16.mxu0 %v5520
    %7393 = vmatmul.mubr.bf16.gmra.mrb[0].mxu0 %v5519
    %v7394 = vpop.f32.mrb[0].mxu0
    %v7395 = vadd.f32 %v6843, %v7394
    %v7396 = vpop.f32.mrb[0].mxu0
    %v7397 = vpop.f32.mrb[0].mxu0
    %v7398 = vadd.f32 %v6846, %v7397
    %v7399 = vpop.f32.mrb[0].mxu0
    %7400 = vmatprep.mubr.bf16.mxu0 %v5529
    %7401 = vmatmul.mubr.bf16.gmra.mrb[0].mxu0 %v5528
    %v7402 = vpop.f32.mrb[0].mxu0
    %v7403 = vadd.f32 %v6851, %v7402
    %v7404 = vpop.f32.mrb[0].mxu0
    %v7405 = vpop.f32.mrb[0].mxu0
    %v7406 = vadd.f32 %v6854, %v7405
    %v7407 = vpop.f32.mrb[0].mxu0
    %7408 = vmatprep.mubr.bf16.mxu0 %v5538
    %7409 = vmatmul.mubr.bf16.gmra.mrb[0].mxu0 %v5537
    %v7410 = vpop.f32.mrb[0].mxu0
    %v7411 = vadd.f32 %v6859, %v7410
    %v7412 = vpop.f32.mrb[0].mxu0
    %v7413 = vpop.f32.mrb[0].mxu0
    %v7414 = vadd.f32 %v6862, %v7413
    %v7415 = vpop.f32.mrb[0].mxu0
    %7416 = vmatprep.mubr.bf16.mxu0 %v5547
    %7417 = vmatmul.mubr.bf16.gmra.mrb[0].mxu0 %v5546
    %v7418 = vpop.f32.mrb[0].mxu0
    %v7419 = vadd.f32 %v6867, %v7418
    %v7420 = vpop.f32.mrb[0].mxu0
    %v7421 = vpop.f32.mrb[0].mxu0
    %v7422 = vadd.f32 %v6870, %v7421
    %v7423 = vpop.f32.mrb[0].mxu0
    %7424 = vmatprep.mubr.bf16.mxu0 %v5556
    %7425 = vmatmul.mubr.bf16.gmra.mrb[0].mxu0 %v5555
    %v7426 = vpop.f32.mrb[0].mxu0
    %v7427 = vadd.f32 %v6875, %v7426
    %v7428 = vpop.f32.mrb[0].mxu0
    %v7429 = vpop.f32.mrb[0].mxu0
    %v7430 = vadd.f32 %v6878, %v7429
    %v7431 = vpop.f32.mrb[0].mxu0
    %7432 = vmatprep.mubr.bf16.mxu0 %v5565
    %7433 = vmatmul.mubr.bf16.gmra.mrb[0].mxu0 %v5564
    %v7434 = vpop.f32.mrb[0].mxu0
    %v7435 = vadd.f32 %v6883, %v7434
    %v7436 = vpop.f32.mrb[0].mxu0
    %v7437 = vpop.f32.mrb[0].mxu0
    %v7438 = vadd.f32 %v6886, %v7437
    %v7439 = vpop.f32.mrb[0].mxu0
    %7440 = vmatprep.mubr.bf16.mxu0 %v5574
    %7441 = vmatmul.mubr.bf16.gmra.mrb[0].mxu0 %v5573
    %v7442 = vpop.f32.mrb[0].mxu0
    %v7443 = vadd.f32 %v6891, %v7442
    %v7444 = vpop.f32.mrb[0].mxu0
    %v7445 = vpop.f32.mrb[0].mxu0
    %v7446 = vadd.f32 %v6894, %v7445
    %v7447 = vpop.f32.mrb[0].mxu0
    %7448 = vmatprep.mubr.bf16.mxu0 %v5583
    %7449 = vmatmul.mubr.bf16.gmra.mrb[0].mxu0 %v5582
    %v7450 = vpop.f32.mrb[0].mxu0
    %v7451 = vadd.f32 %v6899, %v7450
    %v7452 = vpop.f32.mrb[0].mxu0
    %v7453 = vpop.f32.mrb[0].mxu0
    %v7454 = vadd.f32 %v6902, %v7453
    %v7455 = vpop.f32.mrb[0].mxu0
    %7456 = vmatprep.mubr.bf16.mxu0 %v5592
    %7457 = vmatmul.mubr.bf16.gmra.mrb[0].mxu0 %v5591
    %v7458 = vpop.f32.mrb[0].mxu0
    %v7459 = vadd.f32 %v6907, %v7458
    %v7460 = vpop.f32.mrb[0].mxu0
    %v7461 = vpop.f32.mrb[0].mxu0
    %v7462 = vadd.f32 %v6910, %v7461
    %v7463 = vpop.f32.mrb[0].mxu0
    %7464 = vmatprep.mubr.bf16.mxu0 %v5601
    %7465 = vmatmul.mubr.bf16.gmra.mrb[0].mxu0 %v5600
    %v7466 = vpop.f32.mrb[0].mxu0
    %v7467 = vadd.f32 %v6915, %v7466
    %v7468 = vpop.f32.mrb[0].mxu0
    %v7469 = vpop.f32.mrb[0].mxu0
    %v7470 = vadd.f32 %v6918, %v7469
    %v7471 = vpop.f32.mrb[0].mxu0
    %7472 = vmatprep.mubr.bf16.mxu0 %v5610
    %7473 = vmatmul.mubr.bf16.gmra.mrb[0].mxu0 %v5609
    %v7474 = vpop.f32.mrb[0].mxu0
    %v7475 = vadd.f32 %v6923, %v7474
    %v7476 = vpop.f32.mrb[0].mxu0
    %v7477 = vpop.f32.mrb[0].mxu0
    %v7478 = vadd.f32 %v6926, %v7477
    %v7479 = vpop.f32.mrb[0].mxu0
    %7480 = vmatprep.mubr.bf16.mxu0 %v5619
    %7481 = vmatmul.mubr.bf16.gmra.mrb[0].mxu0 %v5618
    %v7482 = vpop.f32.mrb[0].mxu0
    %v7483 = vadd.f32 %v6931, %v7482
    %v7484 = vpop.f32.mrb[0].mxu0
    %v7485 = vpop.f32.mrb[0].mxu0
    %v7486 = vadd.f32 %v6934, %v7485
    %v7487 = vpop.f32.mrb[0].mxu0
    %7488 = vmatprep.mubr.bf16.mxu0 %v5628
    %7489 = vmatmul.mubr.bf16.gmra.mrb[0].mxu0 %v5627
    %v7490 = vpop.f32.mrb[0].mxu0
    %v7491 = vadd.f32 %v6939, %v7490
    %v7492 = vpop.f32.mrb[0].mxu0
    %v7493 = vpop.f32.mrb[0].mxu0
    %v7494 = vadd.f32 %v6942, %v7493
    %v7495 = vpop.f32.mrb[0].mxu0
    %7496 = vmatprep.mubr.bf16.mxu0 %v5637
    %7497 = vmatmul.mubr.bf16.gmra.mrb[0].mxu0 %v5636
    %v7498 = vpop.f32.mrb[0].mxu0
    %v7499 = vadd.f32 %v6947, %v7498
    %v7500 = vpop.f32.mrb[0].mxu0
    %v7501 = vpop.f32.mrb[0].mxu0
    %v7502 = vadd.f32 %v6950, %v7501
    %v7503 = vpop.f32.mrb[0].mxu0
    %7504 = vmatprep.mubr.bf16.mxu0 %v5646
    %7505 = vmatmul.mubr.bf16.gmra.mrb[0].mxu0 %v5645
    %v7506 = vpop.f32.mrb[0].mxu0
    %v7507 = vadd.f32 %v6955, %v7506
    %v7508 = vpop.f32.mrb[0].mxu0
    %v7509 = vpop.f32.mrb[0].mxu0
    %v7510 = vadd.f32 %v6958, %v7509
    %v7511 = vpop.f32.mrb[0].mxu0
    %7512 = vmatprep.mubr.bf16.mxu0 %v5655
    %7513 = vmatmul.mubr.bf16.gmra.mrb[0].mxu0 %v5654
    %v7514 = vpop.f32.mrb[0].mxu0
    %v7515 = vadd.f32 %v6963, %v7514
    %v7516 = vpop.f32.mrb[0].mxu0
    %v7517 = vpop.f32.mrb[0].mxu0
    %v7518 = vadd.f32 %v6966, %v7517
    %v7519 = vpop.f32.mrb[0].mxu0
    %7520 = vmatprep.mubr.bf16.mxu0 %v5664
    %7521 = vmatmul.mubr.bf16.gmra.mrb[0].mxu0 %v5663
    %v7522 = vpop.f32.mrb[0].mxu0
    %v7523 = vadd.f32 %v6971, %v7522
    %v7524 = vpop.f32.mrb[0].mxu0
    %v7525 = vpop.f32.mrb[0].mxu0
    %v7526 = vadd.f32 %v6974, %v7525
    %v7527 = vpop.f32.mrb[0].mxu0
    %7528 = vmatprep.mubr.bf16.mxu0 %v5673
    %7529 = vmatmul.mubr.bf16.gmra.mrb[0].mxu0 %v5672
    %v7530 = vpop.f32.mrb[0].mxu0
    %v7531 = vadd.f32 %v6979, %v7530
    %v7532 = vpop.f32.mrb[0].mxu0
    %v7533 = vpop.f32.mrb[0].mxu0
    %v7534 = vadd.f32 %v6982, %v7533
    %v7535 = vpop.f32.mrb[0].mxu0
    %7536 = vmatprep.mubr.bf16.mxu0 %v5682
    %7537 = vmatmul.mubr.bf16.gmra.mrb[0].mxu0 %v5681
    %v7538 = vpop.f32.mrb[0].mxu0
    %v7539 = vadd.f32 %v6987, %v7538
    %v7540 = vpop.f32.mrb[0].mxu0
    %v7541 = vpop.f32.mrb[0].mxu0
    %v7542 = vadd.f32 %v6990, %v7541
    %v7543 = vpop.f32.mrb[0].mxu0
    %7544 = vmatprep.mubr.bf16.mxu0 %v5691
    %7545 = vmatmul.mubr.bf16.gmra.mrb[0].mxu0 %v5690
    %v7546 = vpop.f32.mrb[0].mxu0
    %v7547 = vadd.f32 %v6995, %v7546
    %v7548 = vpop.f32.mrb[0].mxu0
    %v7549 = vpop.f32.mrb[0].mxu0
    %v7550 = vadd.f32 %v6998, %v7549
    %v7551 = vpop.f32.mrb[0].mxu0
    %7552 = vmatprep.mubr.bf16.mxu0 %v5700
    %7553 = vmatmul.mubr.bf16.gmra.mrb[0].mxu0 %v5699
    %v7554 = vpop.f32.mrb[0].mxu0
    %v7555 = vadd.f32 %v7003, %v7554
    %v7556 = vpop.f32.mrb[0].mxu0
    %v7557 = vpop.f32.mrb[0].mxu0
    %v7558 = vadd.f32 %v7006, %v7557
    %v7559 = vpop.f32.mrb[0].mxu0
    %7560 = vmatprep.mubr.bf16.mxu0 %v5709
    %7561 = vmatmul.mubr.bf16.gmra.mrb[0].mxu0 %v5708
    %v7562 = vpop.f32.mrb[0].mxu0
    %v7563 = vadd.f32 %v7011, %v7562
    %v7564 = vpop.f32.mrb[0].mxu0
    %v7565 = vpop.f32.mrb[0].mxu0
    %v7566 = vadd.f32 %v7014, %v7565
    %v7567 = vpop.f32.mrb[0].mxu0
    %7568 = vmatprep.mubr.bf16.mxu0 %v5718
    %7569 = vmatmul.mubr.bf16.gmra.mrb[0].mxu0 %v5717
    %v7570 = vpop.f32.mrb[0].mxu0
    %v7571 = vadd.f32 %v7019, %v7570
    %v7572 = vpop.f32.mrb[0].mxu0
    %v7573 = vpop.f32.mrb[0].mxu0
    %v7574 = vadd.f32 %v7022, %v7573
    %v7575 = vpop.f32.mrb[0].mxu0
    %7576 = vmatprep.mubr.bf16.mxu0 %v5727
    %7577 = vmatmul.mubr.bf16.gmra.mrb[0].mxu0 %v5726
    %v7578 = vpop.f32.mrb[0].mxu0
    %v7579 = vadd.f32 %v7027, %v7578
    %v7580 = vpop.f32.mrb[0].mxu0
    %v7581 = vpop.f32.mrb[0].mxu0
    %v7582 = vadd.f32 %v7030, %v7581
    %v7583 = vpop.f32.mrb[0].mxu0
    %7584 = vmatprep.mubr.bf16.mxu0 %v5736
    %7585 = vmatmul.mubr.bf16.gmra.mrb[0].mxu0 %v5735
    %v7586 = vpop.f32.mrb[0].mxu0
    %v7587 = vadd.f32 %v7035, %v7586
    %v7588 = vpop.f32.mrb[0].mxu0
    %v7589 = vpop.f32.mrb[0].mxu0
    %v7590 = vadd.f32 %v7038, %v7589
    %v7591 = vpop.f32.mrb[0].mxu0
    %7592 = vmatprep.mubr.bf16.mxu0 %v5745
    %7593 = vmatmul.mubr.bf16.gmra.mrb[0].mxu0 %v5744
    %v7594 = vpop.f32.mrb[0].mxu0
    %v7595 = vadd.f32 %v7043, %v7594
    %v7596 = vpop.f32.mrb[0].mxu0
    %v7597 = vpop.f32.mrb[0].mxu0
    %v7598 = vadd.f32 %v7046, %v7597
    %v7599 = vpop.f32.mrb[0].mxu0
    %7600 = vmatprep.mubr.bf16.mxu0 %v5754
    %7601 = vmatmul.mubr.bf16.gmra.mrb[0].mxu0 %v5753
    %v7602 = vpop.f32.mrb[0].mxu0
    %v7603 = vadd.f32 %v7051, %v7602
    %v7604 = vpop.f32.mrb[0].mxu0
    %v7605 = vpop.f32.mrb[0].mxu0
    %v7606 = vadd.f32 %v7054, %v7605
    %v7607 = vpop.f32.mrb[0].mxu0
    %7608 = vmatprep.mubr.bf16.mxu0 %v5763
    %7609 = vmatmul.mubr.bf16.gmra.mrb[0].mxu0 %v5762
    %v7610 = vpop.f32.mrb[0].mxu0
    %v7611 = vadd.f32 %v7059, %v7610
    %v7612 = vpop.f32.mrb[0].mxu0
    %v7613 = vpop.f32.mrb[0].mxu0
    %v7614 = vadd.f32 %v7062, %v7613
    %v7615 = vpop.f32.mrb[0].mxu0
    %7616 = vmatprep.mubr.bf16.mxu0 %v5772
    %7617 = vmatmul.mubr.bf16.gmra.mrb[0].mxu0 %v5771
    %v7618 = vpop.f32.mrb[0].mxu0
    %v7619 = vadd.f32 %v7067, %v7618
    %v7620 = vpop.f32.mrb[0].mxu0
    %v7621 = vpop.f32.mrb[0].mxu0
    %v7622 = vadd.f32 %v7070, %v7621
    %v7623 = vpop.f32.mrb[0].mxu0
    %7624 = vmatprep.mubr.bf16.mxu0 %v5781
    %7625 = vmatmul.mubr.bf16.gmra.mrb[0].mxu0 %v5780
    %v7626 = vpop.f32.mrb[0].mxu0
    %v7627 = vadd.f32 %v7075, %v7626
    %v7628 = vpop.f32.mrb[0].mxu0
    %v7629 = vpop.f32.mrb[0].mxu0
    %v7630 = vadd.f32 %v7078, %v7629
    %v7631 = vpop.f32.mrb[0].mxu0
    %7632 = vmatprep.mubr.bf16.mxu0 %v5790
    %7633 = vmatmul.mubr.bf16.gmra.mrb[0].mxu0 %v5789
    %v7634 = vpop.f32.mrb[0].mxu0
    %v7635 = vadd.f32 %v7083, %v7634
    %v7636 = vpop.f32.mrb[0].mxu0
    %v7637 = vpop.f32.mrb[0].mxu0
    %v7638 = vadd.f32 %v7086, %v7637
    %v7639 = vpop.f32.mrb[0].mxu0
    %7640 = vmatprep.mubr.bf16.mxu0 %v5799
    %7641 = vmatmul.mubr.bf16.gmra.mrb[0].mxu0 %v5798
    %v7642 = vpop.f32.mrb[0].mxu0
    %v7643 = vadd.f32 %v7091, %v7642
    %v7644 = vpop.f32.mrb[0].mxu0
    %v7645 = vpop.f32.mrb[0].mxu0
    %v7646 = vadd.f32 %v7094, %v7645
    %v7647 = vpop.f32.mrb[0].mxu0
    %7648 = vmatprep.mubr.bf16.mxu0 %v5808
    %7649 = vmatmul.mubr.bf16.gmra.mrb[0].mxu0 %v5807
    %v7650 = vpop.f32.mrb[0].mxu0
    %v7651 = vadd.f32 %v7099, %v7650
    %v7652 = vpop.f32.mrb[0].mxu0
    %v7653 = vpop.f32.mrb[0].mxu0
    %v7654 = vadd.f32 %v7102, %v7653
    %v7655 = vpop.f32.mrb[0].mxu0
    %7656 = vmatprep.mubr.bf16.mxu0 %v5817
    %7657 = vmatmul.mubr.bf16.gmra.mrb[0].mxu0 %v5816
    %v7658 = vpop.f32.mrb[0].mxu0
    %v7659 = vadd.f32 %v7107, %v7658
    %v7660 = vpop.f32.mrb[0].mxu0
    %v7661 = vpop.f32.mrb[0].mxu0
    %v7662 = vadd.f32 %v7110, %v7661
    %v7663 = vpop.f32.mrb[0].mxu0
    %7664 = vmatprep.mubr.bf16.mxu0 %v5826
    %7665 = vmatmul.mubr.bf16.gmra.mrb[0].mxu0 %v5825
    %v7666 = vpop.f32.mrb[0].mxu0
    %v7667 = vadd.f32 %v7115, %v7666
    %v7668 = vpop.f32.mrb[0].mxu0
    %v7669 = vpop.f32.mrb[0].mxu0
    %v7670 = vadd.f32 %v7118, %v7669
    %v7671 = vpop.f32.mrb[0].mxu0
    %7672 = vmatprep.mubr.bf16.mxu0 %v5835
    %7673 = vmatmul.mubr.bf16.gmra.mrb[0].mxu0 %v5834
    %v7674 = vpop.f32.mrb[0].mxu0
    %v7675 = vadd.f32 %v7123, %v7674
    %v7676 = vpop.f32.mrb[0].mxu0
    %v7677 = vpop.f32.mrb[0].mxu0
    %v7678 = vadd.f32 %v7126, %v7677
    %v7679 = vpop.f32.mrb[0].mxu0
    %7680 = vmatprep.mubr.bf16.mxu0 %v5844
    %7681 = vmatmul.mubr.bf16.gmra.mrb[0].mxu0 %v5843
    %v7682 = vpop.f32.mrb[0].mxu0
    %v7683 = vadd.f32 %v7131, %v7682
    %v7684 = vpop.f32.mrb[0].mxu0
    %v7685 = vpop.f32.mrb[0].mxu0
    %v7686 = vadd.f32 %v7134, %v7685
    %v7687 = vpop.f32.mrb[0].mxu0
    %7688 = vmatprep.mubr.bf16.mxu0 %v5853
    %7689 = vmatmul.mubr.bf16.gmra.mrb[0].mxu0 %v5852
    %v7690 = vpop.f32.mrb[0].mxu0
    %v7691 = vadd.f32 %v7139, %v7690
    %v7692 = vpop.f32.mrb[0].mxu0
    %v7693 = vpop.f32.mrb[0].mxu0
    %v7694 = vadd.f32 %v7142, %v7693
    %v7695 = vpop.f32.mrb[0].mxu0
    %7696 = vmatprep.mubr.bf16.mxu0 %v5862
    %7697 = vmatmul.mubr.bf16.gmra.mrb[0].mxu0 %v5861
    %v7698 = vpop.f32.mrb[0].mxu0
    %v7699 = vadd.f32 %v7147, %v7698
    %v7700 = vpop.f32.mrb[0].mxu0
    %v7701 = vpop.f32.mrb[0].mxu0
    %v7702 = vadd.f32 %v7150, %v7701
    %v7703 = vpop.f32.mrb[0].mxu0
    %7704 = vmatprep.mubr.bf16.mxu0 %v5871
    %7705 = vmatmul.mubr.bf16.gmra.mrb[0].mxu0 %v5870
    %v7706 = vpop.f32.mrb[0].mxu0
    %v7707 = vadd.f32 %v7155, %v7706
    %v7708 = vpop.f32.mrb[0].mxu0
    %v7709 = vpop.f32.mrb[0].mxu0
    %v7710 = vadd.f32 %v7158, %v7709
    %v7711 = vpop.f32.mrb[0].mxu0
    %7712 = vmatprep.mubr.bf16.mxu0 %v5880
    %7713 = vmatmul.mubr.bf16.gmra.mrb[0].mxu0 %v5879
    %v7714 = vpop.f32.mrb[0].mxu0
    %v7715 = vadd.f32 %v7163, %v7714
    %v7716 = vpop.f32.mrb[0].mxu0
    %v7717 = vpop.f32.mrb[0].mxu0
    %v7718 = vadd.f32 %v7166, %v7717
    %v7719 = vpop.f32.mrb[0].mxu0
    %7720 = vmatprep.mubr.bf16.mxu0 %v5889
    %7721 = vmatmul.mubr.bf16.gmra.mrb[0].mxu0 %v5888
    %v7722 = vpop.f32.mrb[0].mxu0
    %v7723 = vadd.f32 %v7171, %v7722
    %v7724 = vpop.f32.mrb[0].mxu0
    %v7725 = vpop.f32.mrb[0].mxu0
    %v7726 = vadd.f32 %v7174, %v7725
    %v7727 = vpop.f32.mrb[0].mxu0
    %7728 = vmatprep.mubr.bf16.mxu0 %v5898
    %7729 = vmatmul.mubr.bf16.gmra.mrb[0].mxu0 %v5897
    %v7730 = vpop.f32.mrb[0].mxu0
    %v7731 = vadd.f32 %v7179, %v7730
    %v7732 = vpop.f32.mrb[0].mxu0
    %v7733 = vpop.f32.mrb[0].mxu0
    %v7734 = vadd.f32 %v7182, %v7733
    %v7735 = vpop.f32.mrb[0].mxu0
    %7736 = vmatprep.mubr.bf16.mxu0 %v5907
    %7737 = vmatmul.mubr.bf16.gmra.mrb[0].mxu0 %v5906
    %v7738 = vpop.f32.mrb[0].mxu0
    %v7739 = vadd.f32 %v7187, %v7738
    %v7740 = vpop.f32.mrb[0].mxu0
    %v7741 = vpop.f32.mrb[0].mxu0
    %v7742 = vadd.f32 %v7190, %v7741
    %v7743 = vpop.f32.mrb[0].mxu0
    %7744 = vmatprep.mubr.bf16.mxu0 %v5916
    %7745 = vmatmul.mubr.bf16.gmra.mrb[0].mxu0 %v5915
    %v7746 = vpop.f32.mrb[0].mxu0
    %v7747 = vadd.f32 %v7195, %v7746
    %v7748 = vpop.f32.mrb[0].mxu0
    %v7749 = vpop.f32.mrb[0].mxu0
    %v7750 = vadd.f32 %v7198, %v7749
    %v7751 = vpop.f32.mrb[0].mxu0
    %7752 = vmatprep.mubr.bf16.mxu0 %v5925
    %7753 = vmatmul.mubr.bf16.gmra.mrb[0].mxu0 %v5924
    %v7754 = vpop.f32.mrb[0].mxu0
    %v7755 = vadd.f32 %v7203, %v7754
    %v7756 = vpop.f32.mrb[0].mxu0
    %v7757 = vpop.f32.mrb[0].mxu0
    %v7758 = vadd.f32 %v7206, %v7757
    %v7759 = vpop.f32.mrb[0].mxu0
    %7760 = vmatprep.mubr.bf16.mxu0 %v5934
    %7761 = vmatmul.mubr.bf16.gmra.mrb[0].mxu0 %v5933
    %v7762 = vpop.f32.mrb[0].mxu0
    %v7763 = vadd.f32 %v7211, %v7762
    %v7764 = vpop.f32.mrb[0].mxu0
    %v7765 = vpop.f32.mrb[0].mxu0
    %v7766 = vadd.f32 %v7214, %v7765
    %v7767 = vpop.f32.mrb[0].mxu0
    %7768 = vmatprep.mubr.bf16.mxu0 %v5943
    %7769 = vmatmul.mubr.bf16.gmra.mrb[0].mxu0 %v5942
    %v7770 = vpop.f32.mrb[0].mxu0
    %v7771 = vadd.f32 %v7219, %v7770
    %v7772 = vpop.f32.mrb[0].mxu0
    %v7773 = vpop.f32.mrb[0].mxu0
    %v7774 = vadd.f32 %v7222, %v7773
    %v7775 = vpop.f32.mrb[0].mxu0
    %7776 = vmatprep.mubr.bf16.mxu0 %v5952
    %7777 = vmatmul.mubr.bf16.gmra.mrb[0].mxu0 %v5951
    %v7778 = vpop.f32.mrb[0].mxu0
    %v7779 = vadd.f32 %v7227, %v7778
    %v7780 = vpop.f32.mrb[0].mxu0
    %v7781 = vpop.f32.mrb[0].mxu0
    %v7782 = vadd.f32 %v7230, %v7781
    %v7783 = vpop.f32.mrb[0].mxu0
    %7784 = vmatprep.mubr.bf16.mxu0 %v5961
    %7785 = vmatmul.mubr.bf16.gmra.mrb[0].mxu0 %v5960
    %v7786 = vpop.f32.mrb[0].mxu0
    %v7787 = vadd.f32 %v7235, %v7786
    %v7788 = vpop.f32.mrb[0].mxu0
    %v7789 = vpop.f32.mrb[0].mxu0
    %v7790 = vadd.f32 %v7238, %v7789
    %v7791 = vpop.f32.mrb[0].mxu0
    %7792 = vmatprep.mubr.bf16.mxu0 %v5970
    %7793 = vmatmul.mubr.bf16.gmra.mrb[0].mxu0 %v5969
    %v7794 = vpop.f32.mrb[0].mxu0
    %v7795 = vadd.f32 %v7243, %v7794
    %v7796 = vpop.f32.mrb[0].mxu0
    %v7797 = vpop.f32.mrb[0].mxu0
    %v7798 = vadd.f32 %v7246, %v7797
    %v7799 = vpop.f32.mrb[0].mxu0
    %7800 = vmatprep.mubr.bf16.mxu0 %v5979
    %7801 = vmatmul.mubr.bf16.gmra.mrb[0].mxu0 %v5978
    %v7802 = vpop.f32.mrb[0].mxu0
    %v7803 = vadd.f32 %v7251, %v7802
    %v7804 = vpop.f32.mrb[0].mxu0
    %v7805 = vpop.f32.mrb[0].mxu0
    %v7806 = vpop.f32.mrb[0].mxu0
    %7807 = vdwg.mxu0
    %7808 = vmatprep.subr.bf16.mxu0 0
    %7809 = vmatpush1.bf16.msra.mxu0 %v3561
    %7810 = vmatprep.subr.bf16.mxu0 0
    %7811 = vmatpush1.bf16.msra.mxu0 %v3562
    %7812 = vmatprep.subr.bf16.mxu0 0
    %7813 = vmatpush1.bf16.msra.mxu0 %v3563
    %7814 = vmatprep.subr.bf16.mxu0 0
    %7815 = vmatpush1.bf16.msra.mxu0 %v3564
    %7816 = vmatprep.subr.bf16.mxu0 0
    %7817 = vmatpush1.bf16.msra.mxu0 %v3565
    %7818 = vmatprep.subr.bf16.mxu0 0
    %7819 = vmatpush1.bf16.msra.mxu0 %v3566
    %7820 = vmatprep.subr.bf16.mxu0 0
    %7821 = vmatpush1.bf16.msra.mxu0 %v3567
    %7822 = vmatprep.subr.bf16.mxu0 0
    %7823 = vmatpush1.bf16.msra.mxu0 %v3568
    %7824 = vmatprep.subr.bf16.mxu0 0
    %7825 = vmatpush1.bf16.msra.mxu0 %v3569
    %7826 = vmatprep.subr.bf16.mxu0 0
    %7827 = vmatpush1.bf16.msra.mxu0 %v3570
    %7828 = vmatprep.subr.bf16.mxu0 0
    %7829 = vmatpush1.bf16.msra.mxu0 %v3571
    %7830 = vmatprep.subr.bf16.mxu0 0
    %7831 = vmatpush1.bf16.msra.mxu0 %v3572
    %7832 = vmatprep.subr.bf16.mxu0 0
    %7833 = vmatpush1.bf16.msra.mxu0 %v3573
    %7834 = vmatprep.subr.bf16.mxu0 0
    %7835 = vmatpush1.bf16.msra.mxu0 %v3574
    %7836 = vmatprep.subr.bf16.mxu0 0
    %7837 = vmatpush1.bf16.msra.mxu0 %v3575
    %7838 = vmatprep.subr.bf16.mxu0 0
    %7839 = vmatpush1.bf16.msra.mxu0 %v3576
    %7840 = vmatprep.mubr.bf16.mxu0 %v5405
    %7841 = vmatmul.mubr.bf16.gmra.mrb[0].mxu0 %v5404
    %v7842 = vpop.f32.mrb[0].mxu0
    %v7843 = vadd.f32 %v7291, %v7842
    %v7844 = vpop.f32.mrb[0].mxu0
    %v7845 = vpop.f32.mrb[0].mxu0
    %v7846 = vadd.f32 %v7294, %v7845
    %v7847 = vpop.f32.mrb[0].mxu0
    %7848 = vmatprep.mubr.bf16.mxu0 %v5414
    %7849 = vmatmul.mubr.bf16.gmra.mrb[0].mxu0 %v5413
    %v7850 = vpop.f32.mrb[0].mxu0
    %v7851 = vadd.f32 %v7299, %v7850
    %v7852 = vpop.f32.mrb[0].mxu0
    %v7853 = vpop.f32.mrb[0].mxu0
    %v7854 = vadd.f32 %v7302, %v7853
    %v7855 = vpop.f32.mrb[0].mxu0
    %7856 = vmatprep.mubr.bf16.mxu0 %v5423
    %7857 = vmatmul.mubr.bf16.gmra.mrb[0].mxu0 %v5422
    %v7858 = vpop.f32.mrb[0].mxu0
    %v7859 = vadd.f32 %v7307, %v7858
    %v7860 = vpop.f32.mrb[0].mxu0
    %v7861 = vpop.f32.mrb[0].mxu0
    %v7862 = vadd.f32 %v7310, %v7861
    %v7863 = vpop.f32.mrb[0].mxu0
    %7864 = vmatprep.mubr.bf16.mxu0 %v5432
    %7865 = vmatmul.mubr.bf16.gmra.mrb[0].mxu0 %v5431
    %v7866 = vpop.f32.mrb[0].mxu0
    %v7867 = vadd.f32 %v7315, %v7866
    %v7868 = vpop.f32.mrb[0].mxu0
    %v7869 = vpop.f32.mrb[0].mxu0
    %v7870 = vadd.f32 %v7318, %v7869
    %v7871 = vpop.f32.mrb[0].mxu0
    %7872 = vmatprep.mubr.bf16.mxu0 %v5441
    %7873 = vmatmul.mubr.bf16.gmra.mrb[0].mxu0 %v5440
    %v7874 = vpop.f32.mrb[0].mxu0
    %v7875 = vadd.f32 %v7323, %v7874
    %v7876 = vpop.f32.mrb[0].mxu0
    %v7877 = vpop.f32.mrb[0].mxu0
    %v7878 = vadd.f32 %v7326, %v7877
    %v7879 = vpop.f32.mrb[0].mxu0
    %7880 = vmatprep.mubr.bf16.mxu0 %v5450
    %7881 = vmatmul.mubr.bf16.gmra.mrb[0].mxu0 %v5449
    %v7882 = vpop.f32.mrb[0].mxu0
    %v7883 = vadd.f32 %v7331, %v7882
    %v7884 = vpop.f32.mrb[0].mxu0
    %v7885 = vpop.f32.mrb[0].mxu0
    %v7886 = vadd.f32 %v7334, %v7885
    %v7887 = vpop.f32.mrb[0].mxu0
    %7888 = vmatprep.mubr.bf16.mxu0 %v5459
    %7889 = vmatmul.mubr.bf16.gmra.mrb[0].mxu0 %v5458
    %v7890 = vpop.f32.mrb[0].mxu0
    %v7891 = vadd.f32 %v7339, %v7890
    %v7892 = vpop.f32.mrb[0].mxu0
    %v7893 = vpop.f32.mrb[0].mxu0
    %v7894 = vadd.f32 %v7342, %v7893
    %v7895 = vpop.f32.mrb[0].mxu0
    %7896 = vmatprep.mubr.bf16.mxu0 %v5468
    %7897 = vmatmul.mubr.bf16.gmra.mrb[0].mxu0 %v5467
    %v7898 = vpop.f32.mrb[0].mxu0
    %v7899 = vadd.f32 %v7347, %v7898
    %v7900 = vpop.f32.mrb[0].mxu0
    %v7901 = vpop.f32.mrb[0].mxu0
    %v7902 = vadd.f32 %v7350, %v7901
    %v7903 = vpop.f32.mrb[0].mxu0
    %7904 = vmatprep.mubr.bf16.mxu0 %v5477
    %7905 = vmatmul.mubr.bf16.gmra.mrb[0].mxu0 %v5476
    %v7906 = vpop.f32.mrb[0].mxu0
    %v7907 = vadd.f32 %v7355, %v7906
    %v7908 = vpop.f32.mrb[0].mxu0
    %v7909 = vpop.f32.mrb[0].mxu0
    %v7910 = vadd.f32 %v7358, %v7909
    %v7911 = vpop.f32.mrb[0].mxu0
    %7912 = vmatprep.mubr.bf16.mxu0 %v5486
    %7913 = vmatmul.mubr.bf16.gmra.mrb[0].mxu0 %v5485
    %v7914 = vpop.f32.mrb[0].mxu0
    %v7915 = vadd.f32 %v7363, %v7914
    %v7916 = vpop.f32.mrb[0].mxu0
    %v7917 = vpop.f32.mrb[0].mxu0
    %v7918 = vadd.f32 %v7366, %v7917
    %v7919 = vpop.f32.mrb[0].mxu0
    %7920 = vmatprep.mubr.bf16.mxu0 %v5495
    %7921 = vmatmul.mubr.bf16.gmra.mrb[0].mxu0 %v5494
    %v7922 = vpop.f32.mrb[0].mxu0
    %v7923 = vadd.f32 %v7371, %v7922
    %v7924 = vpop.f32.mrb[0].mxu0
    %v7925 = vpop.f32.mrb[0].mxu0
    %v7926 = vadd.f32 %v7374, %v7925
    %v7927 = vpop.f32.mrb[0].mxu0
    %7928 = vmatprep.mubr.bf16.mxu0 %v5504
    %7929 = vmatmul.mubr.bf16.gmra.mrb[0].mxu0 %v5503
    %v7930 = vpop.f32.mrb[0].mxu0
    %v7931 = vadd.f32 %v7379, %v7930
    %v7932 = vpop.f32.mrb[0].mxu0
    %v7933 = vpop.f32.mrb[0].mxu0
    %v7934 = vadd.f32 %v7382, %v7933
    %v7935 = vpop.f32.mrb[0].mxu0
    %7936 = vmatprep.mubr.bf16.mxu0 %v5513
    %7937 = vmatmul.mubr.bf16.gmra.mrb[0].mxu0 %v5512
    %v7938 = vpop.f32.mrb[0].mxu0
    %v7939 = vadd.f32 %v7387, %v7938
    %v7940 = vpop.f32.mrb[0].mxu0
    %v7941 = vpop.f32.mrb[0].mxu0
    %v7942 = vadd.f32 %v7390, %v7941
    %v7943 = vpop.f32.mrb[0].mxu0
    %7944 = vmatprep.mubr.bf16.mxu0 %v5522
    %7945 = vmatmul.mubr.bf16.gmra.mrb[0].mxu0 %v5521
    %v7946 = vpop.f32.mrb[0].mxu0
    %v7947 = vadd.f32 %v7395, %v7946
    %v7948 = vpop.f32.mrb[0].mxu0
    %v7949 = vpop.f32.mrb[0].mxu0
    %v7950 = vadd.f32 %v7398, %v7949
    %v7951 = vpop.f32.mrb[0].mxu0
    %7952 = vmatprep.mubr.bf16.mxu0 %v5531
    %7953 = vmatmul.mubr.bf16.gmra.mrb[0].mxu0 %v5530
    %v7954 = vpop.f32.mrb[0].mxu0
    %v7955 = vadd.f32 %v7403, %v7954
    %v7956 = vpop.f32.mrb[0].mxu0
    %v7957 = vpop.f32.mrb[0].mxu0
    %v7958 = vadd.f32 %v7406, %v7957
    %v7959 = vpop.f32.mrb[0].mxu0
    %7960 = vmatprep.mubr.bf16.mxu0 %v5540
    %7961 = vmatmul.mubr.bf16.gmra.mrb[0].mxu0 %v5539
    %v7962 = vpop.f32.mrb[0].mxu0
    %v7963 = vadd.f32 %v7411, %v7962
    %v7964 = vpop.f32.mrb[0].mxu0
    %v7965 = vpop.f32.mrb[0].mxu0
    %v7966 = vadd.f32 %v7414, %v7965
    %v7967 = vpop.f32.mrb[0].mxu0
    %7968 = vmatprep.mubr.bf16.mxu0 %v5549
    %7969 = vmatmul.mubr.bf16.gmra.mrb[0].mxu0 %v5548
    %v7970 = vpop.f32.mrb[0].mxu0
    %v7971 = vadd.f32 %v7419, %v7970
    %v7972 = vpop.f32.mrb[0].mxu0
    %v7973 = vpop.f32.mrb[0].mxu0
    %v7974 = vadd.f32 %v7422, %v7973
    %v7975 = vpop.f32.mrb[0].mxu0
    %7976 = vmatprep.mubr.bf16.mxu0 %v5558
    %7977 = vmatmul.mubr.bf16.gmra.mrb[0].mxu0 %v5557
    %v7978 = vpop.f32.mrb[0].mxu0
    %v7979 = vadd.f32 %v7427, %v7978
    %v7980 = vpop.f32.mrb[0].mxu0
    %v7981 = vpop.f32.mrb[0].mxu0
    %v7982 = vadd.f32 %v7430, %v7981
    %v7983 = vpop.f32.mrb[0].mxu0
    %7984 = vmatprep.mubr.bf16.mxu0 %v5567
    %7985 = vmatmul.mubr.bf16.gmra.mrb[0].mxu0 %v5566
    %v7986 = vpop.f32.mrb[0].mxu0
    %v7987 = vadd.f32 %v7435, %v7986
    %v7988 = vpop.f32.mrb[0].mxu0
    %v7989 = vpop.f32.mrb[0].mxu0
    %v7990 = vadd.f32 %v7438, %v7989
    %v7991 = vpop.f32.mrb[0].mxu0
    %7992 = vmatprep.mubr.bf16.mxu0 %v5576
    %7993 = vmatmul.mubr.bf16.gmra.mrb[0].mxu0 %v5575
    %v7994 = vpop.f32.mrb[0].mxu0
    %v7995 = vadd.f32 %v7443, %v7994
    %v7996 = vpop.f32.mrb[0].mxu0
    %v7997 = vpop.f32.mrb[0].mxu0
    %v7998 = vadd.f32 %v7446, %v7997
    %v7999 = vpop.f32.mrb[0].mxu0
    %8000 = vmatprep.mubr.bf16.mxu0 %v5585
    %8001 = vmatmul.mubr.bf16.gmra.mrb[0].mxu0 %v5584
    %v8002 = vpop.f32.mrb[0].mxu0
    %v8003 = vadd.f32 %v7451, %v8002
    %v8004 = vpop.f32.mrb[0].mxu0
    %v8005 = vpop.f32.mrb[0].mxu0
    %v8006 = vadd.f32 %v7454, %v8005
    %v8007 = vpop.f32.mrb[0].mxu0
    %8008 = vmatprep.mubr.bf16.mxu0 %v5594
    %8009 = vmatmul.mubr.bf16.gmra.mrb[0].mxu0 %v5593
    %v8010 = vpop.f32.mrb[0].mxu0
    %v8011 = vadd.f32 %v7459, %v8010
    %v8012 = vpop.f32.mrb[0].mxu0
    %v8013 = vpop.f32.mrb[0].mxu0
    %v8014 = vadd.f32 %v7462, %v8013
    %v8015 = vpop.f32.mrb[0].mxu0
    %8016 = vmatprep.mubr.bf16.mxu0 %v5603
    %8017 = vmatmul.mubr.bf16.gmra.mrb[0].mxu0 %v5602
    %v8018 = vpop.f32.mrb[0].mxu0
    %v8019 = vadd.f32 %v7467, %v8018
    %v8020 = vpop.f32.mrb[0].mxu0
    %v8021 = vpop.f32.mrb[0].mxu0
    %v8022 = vadd.f32 %v7470, %v8021
    %v8023 = vpop.f32.mrb[0].mxu0
    %8024 = vmatprep.mubr.bf16.mxu0 %v5612
    %8025 = vmatmul.mubr.bf16.gmra.mrb[0].mxu0 %v5611
    %v8026 = vpop.f32.mrb[0].mxu0
    %v8027 = vadd.f32 %v7475, %v8026
    %v8028 = vpop.f32.mrb[0].mxu0
    %v8029 = vpop.f32.mrb[0].mxu0
    %v8030 = vadd.f32 %v7478, %v8029
    %v8031 = vpop.f32.mrb[0].mxu0
    %8032 = vmatprep.mubr.bf16.mxu0 %v5621
    %8033 = vmatmul.mubr.bf16.gmra.mrb[0].mxu0 %v5620
    %v8034 = vpop.f32.mrb[0].mxu0
    %v8035 = vadd.f32 %v7483, %v8034
    %v8036 = vpop.f32.mrb[0].mxu0
    %v8037 = vpop.f32.mrb[0].mxu0
    %v8038 = vadd.f32 %v7486, %v8037
    %v8039 = vpop.f32.mrb[0].mxu0
    %8040 = vmatprep.mubr.bf16.mxu0 %v5630
    %8041 = vmatmul.mubr.bf16.gmra.mrb[0].mxu0 %v5629
    %v8042 = vpop.f32.mrb[0].mxu0
    %v8043 = vadd.f32 %v7491, %v8042
    %v8044 = vpop.f32.mrb[0].mxu0
    %v8045 = vpop.f32.mrb[0].mxu0
    %v8046 = vadd.f32 %v7494, %v8045
    %v8047 = vpop.f32.mrb[0].mxu0
    %8048 = vmatprep.mubr.bf16.mxu0 %v5639
    %8049 = vmatmul.mubr.bf16.gmra.mrb[0].mxu0 %v5638
    %v8050 = vpop.f32.mrb[0].mxu0
    %v8051 = vadd.f32 %v7499, %v8050
    %v8052 = vpop.f32.mrb[0].mxu0
    %v8053 = vpop.f32.mrb[0].mxu0
    %v8054 = vadd.f32 %v7502, %v8053
    %v8055 = vpop.f32.mrb[0].mxu0
    %8056 = vmatprep.mubr.bf16.mxu0 %v5648
    %8057 = vmatmul.mubr.bf16.gmra.mrb[0].mxu0 %v5647
    %v8058 = vpop.f32.mrb[0].mxu0
    %v8059 = vadd.f32 %v7507, %v8058
    %v8060 = vpop.f32.mrb[0].mxu0
    %v8061 = vpop.f32.mrb[0].mxu0
    %v8062 = vadd.f32 %v7510, %v8061
    %v8063 = vpop.f32.mrb[0].mxu0
    %8064 = vmatprep.mubr.bf16.mxu0 %v5657
    %8065 = vmatmul.mubr.bf16.gmra.mrb[0].mxu0 %v5656
    %v8066 = vpop.f32.mrb[0].mxu0
    %v8067 = vadd.f32 %v7515, %v8066
    %v8068 = vpop.f32.mrb[0].mxu0
    %v8069 = vpop.f32.mrb[0].mxu0
    %v8070 = vadd.f32 %v7518, %v8069
    %v8071 = vpop.f32.mrb[0].mxu0
    %8072 = vmatprep.mubr.bf16.mxu0 %v5666
    %8073 = vmatmul.mubr.bf16.gmra.mrb[0].mxu0 %v5665
    %v8074 = vpop.f32.mrb[0].mxu0
    %v8075 = vadd.f32 %v7523, %v8074
    %v8076 = vpop.f32.mrb[0].mxu0
    %v8077 = vpop.f32.mrb[0].mxu0
    %v8078 = vadd.f32 %v7526, %v8077
    %v8079 = vpop.f32.mrb[0].mxu0
    %8080 = vmatprep.mubr.bf16.mxu0 %v5675
    %8081 = vmatmul.mubr.bf16.gmra.mrb[0].mxu0 %v5674
    %v8082 = vpop.f32.mrb[0].mxu0
    %v8083 = vadd.f32 %v7531, %v8082
    %v8084 = vpop.f32.mrb[0].mxu0
    %v8085 = vpop.f32.mrb[0].mxu0
    %v8086 = vadd.f32 %v7534, %v8085
    %v8087 = vpop.f32.mrb[0].mxu0
    %8088 = vmatprep.mubr.bf16.mxu0 %v5684
    %8089 = vmatmul.mubr.bf16.gmra.mrb[0].mxu0 %v5683
    %v8090 = vpop.f32.mrb[0].mxu0
    %v8091 = vadd.f32 %v7539, %v8090
    %v8092 = vpop.f32.mrb[0].mxu0
    %v8093 = vpop.f32.mrb[0].mxu0
    %v8094 = vadd.f32 %v7542, %v8093
    %v8095 = vpop.f32.mrb[0].mxu0
    %8096 = vmatprep.mubr.bf16.mxu0 %v5693
    %8097 = vmatmul.mubr.bf16.gmra.mrb[0].mxu0 %v5692
    %v8098 = vpop.f32.mrb[0].mxu0
    %v8099 = vadd.f32 %v7547, %v8098
    %v8100 = vpop.f32.mrb[0].mxu0
    %v8101 = vpop.f32.mrb[0].mxu0
    %v8102 = vadd.f32 %v7550, %v8101
    %v8103 = vpop.f32.mrb[0].mxu0
    %8104 = vmatprep.mubr.bf16.mxu0 %v5702
    %8105 = vmatmul.mubr.bf16.gmra.mrb[0].mxu0 %v5701
    %v8106 = vpop.f32.mrb[0].mxu0
    %v8107 = vadd.f32 %v7555, %v8106
    %v8108 = vpop.f32.mrb[0].mxu0
    %v8109 = vpop.f32.mrb[0].mxu0
    %v8110 = vadd.f32 %v7558, %v8109
    %v8111 = vpop.f32.mrb[0].mxu0
    %8112 = vmatprep.mubr.bf16.mxu0 %v5711
    %8113 = vmatmul.mubr.bf16.gmra.mrb[0].mxu0 %v5710
    %v8114 = vpop.f32.mrb[0].mxu0
    %v8115 = vadd.f32 %v7563, %v8114
    %v8116 = vpop.f32.mrb[0].mxu0
    %v8117 = vpop.f32.mrb[0].mxu0
    %v8118 = vadd.f32 %v7566, %v8117
    %v8119 = vpop.f32.mrb[0].mxu0
    %8120 = vmatprep.mubr.bf16.mxu0 %v5720
    %8121 = vmatmul.mubr.bf16.gmra.mrb[0].mxu0 %v5719
    %v8122 = vpop.f32.mrb[0].mxu0
    %v8123 = vadd.f32 %v7571, %v8122
    %v8124 = vpop.f32.mrb[0].mxu0
    %v8125 = vpop.f32.mrb[0].mxu0
    %v8126 = vadd.f32 %v7574, %v8125
    %v8127 = vpop.f32.mrb[0].mxu0
    %8128 = vmatprep.mubr.bf16.mxu0 %v5729
    %8129 = vmatmul.mubr.bf16.gmra.mrb[0].mxu0 %v5728
    %v8130 = vpop.f32.mrb[0].mxu0
    %v8131 = vadd.f32 %v7579, %v8130
    %v8132 = vpop.f32.mrb[0].mxu0
    %v8133 = vpop.f32.mrb[0].mxu0
    %v8134 = vadd.f32 %v7582, %v8133
    %v8135 = vpop.f32.mrb[0].mxu0
    %8136 = vmatprep.mubr.bf16.mxu0 %v5738
    %8137 = vmatmul.mubr.bf16.gmra.mrb[0].mxu0 %v5737
    %v8138 = vpop.f32.mrb[0].mxu0
    %v8139 = vadd.f32 %v7587, %v8138
    %v8140 = vpop.f32.mrb[0].mxu0
    %v8141 = vpop.f32.mrb[0].mxu0
    %v8142 = vadd.f32 %v7590, %v8141
    %v8143 = vpop.f32.mrb[0].mxu0
    %8144 = vmatprep.mubr.bf16.mxu0 %v5747
    %8145 = vmatmul.mubr.bf16.gmra.mrb[0].mxu0 %v5746
    %v8146 = vpop.f32.mrb[0].mxu0
    %v8147 = vadd.f32 %v7595, %v8146
    %v8148 = vpop.f32.mrb[0].mxu0
    %v8149 = vpop.f32.mrb[0].mxu0
    %v8150 = vadd.f32 %v7598, %v8149
    %v8151 = vpop.f32.mrb[0].mxu0
    %8152 = vmatprep.mubr.bf16.mxu0 %v5756
    %8153 = vmatmul.mubr.bf16.gmra.mrb[0].mxu0 %v5755
    %v8154 = vpop.f32.mrb[0].mxu0
    %v8155 = vadd.f32 %v7603, %v8154
    %v8156 = vpop.f32.mrb[0].mxu0
    %v8157 = vpop.f32.mrb[0].mxu0
    %v8158 = vadd.f32 %v7606, %v8157
    %v8159 = vpop.f32.mrb[0].mxu0
    %8160 = vmatprep.mubr.bf16.mxu0 %v5765
    %8161 = vmatmul.mubr.bf16.gmra.mrb[0].mxu0 %v5764
    %v8162 = vpop.f32.mrb[0].mxu0
    %v8163 = vadd.f32 %v7611, %v8162
    %v8164 = vpop.f32.mrb[0].mxu0
    %v8165 = vpop.f32.mrb[0].mxu0
    %v8166 = vadd.f32 %v7614, %v8165
    %v8167 = vpop.f32.mrb[0].mxu0
    %8168 = vmatprep.mubr.bf16.mxu0 %v5774
    %8169 = vmatmul.mubr.bf16.gmra.mrb[0].mxu0 %v5773
    %v8170 = vpop.f32.mrb[0].mxu0
    %v8171 = vadd.f32 %v7619, %v8170
    %v8172 = vpop.f32.mrb[0].mxu0
    %v8173 = vpop.f32.mrb[0].mxu0
    %v8174 = vadd.f32 %v7622, %v8173
    %v8175 = vpop.f32.mrb[0].mxu0
    %8176 = vmatprep.mubr.bf16.mxu0 %v5783
    %8177 = vmatmul.mubr.bf16.gmra.mrb[0].mxu0 %v5782
    %v8178 = vpop.f32.mrb[0].mxu0
    %v8179 = vadd.f32 %v7627, %v8178
    %v8180 = vpop.f32.mrb[0].mxu0
    %v8181 = vpop.f32.mrb[0].mxu0
    %v8182 = vadd.f32 %v7630, %v8181
    %v8183 = vpop.f32.mrb[0].mxu0
    %8184 = vmatprep.mubr.bf16.mxu0 %v5792
    %8185 = vmatmul.mubr.bf16.gmra.mrb[0].mxu0 %v5791
    %v8186 = vpop.f32.mrb[0].mxu0
    %v8187 = vadd.f32 %v7635, %v8186
    %v8188 = vpop.f32.mrb[0].mxu0
    %v8189 = vpop.f32.mrb[0].mxu0
    %v8190 = vadd.f32 %v7638, %v8189
    %v8191 = vpop.f32.mrb[0].mxu0
    %8192 = vmatprep.mubr.bf16.mxu0 %v5801
    %8193 = vmatmul.mubr.bf16.gmra.mrb[0].mxu0 %v5800
    %v8194 = vpop.f32.mrb[0].mxu0
    %v8195 = vadd.f32 %v7643, %v8194
    %v8196 = vpop.f32.mrb[0].mxu0
    %v8197 = vpop.f32.mrb[0].mxu0
    %v8198 = vadd.f32 %v7646, %v8197
    %v8199 = vpop.f32.mrb[0].mxu0
    %8200 = vmatprep.mubr.bf16.mxu0 %v5810
    %8201 = vmatmul.mubr.bf16.gmra.mrb[0].mxu0 %v5809
    %v8202 = vpop.f32.mrb[0].mxu0
    %v8203 = vadd.f32 %v7651, %v8202
    %v8204 = vpop.f32.mrb[0].mxu0
    %v8205 = vpop.f32.mrb[0].mxu0
    %v8206 = vadd.f32 %v7654, %v8205
    %v8207 = vpop.f32.mrb[0].mxu0
    %8208 = vmatprep.mubr.bf16.mxu0 %v5819
    %8209 = vmatmul.mubr.bf16.gmra.mrb[0].mxu0 %v5818
    %v8210 = vpop.f32.mrb[0].mxu0
    %v8211 = vadd.f32 %v7659, %v8210
    %v8212 = vpop.f32.mrb[0].mxu0
    %v8213 = vpop.f32.mrb[0].mxu0
    %v8214 = vadd.f32 %v7662, %v8213
    %v8215 = vpop.f32.mrb[0].mxu0
    %8216 = vmatprep.mubr.bf16.mxu0 %v5828
    %8217 = vmatmul.mubr.bf16.gmra.mrb[0].mxu0 %v5827
    %v8218 = vpop.f32.mrb[0].mxu0
    %v8219 = vadd.f32 %v7667, %v8218
    %v8220 = vpop.f32.mrb[0].mxu0
    %v8221 = vpop.f32.mrb[0].mxu0
    %v8222 = vadd.f32 %v7670, %v8221
    %v8223 = vpop.f32.mrb[0].mxu0
    %8224 = vmatprep.mubr.bf16.mxu0 %v5837
    %8225 = vmatmul.mubr.bf16.gmra.mrb[0].mxu0 %v5836
    %v8226 = vpop.f32.mrb[0].mxu0
    %v8227 = vadd.f32 %v7675, %v8226
    %v8228 = vpop.f32.mrb[0].mxu0
    %v8229 = vpop.f32.mrb[0].mxu0
    %v8230 = vadd.f32 %v7678, %v8229
    %v8231 = vpop.f32.mrb[0].mxu0
    %8232 = vmatprep.mubr.bf16.mxu0 %v5846
    %8233 = vmatmul.mubr.bf16.gmra.mrb[0].mxu0 %v5845
    %v8234 = vpop.f32.mrb[0].mxu0
    %v8235 = vadd.f32 %v7683, %v8234
    %v8236 = vpop.f32.mrb[0].mxu0
    %v8237 = vpop.f32.mrb[0].mxu0
    %v8238 = vadd.f32 %v7686, %v8237
    %v8239 = vpop.f32.mrb[0].mxu0
    %8240 = vmatprep.mubr.bf16.mxu0 %v5855
    %8241 = vmatmul.mubr.bf16.gmra.mrb[0].mxu0 %v5854
    %v8242 = vpop.f32.mrb[0].mxu0
    %v8243 = vadd.f32 %v7691, %v8242
    %v8244 = vpop.f32.mrb[0].mxu0
    %v8245 = vpop.f32.mrb[0].mxu0
    %v8246 = vadd.f32 %v7694, %v8245
    %v8247 = vpop.f32.mrb[0].mxu0
    %8248 = vmatprep.mubr.bf16.mxu0 %v5864
    %8249 = vmatmul.mubr.bf16.gmra.mrb[0].mxu0 %v5863
    %v8250 = vpop.f32.mrb[0].mxu0
    %v8251 = vadd.f32 %v7699, %v8250
    %v8252 = vpop.f32.mrb[0].mxu0
    %v8253 = vpop.f32.mrb[0].mxu0
    %v8254 = vadd.f32 %v7702, %v8253
    %v8255 = vpop.f32.mrb[0].mxu0
    %8256 = vmatprep.mubr.bf16.mxu0 %v5873
    %8257 = vmatmul.mubr.bf16.gmra.mrb[0].mxu0 %v5872
    %v8258 = vpop.f32.mrb[0].mxu0
    %v8259 = vadd.f32 %v7707, %v8258
    %v8260 = vpop.f32.mrb[0].mxu0
    %v8261 = vpop.f32.mrb[0].mxu0
    %v8262 = vadd.f32 %v7710, %v8261
    %v8263 = vpop.f32.mrb[0].mxu0
    %8264 = vmatprep.mubr.bf16.mxu0 %v5882
    %8265 = vmatmul.mubr.bf16.gmra.mrb[0].mxu0 %v5881
    %v8266 = vpop.f32.mrb[0].mxu0
    %v8267 = vadd.f32 %v7715, %v8266
    %v8268 = vpop.f32.mrb[0].mxu0
    %v8269 = vpop.f32.mrb[0].mxu0
    %v8270 = vadd.f32 %v7718, %v8269
    %v8271 = vpop.f32.mrb[0].mxu0
    %8272 = vmatprep.mubr.bf16.mxu0 %v5891
    %8273 = vmatmul.mubr.bf16.gmra.mrb[0].mxu0 %v5890
    %v8274 = vpop.f32.mrb[0].mxu0
    %v8275 = vadd.f32 %v7723, %v8274
    %v8276 = vpop.f32.mrb[0].mxu0
    %v8277 = vpop.f32.mrb[0].mxu0
    %v8278 = vadd.f32 %v7726, %v8277
    %v8279 = vpop.f32.mrb[0].mxu0
    %8280 = vmatprep.mubr.bf16.mxu0 %v5900
    %8281 = vmatmul.mubr.bf16.gmra.mrb[0].mxu0 %v5899
    %v8282 = vpop.f32.mrb[0].mxu0
    %v8283 = vadd.f32 %v7731, %v8282
    %v8284 = vpop.f32.mrb[0].mxu0
    %v8285 = vpop.f32.mrb[0].mxu0
    %v8286 = vadd.f32 %v7734, %v8285
    %v8287 = vpop.f32.mrb[0].mxu0
    %8288 = vmatprep.mubr.bf16.mxu0 %v5909
    %8289 = vmatmul.mubr.bf16.gmra.mrb[0].mxu0 %v5908
    %v8290 = vpop.f32.mrb[0].mxu0
    %v8291 = vadd.f32 %v7739, %v8290
    %v8292 = vpop.f32.mrb[0].mxu0
    %v8293 = vpop.f32.mrb[0].mxu0
    %v8294 = vadd.f32 %v7742, %v8293
    %v8295 = vpop.f32.mrb[0].mxu0
    %8296 = vmatprep.mubr.bf16.mxu0 %v5918
    %8297 = vmatmul.mubr.bf16.gmra.mrb[0].mxu0 %v5917
    %v8298 = vpop.f32.mrb[0].mxu0
    %v8299 = vadd.f32 %v7747, %v8298
    %v8300 = vpop.f32.mrb[0].mxu0
    %v8301 = vpop.f32.mrb[0].mxu0
    %v8302 = vadd.f32 %v7750, %v8301
    %v8303 = vpop.f32.mrb[0].mxu0
    %8304 = vmatprep.mubr.bf16.mxu0 %v5927
    %8305 = vmatmul.mubr.bf16.gmra.mrb[0].mxu0 %v5926
    %v8306 = vpop.f32.mrb[0].mxu0
    %v8307 = vadd.f32 %v7755, %v8306
    %v8308 = vpop.f32.mrb[0].mxu0
    %v8309 = vpop.f32.mrb[0].mxu0
    %v8310 = vadd.f32 %v7758, %v8309
    %v8311 = vpop.f32.mrb[0].mxu0
    %8312 = vmatprep.mubr.bf16.mxu0 %v5936
    %8313 = vmatmul.mubr.bf16.gmra.mrb[0].mxu0 %v5935
    %v8314 = vpop.f32.mrb[0].mxu0
    %v8315 = vadd.f32 %v7763, %v8314
    %v8316 = vpop.f32.mrb[0].mxu0
    %v8317 = vpop.f32.mrb[0].mxu0
    %v8318 = vadd.f32 %v7766, %v8317
    %v8319 = vpop.f32.mrb[0].mxu0
    %8320 = vmatprep.mubr.bf16.mxu0 %v5945
    %8321 = vmatmul.mubr.bf16.gmra.mrb[0].mxu0 %v5944
    %v8322 = vpop.f32.mrb[0].mxu0
    %v8323 = vadd.f32 %v7771, %v8322
    %v8324 = vpop.f32.mrb[0].mxu0
    %v8325 = vpop.f32.mrb[0].mxu0
    %v8326 = vadd.f32 %v7774, %v8325
    %v8327 = vpop.f32.mrb[0].mxu0
    %8328 = vmatprep.mubr.bf16.mxu0 %v5954
    %8329 = vmatmul.mubr.bf16.gmra.mrb[0].mxu0 %v5953
    %v8330 = vpop.f32.mrb[0].mxu0
    %v8331 = vadd.f32 %v7779, %v8330
    %v8332 = vpop.f32.mrb[0].mxu0
    %v8333 = vpop.f32.mrb[0].mxu0
    %v8334 = vadd.f32 %v7782, %v8333
    %v8335 = vpop.f32.mrb[0].mxu0
    %8336 = vmatprep.mubr.bf16.mxu0 %v5963
    %8337 = vmatmul.mubr.bf16.gmra.mrb[0].mxu0 %v5962
    %v8338 = vpop.f32.mrb[0].mxu0
    %v8339 = vadd.f32 %v7787, %v8338
    %v8340 = vpop.f32.mrb[0].mxu0
    %v8341 = vpop.f32.mrb[0].mxu0
    %v8342 = vadd.f32 %v7790, %v8341
    %v8343 = vpop.f32.mrb[0].mxu0
    %8344 = vmatprep.mubr.bf16.mxu0 %v5972
    %8345 = vmatmul.mubr.bf16.gmra.mrb[0].mxu0 %v5971
    %v8346 = vpop.f32.mrb[0].mxu0
    %v8347 = vadd.f32 %v7795, %v8346
    %v8348 = vpop.f32.mrb[0].mxu0
    %v8349 = vpop.f32.mrb[0].mxu0
    %v8350 = vadd.f32 %v7798, %v8349
    %v8351 = vpop.f32.mrb[0].mxu0
    %8352 = vmatprep.mubr.bf16.mxu0 %v5981
    %8353 = vmatmul.mubr.bf16.gmra.mrb[0].mxu0 %v5980
    %v8354 = vpop.f32.mrb[0].mxu0
    %v8355 = vadd.f32 %v7803, %v8354
    %v8356 = vpop.f32.mrb[0].mxu0
    %v8357 = vpop.f32.mrb[0].mxu0
    %v8358 = vpop.f32.mrb[0].mxu0
    %8359 = vdwg.mxu0
    %8360 = vmatprep.subr.bf16.mxu0 0
    %8361 = vmatpush1.bf16.msra.mxu0 %v3577
    %8362 = vmatprep.subr.bf16.mxu0 0
    %8363 = vmatpush1.bf16.msra.mxu0 %v3578
    %8364 = vmatprep.subr.bf16.mxu0 0
    %8365 = vmatpush1.bf16.msra.mxu0 %v3579
    %8366 = vmatprep.subr.bf16.mxu0 0
    %8367 = vmatpush1.bf16.msra.mxu0 %v3580
    %8368 = vmatprep.subr.bf16.mxu0 0
    %8369 = vmatpush1.bf16.msra.mxu0 %v3581
    %8370 = vmatprep.subr.bf16.mxu0 0
    %8371 = vmatpush1.bf16.msra.mxu0 %v3582
    %8372 = vmatprep.subr.bf16.mxu0 0
    %8373 = vmatpush1.bf16.msra.mxu0 %v3583
    %8374 = vmatprep.subr.bf16.mxu0 0
    %8375 = vmatpush1.bf16.msra.mxu0 %v3584
    %8376 = vmatprep.subr.bf16.mxu0 0
    %8377 = vmatpush1.bf16.msra.mxu0 %v3585
    %8378 = vmatprep.subr.bf16.mxu0 0
    %8379 = vmatpush1.bf16.msra.mxu0 %v3586
    %8380 = vmatprep.subr.bf16.mxu0 0
    %8381 = vmatpush1.bf16.msra.mxu0 %v3587
    %8382 = vmatprep.subr.bf16.mxu0 0
    %8383 = vmatpush1.bf16.msra.mxu0 %v3588
    %8384 = vmatprep.subr.bf16.mxu0 0
    %8385 = vmatpush1.bf16.msra.mxu0 %v3589
    %8386 = vmatprep.subr.bf16.mxu0 0
    %8387 = vmatpush1.bf16.msra.mxu0 %v3590
    %8388 = vmatprep.subr.bf16.mxu0 0
    %8389 = vmatpush1.bf16.msra.mxu0 %v3591
    %8390 = vmatprep.subr.bf16.mxu0 0
    %8391 = vmatpush1.bf16.msra.mxu0 %v3592
    %8392 = vmatprep.mubr.bf16.mxu0 %v5407
    %8393 = vmatmul.mubr.bf16.gmra.mrb[0].mxu0 %v5406
    %v8394 = vpop.f32.mrb[0].mxu0
    %v8395 = vadd.f32 %v7843, %v8394
    %v8396 = vpop.f32.mrb[0].mxu0
    %v8397 = vpop.f32.mrb[0].mxu0
    %v8398 = vadd.f32 %v7846, %v8397
    %v8399 = vpop.f32.mrb[0].mxu0
    %8400 = vmatprep.mubr.bf16.mxu0 %v5416
    %8401 = vmatmul.mubr.bf16.gmra.mrb[0].mxu0 %v5415
    %v8402 = vpop.f32.mrb[0].mxu0
    %v8403 = vadd.f32 %v7851, %v8402
    %v8404 = vpop.f32.mrb[0].mxu0
    %v8405 = vpop.f32.mrb[0].mxu0
    %v8406 = vadd.f32 %v7854, %v8405
    %v8407 = vpop.f32.mrb[0].mxu0
    %8408 = vmatprep.mubr.bf16.mxu0 %v5425
    %8409 = vmatmul.mubr.bf16.gmra.mrb[0].mxu0 %v5424
    %v8410 = vpop.f32.mrb[0].mxu0
    %v8411 = vadd.f32 %v7859, %v8410
    %v8412 = vpop.f32.mrb[0].mxu0
    %v8413 = vpop.f32.mrb[0].mxu0
    %v8414 = vadd.f32 %v7862, %v8413
    %v8415 = vpop.f32.mrb[0].mxu0
    %8416 = vmatprep.mubr.bf16.mxu0 %v5434
    %8417 = vmatmul.mubr.bf16.gmra.mrb[0].mxu0 %v5433
    %v8418 = vpop.f32.mrb[0].mxu0
    %v8419 = vadd.f32 %v7867, %v8418
    %v8420 = vpop.f32.mrb[0].mxu0
    %v8421 = vpop.f32.mrb[0].mxu0
    %v8422 = vadd.f32 %v7870, %v8421
    %v8423 = vpop.f32.mrb[0].mxu0
    %8424 = vmatprep.mubr.bf16.mxu0 %v5443
    %8425 = vmatmul.mubr.bf16.gmra.mrb[0].mxu0 %v5442
    %v8426 = vpop.f32.mrb[0].mxu0
    %v8427 = vadd.f32 %v7875, %v8426
    %v8428 = vpop.f32.mrb[0].mxu0
    %v8429 = vpop.f32.mrb[0].mxu0
    %v8430 = vadd.f32 %v7878, %v8429
    %v8431 = vpop.f32.mrb[0].mxu0
    %8432 = vmatprep.mubr.bf16.mxu0 %v5452
    %8433 = vmatmul.mubr.bf16.gmra.mrb[0].mxu0 %v5451
    %v8434 = vpop.f32.mrb[0].mxu0
    %v8435 = vadd.f32 %v7883, %v8434
    %v8436 = vpop.f32.mrb[0].mxu0
    %v8437 = vpop.f32.mrb[0].mxu0
    %v8438 = vadd.f32 %v7886, %v8437
    %v8439 = vpop.f32.mrb[0].mxu0
    %8440 = vmatprep.mubr.bf16.mxu0 %v5461
    %8441 = vmatmul.mubr.bf16.gmra.mrb[0].mxu0 %v5460
    %v8442 = vpop.f32.mrb[0].mxu0
    %v8443 = vadd.f32 %v7891, %v8442
    %v8444 = vpop.f32.mrb[0].mxu0
    %v8445 = vpop.f32.mrb[0].mxu0
    %v8446 = vadd.f32 %v7894, %v8445
    %v8447 = vpop.f32.mrb[0].mxu0
    %8448 = vmatprep.mubr.bf16.mxu0 %v5470
    %8449 = vmatmul.mubr.bf16.gmra.mrb[0].mxu0 %v5469
    %v8450 = vpop.f32.mrb[0].mxu0
    %v8451 = vadd.f32 %v7899, %v8450
    %v8452 = vpop.f32.mrb[0].mxu0
    %v8453 = vpop.f32.mrb[0].mxu0
    %v8454 = vadd.f32 %v7902, %v8453
    %v8455 = vpop.f32.mrb[0].mxu0
    %8456 = vmatprep.mubr.bf16.mxu0 %v5479
    %8457 = vmatmul.mubr.bf16.gmra.mrb[0].mxu0 %v5478
    %v8458 = vpop.f32.mrb[0].mxu0
    %v8459 = vadd.f32 %v7907, %v8458
    %v8460 = vpop.f32.mrb[0].mxu0
    %v8461 = vpop.f32.mrb[0].mxu0
    %v8462 = vadd.f32 %v7910, %v8461
    %v8463 = vpop.f32.mrb[0].mxu0
    %8464 = vmatprep.mubr.bf16.mxu0 %v5488
    %8465 = vmatmul.mubr.bf16.gmra.mrb[0].mxu0 %v5487
    %v8466 = vpop.f32.mrb[0].mxu0
    %v8467 = vadd.f32 %v7915, %v8466
    %v8468 = vpop.f32.mrb[0].mxu0
    %v8469 = vpop.f32.mrb[0].mxu0
    %v8470 = vadd.f32 %v7918, %v8469
    %v8471 = vpop.f32.mrb[0].mxu0
    %8472 = vmatprep.mubr.bf16.mxu0 %v5497
    %8473 = vmatmul.mubr.bf16.gmra.mrb[0].mxu0 %v5496
    %v8474 = vpop.f32.mrb[0].mxu0
    %v8475 = vadd.f32 %v7923, %v8474
    %v8476 = vpop.f32.mrb[0].mxu0
    %v8477 = vpop.f32.mrb[0].mxu0
    %v8478 = vadd.f32 %v7926, %v8477
    %v8479 = vpop.f32.mrb[0].mxu0
    %8480 = vmatprep.mubr.bf16.mxu0 %v5506
    %8481 = vmatmul.mubr.bf16.gmra.mrb[0].mxu0 %v5505
    %v8482 = vpop.f32.mrb[0].mxu0
    %v8483 = vadd.f32 %v7931, %v8482
    %v8484 = vpop.f32.mrb[0].mxu0
    %v8485 = vpop.f32.mrb[0].mxu0
    %v8486 = vadd.f32 %v7934, %v8485
    %v8487 = vpop.f32.mrb[0].mxu0
    %8488 = vmatprep.mubr.bf16.mxu0 %v5515
    %8489 = vmatmul.mubr.bf16.gmra.mrb[0].mxu0 %v5514
    %v8490 = vpop.f32.mrb[0].mxu0
    %v8491 = vadd.f32 %v7939, %v8490
    %v8492 = vpop.f32.mrb[0].mxu0
    %v8493 = vpop.f32.mrb[0].mxu0
    %v8494 = vadd.f32 %v7942, %v8493
    %v8495 = vpop.f32.mrb[0].mxu0
    %8496 = vmatprep.mubr.bf16.mxu0 %v5524
    %8497 = vmatmul.mubr.bf16.gmra.mrb[0].mxu0 %v5523
    %v8498 = vpop.f32.mrb[0].mxu0
    %v8499 = vadd.f32 %v7947, %v8498
    %v8500 = vpop.f32.mrb[0].mxu0
    %v8501 = vpop.f32.mrb[0].mxu0
    %v8502 = vadd.f32 %v7950, %v8501
    %v8503 = vpop.f32.mrb[0].mxu0
    %8504 = vmatprep.mubr.bf16.mxu0 %v5533
    %8505 = vmatmul.mubr.bf16.gmra.mrb[0].mxu0 %v5532
    %v8506 = vpop.f32.mrb[0].mxu0
    %v8507 = vadd.f32 %v7955, %v8506
    %v8508 = vpop.f32.mrb[0].mxu0
    %v8509 = vpop.f32.mrb[0].mxu0
    %v8510 = vadd.f32 %v7958, %v8509
    %v8511 = vpop.f32.mrb[0].mxu0
    %8512 = vmatprep.mubr.bf16.mxu0 %v5542
    %8513 = vmatmul.mubr.bf16.gmra.mrb[0].mxu0 %v5541
    %v8514 = vpop.f32.mrb[0].mxu0
    %v8515 = vadd.f32 %v7963, %v8514
    %v8516 = vpop.f32.mrb[0].mxu0
    %v8517 = vpop.f32.mrb[0].mxu0
    %v8518 = vadd.f32 %v7966, %v8517
    %v8519 = vpop.f32.mrb[0].mxu0
    %8520 = vmatprep.mubr.bf16.mxu0 %v5551
    %8521 = vmatmul.mubr.bf16.gmra.mrb[0].mxu0 %v5550
    %v8522 = vpop.f32.mrb[0].mxu0
    %v8523 = vadd.f32 %v7971, %v8522
    %v8524 = vpop.f32.mrb[0].mxu0
    %v8525 = vpop.f32.mrb[0].mxu0
    %v8526 = vadd.f32 %v7974, %v8525
    %v8527 = vpop.f32.mrb[0].mxu0
    %8528 = vmatprep.mubr.bf16.mxu0 %v5560
    %8529 = vmatmul.mubr.bf16.gmra.mrb[0].mxu0 %v5559
    %v8530 = vpop.f32.mrb[0].mxu0
    %v8531 = vadd.f32 %v7979, %v8530
    %v8532 = vpop.f32.mrb[0].mxu0
    %v8533 = vpop.f32.mrb[0].mxu0
    %v8534 = vadd.f32 %v7982, %v8533
    %v8535 = vpop.f32.mrb[0].mxu0
    %8536 = vmatprep.mubr.bf16.mxu0 %v5569
    %8537 = vmatmul.mubr.bf16.gmra.mrb[0].mxu0 %v5568
    %v8538 = vpop.f32.mrb[0].mxu0
    %v8539 = vadd.f32 %v7987, %v8538
    %v8540 = vpop.f32.mrb[0].mxu0
    %v8541 = vpop.f32.mrb[0].mxu0
    %v8542 = vadd.f32 %v7990, %v8541
    %v8543 = vpop.f32.mrb[0].mxu0
    %8544 = vmatprep.mubr.bf16.mxu0 %v5578
    %8545 = vmatmul.mubr.bf16.gmra.mrb[0].mxu0 %v5577
    %v8546 = vpop.f32.mrb[0].mxu0
    %v8547 = vadd.f32 %v7995, %v8546
    %v8548 = vpop.f32.mrb[0].mxu0
    %v8549 = vpop.f32.mrb[0].mxu0
    %v8550 = vadd.f32 %v7998, %v8549
    %v8551 = vpop.f32.mrb[0].mxu0
    %8552 = vmatprep.mubr.bf16.mxu0 %v5587
    %8553 = vmatmul.mubr.bf16.gmra.mrb[0].mxu0 %v5586
    %v8554 = vpop.f32.mrb[0].mxu0
    %v8555 = vadd.f32 %v8003, %v8554
    %v8556 = vpop.f32.mrb[0].mxu0
    %v8557 = vpop.f32.mrb[0].mxu0
    %v8558 = vadd.f32 %v8006, %v8557
    %v8559 = vpop.f32.mrb[0].mxu0
    %8560 = vmatprep.mubr.bf16.mxu0 %v5596
    %8561 = vmatmul.mubr.bf16.gmra.mrb[0].mxu0 %v5595
    %v8562 = vpop.f32.mrb[0].mxu0
    %v8563 = vadd.f32 %v8011, %v8562
    %v8564 = vpop.f32.mrb[0].mxu0
    %v8565 = vpop.f32.mrb[0].mxu0
    %v8566 = vadd.f32 %v8014, %v8565
    %v8567 = vpop.f32.mrb[0].mxu0
    %8568 = vmatprep.mubr.bf16.mxu0 %v5605
    %8569 = vmatmul.mubr.bf16.gmra.mrb[0].mxu0 %v5604
    %v8570 = vpop.f32.mrb[0].mxu0
    %v8571 = vadd.f32 %v8019, %v8570
    %v8572 = vpop.f32.mrb[0].mxu0
    %v8573 = vpop.f32.mrb[0].mxu0
    %v8574 = vadd.f32 %v8022, %v8573
    %v8575 = vpop.f32.mrb[0].mxu0
    %8576 = vmatprep.mubr.bf16.mxu0 %v5614
    %8577 = vmatmul.mubr.bf16.gmra.mrb[0].mxu0 %v5613
    %v8578 = vpop.f32.mrb[0].mxu0
    %v8579 = vadd.f32 %v8027, %v8578
    %v8580 = vpop.f32.mrb[0].mxu0
    %v8581 = vpop.f32.mrb[0].mxu0
    %v8582 = vadd.f32 %v8030, %v8581
    %v8583 = vpop.f32.mrb[0].mxu0
    %8584 = vmatprep.mubr.bf16.mxu0 %v5623
    %8585 = vmatmul.mubr.bf16.gmra.mrb[0].mxu0 %v5622
    %v8586 = vpop.f32.mrb[0].mxu0
    %v8587 = vadd.f32 %v8035, %v8586
    %v8588 = vpop.f32.mrb[0].mxu0
    %v8589 = vpop.f32.mrb[0].mxu0
    %v8590 = vadd.f32 %v8038, %v8589
    %v8591 = vpop.f32.mrb[0].mxu0
    %8592 = vmatprep.mubr.bf16.mxu0 %v5632
    %8593 = vmatmul.mubr.bf16.gmra.mrb[0].mxu0 %v5631
    %v8594 = vpop.f32.mrb[0].mxu0
    %v8595 = vadd.f32 %v8043, %v8594
    %v8596 = vpop.f32.mrb[0].mxu0
    %v8597 = vpop.f32.mrb[0].mxu0
    %v8598 = vadd.f32 %v8046, %v8597
    %v8599 = vpop.f32.mrb[0].mxu0
    %8600 = vmatprep.mubr.bf16.mxu0 %v5641
    %8601 = vmatmul.mubr.bf16.gmra.mrb[0].mxu0 %v5640
    %v8602 = vpop.f32.mrb[0].mxu0
    %v8603 = vadd.f32 %v8051, %v8602
    %v8604 = vpop.f32.mrb[0].mxu0
    %v8605 = vpop.f32.mrb[0].mxu0
    %v8606 = vadd.f32 %v8054, %v8605
    %v8607 = vpop.f32.mrb[0].mxu0
    %8608 = vmatprep.mubr.bf16.mxu0 %v5650
    %8609 = vmatmul.mubr.bf16.gmra.mrb[0].mxu0 %v5649
    %v8610 = vpop.f32.mrb[0].mxu0
    %v8611 = vadd.f32 %v8059, %v8610
    %v8612 = vpop.f32.mrb[0].mxu0
    %v8613 = vpop.f32.mrb[0].mxu0
    %v8614 = vadd.f32 %v8062, %v8613
    %v8615 = vpop.f32.mrb[0].mxu0
    %8616 = vmatprep.mubr.bf16.mxu0 %v5659
    %8617 = vmatmul.mubr.bf16.gmra.mrb[0].mxu0 %v5658
    %v8618 = vpop.f32.mrb[0].mxu0
    %v8619 = vadd.f32 %v8067, %v8618
    %v8620 = vpop.f32.mrb[0].mxu0
    %v8621 = vpop.f32.mrb[0].mxu0
    %v8622 = vadd.f32 %v8070, %v8621
    %v8623 = vpop.f32.mrb[0].mxu0
    %8624 = vmatprep.mubr.bf16.mxu0 %v5668
    %8625 = vmatmul.mubr.bf16.gmra.mrb[0].mxu0 %v5667
    %v8626 = vpop.f32.mrb[0].mxu0
    %v8627 = vadd.f32 %v8075, %v8626
    %v8628 = vpop.f32.mrb[0].mxu0
    %v8629 = vpop.f32.mrb[0].mxu0
    %v8630 = vadd.f32 %v8078, %v8629
    %v8631 = vpop.f32.mrb[0].mxu0
    %8632 = vmatprep.mubr.bf16.mxu0 %v5677
    %8633 = vmatmul.mubr.bf16.gmra.mrb[0].mxu0 %v5676
    %v8634 = vpop.f32.mrb[0].mxu0
    %v8635 = vadd.f32 %v8083, %v8634
    %v8636 = vpop.f32.mrb[0].mxu0
    %v8637 = vpop.f32.mrb[0].mxu0
    %v8638 = vadd.f32 %v8086, %v8637
    %v8639 = vpop.f32.mrb[0].mxu0
    %8640 = vmatprep.mubr.bf16.mxu0 %v5686
    %8641 = vmatmul.mubr.bf16.gmra.mrb[0].mxu0 %v5685
    %v8642 = vpop.f32.mrb[0].mxu0
    %v8643 = vadd.f32 %v8091, %v8642
    %v8644 = vpop.f32.mrb[0].mxu0
    %v8645 = vpop.f32.mrb[0].mxu0
    %v8646 = vadd.f32 %v8094, %v8645
    %v8647 = vpop.f32.mrb[0].mxu0
    %8648 = vmatprep.mubr.bf16.mxu0 %v5695
    %8649 = vmatmul.mubr.bf16.gmra.mrb[0].mxu0 %v5694
    %v8650 = vpop.f32.mrb[0].mxu0
    %v8651 = vadd.f32 %v8099, %v8650
    %v8652 = vpop.f32.mrb[0].mxu0
    %v8653 = vpop.f32.mrb[0].mxu0
    %v8654 = vadd.f32 %v8102, %v8653
    %v8655 = vpop.f32.mrb[0].mxu0
    %8656 = vmatprep.mubr.bf16.mxu0 %v5704
    %8657 = vmatmul.mubr.bf16.gmra.mrb[0].mxu0 %v5703
    %v8658 = vpop.f32.mrb[0].mxu0
    %v8659 = vadd.f32 %v8107, %v8658
    %v8660 = vpop.f32.mrb[0].mxu0
    %v8661 = vpop.f32.mrb[0].mxu0
    %v8662 = vadd.f32 %v8110, %v8661
    %v8663 = vpop.f32.mrb[0].mxu0
    %8664 = vmatprep.mubr.bf16.mxu0 %v5713
    %8665 = vmatmul.mubr.bf16.gmra.mrb[0].mxu0 %v5712
    %v8666 = vpop.f32.mrb[0].mxu0
    %v8667 = vadd.f32 %v8115, %v8666
    %v8668 = vpop.f32.mrb[0].mxu0
    %v8669 = vpop.f32.mrb[0].mxu0
    %v8670 = vadd.f32 %v8118, %v8669
    %v8671 = vpop.f32.mrb[0].mxu0
    %8672 = vmatprep.mubr.bf16.mxu0 %v5722
    %8673 = vmatmul.mubr.bf16.gmra.mrb[0].mxu0 %v5721
    %v8674 = vpop.f32.mrb[0].mxu0
    %v8675 = vadd.f32 %v8123, %v8674
    %v8676 = vpop.f32.mrb[0].mxu0
    %v8677 = vpop.f32.mrb[0].mxu0
    %v8678 = vadd.f32 %v8126, %v8677
    %v8679 = vpop.f32.mrb[0].mxu0
    %8680 = vmatprep.mubr.bf16.mxu0 %v5731
    %8681 = vmatmul.mubr.bf16.gmra.mrb[0].mxu0 %v5730
    %v8682 = vpop.f32.mrb[0].mxu0
    %v8683 = vadd.f32 %v8131, %v8682
    %v8684 = vpop.f32.mrb[0].mxu0
    %v8685 = vpop.f32.mrb[0].mxu0
    %v8686 = vadd.f32 %v8134, %v8685
    %v8687 = vpop.f32.mrb[0].mxu0
    %8688 = vmatprep.mubr.bf16.mxu0 %v5740
    %8689 = vmatmul.mubr.bf16.gmra.mrb[0].mxu0 %v5739
    %v8690 = vpop.f32.mrb[0].mxu0
    %v8691 = vadd.f32 %v8139, %v8690
    %v8692 = vpop.f32.mrb[0].mxu0
    %v8693 = vpop.f32.mrb[0].mxu0
    %v8694 = vadd.f32 %v8142, %v8693
    %v8695 = vpop.f32.mrb[0].mxu0
    %8696 = vmatprep.mubr.bf16.mxu0 %v5749
    %8697 = vmatmul.mubr.bf16.gmra.mrb[0].mxu0 %v5748
    %v8698 = vpop.f32.mrb[0].mxu0
    %v8699 = vadd.f32 %v8147, %v8698
    %v8700 = vpop.f32.mrb[0].mxu0
    %v8701 = vpop.f32.mrb[0].mxu0
    %v8702 = vadd.f32 %v8150, %v8701
    %v8703 = vpop.f32.mrb[0].mxu0
    %8704 = vmatprep.mubr.bf16.mxu0 %v5758
    %8705 = vmatmul.mubr.bf16.gmra.mrb[0].mxu0 %v5757
    %v8706 = vpop.f32.mrb[0].mxu0
    %v8707 = vadd.f32 %v8155, %v8706
    %v8708 = vpop.f32.mrb[0].mxu0
    %v8709 = vpop.f32.mrb[0].mxu0
    %v8710 = vadd.f32 %v8158, %v8709
    %v8711 = vpop.f32.mrb[0].mxu0
    %8712 = vmatprep.mubr.bf16.mxu0 %v5767
    %8713 = vmatmul.mubr.bf16.gmra.mrb[0].mxu0 %v5766
    %v8714 = vpop.f32.mrb[0].mxu0
    %v8715 = vadd.f32 %v8163, %v8714
    %v8716 = vpop.f32.mrb[0].mxu0
    %v8717 = vpop.f32.mrb[0].mxu0
    %v8718 = vadd.f32 %v8166, %v8717
    %v8719 = vpop.f32.mrb[0].mxu0
    %8720 = vmatprep.mubr.bf16.mxu0 %v5776
    %8721 = vmatmul.mubr.bf16.gmra.mrb[0].mxu0 %v5775
    %v8722 = vpop.f32.mrb[0].mxu0
    %v8723 = vadd.f32 %v8171, %v8722
    %v8724 = vpop.f32.mrb[0].mxu0
    %v8725 = vpop.f32.mrb[0].mxu0
    %v8726 = vadd.f32 %v8174, %v8725
    %v8727 = vpop.f32.mrb[0].mxu0
    %8728 = vmatprep.mubr.bf16.mxu0 %v5785
    %8729 = vmatmul.mubr.bf16.gmra.mrb[0].mxu0 %v5784
    %v8730 = vpop.f32.mrb[0].mxu0
    %v8731 = vadd.f32 %v8179, %v8730
    %v8732 = vpop.f32.mrb[0].mxu0
    %v8733 = vpop.f32.mrb[0].mxu0
    %v8734 = vadd.f32 %v8182, %v8733
    %v8735 = vpop.f32.mrb[0].mxu0
    %8736 = vmatprep.mubr.bf16.mxu0 %v5794
    %8737 = vmatmul.mubr.bf16.gmra.mrb[0].mxu0 %v5793
    %v8738 = vpop.f32.mrb[0].mxu0
    %v8739 = vadd.f32 %v8187, %v8738
    %v8740 = vpop.f32.mrb[0].mxu0
    %v8741 = vpop.f32.mrb[0].mxu0
    %v8742 = vadd.f32 %v8190, %v8741
    %v8743 = vpop.f32.mrb[0].mxu0
    %8744 = vmatprep.mubr.bf16.mxu0 %v5803
    %8745 = vmatmul.mubr.bf16.gmra.mrb[0].mxu0 %v5802
    %v8746 = vpop.f32.mrb[0].mxu0
    %v8747 = vadd.f32 %v8195, %v8746
    %v8748 = vpop.f32.mrb[0].mxu0
    %v8749 = vpop.f32.mrb[0].mxu0
    %v8750 = vadd.f32 %v8198, %v8749
    %v8751 = vpop.f32.mrb[0].mxu0
    %8752 = vmatprep.mubr.bf16.mxu0 %v5812
    %8753 = vmatmul.mubr.bf16.gmra.mrb[0].mxu0 %v5811
    %v8754 = vpop.f32.mrb[0].mxu0
    %v8755 = vadd.f32 %v8203, %v8754
    %v8756 = vpop.f32.mrb[0].mxu0
    %v8757 = vpop.f32.mrb[0].mxu0
    %v8758 = vadd.f32 %v8206, %v8757
    %v8759 = vpop.f32.mrb[0].mxu0
    %8760 = vmatprep.mubr.bf16.mxu0 %v5821
    %8761 = vmatmul.mubr.bf16.gmra.mrb[0].mxu0 %v5820
    %v8762 = vpop.f32.mrb[0].mxu0
    %v8763 = vadd.f32 %v8211, %v8762
    %v8764 = vpop.f32.mrb[0].mxu0
    %v8765 = vpop.f32.mrb[0].mxu0
    %v8766 = vadd.f32 %v8214, %v8765
    %v8767 = vpop.f32.mrb[0].mxu0
    %8768 = vmatprep.mubr.bf16.mxu0 %v5830
    %8769 = vmatmul.mubr.bf16.gmra.mrb[0].mxu0 %v5829
    %v8770 = vpop.f32.mrb[0].mxu0
    %v8771 = vadd.f32 %v8219, %v8770
    %v8772 = vpop.f32.mrb[0].mxu0
    %v8773 = vpop.f32.mrb[0].mxu0
    %v8774 = vadd.f32 %v8222, %v8773
    %v8775 = vpop.f32.mrb[0].mxu0
    %8776 = vmatprep.mubr.bf16.mxu0 %v5839
    %8777 = vmatmul.mubr.bf16.gmra.mrb[0].mxu0 %v5838
    %v8778 = vpop.f32.mrb[0].mxu0
    %v8779 = vadd.f32 %v8227, %v8778
    %v8780 = vpop.f32.mrb[0].mxu0
    %v8781 = vpop.f32.mrb[0].mxu0
    %v8782 = vadd.f32 %v8230, %v8781
    %v8783 = vpop.f32.mrb[0].mxu0
    %8784 = vmatprep.mubr.bf16.mxu0 %v5848
    %8785 = vmatmul.mubr.bf16.gmra.mrb[0].mxu0 %v5847
    %v8786 = vpop.f32.mrb[0].mxu0
    %v8787 = vadd.f32 %v8235, %v8786
    %v8788 = vpop.f32.mrb[0].mxu0
    %v8789 = vpop.f32.mrb[0].mxu0
    %v8790 = vadd.f32 %v8238, %v8789
    %v8791 = vpop.f32.mrb[0].mxu0
    %8792 = vmatprep.mubr.bf16.mxu0 %v5857
    %8793 = vmatmul.mubr.bf16.gmra.mrb[0].mxu0 %v5856
    %v8794 = vpop.f32.mrb[0].mxu0
    %v8795 = vadd.f32 %v8243, %v8794
    %v8796 = vpop.f32.mrb[0].mxu0
    %v8797 = vpop.f32.mrb[0].mxu0
    %v8798 = vadd.f32 %v8246, %v8797
    %v8799 = vpop.f32.mrb[0].mxu0
    %8800 = vmatprep.mubr.bf16.mxu0 %v5866
    %8801 = vmatmul.mubr.bf16.gmra.mrb[0].mxu0 %v5865
    %v8802 = vpop.f32.mrb[0].mxu0
    %v8803 = vadd.f32 %v8251, %v8802
    %v8804 = vpop.f32.mrb[0].mxu0
    %v8805 = vpop.f32.mrb[0].mxu0
    %v8806 = vadd.f32 %v8254, %v8805
    %v8807 = vpop.f32.mrb[0].mxu0
    %8808 = vmatprep.mubr.bf16.mxu0 %v5875
    %8809 = vmatmul.mubr.bf16.gmra.mrb[0].mxu0 %v5874
    %v8810 = vpop.f32.mrb[0].mxu0
    %v8811 = vadd.f32 %v8259, %v8810
    %v8812 = vpop.f32.mrb[0].mxu0
    %v8813 = vpop.f32.mrb[0].mxu0
    %v8814 = vadd.f32 %v8262, %v8813
    %v8815 = vpop.f32.mrb[0].mxu0
    %8816 = vmatprep.mubr.bf16.mxu0 %v5884
    %8817 = vmatmul.mubr.bf16.gmra.mrb[0].mxu0 %v5883
    %v8818 = vpop.f32.mrb[0].mxu0
    %v8819 = vadd.f32 %v8267, %v8818
    %v8820 = vpop.f32.mrb[0].mxu0
    %v8821 = vpop.f32.mrb[0].mxu0
    %v8822 = vadd.f32 %v8270, %v8821
    %v8823 = vpop.f32.mrb[0].mxu0
    %8824 = vmatprep.mubr.bf16.mxu0 %v5893
    %8825 = vmatmul.mubr.bf16.gmra.mrb[0].mxu0 %v5892
    %v8826 = vpop.f32.mrb[0].mxu0
    %v8827 = vadd.f32 %v8275, %v8826
    %v8828 = vpop.f32.mrb[0].mxu0
    %v8829 = vpop.f32.mrb[0].mxu0
    %v8830 = vadd.f32 %v8278, %v8829
    %v8831 = vpop.f32.mrb[0].mxu0
    %8832 = vmatprep.mubr.bf16.mxu0 %v5902
    %8833 = vmatmul.mubr.bf16.gmra.mrb[0].mxu0 %v5901
    %v8834 = vpop.f32.mrb[0].mxu0
    %v8835 = vadd.f32 %v8283, %v8834
    %v8836 = vpop.f32.mrb[0].mxu0
    %v8837 = vpop.f32.mrb[0].mxu0
    %v8838 = vadd.f32 %v8286, %v8837
    %v8839 = vpop.f32.mrb[0].mxu0
    %8840 = vmatprep.mubr.bf16.mxu0 %v5911
    %8841 = vmatmul.mubr.bf16.gmra.mrb[0].mxu0 %v5910
    %v8842 = vpop.f32.mrb[0].mxu0
    %v8843 = vadd.f32 %v8291, %v8842
    %v8844 = vpop.f32.mrb[0].mxu0
    %v8845 = vpop.f32.mrb[0].mxu0
    %v8846 = vadd.f32 %v8294, %v8845
    %v8847 = vpop.f32.mrb[0].mxu0
    %8848 = vmatprep.mubr.bf16.mxu0 %v5920
    %8849 = vmatmul.mubr.bf16.gmra.mrb[0].mxu0 %v5919
    %v8850 = vpop.f32.mrb[0].mxu0
    %v8851 = vadd.f32 %v8299, %v8850
    %v8852 = vpop.f32.mrb[0].mxu0
    %v8853 = vpop.f32.mrb[0].mxu0
    %v8854 = vadd.f32 %v8302, %v8853
    %v8855 = vpop.f32.mrb[0].mxu0
    %8856 = vmatprep.mubr.bf16.mxu0 %v5929
    %8857 = vmatmul.mubr.bf16.gmra.mrb[0].mxu0 %v5928
    %v8858 = vpop.f32.mrb[0].mxu0
    %v8859 = vadd.f32 %v8307, %v8858
    %v8860 = vpop.f32.mrb[0].mxu0
    %v8861 = vpop.f32.mrb[0].mxu0
    %v8862 = vadd.f32 %v8310, %v8861
    %v8863 = vpop.f32.mrb[0].mxu0
    %8864 = vmatprep.mubr.bf16.mxu0 %v5938
    %8865 = vmatmul.mubr.bf16.gmra.mrb[0].mxu0 %v5937
    %v8866 = vpop.f32.mrb[0].mxu0
    %v8867 = vadd.f32 %v8315, %v8866
    %v8868 = vpop.f32.mrb[0].mxu0
    %v8869 = vpop.f32.mrb[0].mxu0
    %v8870 = vadd.f32 %v8318, %v8869
    %v8871 = vpop.f32.mrb[0].mxu0
    %8872 = vmatprep.mubr.bf16.mxu0 %v5947
    %8873 = vmatmul.mubr.bf16.gmra.mrb[0].mxu0 %v5946
    %v8874 = vpop.f32.mrb[0].mxu0
    %v8875 = vadd.f32 %v8323, %v8874
    %v8876 = vpop.f32.mrb[0].mxu0
    %v8877 = vpop.f32.mrb[0].mxu0
    %v8878 = vadd.f32 %v8326, %v8877
    %v8879 = vpop.f32.mrb[0].mxu0
    %8880 = vmatprep.mubr.bf16.mxu0 %v5956
    %8881 = vmatmul.mubr.bf16.gmra.mrb[0].mxu0 %v5955
    %v8882 = vpop.f32.mrb[0].mxu0
    %v8883 = vadd.f32 %v8331, %v8882
    %v8884 = vpop.f32.mrb[0].mxu0
    %v8885 = vpop.f32.mrb[0].mxu0
    %v8886 = vadd.f32 %v8334, %v8885
    %v8887 = vpop.f32.mrb[0].mxu0
    %8888 = vmatprep.mubr.bf16.mxu0 %v5965
    %8889 = vmatmul.mubr.bf16.gmra.mrb[0].mxu0 %v5964
    %v8890 = vpop.f32.mrb[0].mxu0
    %v8891 = vadd.f32 %v8339, %v8890
    %v8892 = vpop.f32.mrb[0].mxu0
    %v8893 = vpop.f32.mrb[0].mxu0
    %v8894 = vadd.f32 %v8342, %v8893
    %v8895 = vpop.f32.mrb[0].mxu0
    %8896 = vmatprep.mubr.bf16.mxu0 %v5974
    %8897 = vmatmul.mubr.bf16.gmra.mrb[0].mxu0 %v5973
    %v8898 = vpop.f32.mrb[0].mxu0
    %v8899 = vadd.f32 %v8347, %v8898
    %v8900 = vpop.f32.mrb[0].mxu0
    %v8901 = vpop.f32.mrb[0].mxu0
    %v8902 = vadd.f32 %v8350, %v8901
    %v8903 = vpop.f32.mrb[0].mxu0
    %8904 = vmatprep.mubr.bf16.mxu0 %v5983
    %8905 = vmatmul.mubr.bf16.gmra.mrb[0].mxu0 %v5982
    %v8906 = vpop.f32.mrb[0].mxu0
    %v8907 = vadd.f32 %v8355, %v8906
    %v8908 = vpop.f32.mrb[0].mxu0
    %v8909 = vpop.f32.mrb[0].mxu0
    %v8910 = vpop.f32.mrb[0].mxu0
    %8911 = vdwg.mxu0
    %8912 = vmatprep.subr.bf16.mxu0 0
    %8913 = vmatpush1.bf16.msra.mxu0 %v6702
    %8914 = vmatprep.subr.bf16.mxu0 0
    %8915 = vmatpush1.bf16.msra.mxu0 0
    %8916 = vmatprep.subr.bf16.mxu0 0
    %8917 = vmatpush1.bf16.msra.mxu0 0
    %8918 = vmatprep.subr.bf16.mxu0 0
    %8919 = vmatpush1.bf16.msra.mxu0 0
    %8920 = vmatprep.subr.bf16.mxu0 0
    %8921 = vmatpush1.bf16.msra.mxu0 0
    %8922 = vmatprep.subr.bf16.mxu0 0
    %8923 = vmatpush1.bf16.msra.mxu0 0
    %8924 = vmatprep.subr.bf16.mxu0 0
    %8925 = vmatpush1.bf16.msra.mxu0 0
    %8926 = vmatprep.subr.bf16.mxu0 0
    %8927 = vmatpush1.bf16.msra.mxu0 0
    %8928 = vmatprep.subr.bf16.mxu0 0
    %8929 = vmatpush1.bf16.msra.mxu0 0
    %8930 = vmatprep.subr.bf16.mxu0 0
    %8931 = vmatpush1.bf16.msra.mxu0 0
    %8932 = vmatprep.subr.bf16.mxu0 0
    %8933 = vmatpush1.bf16.msra.mxu0 0
    %8934 = vmatprep.subr.bf16.mxu0 0
    %8935 = vmatpush1.bf16.msra.mxu0 0
    %8936 = vmatprep.subr.bf16.mxu0 0
    %8937 = vmatpush1.bf16.msra.mxu0 0
    %8938 = vmatprep.subr.bf16.mxu0 0
    %8939 = vmatpush1.bf16.msra.mxu0 0
    %8940 = vmatprep.subr.bf16.mxu0 0
    %8941 = vmatpush1.bf16.msra.mxu0 0
    %8942 = vmatprep.subr.bf16.mxu0 0
    %8943 = vmatpush1.bf16.msra.mxu0 0
    %8944 = vmatprep.mubr.bf16.mxu0 0
    %8945 = vmatmul.mubr.bf16.gmra.mrb[0].mxu0 %v6507
    %v8946 = vpop.f32.mrb[0].mxu0
    %v8947 = vadd.f32 %v8395, %v8946
    %v8948 = vpop.f32.mrb[0].mxu0
    %v8949 = vpop.f32.mrb[0].mxu0
    %v8950 = vadd.f32 %v8398, %v8949
    %v8951 = vpop.f32.mrb[0].mxu0
    %8952 = vmatprep.mubr.bf16.mxu0 0
    %8953 = vmatmul.mubr.bf16.gmra.mrb[0].mxu0 %v6510
    %v8954 = vpop.f32.mrb[0].mxu0
    %v8955 = vadd.f32 %v8403, %v8954
    %v8956 = vpop.f32.mrb[0].mxu0
    %v8957 = vpop.f32.mrb[0].mxu0
    %v8958 = vadd.f32 %v8406, %v8957
    %v8959 = vpop.f32.mrb[0].mxu0
    %8960 = vmatprep.mubr.bf16.mxu0 0
    %8961 = vmatmul.mubr.bf16.gmra.mrb[0].mxu0 %v6513
    %v8962 = vpop.f32.mrb[0].mxu0
    %v8963 = vadd.f32 %v8411, %v8962
    %v8964 = vpop.f32.mrb[0].mxu0
    %v8965 = vpop.f32.mrb[0].mxu0
    %v8966 = vadd.f32 %v8414, %v8965
    %v8967 = vpop.f32.mrb[0].mxu0
    %8968 = vmatprep.mubr.bf16.mxu0 0
    %8969 = vmatmul.mubr.bf16.gmra.mrb[0].mxu0 %v6516
    %v8970 = vpop.f32.mrb[0].mxu0
    %v8971 = vadd.f32 %v8419, %v8970
    %v8972 = vpop.f32.mrb[0].mxu0
    %v8973 = vpop.f32.mrb[0].mxu0
    %v8974 = vadd.f32 %v8422, %v8973
    %v8975 = vpop.f32.mrb[0].mxu0
    %8976 = vmatprep.mubr.bf16.mxu0 0
    %8977 = vmatmul.mubr.bf16.gmra.mrb[0].mxu0 %v6519
    %v8978 = vpop.f32.mrb[0].mxu0
    %v8979 = vadd.f32 %v8427, %v8978
    %v8980 = vpop.f32.mrb[0].mxu0
    %v8981 = vpop.f32.mrb[0].mxu0
    %v8982 = vadd.f32 %v8430, %v8981
    %v8983 = vpop.f32.mrb[0].mxu0
    %8984 = vmatprep.mubr.bf16.mxu0 0
    %8985 = vmatmul.mubr.bf16.gmra.mrb[0].mxu0 %v6522
    %v8986 = vpop.f32.mrb[0].mxu0
    %v8987 = vadd.f32 %v8435, %v8986
    %v8988 = vpop.f32.mrb[0].mxu0
    %v8989 = vpop.f32.mrb[0].mxu0
    %v8990 = vadd.f32 %v8438, %v8989
    %v8991 = vpop.f32.mrb[0].mxu0
    %8992 = vmatprep.mubr.bf16.mxu0 0
    %8993 = vmatmul.mubr.bf16.gmra.mrb[0].mxu0 %v6525
    %v8994 = vpop.f32.mrb[0].mxu0
    %v8995 = vadd.f32 %v8443, %v8994
    %v8996 = vpop.f32.mrb[0].mxu0
    %v8997 = vpop.f32.mrb[0].mxu0
    %v8998 = vadd.f32 %v8446, %v8997
    %v8999 = vpop.f32.mrb[0].mxu0
    %9000 = vmatprep.mubr.bf16.mxu0 0
    %9001 = vmatmul.mubr.bf16.gmra.mrb[0].mxu0 %v6528
    %v9002 = vpop.f32.mrb[0].mxu0
    %v9003 = vadd.f32 %v8451, %v9002
    %v9004 = vpop.f32.mrb[0].mxu0
    %v9005 = vpop.f32.mrb[0].mxu0
    %v9006 = vadd.f32 %v8454, %v9005
    %v9007 = vpop.f32.mrb[0].mxu0
    %9008 = vmatprep.mubr.bf16.mxu0 0
    %9009 = vmatmul.mubr.bf16.gmra.mrb[0].mxu0 %v6531
    %v9010 = vpop.f32.mrb[0].mxu0
    %v9011 = vadd.f32 %v8459, %v9010
    %v9012 = vpop.f32.mrb[0].mxu0
    %v9013 = vpop.f32.mrb[0].mxu0
    %v9014 = vadd.f32 %v8462, %v9013
    %v9015 = vpop.f32.mrb[0].mxu0
    %9016 = vmatprep.mubr.bf16.mxu0 0
    %9017 = vmatmul.mubr.bf16.gmra.mrb[0].mxu0 %v6534
    %v9018 = vpop.f32.mrb[0].mxu0
    %v9019 = vadd.f32 %v8467, %v9018
    %v9020 = vpop.f32.mrb[0].mxu0
    %v9021 = vpop.f32.mrb[0].mxu0
    %v9022 = vadd.f32 %v8470, %v9021
    %v9023 = vpop.f32.mrb[0].mxu0
    %9024 = vmatprep.mubr.bf16.mxu0 0
    %9025 = vmatmul.mubr.bf16.gmra.mrb[0].mxu0 %v6537
    %v9026 = vpop.f32.mrb[0].mxu0
    %v9027 = vadd.f32 %v8475, %v9026
    %v9028 = vpop.f32.mrb[0].mxu0
    %v9029 = vpop.f32.mrb[0].mxu0
    %v9030 = vadd.f32 %v8478, %v9029
    %v9031 = vpop.f32.mrb[0].mxu0
    %9032 = vmatprep.mubr.bf16.mxu0 0
    %9033 = vmatmul.mubr.bf16.gmra.mrb[0].mxu0 %v6540
    %v9034 = vpop.f32.mrb[0].mxu0
    %v9035 = vadd.f32 %v8483, %v9034
    %v9036 = vpop.f32.mrb[0].mxu0
    %v9037 = vpop.f32.mrb[0].mxu0
    %v9038 = vadd.f32 %v8486, %v9037
    %v9039 = vpop.f32.mrb[0].mxu0
    %9040 = vmatprep.mubr.bf16.mxu0 0
    %9041 = vmatmul.mubr.bf16.gmra.mrb[0].mxu0 %v6543
    %v9042 = vpop.f32.mrb[0].mxu0
    %v9043 = vadd.f32 %v8491, %v9042
    %v9044 = vpop.f32.mrb[0].mxu0
    %v9045 = vpop.f32.mrb[0].mxu0
    %v9046 = vadd.f32 %v8494, %v9045
    %v9047 = vpop.f32.mrb[0].mxu0
    %9048 = vmatprep.mubr.bf16.mxu0 0
    %9049 = vmatmul.mubr.bf16.gmra.mrb[0].mxu0 %v6546
    %v9050 = vpop.f32.mrb[0].mxu0
    %v9051 = vadd.f32 %v8499, %v9050
    %v9052 = vpop.f32.mrb[0].mxu0
    %v9053 = vpop.f32.mrb[0].mxu0
    %v9054 = vadd.f32 %v8502, %v9053
    %v9055 = vpop.f32.mrb[0].mxu0
    %9056 = vmatprep.mubr.bf16.mxu0 0
    %9057 = vmatmul.mubr.bf16.gmra.mrb[0].mxu0 %v6549
    %v9058 = vpop.f32.mrb[0].mxu0
    %v9059 = vadd.f32 %v8507, %v9058
    %v9060 = vpop.f32.mrb[0].mxu0
    %v9061 = vpop.f32.mrb[0].mxu0
    %v9062 = vadd.f32 %v8510, %v9061
    %v9063 = vpop.f32.mrb[0].mxu0
    %9064 = vmatprep.mubr.bf16.mxu0 0
    %9065 = vmatmul.mubr.bf16.gmra.mrb[0].mxu0 %v6552
    %v9066 = vpop.f32.mrb[0].mxu0
    %v9067 = vadd.f32 %v8515, %v9066
    %v9068 = vpop.f32.mrb[0].mxu0
    %v9069 = vpop.f32.mrb[0].mxu0
    %v9070 = vadd.f32 %v8518, %v9069
    %v9071 = vpop.f32.mrb[0].mxu0
    %9072 = vmatprep.mubr.bf16.mxu0 0
    %9073 = vmatmul.mubr.bf16.gmra.mrb[0].mxu0 %v6555
    %v9074 = vpop.f32.mrb[0].mxu0
    %v9075 = vadd.f32 %v8523, %v9074
    %v9076 = vpop.f32.mrb[0].mxu0
    %v9077 = vpop.f32.mrb[0].mxu0
    %v9078 = vadd.f32 %v8526, %v9077
    %v9079 = vpop.f32.mrb[0].mxu0
    %9080 = vmatprep.mubr.bf16.mxu0 0
    %9081 = vmatmul.mubr.bf16.gmra.mrb[0].mxu0 %v6558
    %v9082 = vpop.f32.mrb[0].mxu0
    %v9083 = vadd.f32 %v8531, %v9082
    %v9084 = vpop.f32.mrb[0].mxu0
    %v9085 = vpop.f32.mrb[0].mxu0
    %v9086 = vadd.f32 %v8534, %v9085
    %v9087 = vpop.f32.mrb[0].mxu0
    %9088 = vmatprep.mubr.bf16.mxu0 0
    %9089 = vmatmul.mubr.bf16.gmra.mrb[0].mxu0 %v6561
    %v9090 = vpop.f32.mrb[0].mxu0
    %v9091 = vadd.f32 %v8539, %v9090
    %v9092 = vpop.f32.mrb[0].mxu0
    %v9093 = vpop.f32.mrb[0].mxu0
    %v9094 = vadd.f32 %v8542, %v9093
    %v9095 = vpop.f32.mrb[0].mxu0
    %9096 = vmatprep.mubr.bf16.mxu0 0
    %9097 = vmatmul.mubr.bf16.gmra.mrb[0].mxu0 %v6564
    %v9098 = vpop.f32.mrb[0].mxu0
    %v9099 = vadd.f32 %v8547, %v9098
    %v9100 = vpop.f32.mrb[0].mxu0
    %v9101 = vpop.f32.mrb[0].mxu0
    %v9102 = vadd.f32 %v8550, %v9101
    %v9103 = vpop.f32.mrb[0].mxu0
    %9104 = vmatprep.mubr.bf16.mxu0 0
    %9105 = vmatmul.mubr.bf16.gmra.mrb[0].mxu0 %v6567
    %v9106 = vpop.f32.mrb[0].mxu0
    %v9107 = vadd.f32 %v8555, %v9106
    %v9108 = vpop.f32.mrb[0].mxu0
    %v9109 = vpop.f32.mrb[0].mxu0
    %v9110 = vadd.f32 %v8558, %v9109
    %v9111 = vpop.f32.mrb[0].mxu0
    %9112 = vmatprep.mubr.bf16.mxu0 0
    %9113 = vmatmul.mubr.bf16.gmra.mrb[0].mxu0 %v6570
    %v9114 = vpop.f32.mrb[0].mxu0
    %v9115 = vadd.f32 %v8563, %v9114
    %v9116 = vpop.f32.mrb[0].mxu0
    %v9117 = vpop.f32.mrb[0].mxu0
    %v9118 = vadd.f32 %v8566, %v9117
    %v9119 = vpop.f32.mrb[0].mxu0
    %9120 = vmatprep.mubr.bf16.mxu0 0
    %9121 = vmatmul.mubr.bf16.gmra.mrb[0].mxu0 %v6573
    %v9122 = vpop.f32.mrb[0].mxu0
    %v9123 = vadd.f32 %v8571, %v9122
    %v9124 = vpop.f32.mrb[0].mxu0
    %v9125 = vpop.f32.mrb[0].mxu0
    %v9126 = vadd.f32 %v8574, %v9125
    %v9127 = vpop.f32.mrb[0].mxu0
    %9128 = vmatprep.mubr.bf16.mxu0 0
    %9129 = vmatmul.mubr.bf16.gmra.mrb[0].mxu0 %v6576
    %v9130 = vpop.f32.mrb[0].mxu0
    %v9131 = vadd.f32 %v8579, %v9130
    %v9132 = vpop.f32.mrb[0].mxu0
    %v9133 = vpop.f32.mrb[0].mxu0
    %v9134 = vadd.f32 %v8582, %v9133
    %v9135 = vpop.f32.mrb[0].mxu0
    %9136 = vmatprep.mubr.bf16.mxu0 0
    %9137 = vmatmul.mubr.bf16.gmra.mrb[0].mxu0 %v6579
    %v9138 = vpop.f32.mrb[0].mxu0
    %v9139 = vadd.f32 %v8587, %v9138
    %v9140 = vpop.f32.mrb[0].mxu0
    %v9141 = vpop.f32.mrb[0].mxu0
    %v9142 = vadd.f32 %v8590, %v9141
    %v9143 = vpop.f32.mrb[0].mxu0
    %9144 = vmatprep.mubr.bf16.mxu0 0
    %9145 = vmatmul.mubr.bf16.gmra.mrb[0].mxu0 %v6582
    %v9146 = vpop.f32.mrb[0].mxu0
    %v9147 = vadd.f32 %v8595, %v9146
    %v9148 = vpop.f32.mrb[0].mxu0
    %v9149 = vpop.f32.mrb[0].mxu0
    %v9150 = vadd.f32 %v8598, %v9149
    %v9151 = vpop.f32.mrb[0].mxu0
    %9152 = vmatprep.mubr.bf16.mxu0 0
    %9153 = vmatmul.mubr.bf16.gmra.mrb[0].mxu0 %v6585
    %v9154 = vpop.f32.mrb[0].mxu0
    %v9155 = vadd.f32 %v8603, %v9154
    %v9156 = vpop.f32.mrb[0].mxu0
    %v9157 = vpop.f32.mrb[0].mxu0
    %v9158 = vadd.f32 %v8606, %v9157
    %v9159 = vpop.f32.mrb[0].mxu0
    %9160 = vmatprep.mubr.bf16.mxu0 0
    %9161 = vmatmul.mubr.bf16.gmra.mrb[0].mxu0 %v6588
    %v9162 = vpop.f32.mrb[0].mxu0
    %v9163 = vadd.f32 %v8611, %v9162
    %v9164 = vpop.f32.mrb[0].mxu0
    %v9165 = vpop.f32.mrb[0].mxu0
    %v9166 = vadd.f32 %v8614, %v9165
    %v9167 = vpop.f32.mrb[0].mxu0
    %9168 = vmatprep.mubr.bf16.mxu0 0
    %9169 = vmatmul.mubr.bf16.gmra.mrb[0].mxu0 %v6591
    %v9170 = vpop.f32.mrb[0].mxu0
    %v9171 = vadd.f32 %v8619, %v9170
    %v9172 = vpop.f32.mrb[0].mxu0
    %v9173 = vpop.f32.mrb[0].mxu0
    %v9174 = vadd.f32 %v8622, %v9173
    %v9175 = vpop.f32.mrb[0].mxu0
    %9176 = vmatprep.mubr.bf16.mxu0 0
    %9177 = vmatmul.mubr.bf16.gmra.mrb[0].mxu0 %v6594
    %v9178 = vpop.f32.mrb[0].mxu0
    %v9179 = vadd.f32 %v8627, %v9178
    %v9180 = vpop.f32.mrb[0].mxu0
    %v9181 = vpop.f32.mrb[0].mxu0
    %v9182 = vadd.f32 %v8630, %v9181
    %v9183 = vpop.f32.mrb[0].mxu0
    %9184 = vmatprep.mubr.bf16.mxu0 0
    %9185 = vmatmul.mubr.bf16.gmra.mrb[0].mxu0 %v6597
    %v9186 = vpop.f32.mrb[0].mxu0
    %v9187 = vadd.f32 %v8635, %v9186
    %v9188 = vpop.f32.mrb[0].mxu0
    %v9189 = vpop.f32.mrb[0].mxu0
    %v9190 = vadd.f32 %v8638, %v9189
    %v9191 = vpop.f32.mrb[0].mxu0
    %9192 = vmatprep.mubr.bf16.mxu0 0
    %9193 = vmatmul.mubr.bf16.gmra.mrb[0].mxu0 %v6600
    %v9194 = vpop.f32.mrb[0].mxu0
    %v9195 = vadd.f32 %v8643, %v9194
    %v9196 = vpop.f32.mrb[0].mxu0
    %v9197 = vpop.f32.mrb[0].mxu0
    %v9198 = vadd.f32 %v8646, %v9197
    %v9199 = vpop.f32.mrb[0].mxu0
    %9200 = vmatprep.mubr.bf16.mxu0 0
    %9201 = vmatmul.mubr.bf16.gmra.mrb[0].mxu0 %v6603
    %v9202 = vpop.f32.mrb[0].mxu0
    %v9203 = vadd.f32 %v8651, %v9202
    %v9204 = vpop.f32.mrb[0].mxu0
    %v9205 = vpop.f32.mrb[0].mxu0
    %v9206 = vadd.f32 %v8654, %v9205
    %v9207 = vpop.f32.mrb[0].mxu0
    %9208 = vmatprep.mubr.bf16.mxu0 0
    %9209 = vmatmul.mubr.bf16.gmra.mrb[0].mxu0 %v6606
    %v9210 = vpop.f32.mrb[0].mxu0
    %v9211 = vadd.f32 %v8659, %v9210
    %v9212 = vpop.f32.mrb[0].mxu0
    %v9213 = vpop.f32.mrb[0].mxu0
    %v9214 = vadd.f32 %v8662, %v9213
    %v9215 = vpop.f32.mrb[0].mxu0
    %9216 = vmatprep.mubr.bf16.mxu0 0
    %9217 = vmatmul.mubr.bf16.gmra.mrb[0].mxu0 %v6609
    %v9218 = vpop.f32.mrb[0].mxu0
    %v9219 = vadd.f32 %v8667, %v9218
    %v9220 = vpop.f32.mrb[0].mxu0
    %v9221 = vpop.f32.mrb[0].mxu0
    %v9222 = vadd.f32 %v8670, %v9221
    %v9223 = vpop.f32.mrb[0].mxu0
    %9224 = vmatprep.mubr.bf16.mxu0 0
    %9225 = vmatmul.mubr.bf16.gmra.mrb[0].mxu0 %v6612
    %v9226 = vpop.f32.mrb[0].mxu0
    %v9227 = vadd.f32 %v8675, %v9226
    %v9228 = vpop.f32.mrb[0].mxu0
    %v9229 = vpop.f32.mrb[0].mxu0
    %v9230 = vadd.f32 %v8678, %v9229
    %v9231 = vpop.f32.mrb[0].mxu0
    %9232 = vmatprep.mubr.bf16.mxu0 0
    %9233 = vmatmul.mubr.bf16.gmra.mrb[0].mxu0 %v6615
    %v9234 = vpop.f32.mrb[0].mxu0
    %v9235 = vadd.f32 %v8683, %v9234
    %v9236 = vpop.f32.mrb[0].mxu0
    %v9237 = vpop.f32.mrb[0].mxu0
    %v9238 = vadd.f32 %v8686, %v9237
    %v9239 = vpop.f32.mrb[0].mxu0
    %9240 = vmatprep.mubr.bf16.mxu0 0
    %9241 = vmatmul.mubr.bf16.gmra.mrb[0].mxu0 %v6618
    %v9242 = vpop.f32.mrb[0].mxu0
    %v9243 = vadd.f32 %v8691, %v9242
    %v9244 = vpop.f32.mrb[0].mxu0
    %v9245 = vpop.f32.mrb[0].mxu0
    %v9246 = vadd.f32 %v8694, %v9245
    %v9247 = vpop.f32.mrb[0].mxu0
    %9248 = vmatprep.mubr.bf16.mxu0 0
    %9249 = vmatmul.mubr.bf16.gmra.mrb[0].mxu0 %v6621
    %v9250 = vpop.f32.mrb[0].mxu0
    %v9251 = vadd.f32 %v8699, %v9250
    %v9252 = vpop.f32.mrb[0].mxu0
    %v9253 = vpop.f32.mrb[0].mxu0
    %v9254 = vadd.f32 %v8702, %v9253
    %v9255 = vpop.f32.mrb[0].mxu0
    %9256 = vmatprep.mubr.bf16.mxu0 0
    %9257 = vmatmul.mubr.bf16.gmra.mrb[0].mxu0 %v6624
    %v9258 = vpop.f32.mrb[0].mxu0
    %v9259 = vadd.f32 %v8707, %v9258
    %v9260 = vpop.f32.mrb[0].mxu0
    %v9261 = vpop.f32.mrb[0].mxu0
    %v9262 = vadd.f32 %v8710, %v9261
    %v9263 = vpop.f32.mrb[0].mxu0
    %9264 = vmatprep.mubr.bf16.mxu0 0
    %9265 = vmatmul.mubr.bf16.gmra.mrb[0].mxu0 %v6627
    %v9266 = vpop.f32.mrb[0].mxu0
    %v9267 = vadd.f32 %v8715, %v9266
    %v9268 = vpop.f32.mrb[0].mxu0
    %v9269 = vpop.f32.mrb[0].mxu0
    %v9270 = vadd.f32 %v8718, %v9269
    %v9271 = vpop.f32.mrb[0].mxu0
    %9272 = vmatprep.mubr.bf16.mxu0 0
    %9273 = vmatmul.mubr.bf16.gmra.mrb[0].mxu0 %v6630
    %v9274 = vpop.f32.mrb[0].mxu0
    %v9275 = vadd.f32 %v8723, %v9274
    %v9276 = vpop.f32.mrb[0].mxu0
    %v9277 = vpop.f32.mrb[0].mxu0
    %v9278 = vadd.f32 %v8726, %v9277
    %v9279 = vpop.f32.mrb[0].mxu0
    %9280 = vmatprep.mubr.bf16.mxu0 0
    %9281 = vmatmul.mubr.bf16.gmra.mrb[0].mxu0 %v6633
    %v9282 = vpop.f32.mrb[0].mxu0
    %v9283 = vadd.f32 %v8731, %v9282
    %v9284 = vpop.f32.mrb[0].mxu0
    %v9285 = vpop.f32.mrb[0].mxu0
    %v9286 = vadd.f32 %v8734, %v9285
    %v9287 = vpop.f32.mrb[0].mxu0
    %9288 = vmatprep.mubr.bf16.mxu0 0
    %9289 = vmatmul.mubr.bf16.gmra.mrb[0].mxu0 %v6636
    %v9290 = vpop.f32.mrb[0].mxu0
    %v9291 = vadd.f32 %v8739, %v9290
    %v9292 = vpop.f32.mrb[0].mxu0
    %v9293 = vpop.f32.mrb[0].mxu0
    %v9294 = vadd.f32 %v8742, %v9293
    %v9295 = vpop.f32.mrb[0].mxu0
    %9296 = vmatprep.mubr.bf16.mxu0 0
    %9297 = vmatmul.mubr.bf16.gmra.mrb[0].mxu0 %v6639
    %v9298 = vpop.f32.mrb[0].mxu0
    %v9299 = vadd.f32 %v8747, %v9298
    %v9300 = vpop.f32.mrb[0].mxu0
    %v9301 = vpop.f32.mrb[0].mxu0
    %v9302 = vadd.f32 %v8750, %v9301
    %v9303 = vpop.f32.mrb[0].mxu0
    %9304 = vmatprep.mubr.bf16.mxu0 0
    %9305 = vmatmul.mubr.bf16.gmra.mrb[0].mxu0 %v6642
    %v9306 = vpop.f32.mrb[0].mxu0
    %v9307 = vadd.f32 %v8755, %v9306
    %v9308 = vpop.f32.mrb[0].mxu0
    %v9309 = vpop.f32.mrb[0].mxu0
    %v9310 = vadd.f32 %v8758, %v9309
    %v9311 = vpop.f32.mrb[0].mxu0
    %9312 = vmatprep.mubr.bf16.mxu0 0
    %9313 = vmatmul.mubr.bf16.gmra.mrb[0].mxu0 %v6645
    %v9314 = vpop.f32.mrb[0].mxu0
    %v9315 = vadd.f32 %v8763, %v9314
    %v9316 = vpop.f32.mrb[0].mxu0
    %v9317 = vpop.f32.mrb[0].mxu0
    %v9318 = vadd.f32 %v8766, %v9317
    %v9319 = vpop.f32.mrb[0].mxu0
    %9320 = vmatprep.mubr.bf16.mxu0 0
    %9321 = vmatmul.mubr.bf16.gmra.mrb[0].mxu0 %v6648
    %v9322 = vpop.f32.mrb[0].mxu0
    %v9323 = vadd.f32 %v8771, %v9322
    %v9324 = vpop.f32.mrb[0].mxu0
    %v9325 = vpop.f32.mrb[0].mxu0
    %v9326 = vadd.f32 %v8774, %v9325
    %v9327 = vpop.f32.mrb[0].mxu0
    %9328 = vmatprep.mubr.bf16.mxu0 0
    %9329 = vmatmul.mubr.bf16.gmra.mrb[0].mxu0 %v6651
    %v9330 = vpop.f32.mrb[0].mxu0
    %v9331 = vadd.f32 %v8779, %v9330
    %v9332 = vpop.f32.mrb[0].mxu0
    %v9333 = vpop.f32.mrb[0].mxu0
    %v9334 = vadd.f32 %v8782, %v9333
    %v9335 = vpop.f32.mrb[0].mxu0
    %9336 = vmatprep.mubr.bf16.mxu0 0
    %9337 = vmatmul.mubr.bf16.gmra.mrb[0].mxu0 %v6654
    %v9338 = vpop.f32.mrb[0].mxu0
    %v9339 = vadd.f32 %v8787, %v9338
    %v9340 = vpop.f32.mrb[0].mxu0
    %v9341 = vpop.f32.mrb[0].mxu0
    %v9342 = vadd.f32 %v8790, %v9341
    %v9343 = vpop.f32.mrb[0].mxu0
    %9344 = vmatprep.mubr.bf16.mxu0 0
    %9345 = vmatmul.mubr.bf16.gmra.mrb[0].mxu0 %v6657
    %v9346 = vpop.f32.mrb[0].mxu0
    %v9347 = vadd.f32 %v8795, %v9346
    %v9348 = vpop.f32.mrb[0].mxu0
    %v9349 = vpop.f32.mrb[0].mxu0
    %v9350 = vadd.f32 %v8798, %v9349
    %v9351 = vpop.f32.mrb[0].mxu0
    %9352 = vmatprep.mubr.bf16.mxu0 0
    %9353 = vmatmul.mubr.bf16.gmra.mrb[0].mxu0 %v6660
    %v9354 = vpop.f32.mrb[0].mxu0
    %v9355 = vadd.f32 %v8803, %v9354
    %v9356 = vpop.f32.mrb[0].mxu0
    %v9357 = vpop.f32.mrb[0].mxu0
    %v9358 = vadd.f32 %v8806, %v9357
    %v9359 = vpop.f32.mrb[0].mxu0
    %9360 = vmatprep.mubr.bf16.mxu0 0
    %9361 = vmatmul.mubr.bf16.gmra.mrb[0].mxu0 %v6663
    %v9362 = vpop.f32.mrb[0].mxu0
    %v9363 = vadd.f32 %v8811, %v9362
    %v9364 = vpop.f32.mrb[0].mxu0
    %v9365 = vpop.f32.mrb[0].mxu0
    %v9366 = vadd.f32 %v8814, %v9365
    %v9367 = vpop.f32.mrb[0].mxu0
    %9368 = vmatprep.mubr.bf16.mxu0 0
    %9369 = vmatmul.mubr.bf16.gmra.mrb[0].mxu0 %v6666
    %v9370 = vpop.f32.mrb[0].mxu0
    %v9371 = vadd.f32 %v8819, %v9370
    %v9372 = vpop.f32.mrb[0].mxu0
    %v9373 = vpop.f32.mrb[0].mxu0
    %v9374 = vadd.f32 %v8822, %v9373
    %v9375 = vpop.f32.mrb[0].mxu0
    %9376 = vmatprep.mubr.bf16.mxu0 0
    %9377 = vmatmul.mubr.bf16.gmra.mrb[0].mxu0 %v6669
    %v9378 = vpop.f32.mrb[0].mxu0
    %v9379 = vadd.f32 %v8827, %v9378
    %v9380 = vpop.f32.mrb[0].mxu0
    %v9381 = vpop.f32.mrb[0].mxu0
    %v9382 = vadd.f32 %v8830, %v9381
    %v9383 = vpop.f32.mrb[0].mxu0
    %9384 = vmatprep.mubr.bf16.mxu0 0
    %9385 = vmatmul.mubr.bf16.gmra.mrb[0].mxu0 %v6672
    %v9386 = vpop.f32.mrb[0].mxu0
    %v9387 = vadd.f32 %v8835, %v9386
    %v9388 = vpop.f32.mrb[0].mxu0
    %v9389 = vpop.f32.mrb[0].mxu0
    %v9390 = vadd.f32 %v8838, %v9389
    %v9391 = vpop.f32.mrb[0].mxu0
    %9392 = vmatprep.mubr.bf16.mxu0 0
    %9393 = vmatmul.mubr.bf16.gmra.mrb[0].mxu0 %v6675
    %v9394 = vpop.f32.mrb[0].mxu0
    %v9395 = vadd.f32 %v8843, %v9394
    %v9396 = vpop.f32.mrb[0].mxu0
    %v9397 = vpop.f32.mrb[0].mxu0
    %v9398 = vadd.f32 %v8846, %v9397
    %v9399 = vpop.f32.mrb[0].mxu0
    %9400 = vmatprep.mubr.bf16.mxu0 0
    %9401 = vmatmul.mubr.bf16.gmra.mrb[0].mxu0 %v6678
    %v9402 = vpop.f32.mrb[0].mxu0
    %v9403 = vadd.f32 %v8851, %v9402
    %v9404 = vpop.f32.mrb[0].mxu0
    %v9405 = vpop.f32.mrb[0].mxu0
    %v9406 = vadd.f32 %v8854, %v9405
    %v9407 = vpop.f32.mrb[0].mxu0
    %9408 = vmatprep.mubr.bf16.mxu0 0
    %9409 = vmatmul.mubr.bf16.gmra.mrb[0].mxu0 %v6681
    %v9410 = vpop.f32.mrb[0].mxu0
    %v9411 = vadd.f32 %v8859, %v9410
    %v9412 = vpop.f32.mrb[0].mxu0
    %v9413 = vpop.f32.mrb[0].mxu0
    %v9414 = vadd.f32 %v8862, %v9413
    %v9415 = vpop.f32.mrb[0].mxu0
    %9416 = vmatprep.mubr.bf16.mxu0 0
    %9417 = vmatmul.mubr.bf16.gmra.mrb[0].mxu0 %v6684
    %v9418 = vpop.f32.mrb[0].mxu0
    %v9419 = vadd.f32 %v8867, %v9418
    %v9420 = vpop.f32.mrb[0].mxu0
    %v9421 = vpop.f32.mrb[0].mxu0
    %v9422 = vadd.f32 %v8870, %v9421
    %v9423 = vpop.f32.mrb[0].mxu0
    %9424 = vmatprep.mubr.bf16.mxu0 0
    %9425 = vmatmul.mubr.bf16.gmra.mrb[0].mxu0 %v6687
    %v9426 = vpop.f32.mrb[0].mxu0
    %v9427 = vadd.f32 %v8875, %v9426
    %v9428 = vpop.f32.mrb[0].mxu0
    %v9429 = vpop.f32.mrb[0].mxu0
    %v9430 = vadd.f32 %v8878, %v9429
    %v9431 = vpop.f32.mrb[0].mxu0
    %9432 = vmatprep.mubr.bf16.mxu0 0
    %9433 = vmatmul.mubr.bf16.gmra.mrb[0].mxu0 %v6690
    %v9434 = vpop.f32.mrb[0].mxu0
    %v9435 = vadd.f32 %v8883, %v9434
    %v9436 = vpop.f32.mrb[0].mxu0
    %v9437 = vpop.f32.mrb[0].mxu0
    %v9438 = vadd.f32 %v8886, %v9437
    %v9439 = vpop.f32.mrb[0].mxu0
    %9440 = vmatprep.mubr.bf16.mxu0 0
    %9441 = vmatmul.mubr.bf16.gmra.mrb[0].mxu0 %v6693
    %v9442 = vpop.f32.mrb[0].mxu0
    %v9443 = vadd.f32 %v8891, %v9442
    %v9444 = vpop.f32.mrb[0].mxu0
    %v9445 = vpop.f32.mrb[0].mxu0
    %v9446 = vadd.f32 %v8894, %v9445
    %v9447 = vpop.f32.mrb[0].mxu0
    %9448 = vmatprep.mubr.bf16.mxu0 0
    %9449 = vmatmul.mubr.bf16.gmra.mrb[0].mxu0 %v6696
    %v9450 = vpop.f32.mrb[0].mxu0
    %v9451 = vadd.f32 %v8899, %v9450
    %v9452 = vpop.f32.mrb[0].mxu0
    %v9453 = vpop.f32.mrb[0].mxu0
    %v9454 = vadd.f32 %v8902, %v9453
    %v9455 = vpop.f32.mrb[0].mxu0
    %9456 = vmatprep.mubr.bf16.mxu0 0
    %9457 = vmatmul.mubr.bf16.gmra.mrb[0].mxu0 %v6699
    %v9458 = vpop.f32.mrb[0].mxu0
    %v9459 = vadd.f32 %v8907, %v9458
    %v9460 = vpop.f32.mrb[0].mxu0
    %v9461 = vpop.f32.mrb[0].mxu0
    %v9462 = vpop.f32.mrb[0].mxu0
    %9463 = vdwg.mxu0
    %v9464 = vmul.f32 %v8947, 0.2
    %v9465 = vmul.f32 %v8950, 0.2
    %v9466 = vmul.f32 %v8955, 0.2
    %v9467 = vmul.f32 %v8958, 0.2
    %v9468 = vmul.f32 %v8963, 0.2
    %v9469 = vmul.f32 %v8966, 0.2
    %v9470 = vmul.f32 %v8971, 0.2
    %v9471 = vmul.f32 %v8974, 0.2
    %v9472 = vmul.f32 %v8979, 0.2
    %v9473 = vmul.f32 %v8982, 0.2
    %v9474 = vmul.f32 %v8987, 0.2
    %v9475 = vmul.f32 %v8990, 0.2
    %v9476 = vmul.f32 %v8995, 0.2
    %v9477 = vmul.f32 %v8998, 0.2
    %v9478 = vmul.f32 %v9003, 0.2
    %v9479 = vmul.f32 %v9006, 0.2
    %v9480 = vmul.f32 %v9011, 0.2
    %v9481 = vmul.f32 %v9014, 0.2
    %v9482 = vmul.f32 %v9019, 0.2
    %v9483 = vmul.f32 %v9022, 0.2
    %v9484 = vmul.f32 %v9027, 0.2
    %v9485 = vmul.f32 %v9030, 0.2
    %v9486 = vmul.f32 %v9035, 0.2
    %v9487 = vmul.f32 %v9038, 0.2
    %v9488 = vmul.f32 %v9043, 0.2
    %v9489 = vmul.f32 %v9046, 0.2
    %v9490 = vmul.f32 %v9051, 0.2
    %v9491 = vmul.f32 %v9054, 0.2
    %v9492 = vmul.f32 %v9059, 0.2
    %v9493 = vmul.f32 %v9062, 0.2
    %v9494 = vmul.f32 %v9067, 0.2
    %v9495 = vmul.f32 %v9070, 0.2
    %v9496 = vmul.f32 %v9075, 0.2
    %v9497 = vmul.f32 %v9078, 0.2
    %v9498 = vmul.f32 %v9083, 0.2
    %v9499 = vmul.f32 %v9086, 0.2
    %v9500 = vmul.f32 %v9091, 0.2
    %v9501 = vmul.f32 %v9094, 0.2
    %v9502 = vmul.f32 %v9099, 0.2
    %v9503 = vmul.f32 %v9102, 0.2
    %v9504 = vmul.f32 %v9107, 0.2
    %v9505 = vmul.f32 %v9110, 0.2
    %v9506 = vmul.f32 %v9115, 0.2
    %v9507 = vmul.f32 %v9118, 0.2
    %v9508 = vmul.f32 %v9123, 0.2
    %v9509 = vmul.f32 %v9126, 0.2
    %v9510 = vmul.f32 %v9131, 0.2
    %v9511 = vmul.f32 %v9134, 0.2
    %v9512 = vmul.f32 %v9139, 0.2
    %v9513 = vmul.f32 %v9142, 0.2
    %v9514 = vmul.f32 %v9147, 0.2
    %v9515 = vmul.f32 %v9150, 0.2
    %v9516 = vmul.f32 %v9155, 0.2
    %v9517 = vmul.f32 %v9158, 0.2
    %v9518 = vmul.f32 %v9163, 0.2
    %v9519 = vmul.f32 %v9166, 0.2
    %v9520 = vmul.f32 %v9171, 0.2
    %v9521 = vmul.f32 %v9174, 0.2
    %v9522 = vmul.f32 %v9179, 0.2
    %v9523 = vmul.f32 %v9182, 0.2
    %v9524 = vmul.f32 %v9187, 0.2
    %v9525 = vmul.f32 %v9190, 0.2
    %v9526 = vmul.f32 %v9195, 0.2
    %v9527 = vmul.f32 %v9198, 0.2
    %v9528 = vmul.f32 %v9203, 0.2
    %v9529 = vmul.f32 %v9206, 0.2
    %v9530 = vmul.f32 %v9211, 0.2
    %v9531 = vmul.f32 %v9214, 0.2
    %v9532 = vmul.f32 %v9219, 0.2
    %v9533 = vmul.f32 %v9222, 0.2
    %v9534 = vmul.f32 %v9227, 0.2
    %v9535 = vmul.f32 %v9230, 0.2
    %v9536 = vmul.f32 %v9235, 0.2
    %v9537 = vmul.f32 %v9238, 0.2
    %v9538 = vmul.f32 %v9243, 0.2
    %v9539 = vmul.f32 %v9246, 0.2
    %v9540 = vmul.f32 %v9251, 0.2
    %v9541 = vmul.f32 %v9254, 0.2
    %v9542 = vmul.f32 %v9259, 0.2
    %v9543 = vmul.f32 %v9262, 0.2
    %v9544 = vmul.f32 %v9267, 0.2
    %v9545 = vmul.f32 %v9270, 0.2
    %v9546 = vmul.f32 %v9275, 0.2
    %v9547 = vmul.f32 %v9278, 0.2
    %v9548 = vmul.f32 %v9283, 0.2
    %v9549 = vmul.f32 %v9286, 0.2
    %v9550 = vmul.f32 %v9291, 0.2
    %v9551 = vmul.f32 %v9294, 0.2
    %v9552 = vmul.f32 %v9299, 0.2
    %v9553 = vmul.f32 %v9302, 0.2
    %v9554 = vmul.f32 %v9307, 0.2
    %v9555 = vmul.f32 %v9310, 0.2
    %v9556 = vmul.f32 %v9315, 0.2
    %v9557 = vmul.f32 %v9318, 0.2
    %v9558 = vmul.f32 %v9323, 0.2
    %v9559 = vmul.f32 %v9326, 0.2
    %v9560 = vmul.f32 %v9331, 0.2
    %v9561 = vmul.f32 %v9334, 0.2
    %v9562 = vmul.f32 %v9339, 0.2
    %v9563 = vmul.f32 %v9342, 0.2
    %v9564 = vmul.f32 %v9347, 0.2
    %v9565 = vmul.f32 %v9350, 0.2
    %v9566 = vmul.f32 %v9355, 0.2
    %v9567 = vmul.f32 %v9358, 0.2
    %v9568 = vmul.f32 %v9363, 0.2
    %v9569 = vmul.f32 %v9366, 0.2
    %v9570 = vmul.f32 %v9371, 0.2
    %v9571 = vmul.f32 %v9374, 0.2
    %v9572 = vmul.f32 %v9379, 0.2
    %v9573 = vmul.f32 %v9382, 0.2
    %v9574 = vmul.f32 %v9387, 0.2
    %v9575 = vmul.f32 %v9390, 0.2
    %v9576 = vmul.f32 %v9395, 0.2
    %v9577 = vmul.f32 %v9398, 0.2
    %v9578 = vmul.f32 %v9403, 0.2
    %v9579 = vmul.f32 %v9406, 0.2
    %v9580 = vmul.f32 %v9411, 0.2
    %v9581 = vmul.f32 %v9414, 0.2
    %v9582 = vmul.f32 %v9419, 0.2
    %v9583 = vmul.f32 %v9422, 0.2
    %v9584 = vmul.f32 %v9427, 0.2
    %v9585 = vmul.f32 %v9430, 0.2
    %v9586 = vmul.f32 %v9435, 0.2
    %v9587 = vmul.f32 %v9438, 0.2
    %v9588 = vmul.f32 %v9443, 0.2
    %v9589 = vmul.f32 %v9446, 0.2
    %v9590 = vmul.f32 %v9451, 0.2
    %v9591 = vmul.f32 %v9454, 0.2
    %v9592 = vmul.f32 %v9459, 0.2
    %v9593 = vmax.f32 %v8947, %v9464
    %v9594 = vmax.f32 %v8950, %v9465
    %v9595 = vmax.f32 %v8955, %v9466
    %v9596 = vmax.f32 %v8958, %v9467
    %v9597 = vmax.f32 %v8963, %v9468
    %v9598 = vmax.f32 %v8966, %v9469
    %v9599 = vmax.f32 %v8971, %v9470
    %v9600 = vmax.f32 %v8974, %v9471
    %v9601 = vmax.f32 %v8979, %v9472
    %v9602 = vmax.f32 %v8982, %v9473
    %v9603 = vmax.f32 %v8987, %v9474
    %v9604 = vmax.f32 %v8990, %v9475
    %v9605 = vmax.f32 %v8995, %v9476
    %v9606 = vmax.f32 %v8998, %v9477
    %v9607 = vmax.f32 %v9003, %v9478
    %v9608 = vmax.f32 %v9006, %v9479
    %v9609 = vmax.f32 %v9011, %v9480
    %v9610 = vmax.f32 %v9014, %v9481
    %v9611 = vmax.f32 %v9019, %v9482
    %v9612 = vmax.f32 %v9022, %v9483
    %v9613 = vmax.f32 %v9027, %v9484
    %v9614 = vmax.f32 %v9030, %v9485
    %v9615 = vmax.f32 %v9035, %v9486
    %v9616 = vmax.f32 %v9038, %v9487
    %v9617 = vmax.f32 %v9043, %v9488
    %v9618 = vmax.f32 %v9046, %v9489
    %v9619 = vmax.f32 %v9051, %v9490
    %v9620 = vmax.f32 %v9054, %v9491
    %v9621 = vmax.f32 %v9059, %v9492
    %v9622 = vmax.f32 %v9062, %v9493
    %v9623 = vmax.f32 %v9067, %v9494
    %v9624 = vmax.f32 %v9070, %v9495
    %v9625 = vmax.f32 %v9075, %v9496
    %v9626 = vmax.f32 %v9078, %v9497
    %v9627 = vmax.f32 %v9083, %v9498
    %v9628 = vmax.f32 %v9086, %v9499
    %v9629 = vmax.f32 %v9091, %v9500
    %v9630 = vmax.f32 %v9094, %v9501
    %v9631 = vmax.f32 %v9099, %v9502
    %v9632 = vmax.f32 %v9102, %v9503
    %v9633 = vmax.f32 %v9107, %v9504
    %v9634 = vmax.f32 %v9110, %v9505
    %v9635 = vmax.f32 %v9115, %v9506
    %v9636 = vmax.f32 %v9118, %v9507
    %v9637 = vmax.f32 %v9123, %v9508
    %v9638 = vmax.f32 %v9126, %v9509
    %v9639 = vmax.f32 %v9131, %v9510
    %v9640 = vmax.f32 %v9134, %v9511
    %v9641 = vmax.f32 %v9139, %v9512
    %v9642 = vmax.f32 %v9142, %v9513
    %v9643 = vmax.f32 %v9147, %v9514
    %v9644 = vmax.f32 %v9150, %v9515
    %v9645 = vmax.f32 %v9155, %v9516
    %v9646 = vmax.f32 %v9158, %v9517
    %v9647 = vmax.f32 %v9163, %v9518
    %v9648 = vmax.f32 %v9166, %v9519
    %v9649 = vmax.f32 %v9171, %v9520
    %v9650 = vmax.f32 %v9174, %v9521
    %v9651 = vmax.f32 %v9179, %v9522
    %v9652 = vmax.f32 %v9182, %v9523
    %v9653 = vmax.f32 %v9187, %v9524
    %v9654 = vmax.f32 %v9190, %v9525
    %v9655 = vmax.f32 %v9195, %v9526
    %v9656 = vmax.f32 %v9198, %v9527
    %v9657 = vmax.f32 %v9203, %v9528
    %v9658 = vmax.f32 %v9206, %v9529
    %v9659 = vmax.f32 %v9211, %v9530
    %v9660 = vmax.f32 %v9214, %v9531
    %v9661 = vmax.f32 %v9219, %v9532
    %v9662 = vmax.f32 %v9222, %v9533
    %v9663 = vmax.f32 %v9227, %v9534
    %v9664 = vmax.f32 %v9230, %v9535
    %v9665 = vmax.f32 %v9235, %v9536
    %v9666 = vmax.f32 %v9238, %v9537
    %v9667 = vmax.f32 %v9243, %v9538
    %v9668 = vmax.f32 %v9246, %v9539
    %v9669 = vmax.f32 %v9251, %v9540
    %v9670 = vmax.f32 %v9254, %v9541
    %v9671 = vmax.f32 %v9259, %v9542
    %v9672 = vmax.f32 %v9262, %v9543
    %v9673 = vmax.f32 %v9267, %v9544
    %v9674 = vmax.f32 %v9270, %v9545
    %v9675 = vmax.f32 %v9275, %v9546
    %v9676 = vmax.f32 %v9278, %v9547
    %v9677 = vmax.f32 %v9283, %v9548
    %v9678 = vmax.f32 %v9286, %v9549
    %v9679 = vmax.f32 %v9291, %v9550
    %v9680 = vmax.f32 %v9294, %v9551
    %v9681 = vmax.f32 %v9299, %v9552
    %v9682 = vmax.f32 %v9302, %v9553
    %v9683 = vmax.f32 %v9307, %v9554
    %v9684 = vmax.f32 %v9310, %v9555
    %v9685 = vmax.f32 %v9315, %v9556
    %v9686 = vmax.f32 %v9318, %v9557
    %v9687 = vmax.f32 %v9323, %v9558
    %v9688 = vmax.f32 %v9326, %v9559
    %v9689 = vmax.f32 %v9331, %v9560
    %v9690 = vmax.f32 %v9334, %v9561
    %v9691 = vmax.f32 %v9339, %v9562
    %v9692 = vmax.f32 %v9342, %v9563
    %v9693 = vmax.f32 %v9347, %v9564
    %v9694 = vmax.f32 %v9350, %v9565
    %v9695 = vmax.f32 %v9355, %v9566
    %v9696 = vmax.f32 %v9358, %v9567
    %v9697 = vmax.f32 %v9363, %v9568
    %v9698 = vmax.f32 %v9366, %v9569
    %v9699 = vmax.f32 %v9371, %v9570
    %v9700 = vmax.f32 %v9374, %v9571
    %v9701 = vmax.f32 %v9379, %v9572
    %v9702 = vmax.f32 %v9382, %v9573
    %v9703 = vmax.f32 %v9387, %v9574
    %v9704 = vmax.f32 %v9390, %v9575
    %v9705 = vmax.f32 %v9395, %v9576
    %v9706 = vmax.f32 %v9398, %v9577
    %v9707 = vmax.f32 %v9403, %v9578
    %v9708 = vmax.f32 %v9406, %v9579
    %v9709 = vmax.f32 %v9411, %v9580
    %v9710 = vmax.f32 %v9414, %v9581
    %v9711 = vmax.f32 %v9419, %v9582
    %v9712 = vmax.f32 %v9422, %v9583
    %v9713 = vmax.f32 %v9427, %v9584
    %v9714 = vmax.f32 %v9430, %v9585
    %v9715 = vmax.f32 %v9435, %v9586
    %v9716 = vmax.f32 %v9438, %v9587
    %v9717 = vmax.f32 %v9443, %v9588
    %v9718 = vmax.f32 %v9446, %v9589
    %v9719 = vmax.f32 %v9451, %v9590
    %v9720 = vmax.f32 %v9454, %v9591
    %v9721 = vmax.f32 %v9459, %v9592
    %v9722 = vpack.c.bf16 %v9594, %v9593
    %v9723 = vpack.c.bf16 %v9596, %v9595
    %v9724 = vpack.c.bf16 %v9598, %v9597
    %v9725 = vpack.c.bf16 %v9600, %v9599
    %v9726 = vpack.c.bf16 %v9602, %v9601
    %v9727 = vpack.c.bf16 %v9604, %v9603
    %v9728 = vpack.c.bf16 %v9606, %v9605
    %v9729 = vpack.c.bf16 %v9608, %v9607
    %v9730 = vpack.c.bf16 %v9610, %v9609
    %v9731 = vpack.c.bf16 %v9612, %v9611
    %v9732 = vpack.c.bf16 %v9614, %v9613
    %v9733 = vpack.c.bf16 %v9616, %v9615
    %v9734 = vpack.c.bf16 %v9618, %v9617
    %v9735 = vpack.c.bf16 %v9620, %v9619
    %v9736 = vpack.c.bf16 %v9622, %v9621
    %v9737 = vpack.c.bf16 %v9624, %v9623
    %v9738 = vpack.c.bf16 %v9626, %v9625
    %v9739 = vpack.c.bf16 %v9628, %v9627
    %v9740 = vpack.c.bf16 %v9630, %v9629
    %v9741 = vpack.c.bf16 %v9632, %v9631
    %v9742 = vpack.c.bf16 %v9634, %v9633
    %v9743 = vpack.c.bf16 %v9636, %v9635
    %v9744 = vpack.c.bf16 %v9638, %v9637
    %v9745 = vpack.c.bf16 %v9640, %v9639
    %v9746 = vpack.c.bf16 %v9642, %v9641
    %v9747 = vpack.c.bf16 %v9644, %v9643
    %v9748 = vpack.c.bf16 %v9646, %v9645
    %v9749 = vpack.c.bf16 %v9648, %v9647
    %v9750 = vpack.c.bf16 %v9650, %v9649
    %v9751 = vpack.c.bf16 %v9652, %v9651
    %v9752 = vpack.c.bf16 %v9654, %v9653
    %v9753 = vpack.c.bf16 %v9656, %v9655
    %v9754 = vpack.c.bf16 %v9658, %v9657
    %v9755 = vpack.c.bf16 %v9660, %v9659
    %v9756 = vpack.c.bf16 %v9662, %v9661
    %v9757 = vpack.c.bf16 %v9664, %v9663
    %v9758 = vpack.c.bf16 %v9666, %v9665
    %v9759 = vpack.c.bf16 %v9668, %v9667
    %v9760 = vpack.c.bf16 %v9670, %v9669
    %v9761 = vpack.c.bf16 %v9672, %v9671
    %v9762 = vpack.c.bf16 %v9674, %v9673
    %v9763 = vpack.c.bf16 %v9676, %v9675
    %v9764 = vpack.c.bf16 %v9678, %v9677
    %v9765 = vpack.c.bf16 %v9680, %v9679
    %v9766 = vpack.c.bf16 %v9682, %v9681
    %v9767 = vpack.c.bf16 %v9684, %v9683
    %v9768 = vpack.c.bf16 %v9686, %v9685
    %v9769 = vpack.c.bf16 %v9688, %v9687
    %v9770 = vpack.c.bf16 %v9690, %v9689
    %v9771 = vpack.c.bf16 %v9692, %v9691
    %v9772 = vpack.c.bf16 %v9694, %v9693
    %v9773 = vpack.c.bf16 %v9696, %v9695
    %v9774 = vpack.c.bf16 %v9698, %v9697
    %v9775 = vpack.c.bf16 %v9700, %v9699
    %v9776 = vpack.c.bf16 %v9702, %v9701
    %v9777 = vpack.c.bf16 %v9704, %v9703
    %v9778 = vpack.c.bf16 %v9706, %v9705
    %v9779 = vpack.c.bf16 %v9708, %v9707
    %v9780 = vpack.c.bf16 %v9710, %v9709
    %v9781 = vpack.c.bf16 %v9712, %v9711
    %v9782 = vpack.c.bf16 %v9714, %v9713
    %v9783 = vpack.c.bf16 %v9716, %v9715
    %v9784 = vpack.c.bf16 %v9718, %v9717
    %v9785 = vpack.c.bf16 %v9720, %v9719
    %v9786 = vpack.c.bf16 %v9721, %v9721
    %v9947 = vunpack.c.l.b16 %v1032
    %v9948 = vunpack.c.h.b16 %v1032
    %v9949 = vunpack.c.l.b16 %v1033
    %v9950 = vunpack.c.h.b16 %v1033
    %v9951 = vunpack.c.l.b16 %v1034
    %v9952 = vunpack.c.h.b16 %v1034
    %v9953 = vunpack.c.l.b16 %v1035
    %v9954 = vunpack.c.h.b16 %v1035
    %v9955 = vunpack.c.l.b16 %v1036
    %v9956 = vunpack.c.l.b16 %v1037
    %v9957 = vunpack.c.h.b16 %v1037
    %v9958 = vunpack.c.l.b16 %v1038
    %v9959 = vunpack.c.h.b16 %v1038
    %v9960 = vunpack.c.l.b16 %v1039
    %v9961 = vunpack.c.h.b16 %v1039
    %v9962 = vunpack.c.l.b16 %v1040
    %v9963 = vunpack.c.h.b16 %v1040
    %v9964 = vunpack.c.l.b16 %v1041
    %v9965 = vunpack.c.l.b16 %v1042
    %v9966 = vunpack.c.h.b16 %v1042
    %v9967 = vunpack.c.l.b16 %v1043
    %v9968 = vunpack.c.h.b16 %v1043
    %v9969 = vunpack.c.l.b16 %v1044
    %v9970 = vunpack.c.h.b16 %v1044
    %v9971 = vunpack.c.l.b16 %v1045
    %v9972 = vunpack.c.h.b16 %v1045
    %v9973 = vunpack.c.l.b16 %v1046
    %v9974 = vunpack.c.l.b16 %v1047
    %v9975 = vunpack.c.h.b16 %v1047
    %v9976 = vunpack.c.l.b16 %v1048
    %v9977 = vunpack.c.h.b16 %v1048
    %v9978 = vunpack.c.l.b16 %v1049
    %v9979 = vunpack.c.h.b16 %v1049
    %v9980 = vunpack.c.l.b16 %v1050
    %v9981 = vunpack.c.h.b16 %v1050
    %v9982 = vunpack.c.l.b16 %v1051
    %v9983 = vunpack.c.l.b16 %v1052
    %v9984 = vunpack.c.h.b16 %v1052
    %v9985 = vunpack.c.l.b16 %v1053
    %v9986 = vunpack.c.h.b16 %v1053
    %v9987 = vunpack.c.l.b16 %v1054
    %v9988 = vunpack.c.h.b16 %v1054
    %v9989 = vunpack.c.l.b16 %v1055
    %v9990 = vunpack.c.h.b16 %v1055
    %v9991 = vunpack.c.l.b16 %v1056
    %v9992 = vunpack.c.l.b16 %v1057
    %v9993 = vunpack.c.h.b16 %v1057
    %v9994 = vunpack.c.l.b16 %v1058
    %v9995 = vunpack.c.h.b16 %v1058
    %v9996 = vunpack.c.l.b16 %v1059
    %v9997 = vunpack.c.h.b16 %v1059
    %v9998 = vunpack.c.l.b16 %v1060
    %v9999 = vunpack.c.h.b16 %v1060
    %v10000 = vunpack.c.l.b16 %v1061
    %v10001 = vunpack.c.l.b16 %v1062
    %v10002 = vunpack.c.h.b16 %v1062
    %v10003 = vunpack.c.l.b16 %v1063
    %v10004 = vunpack.c.h.b16 %v1063
    %v10005 = vunpack.c.l.b16 %v1064
    %v10006 = vunpack.c.h.b16 %v1064
    %v10007 = vunpack.c.l.b16 %v1065
    %v10008 = vunpack.c.h.b16 %v1065
    %v10009 = vunpack.c.l.b16 %v1066
    %v10010 = vunpack.c.l.b16 %v1067
    %v10011 = vunpack.c.h.b16 %v1067
    %v10012 = vunpack.c.l.b16 %v1068
    %v10013 = vunpack.c.h.b16 %v1068
    %v10014 = vunpack.c.l.b16 %v1069
    %v10015 = vunpack.c.h.b16 %v1069
    %v10016 = vunpack.c.l.b16 %v1070
    %v10017 = vunpack.c.h.b16 %v1070
    %v10018 = vunpack.c.l.b16 %v1071
    %v10019 = vunpack.c.l.b16 %v1072
    %v10020 = vunpack.c.h.b16 %v1072
    %v10021 = vunpack.c.l.b16 %v1073
    %v10022 = vunpack.c.h.b16 %v1073
    %v10023 = vunpack.c.l.b16 %v1074
    %v10024 = vunpack.c.h.b16 %v1074
    %v10025 = vunpack.c.l.b16 %v1075
    %v10026 = vunpack.c.h.b16 %v1075
    %v10027 = vunpack.c.l.b16 %v1076
    %v10028 = vunpack.c.l.b16 %v1077
    %v10029 = vunpack.c.h.b16 %v1077
    %v10030 = vunpack.c.l.b16 %v1078
    %v10031 = vunpack.c.h.b16 %v1078
    %v10032 = vunpack.c.l.b16 %v1079
    %v10033 = vunpack.c.h.b16 %v1079
    %v10034 = vunpack.c.l.b16 %v1080
    %v10035 = vunpack.c.h.b16 %v1080
    %v10036 = vunpack.c.l.b16 %v1081
    %v10037 = vunpack.c.l.b16 %v1082
    %v10038 = vunpack.c.h.b16 %v1082
    %v10039 = vunpack.c.l.b16 %v1083
    %v10040 = vunpack.c.h.b16 %v1083
    %v10041 = vunpack.c.l.b16 %v1084
    %v10042 = vunpack.c.h.b16 %v1084
    %v10043 = vunpack.c.l.b16 %v1085
    %v10044 = vunpack.c.h.b16 %v1085
    %v10045 = vunpack.c.l.b16 %v1086
    %v10046 = vunpack.c.l.b16 %v1087
    %v10047 = vunpack.c.h.b16 %v1087
    %v10048 = vunpack.c.l.b16 %v1088
    %v10049 = vunpack.c.h.b16 %v1088
    %v10050 = vunpack.c.l.b16 %v1089
    %v10051 = vunpack.c.h.b16 %v1089
    %v10052 = vunpack.c.l.b16 %v1090
    %v10053 = vunpack.c.h.b16 %v1090
    %v10054 = vunpack.c.l.b16 %v1091
    %v10055 = vunpack.c.l.b16 %v1092
    %v10056 = vunpack.c.h.b16 %v1092
    %v10057 = vunpack.c.l.b16 %v1093
    %v10058 = vunpack.c.h.b16 %v1093
    %v10059 = vunpack.c.l.b16 %v1094
    %v10060 = vunpack.c.h.b16 %v1094
    %v10061 = vunpack.c.l.b16 %v1095
    %v10062 = vunpack.c.h.b16 %v1095
    %v10063 = vunpack.c.l.b16 %v1096
    %v10064 = vunpack.c.l.b16 %v1097
    %v10065 = vunpack.c.h.b16 %v1097
    %v10066 = vunpack.c.l.b16 %v1098
    %v10067 = vunpack.c.h.b16 %v1098
    %v10068 = vunpack.c.l.b16 %v1099
    %v10069 = vunpack.c.h.b16 %v1099
    %v10070 = vunpack.c.l.b16 %v1100
    %v10071 = vunpack.c.h.b16 %v1100
    %v10072 = vunpack.c.l.b16 %v1101
    %v10073 = vunpack.c.l.b16 %v1102
    %v10074 = vunpack.c.h.b16 %v1102
    %v10075 = vunpack.c.l.b16 %v1103
    %v10076 = vunpack.c.h.b16 %v1103
    %v10077 = vunpack.c.l.b16 %v1104
    %v10078 = vunpack.c.h.b16 %v1104
    %v10079 = vunpack.c.l.b16 %v1105
    %v10080 = vunpack.c.h.b16 %v1105
    %v10081 = vunpack.c.l.b16 %v1106
    %v10082 = vunpack.c.l.b16 %v1107
    %v10083 = vunpack.c.h.b16 %v1107
    %v10084 = vunpack.c.l.b16 %v1108
    %v10085 = vunpack.c.h.b16 %v1108
    %v10086 = vunpack.c.l.b16 %v1109
    %v10087 = vunpack.c.h.b16 %v1109
    %v10088 = vunpack.c.l.b16 %v1110
    %v10089 = vunpack.c.h.b16 %v1110
    %v10090 = vunpack.c.l.b16 %v1111
    %v10091 = vunpack.c.l.b16 %v1112
    %v10092 = vunpack.c.h.b16 %v1112
    %v10093 = vunpack.c.l.b16 %v1113
    %v10094 = vunpack.c.h.b16 %v1113
    %v10095 = vunpack.c.l.b16 %v1114
    %v10096 = vunpack.c.h.b16 %v1114
    %v10097 = vunpack.c.l.b16 %v1115
    %v10098 = vunpack.c.h.b16 %v1115
    %v10099 = vunpack.c.l.b16 %v1116
    %v10100 = vunpack.c.l.b16 %v1117
    %v10101 = vunpack.c.h.b16 %v1117
    %v10102 = vunpack.c.l.b16 %v1118
    %v10103 = vunpack.c.h.b16 %v1118
    %v10104 = vunpack.c.l.b16 %v1119
    %v10105 = vunpack.c.h.b16 %v1119
    %v10106 = vunpack.c.l.b16 %v1120
    %v10107 = vunpack.c.h.b16 %v1120
    %v10108 = vunpack.c.l.b16 %v1121
    %v10109 = vunpack.c.l.b16 %v1122
    %v10110 = vunpack.c.h.b16 %v1122
    %v10111 = vunpack.c.l.b16 %v1123
    %v10112 = vunpack.c.h.b16 %v1123
    %v10113 = vunpack.c.l.b16 %v1124
    %v10114 = vunpack.c.h.b16 %v1124
    %v10115 = vunpack.c.l.b16 %v1125
    %v10116 = vunpack.c.h.b16 %v1125
    %v10117 = vunpack.c.l.b16 %v1126
    %v10118 = vunpack.c.l.b16 %v1127
    %v10119 = vunpack.c.h.b16 %v1127
    %v10120 = vunpack.c.l.b16 %v1128
    %v10121 = vunpack.c.h.b16 %v1128
    %v10122 = vunpack.c.l.b16 %v1129
    %v10123 = vunpack.c.h.b16 %v1129
    %v10124 = vunpack.c.l.b16 %v1130
    %v10125 = vunpack.c.h.b16 %v1130
    %v10126 = vunpack.c.l.b16 %v1131
    %v10127 = vunpack.c.l.b16 %v1132
    %v10128 = vunpack.c.h.b16 %v1132
    %v10129 = vunpack.c.l.b16 %v1133
    %v10130 = vunpack.c.h.b16 %v1133
    %v10131 = vunpack.c.l.b16 %v1134
    %v10132 = vunpack.c.h.b16 %v1134
    %v10133 = vunpack.c.l.b16 %v1135
    %v10134 = vunpack.c.h.b16 %v1135
    %v10135 = vunpack.c.l.b16 %v1136
    %v10136 = vunpack.c.l.b16 %v1137
    %v10137 = vunpack.c.h.b16 %v1137
    %v10138 = vunpack.c.l.b16 %v1138
    %v10139 = vunpack.c.h.b16 %v1138
    %v10140 = vunpack.c.l.b16 %v1139
    %v10141 = vunpack.c.h.b16 %v1139
    %v10142 = vunpack.c.l.b16 %v1140
    %v10143 = vunpack.c.h.b16 %v1140
    %v10144 = vunpack.c.l.b16 %v1141
    %v10145 = vunpack.c.l.b16 %v1142
    %v10146 = vunpack.c.h.b16 %v1142
    %v10147 = vunpack.c.l.b16 %v1143
    %v10148 = vunpack.c.h.b16 %v1143
    %v10149 = vunpack.c.l.b16 %v1144
    %v10150 = vunpack.c.h.b16 %v1144
    %v10151 = vunpack.c.l.b16 %v1145
    %v10152 = vunpack.c.h.b16 %v1145
    %v10153 = vunpack.c.l.b16 %v1146
    %v10154 = vunpack.c.l.b16 %v1147
    %v10155 = vunpack.c.h.b16 %v1147
    %v10156 = vunpack.c.l.b16 %v1148
    %v10157 = vunpack.c.h.b16 %v1148
    %v10158 = vunpack.c.l.b16 %v1149
    %v10159 = vunpack.c.h.b16 %v1149
    %v10160 = vunpack.c.l.b16 %v1150
    %v10161 = vunpack.c.h.b16 %v1150
    %v10162 = vunpack.c.l.b16 %v1151
    %v10163 = vunpack.c.l.b16 %v1152
    %v10164 = vunpack.c.h.b16 %v1152
    %v10165 = vunpack.c.l.b16 %v1153
    %v10166 = vunpack.c.h.b16 %v1153
    %v10167 = vunpack.c.l.b16 %v1154
    %v10168 = vunpack.c.h.b16 %v1154
    %v10169 = vunpack.c.l.b16 %v1155
    %v10170 = vunpack.c.h.b16 %v1155
    %v10171 = vunpack.c.l.b16 %v1156
    %v10172 = vunpack.c.l.b16 %v1157
    %v10173 = vunpack.c.h.b16 %v1157
    %v10174 = vunpack.c.l.b16 %v1158
    %v10175 = vunpack.c.h.b16 %v1158
    %v10176 = vunpack.c.l.b16 %v1159
    %v10177 = vunpack.c.h.b16 %v1159
    %v10178 = vunpack.c.l.b16 %v1160
    %v10179 = vunpack.c.h.b16 %v1160
    %v10180 = vunpack.c.l.b16 %v1161
    %v10181 = vunpack.c.l.b16 %v1162
    %v10182 = vunpack.c.h.b16 %v1162
    %v10183 = vunpack.c.l.b16 %v1163
    %v10184 = vunpack.c.h.b16 %v1163
    %v10185 = vunpack.c.l.b16 %v1164
    %v10186 = vunpack.c.h.b16 %v1164
    %v10187 = vunpack.c.l.b16 %v1165
    %v10188 = vunpack.c.h.b16 %v1165
    %v10189 = vunpack.c.l.b16 %v1166
    %v10190 = vunpack.c.l.b16 %v1167
    %v10191 = vunpack.c.h.b16 %v1167
    %v10192 = vunpack.c.l.b16 %v1168
    %v10193 = vunpack.c.h.b16 %v1168
    %v10194 = vunpack.c.l.b16 %v1169
    %v10195 = vunpack.c.h.b16 %v1169
    %v10196 = vunpack.c.l.b16 %v1170
    %v10197 = vunpack.c.h.b16 %v1170
    %v10198 = vunpack.c.l.b16 %v1171
    %v10199 = vunpack.c.l.b16 %v1172
    %v10200 = vunpack.c.h.b16 %v1172
    %v10201 = vunpack.c.l.b16 %v1173
    %v10202 = vunpack.c.h.b16 %v1173
    %v10203 = vunpack.c.l.b16 %v1174
    %v10204 = vunpack.c.h.b16 %v1174
    %v10205 = vunpack.c.l.b16 %v1175
    %v10206 = vunpack.c.h.b16 %v1175
    %v10207 = vunpack.c.l.b16 %v1176
    %v10208 = vunpack.c.l.b16 %v1177
    %v10209 = vunpack.c.h.b16 %v1177
    %v10210 = vunpack.c.l.b16 %v1178
    %v10211 = vunpack.c.h.b16 %v1178
    %v10212 = vunpack.c.l.b16 %v1179
    %v10213 = vunpack.c.h.b16 %v1179
    %v10214 = vunpack.c.l.b16 %v1180
    %v10215 = vunpack.c.h.b16 %v1180
    %v10216 = vunpack.c.l.b16 %v1181
    %v10217 = vunpack.c.l.b16 %v1182
    %v10218 = vunpack.c.h.b16 %v1182
    %v10219 = vunpack.c.l.b16 %v1183
    %v10220 = vunpack.c.h.b16 %v1183
    %v10221 = vunpack.c.l.b16 %v1184
    %v10222 = vunpack.c.h.b16 %v1184
    %v10223 = vunpack.c.l.b16 %v1185
    %v10224 = vunpack.c.h.b16 %v1185
    %v10225 = vunpack.c.l.b16 %v1186
    %v10226 = vunpack.c.l.b16 %v1187
    %v10227 = vunpack.c.h.b16 %v1187
    %v10228 = vunpack.c.l.b16 %v1188
    %v10229 = vunpack.c.h.b16 %v1188
    %v10230 = vunpack.c.l.b16 %v1189
    %v10231 = vunpack.c.h.b16 %v1189
    %v10232 = vunpack.c.l.b16 %v1190
    %v10233 = vunpack.c.h.b16 %v1190
    %v10234 = vunpack.c.l.b16 %v1191
    %v10235 = vpack.c.b16 %v9956, %v9947
    %v10236 = vpack.c.b16 %v9957, %v9948
    %v10237 = vpack.c.b16 %v9958, %v9949
    %v10238 = vpack.c.b16 %v9959, %v9950
    %v10239 = vpack.c.b16 %v9960, %v9951
    %v10240 = vpack.c.b16 %v9961, %v9952
    %v10241 = vpack.c.b16 %v9962, %v9953
    %v10242 = vpack.c.b16 %v9963, %v9954
    %v10243 = vpack.c.b16 %v9964, %v9955
    %v10244 = vpack.c.b16 %v9974, %v9965
    %v10245 = vpack.c.b16 %v9975, %v9966
    %v10246 = vpack.c.b16 %v9976, %v9967
    %v10247 = vpack.c.b16 %v9977, %v9968
    %v10248 = vpack.c.b16 %v9978, %v9969
    %v10249 = vpack.c.b16 %v9979, %v9970
    %v10250 = vpack.c.b16 %v9980, %v9971
    %v10251 = vpack.c.b16 %v9981, %v9972
    %v10252 = vpack.c.b16 %v9982, %v9973
    %v10253 = vpack.c.b16 %v9992, %v9983
    %v10254 = vpack.c.b16 %v9993, %v9984
    %v10255 = vpack.c.b16 %v9994, %v9985
    %v10256 = vpack.c.b16 %v9995, %v9986
    %v10257 = vpack.c.b16 %v9996, %v9987
    %v10258 = vpack.c.b16 %v9997, %v9988
    %v10259 = vpack.c.b16 %v9998, %v9989
    %v10260 = vpack.c.b16 %v9999, %v9990
    %v10261 = vpack.c.b16 %v10000, %v9991
    %v10262 = vpack.c.b16 %v10010, %v10001
    %v10263 = vpack.c.b16 %v10011, %v10002
    %v10264 = vpack.c.b16 %v10012, %v10003
    %v10265 = vpack.c.b16 %v10013, %v10004
    %v10266 = vpack.c.b16 %v10014, %v10005
    %v10267 = vpack.c.b16 %v10015, %v10006
    %v10268 = vpack.c.b16 %v10016, %v10007
    %v10269 = vpack.c.b16 %v10017, %v10008
    %v10270 = vpack.c.b16 %v10018, %v10009
    %v10271 = vpack.c.b16 %v10028, %v10019
    %v10272 = vpack.c.b16 %v10029, %v10020
    %v10273 = vpack.c.b16 %v10030, %v10021
    %v10274 = vpack.c.b16 %v10031, %v10022
    %v10275 = vpack.c.b16 %v10032, %v10023
    %v10276 = vpack.c.b16 %v10033, %v10024
    %v10277 = vpack.c.b16 %v10034, %v10025
    %v10278 = vpack.c.b16 %v10035, %v10026
    %v10279 = vpack.c.b16 %v10036, %v10027
    %v10280 = vpack.c.b16 %v10046, %v10037
    %v10281 = vpack.c.b16 %v10047, %v10038
    %v10282 = vpack.c.b16 %v10048, %v10039
    %v10283 = vpack.c.b16 %v10049, %v10040
    %v10284 = vpack.c.b16 %v10050, %v10041
    %v10285 = vpack.c.b16 %v10051, %v10042
    %v10286 = vpack.c.b16 %v10052, %v10043
    %v10287 = vpack.c.b16 %v10053, %v10044
    %v10288 = vpack.c.b16 %v10054, %v10045
    %v10289 = vpack.c.b16 %v10064, %v10055
    %v10290 = vpack.c.b16 %v10065, %v10056
    %v10291 = vpack.c.b16 %v10066, %v10057
    %v10292 = vpack.c.b16 %v10067, %v10058
    %v10293 = vpack.c.b16 %v10068, %v10059
    %v10294 = vpack.c.b16 %v10069, %v10060
    %v10295 = vpack.c.b16 %v10070, %v10061
    %v10296 = vpack.c.b16 %v10071, %v10062
    %v10297 = vpack.c.b16 %v10072, %v10063
    %v10298 = vpack.c.b16 %v10082, %v10073
    %v10299 = vpack.c.b16 %v10083, %v10074
    %v10300 = vpack.c.b16 %v10084, %v10075
    %v10301 = vpack.c.b16 %v10085, %v10076
    %v10302 = vpack.c.b16 %v10086, %v10077
    %v10303 = vpack.c.b16 %v10087, %v10078
    %v10304 = vpack.c.b16 %v10088, %v10079
    %v10305 = vpack.c.b16 %v10089, %v10080
    %v10306 = vpack.c.b16 %v10090, %v10081
    %v10307 = vpack.c.b16 %v10100, %v10091
    %v10308 = vpack.c.b16 %v10101, %v10092
    %v10309 = vpack.c.b16 %v10102, %v10093
    %v10310 = vpack.c.b16 %v10103, %v10094
    %v10311 = vpack.c.b16 %v10104, %v10095
    %v10312 = vpack.c.b16 %v10105, %v10096
    %v10313 = vpack.c.b16 %v10106, %v10097
    %v10314 = vpack.c.b16 %v10107, %v10098
    %v10315 = vpack.c.b16 %v10108, %v10099
    %v10316 = vpack.c.b16 %v10118, %v10109
    %v10317 = vpack.c.b16 %v10119, %v10110
    %v10318 = vpack.c.b16 %v10120, %v10111
    %v10319 = vpack.c.b16 %v10121, %v10112
    %v10320 = vpack.c.b16 %v10122, %v10113
    %v10321 = vpack.c.b16 %v10123, %v10114
    %v10322 = vpack.c.b16 %v10124, %v10115
    %v10323 = vpack.c.b16 %v10125, %v10116
    %v10324 = vpack.c.b16 %v10126, %v10117
    %v10325 = vpack.c.b16 %v10136, %v10127
    %v10326 = vpack.c.b16 %v10137, %v10128
    %v10327 = vpack.c.b16 %v10138, %v10129
    %v10328 = vpack.c.b16 %v10139, %v10130
    %v10329 = vpack.c.b16 %v10140, %v10131
    %v10330 = vpack.c.b16 %v10141, %v10132
    %v10331 = vpack.c.b16 %v10142, %v10133
    %v10332 = vpack.c.b16 %v10143, %v10134
    %v10333 = vpack.c.b16 %v10144, %v10135
    %v10334 = vpack.c.b16 %v10154, %v10145
    %v10335 = vpack.c.b16 %v10155, %v10146
    %v10336 = vpack.c.b16 %v10156, %v10147
    %v10337 = vpack.c.b16 %v10157, %v10148
    %v10338 = vpack.c.b16 %v10158, %v10149
    %v10339 = vpack.c.b16 %v10159, %v10150
    %v10340 = vpack.c.b16 %v10160, %v10151
    %v10341 = vpack.c.b16 %v10161, %v10152
    %v10342 = vpack.c.b16 %v10162, %v10153
    %v10343 = vpack.c.b16 %v10172, %v10163
    %v10344 = vpack.c.b16 %v10173, %v10164
    %v10345 = vpack.c.b16 %v10174, %v10165
    %v10346 = vpack.c.b16 %v10175, %v10166
    %v10347 = vpack.c.b16 %v10176, %v10167
    %v10348 = vpack.c.b16 %v10177, %v10168
    %v10349 = vpack.c.b16 %v10178, %v10169
    %v10350 = vpack.c.b16 %v10179, %v10170
    %v10351 = vpack.c.b16 %v10180, %v10171
    %v10352 = vpack.c.b16 %v10190, %v10181
    %v10353 = vpack.c.b16 %v10191, %v10182
    %v10354 = vpack.c.b16 %v10192, %v10183
    %v10355 = vpack.c.b16 %v10193, %v10184
    %v10356 = vpack.c.b16 %v10194, %v10185
    %v10357 = vpack.c.b16 %v10195, %v10186
    %v10358 = vpack.c.b16 %v10196, %v10187
    %v10359 = vpack.c.b16 %v10197, %v10188
    %v10360 = vpack.c.b16 %v10198, %v10189
    %v10361 = vpack.c.b16 %v10208, %v10199
    %v10362 = vpack.c.b16 %v10209, %v10200
    %v10363 = vpack.c.b16 %v10210, %v10201
    %v10364 = vpack.c.b16 %v10211, %v10202
    %v10365 = vpack.c.b16 %v10212, %v10203
    %v10366 = vpack.c.b16 %v10213, %v10204
    %v10367 = vpack.c.b16 %v10214, %v10205
    %v10368 = vpack.c.b16 %v10215, %v10206
    %v10369 = vpack.c.b16 %v10216, %v10207
    %v10370 = vpack.c.b16 %v10226, %v10217
    %v10371 = vpack.c.b16 %v10227, %v10218
    %v10372 = vpack.c.b16 %v10228, %v10219
    %v10373 = vpack.c.b16 %v10229, %v10220
    %v10374 = vpack.c.b16 %v10230, %v10221
    %v10375 = vpack.c.b16 %v10231, %v10222
    %v10376 = vpack.c.b16 %v10232, %v10223
    %v10377 = vpack.c.b16 %v10233, %v10224
    %v10378 = vpack.c.b16 %v10234, %v10225
    %v10508 = vsel %vm6505, %v10243, 0
    %v10511 = vsel %vm6505, %v10252, 0
    %v10514 = vsel %vm6505, %v10261, 0
    %v10517 = vsel %vm6505, %v10270, 0
    %v10520 = vsel %vm6505, %v10279, 0
    %v10523 = vsel %vm6505, %v10288, 0
    %v10526 = vsel %vm6505, %v10297, 0
    %v10529 = vsel %vm6505, %v10306, 0
    %v10532 = vsel %vm6505, %v10315, 0
    %v10535 = vsel %vm6505, %v10324, 0
    %v10538 = vsel %vm6505, %v10333, 0
    %v10541 = vsel %vm6505, %v10342, 0
    %v10544 = vsel %vm6505, %v10351, 0
    %v10547 = vsel %vm6505, %v10360, 0
    %v10550 = vsel %vm6505, %v10369, 0
    %v10553 = vsel %vm6505, %v10378, 0
    %v10556 = vand.u32 %v9786, %v2715
    %10558 = vmatprep.subr.bf16.mxu0 0
    %10559 = vmatpush1.bf16.msra.mxu0 %v9722
    %10560 = vmatprep.subr.bf16.mxu0 0
    %10561 = vmatpush1.bf16.msra.mxu0 %v9723
    %10562 = vmatprep.subr.bf16.mxu0 0
    %10563 = vmatpush1.bf16.msra.mxu0 %v9724
    %10564 = vmatprep.subr.bf16.mxu0 0
    %10565 = vmatpush1.bf16.msra.mxu0 %v9725
    %10566 = vmatprep.subr.bf16.mxu0 0
    %10567 = vmatpush1.bf16.msra.mxu0 %v9726
    %10568 = vmatprep.subr.bf16.mxu0 0
    %10569 = vmatpush1.bf16.msra.mxu0 %v9727
    %10570 = vmatprep.subr.bf16.mxu0 0
    %10571 = vmatpush1.bf16.msra.mxu0 %v9728
    %10572 = vmatprep.subr.bf16.mxu0 0
    %10573 = vmatpush1.bf16.msra.mxu0 %v9729
    %10574 = vmatprep.subr.bf16.mxu0 0
    %10575 = vmatpush1.bf16.msra.mxu0 %v9730
    %10576 = vmatprep.subr.bf16.mxu0 0
    %10577 = vmatpush1.bf16.msra.mxu0 %v9731
    %10578 = vmatprep.subr.bf16.mxu0 0
    %10579 = vmatpush1.bf16.msra.mxu0 %v9732
    %10580 = vmatprep.subr.bf16.mxu0 0
    %10581 = vmatpush1.bf16.msra.mxu0 %v9733
    %10582 = vmatprep.subr.bf16.mxu0 0
    %10583 = vmatpush1.bf16.msra.mxu0 %v9734
    %10584 = vmatprep.subr.bf16.mxu0 0
    %10585 = vmatpush1.bf16.msra.mxu0 %v9735
    %10586 = vmatprep.subr.bf16.mxu0 0
    %10587 = vmatpush1.bf16.msra.mxu0 %v9736
    %10588 = vmatprep.subr.bf16.mxu0 0
    %10589 = vmatpush1.bf16.msra.mxu0 %v9737
    %10590 = vmatprep.mubr.bf16.mxu0 %v10236
    %10591 = vmatmul.mubr.bf16.gmra.mrb[0].mxu0 %v10235
    %v10592 = vpop.f32.mrb[0].mxu0
    %v10593 = vadd.f32 0.0, %v10592
    %v10594 = vpop.f32.mrb[0].mxu0
    %v10595 = vpop.f32.mrb[0].mxu0
    %v10596 = vadd.f32 0.0, %v10595
    %v10597 = vpop.f32.mrb[0].mxu0
    %10598 = vmatprep.mubr.bf16.mxu0 %v10245
    %10599 = vmatmul.mubr.bf16.gmra.mrb[0].mxu0 %v10244
    %v10600 = vpop.f32.mrb[0].mxu0
    %v10601 = vadd.f32 0.0, %v10600
    %v10602 = vpop.f32.mrb[0].mxu0
    %v10603 = vpop.f32.mrb[0].mxu0
    %v10604 = vadd.f32 0.0, %v10603
    %v10605 = vpop.f32.mrb[0].mxu0
    %10606 = vmatprep.mubr.bf16.mxu0 %v10254
    %10607 = vmatmul.mubr.bf16.gmra.mrb[0].mxu0 %v10253
    %v10608 = vpop.f32.mrb[0].mxu0
    %v10609 = vadd.f32 0.0, %v10608
    %v10610 = vpop.f32.mrb[0].mxu0
    %v10611 = vpop.f32.mrb[0].mxu0
    %v10612 = vadd.f32 0.0, %v10611
    %v10613 = vpop.f32.mrb[0].mxu0
    %10614 = vmatprep.mubr.bf16.mxu0 %v10263
    %10615 = vmatmul.mubr.bf16.gmra.mrb[0].mxu0 %v10262
    %v10616 = vpop.f32.mrb[0].mxu0
    %v10617 = vadd.f32 0.0, %v10616
    %v10618 = vpop.f32.mrb[0].mxu0
    %v10619 = vpop.f32.mrb[0].mxu0
    %v10620 = vadd.f32 0.0, %v10619
    %v10621 = vpop.f32.mrb[0].mxu0
    %10622 = vmatprep.mubr.bf16.mxu0 %v10272
    %10623 = vmatmul.mubr.bf16.gmra.mrb[0].mxu0 %v10271
    %v10624 = vpop.f32.mrb[0].mxu0
    %v10625 = vadd.f32 0.0, %v10624
    %v10626 = vpop.f32.mrb[0].mxu0
    %v10627 = vpop.f32.mrb[0].mxu0
    %v10628 = vadd.f32 0.0, %v10627
    %v10629 = vpop.f32.mrb[0].mxu0
    %10630 = vmatprep.mubr.bf16.mxu0 %v10281
    %10631 = vmatmul.mubr.bf16.gmra.mrb[0].mxu0 %v10280
    %v10632 = vpop.f32.mrb[0].mxu0
    %v10633 = vadd.f32 0.0, %v10632
    %v10634 = vpop.f32.mrb[0].mxu0
    %v10635 = vpop.f32.mrb[0].mxu0
    %v10636 = vadd.f32 0.0, %v10635
    %v10637 = vpop.f32.mrb[0].mxu0
    %10638 = vmatprep.mubr.bf16.mxu0 %v10290
    %10639 = vmatmul.mubr.bf16.gmra.mrb[0].mxu0 %v10289
    %v10640 = vpop.f32.mrb[0].mxu0
    %v10641 = vadd.f32 0.0, %v10640
    %v10642 = vpop.f32.mrb[0].mxu0
    %v10643 = vpop.f32.mrb[0].mxu0
    %v10644 = vadd.f32 0.0, %v10643
    %v10645 = vpop.f32.mrb[0].mxu0
    %10646 = vmatprep.mubr.bf16.mxu0 %v10299
    %10647 = vmatmul.mubr.bf16.gmra.mrb[0].mxu0 %v10298
    %v10648 = vpop.f32.mrb[0].mxu0
    %v10649 = vadd.f32 0.0, %v10648
    %v10650 = vpop.f32.mrb[0].mxu0
    %v10651 = vpop.f32.mrb[0].mxu0
    %v10652 = vadd.f32 0.0, %v10651
    %v10653 = vpop.f32.mrb[0].mxu0
    %10654 = vmatprep.mubr.bf16.mxu0 %v10308
    %10655 = vmatmul.mubr.bf16.gmra.mrb[0].mxu0 %v10307
    %v10656 = vpop.f32.mrb[0].mxu0
    %v10657 = vadd.f32 0.0, %v10656
    %v10658 = vpop.f32.mrb[0].mxu0
    %v10659 = vpop.f32.mrb[0].mxu0
    %v10660 = vadd.f32 0.0, %v10659
    %v10661 = vpop.f32.mrb[0].mxu0
    %10662 = vmatprep.mubr.bf16.mxu0 %v10317
    %10663 = vmatmul.mubr.bf16.gmra.mrb[0].mxu0 %v10316
    %v10664 = vpop.f32.mrb[0].mxu0
    %v10665 = vadd.f32 0.0, %v10664
    %v10666 = vpop.f32.mrb[0].mxu0
    %v10667 = vpop.f32.mrb[0].mxu0
    %v10668 = vadd.f32 0.0, %v10667
    %v10669 = vpop.f32.mrb[0].mxu0
    %10670 = vmatprep.mubr.bf16.mxu0 %v10326
    %10671 = vmatmul.mubr.bf16.gmra.mrb[0].mxu0 %v10325
    %v10672 = vpop.f32.mrb[0].mxu0
    %v10673 = vadd.f32 0.0, %v10672
    %v10674 = vpop.f32.mrb[0].mxu0
    %v10675 = vpop.f32.mrb[0].mxu0
    %v10676 = vadd.f32 0.0, %v10675
    %v10677 = vpop.f32.mrb[0].mxu0
    %10678 = vmatprep.mubr.bf16.mxu0 %v10335
    %10679 = vmatmul.mubr.bf16.gmra.mrb[0].mxu0 %v10334
    %v10680 = vpop.f32.mrb[0].mxu0
    %v10681 = vadd.f32 0.0, %v10680
    %v10682 = vpop.f32.mrb[0].mxu0
    %v10683 = vpop.f32.mrb[0].mxu0
    %v10684 = vadd.f32 0.0, %v10683
    %v10685 = vpop.f32.mrb[0].mxu0
    %10686 = vmatprep.mubr.bf16.mxu0 %v10344
    %10687 = vmatmul.mubr.bf16.gmra.mrb[0].mxu0 %v10343
    %v10688 = vpop.f32.mrb[0].mxu0
    %v10689 = vadd.f32 0.0, %v10688
    %v10690 = vpop.f32.mrb[0].mxu0
    %v10691 = vpop.f32.mrb[0].mxu0
    %v10692 = vadd.f32 0.0, %v10691
    %v10693 = vpop.f32.mrb[0].mxu0
    %10694 = vmatprep.mubr.bf16.mxu0 %v10353
    %10695 = vmatmul.mubr.bf16.gmra.mrb[0].mxu0 %v10352
    %v10696 = vpop.f32.mrb[0].mxu0
    %v10697 = vadd.f32 0.0, %v10696
    %v10698 = vpop.f32.mrb[0].mxu0
    %v10699 = vpop.f32.mrb[0].mxu0
    %v10700 = vadd.f32 0.0, %v10699
    %v10701 = vpop.f32.mrb[0].mxu0
    %10702 = vmatprep.mubr.bf16.mxu0 %v10362
    %10703 = vmatmul.mubr.bf16.gmra.mrb[0].mxu0 %v10361
    %v10704 = vpop.f32.mrb[0].mxu0
    %v10705 = vadd.f32 0.0, %v10704
    %v10706 = vpop.f32.mrb[0].mxu0
    %v10707 = vpop.f32.mrb[0].mxu0
    %v10708 = vadd.f32 0.0, %v10707
    %v10709 = vpop.f32.mrb[0].mxu0
    %10710 = vmatprep.mubr.bf16.mxu0 %v10371
    %10711 = vmatmul.mubr.bf16.gmra.mrb[0].mxu0 %v10370
    %v10712 = vpop.f32.mrb[0].mxu0
    %v10713 = vadd.f32 0.0, %v10712
    %v10714 = vpop.f32.mrb[0].mxu0
    %v10715 = vpop.f32.mrb[0].mxu0
    %v10716 = vadd.f32 0.0, %v10715
    %v10717 = vpop.f32.mrb[0].mxu0
    %10718 = vdwg.mxu0
    %10719 = vmatprep.subr.bf16.mxu0 0
    %10720 = vmatpush1.bf16.msra.mxu0 %v9738
    %10721 = vmatprep.subr.bf16.mxu0 0
    %10722 = vmatpush1.bf16.msra.mxu0 %v9739
    %10723 = vmatprep.subr.bf16.mxu0 0
    %10724 = vmatpush1.bf16.msra.mxu0 %v9740
    %10725 = vmatprep.subr.bf16.mxu0 0
    %10726 = vmatpush1.bf16.msra.mxu0 %v9741
    %10727 = vmatprep.subr.bf16.mxu0 0
    %10728 = vmatpush1.bf16.msra.mxu0 %v9742
    %10729 = vmatprep.subr.bf16.mxu0 0
    %10730 = vmatpush1.bf16.msra.mxu0 %v9743
    %10731 = vmatprep.subr.bf16.mxu0 0
    %10732 = vmatpush1.bf16.msra.mxu0 %v9744
    %10733 = vmatprep.subr.bf16.mxu0 0
    %10734 = vmatpush1.bf16.msra.mxu0 %v9745
    %10735 = vmatprep.subr.bf16.mxu0 0
    %10736 = vmatpush1.bf16.msra.mxu0 %v9746
    %10737 = vmatprep.subr.bf16.mxu0 0
    %10738 = vmatpush1.bf16.msra.mxu0 %v9747
    %10739 = vmatprep.subr.bf16.mxu0 0
    %10740 = vmatpush1.bf16.msra.mxu0 %v9748
    %10741 = vmatprep.subr.bf16.mxu0 0
    %10742 = vmatpush1.bf16.msra.mxu0 %v9749
    %10743 = vmatprep.subr.bf16.mxu0 0
    %10744 = vmatpush1.bf16.msra.mxu0 %v9750
    %10745 = vmatprep.subr.bf16.mxu0 0
    %10746 = vmatpush1.bf16.msra.mxu0 %v9751
    %10747 = vmatprep.subr.bf16.mxu0 0
    %10748 = vmatpush1.bf16.msra.mxu0 %v9752
    %10749 = vmatprep.subr.bf16.mxu0 0
    %10750 = vmatpush1.bf16.msra.mxu0 %v9753
    %10751 = vmatprep.mubr.bf16.mxu0 %v10238
    %10752 = vmatmul.mubr.bf16.gmra.mrb[0].mxu0 %v10237
    %v10753 = vpop.f32.mrb[0].mxu0
    %v10754 = vadd.f32 %v10593, %v10753
    %v10755 = vpop.f32.mrb[0].mxu0
    %v10756 = vpop.f32.mrb[0].mxu0
    %v10757 = vadd.f32 %v10596, %v10756
    %v10758 = vpop.f32.mrb[0].mxu0
    %10759 = vmatprep.mubr.bf16.mxu0 %v10247
    %10760 = vmatmul.mubr.bf16.gmra.mrb[0].mxu0 %v10246
    %v10761 = vpop.f32.mrb[0].mxu0
    %v10762 = vadd.f32 %v10601, %v10761
    %v10763 = vpop.f32.mrb[0].mxu0
    %v10764 = vpop.f32.mrb[0].mxu0
    %v10765 = vadd.f32 %v10604, %v10764
    %v10766 = vpop.f32.mrb[0].mxu0
    %10767 = vmatprep.mubr.bf16.mxu0 %v10256
    %10768 = vmatmul.mubr.bf16.gmra.mrb[0].mxu0 %v10255
    %v10769 = vpop.f32.mrb[0].mxu0
    %v10770 = vadd.f32 %v10609, %v10769
    %v10771 = vpop.f32.mrb[0].mxu0
    %v10772 = vpop.f32.mrb[0].mxu0
    %v10773 = vadd.f32 %v10612, %v10772
    %v10774 = vpop.f32.mrb[0].mxu0
    %10775 = vmatprep.mubr.bf16.mxu0 %v10265
    %10776 = vmatmul.mubr.bf16.gmra.mrb[0].mxu0 %v10264
    %v10777 = vpop.f32.mrb[0].mxu0
    %v10778 = vadd.f32 %v10617, %v10777
    %v10779 = vpop.f32.mrb[0].mxu0
    %v10780 = vpop.f32.mrb[0].mxu0
    %v10781 = vadd.f32 %v10620, %v10780
    %v10782 = vpop.f32.mrb[0].mxu0
    %10783 = vmatprep.mubr.bf16.mxu0 %v10274
    %10784 = vmatmul.mubr.bf16.gmra.mrb[0].mxu0 %v10273
    %v10785 = vpop.f32.mrb[0].mxu0
    %v10786 = vadd.f32 %v10625, %v10785
    %v10787 = vpop.f32.mrb[0].mxu0
    %v10788 = vpop.f32.mrb[0].mxu0
    %v10789 = vadd.f32 %v10628, %v10788
    %v10790 = vpop.f32.mrb[0].mxu0
    %10791 = vmatprep.mubr.bf16.mxu0 %v10283
    %10792 = vmatmul.mubr.bf16.gmra.mrb[0].mxu0 %v10282
    %v10793 = vpop.f32.mrb[0].mxu0
    %v10794 = vadd.f32 %v10633, %v10793
    %v10795 = vpop.f32.mrb[0].mxu0
    %v10796 = vpop.f32.mrb[0].mxu0
    %v10797 = vadd.f32 %v10636, %v10796
    %v10798 = vpop.f32.mrb[0].mxu0
    %10799 = vmatprep.mubr.bf16.mxu0 %v10292
    %10800 = vmatmul.mubr.bf16.gmra.mrb[0].mxu0 %v10291
    %v10801 = vpop.f32.mrb[0].mxu0
    %v10802 = vadd.f32 %v10641, %v10801
    %v10803 = vpop.f32.mrb[0].mxu0
    %v10804 = vpop.f32.mrb[0].mxu0
    %v10805 = vadd.f32 %v10644, %v10804
    %v10806 = vpop.f32.mrb[0].mxu0
    %10807 = vmatprep.mubr.bf16.mxu0 %v10301
    %10808 = vmatmul.mubr.bf16.gmra.mrb[0].mxu0 %v10300
    %v10809 = vpop.f32.mrb[0].mxu0
    %v10810 = vadd.f32 %v10649, %v10809
    %v10811 = vpop.f32.mrb[0].mxu0
    %v10812 = vpop.f32.mrb[0].mxu0
    %v10813 = vadd.f32 %v10652, %v10812
    %v10814 = vpop.f32.mrb[0].mxu0
    %10815 = vmatprep.mubr.bf16.mxu0 %v10310
    %10816 = vmatmul.mubr.bf16.gmra.mrb[0].mxu0 %v10309
    %v10817 = vpop.f32.mrb[0].mxu0
    %v10818 = vadd.f32 %v10657, %v10817
    %v10819 = vpop.f32.mrb[0].mxu0
    %v10820 = vpop.f32.mrb[0].mxu0
    %v10821 = vadd.f32 %v10660, %v10820
    %v10822 = vpop.f32.mrb[0].mxu0
    %10823 = vmatprep.mubr.bf16.mxu0 %v10319
    %10824 = vmatmul.mubr.bf16.gmra.mrb[0].mxu0 %v10318
    %v10825 = vpop.f32.mrb[0].mxu0
    %v10826 = vadd.f32 %v10665, %v10825
    %v10827 = vpop.f32.mrb[0].mxu0
    %v10828 = vpop.f32.mrb[0].mxu0
    %v10829 = vadd.f32 %v10668, %v10828
    %v10830 = vpop.f32.mrb[0].mxu0
    %10831 = vmatprep.mubr.bf16.mxu0 %v10328
    %10832 = vmatmul.mubr.bf16.gmra.mrb[0].mxu0 %v10327
    %v10833 = vpop.f32.mrb[0].mxu0
    %v10834 = vadd.f32 %v10673, %v10833
    %v10835 = vpop.f32.mrb[0].mxu0
    %v10836 = vpop.f32.mrb[0].mxu0
    %v10837 = vadd.f32 %v10676, %v10836
    %v10838 = vpop.f32.mrb[0].mxu0
    %10839 = vmatprep.mubr.bf16.mxu0 %v10337
    %10840 = vmatmul.mubr.bf16.gmra.mrb[0].mxu0 %v10336
    %v10841 = vpop.f32.mrb[0].mxu0
    %v10842 = vadd.f32 %v10681, %v10841
    %v10843 = vpop.f32.mrb[0].mxu0
    %v10844 = vpop.f32.mrb[0].mxu0
    %v10845 = vadd.f32 %v10684, %v10844
    %v10846 = vpop.f32.mrb[0].mxu0
    %10847 = vmatprep.mubr.bf16.mxu0 %v10346
    %10848 = vmatmul.mubr.bf16.gmra.mrb[0].mxu0 %v10345
    %v10849 = vpop.f32.mrb[0].mxu0
    %v10850 = vadd.f32 %v10689, %v10849
    %v10851 = vpop.f32.mrb[0].mxu0
    %v10852 = vpop.f32.mrb[0].mxu0
    %v10853 = vadd.f32 %v10692, %v10852
    %v10854 = vpop.f32.mrb[0].mxu0
    %10855 = vmatprep.mubr.bf16.mxu0 %v10355
    %10856 = vmatmul.mubr.bf16.gmra.mrb[0].mxu0 %v10354
    %v10857 = vpop.f32.mrb[0].mxu0
    %v10858 = vadd.f32 %v10697, %v10857
    %v10859 = vpop.f32.mrb[0].mxu0
    %v10860 = vpop.f32.mrb[0].mxu0
    %v10861 = vadd.f32 %v10700, %v10860
    %v10862 = vpop.f32.mrb[0].mxu0
    %10863 = vmatprep.mubr.bf16.mxu0 %v10364
    %10864 = vmatmul.mubr.bf16.gmra.mrb[0].mxu0 %v10363
    %v10865 = vpop.f32.mrb[0].mxu0
    %v10866 = vadd.f32 %v10705, %v10865
    %v10867 = vpop.f32.mrb[0].mxu0
    %v10868 = vpop.f32.mrb[0].mxu0
    %v10869 = vadd.f32 %v10708, %v10868
    %v10870 = vpop.f32.mrb[0].mxu0
    %10871 = vmatprep.mubr.bf16.mxu0 %v10373
    %10872 = vmatmul.mubr.bf16.gmra.mrb[0].mxu0 %v10372
    %v10873 = vpop.f32.mrb[0].mxu0
    %v10874 = vadd.f32 %v10713, %v10873
    %v10875 = vpop.f32.mrb[0].mxu0
    %v10876 = vpop.f32.mrb[0].mxu0
    %v10877 = vadd.f32 %v10716, %v10876
    %v10878 = vpop.f32.mrb[0].mxu0
    %10879 = vdwg.mxu0
    %10880 = vmatprep.subr.bf16.mxu0 0
    %10881 = vmatpush1.bf16.msra.mxu0 %v9754
    %10882 = vmatprep.subr.bf16.mxu0 0
    %10883 = vmatpush1.bf16.msra.mxu0 %v9755
    %10884 = vmatprep.subr.bf16.mxu0 0
    %10885 = vmatpush1.bf16.msra.mxu0 %v9756
    %10886 = vmatprep.subr.bf16.mxu0 0
    %10887 = vmatpush1.bf16.msra.mxu0 %v9757
    %10888 = vmatprep.subr.bf16.mxu0 0
    %10889 = vmatpush1.bf16.msra.mxu0 %v9758
    %10890 = vmatprep.subr.bf16.mxu0 0
    %10891 = vmatpush1.bf16.msra.mxu0 %v9759
    %10892 = vmatprep.subr.bf16.mxu0 0
    %10893 = vmatpush1.bf16.msra.mxu0 %v9760
    %10894 = vmatprep.subr.bf16.mxu0 0
    %10895 = vmatpush1.bf16.msra.mxu0 %v9761
    %10896 = vmatprep.subr.bf16.mxu0 0
    %10897 = vmatpush1.bf16.msra.mxu0 %v9762
    %10898 = vmatprep.subr.bf16.mxu0 0
    %10899 = vmatpush1.bf16.msra.mxu0 %v9763
    %10900 = vmatprep.subr.bf16.mxu0 0
    %10901 = vmatpush1.bf16.msra.mxu0 %v9764
    %10902 = vmatprep.subr.bf16.mxu0 0
    %10903 = vmatpush1.bf16.msra.mxu0 %v9765
    %10904 = vmatprep.subr.bf16.mxu0 0
    %10905 = vmatpush1.bf16.msra.mxu0 %v9766
    %10906 = vmatprep.subr.bf16.mxu0 0
    %10907 = vmatpush1.bf16.msra.mxu0 %v9767
    %10908 = vmatprep.subr.bf16.mxu0 0
    %10909 = vmatpush1.bf16.msra.mxu0 %v9768
    %10910 = vmatprep.subr.bf16.mxu0 0
    %10911 = vmatpush1.bf16.msra.mxu0 %v9769
    %10912 = vmatprep.mubr.bf16.mxu0 %v10240
    %10913 = vmatmul.mubr.bf16.gmra.mrb[0].mxu0 %v10239
    %v10914 = vpop.f32.mrb[0].mxu0
    %v10915 = vadd.f32 %v10754, %v10914
    %v10916 = vpop.f32.mrb[0].mxu0
    %v10917 = vpop.f32.mrb[0].mxu0
    %v10918 = vadd.f32 %v10757, %v10917
    %v10919 = vpop.f32.mrb[0].mxu0
    %10920 = vmatprep.mubr.bf16.mxu0 %v10249
    %10921 = vmatmul.mubr.bf16.gmra.mrb[0].mxu0 %v10248
    %v10922 = vpop.f32.mrb[0].mxu0
    %v10923 = vadd.f32 %v10762, %v10922
    %v10924 = vpop.f32.mrb[0].mxu0
    %v10925 = vpop.f32.mrb[0].mxu0
    %v10926 = vadd.f32 %v10765, %v10925
    %v10927 = vpop.f32.mrb[0].mxu0
    %10928 = vmatprep.mubr.bf16.mxu0 %v10258
    %10929 = vmatmul.mubr.bf16.gmra.mrb[0].mxu0 %v10257
    %v10930 = vpop.f32.mrb[0].mxu0
    %v10931 = vadd.f32 %v10770, %v10930
    %v10932 = vpop.f32.mrb[0].mxu0
    %v10933 = vpop.f32.mrb[0].mxu0
    %v10934 = vadd.f32 %v10773, %v10933
    %v10935 = vpop.f32.mrb[0].mxu0
    %10936 = vmatprep.mubr.bf16.mxu0 %v10267
    %10937 = vmatmul.mubr.bf16.gmra.mrb[0].mxu0 %v10266
    %v10938 = vpop.f32.mrb[0].mxu0
    %v10939 = vadd.f32 %v10778, %v10938
    %v10940 = vpop.f32.mrb[0].mxu0
    %v10941 = vpop.f32.mrb[0].mxu0
    %v10942 = vadd.f32 %v10781, %v10941
    %v10943 = vpop.f32.mrb[0].mxu0
    %10944 = vmatprep.mubr.bf16.mxu0 %v10276
    %10945 = vmatmul.mubr.bf16.gmra.mrb[0].mxu0 %v10275
    %v10946 = vpop.f32.mrb[0].mxu0
    %v10947 = vadd.f32 %v10786, %v10946
    %v10948 = vpop.f32.mrb[0].mxu0
    %v10949 = vpop.f32.mrb[0].mxu0
    %v10950 = vadd.f32 %v10789, %v10949
    %v10951 = vpop.f32.mrb[0].mxu0
    %10952 = vmatprep.mubr.bf16.mxu0 %v10285
    %10953 = vmatmul.mubr.bf16.gmra.mrb[0].mxu0 %v10284
    %v10954 = vpop.f32.mrb[0].mxu0
    %v10955 = vadd.f32 %v10794, %v10954
    %v10956 = vpop.f32.mrb[0].mxu0
    %v10957 = vpop.f32.mrb[0].mxu0
    %v10958 = vadd.f32 %v10797, %v10957
    %v10959 = vpop.f32.mrb[0].mxu0
    %10960 = vmatprep.mubr.bf16.mxu0 %v10294
    %10961 = vmatmul.mubr.bf16.gmra.mrb[0].mxu0 %v10293
    %v10962 = vpop.f32.mrb[0].mxu0
    %v10963 = vadd.f32 %v10802, %v10962
    %v10964 = vpop.f32.mrb[0].mxu0
    %v10965 = vpop.f32.mrb[0].mxu0
    %v10966 = vadd.f32 %v10805, %v10965
    %v10967 = vpop.f32.mrb[0].mxu0
    %10968 = vmatprep.mubr.bf16.mxu0 %v10303
    %10969 = vmatmul.mubr.bf16.gmra.mrb[0].mxu0 %v10302
    %v10970 = vpop.f32.mrb[0].mxu0
    %v10971 = vadd.f32 %v10810, %v10970
    %v10972 = vpop.f32.mrb[0].mxu0
    %v10973 = vpop.f32.mrb[0].mxu0
    %v10974 = vadd.f32 %v10813, %v10973
    %v10975 = vpop.f32.mrb[0].mxu0
    %10976 = vmatprep.mubr.bf16.mxu0 %v10312
    %10977 = vmatmul.mubr.bf16.gmra.mrb[0].mxu0 %v10311
    %v10978 = vpop.f32.mrb[0].mxu0
    %v10979 = vadd.f32 %v10818, %v10978
    %v10980 = vpop.f32.mrb[0].mxu0
    %v10981 = vpop.f32.mrb[0].mxu0
    %v10982 = vadd.f32 %v10821, %v10981
    %v10983 = vpop.f32.mrb[0].mxu0
    %10984 = vmatprep.mubr.bf16.mxu0 %v10321
    %10985 = vmatmul.mubr.bf16.gmra.mrb[0].mxu0 %v10320
    %v10986 = vpop.f32.mrb[0].mxu0
    %v10987 = vadd.f32 %v10826, %v10986
    %v10988 = vpop.f32.mrb[0].mxu0
    %v10989 = vpop.f32.mrb[0].mxu0
    %v10990 = vadd.f32 %v10829, %v10989
    %v10991 = vpop.f32.mrb[0].mxu0
    %10992 = vmatprep.mubr.bf16.mxu0 %v10330
    %10993 = vmatmul.mubr.bf16.gmra.mrb[0].mxu0 %v10329
    %v10994 = vpop.f32.mrb[0].mxu0
    %v10995 = vadd.f32 %v10834, %v10994
    %v10996 = vpop.f32.mrb[0].mxu0
    %v10997 = vpop.f32.mrb[0].mxu0
    %v10998 = vadd.f32 %v10837, %v10997
    %v10999 = vpop.f32.mrb[0].mxu0
    %11000 = vmatprep.mubr.bf16.mxu0 %v10339
    %11001 = vmatmul.mubr.bf16.gmra.mrb[0].mxu0 %v10338
    %v11002 = vpop.f32.mrb[0].mxu0
    %v11003 = vadd.f32 %v10842, %v11002
    %v11004 = vpop.f32.mrb[0].mxu0
    %v11005 = vpop.f32.mrb[0].mxu0
    %v11006 = vadd.f32 %v10845, %v11005
    %v11007 = vpop.f32.mrb[0].mxu0
    %11008 = vmatprep.mubr.bf16.mxu0 %v10348
    %11009 = vmatmul.mubr.bf16.gmra.mrb[0].mxu0 %v10347
    %v11010 = vpop.f32.mrb[0].mxu0
    %v11011 = vadd.f32 %v10850, %v11010
    %v11012 = vpop.f32.mrb[0].mxu0
    %v11013 = vpop.f32.mrb[0].mxu0
    %v11014 = vadd.f32 %v10853, %v11013
    %v11015 = vpop.f32.mrb[0].mxu0
    %11016 = vmatprep.mubr.bf16.mxu0 %v10357
    %11017 = vmatmul.mubr.bf16.gmra.mrb[0].mxu0 %v10356
    %v11018 = vpop.f32.mrb[0].mxu0
    %v11019 = vadd.f32 %v10858, %v11018
    %v11020 = vpop.f32.mrb[0].mxu0
    %v11021 = vpop.f32.mrb[0].mxu0
    %v11022 = vadd.f32 %v10861, %v11021
    %v11023 = vpop.f32.mrb[0].mxu0
    %11024 = vmatprep.mubr.bf16.mxu0 %v10366
    %11025 = vmatmul.mubr.bf16.gmra.mrb[0].mxu0 %v10365
    %v11026 = vpop.f32.mrb[0].mxu0
    %v11027 = vadd.f32 %v10866, %v11026
    %v11028 = vpop.f32.mrb[0].mxu0
    %v11029 = vpop.f32.mrb[0].mxu0
    %v11030 = vadd.f32 %v10869, %v11029
    %v11031 = vpop.f32.mrb[0].mxu0
    %11032 = vmatprep.mubr.bf16.mxu0 %v10375
    %11033 = vmatmul.mubr.bf16.gmra.mrb[0].mxu0 %v10374
    %v11034 = vpop.f32.mrb[0].mxu0
    %v11035 = vadd.f32 %v10874, %v11034
    %v11036 = vpop.f32.mrb[0].mxu0
    %v11037 = vpop.f32.mrb[0].mxu0
    %v11038 = vadd.f32 %v10877, %v11037
    %v11039 = vpop.f32.mrb[0].mxu0
    %11040 = vdwg.mxu0
    %11041 = vmatprep.subr.bf16.mxu0 0
    %11042 = vmatpush1.bf16.msra.mxu0 %v9770
    %11043 = vmatprep.subr.bf16.mxu0 0
    %11044 = vmatpush1.bf16.msra.mxu0 %v9771
    %11045 = vmatprep.subr.bf16.mxu0 0
    %11046 = vmatpush1.bf16.msra.mxu0 %v9772
    %11047 = vmatprep.subr.bf16.mxu0 0
    %11048 = vmatpush1.bf16.msra.mxu0 %v9773
    %11049 = vmatprep.subr.bf16.mxu0 0
    %11050 = vmatpush1.bf16.msra.mxu0 %v9774
    %11051 = vmatprep.subr.bf16.mxu0 0
    %11052 = vmatpush1.bf16.msra.mxu0 %v9775
    %11053 = vmatprep.subr.bf16.mxu0 0
    %11054 = vmatpush1.bf16.msra.mxu0 %v9776
    %11055 = vmatprep.subr.bf16.mxu0 0
    %11056 = vmatpush1.bf16.msra.mxu0 %v9777
    %11057 = vmatprep.subr.bf16.mxu0 0
    %11058 = vmatpush1.bf16.msra.mxu0 %v9778
    %11059 = vmatprep.subr.bf16.mxu0 0
    %11060 = vmatpush1.bf16.msra.mxu0 %v9779
    %11061 = vmatprep.subr.bf16.mxu0 0
    %11062 = vmatpush1.bf16.msra.mxu0 %v9780
    %11063 = vmatprep.subr.bf16.mxu0 0
    %11064 = vmatpush1.bf16.msra.mxu0 %v9781
    %11065 = vmatprep.subr.bf16.mxu0 0
    %11066 = vmatpush1.bf16.msra.mxu0 %v9782
    %11067 = vmatprep.subr.bf16.mxu0 0
    %11068 = vmatpush1.bf16.msra.mxu0 %v9783
    %11069 = vmatprep.subr.bf16.mxu0 0
    %11070 = vmatpush1.bf16.msra.mxu0 %v9784
    %11071 = vmatprep.subr.bf16.mxu0 0
    %11072 = vmatpush1.bf16.msra.mxu0 %v9785
    %11073 = vmatprep.mubr.bf16.mxu0 %v10242
    %11074 = vmatmul.mubr.bf16.gmra.mrb[0].mxu0 %v10241
    %v11075 = vpop.f32.mrb[0].mxu0
    %v11076 = vadd.f32 %v10915, %v11075
    %v11077 = vpop.f32.mrb[0].mxu0
    %v11078 = vpop.f32.mrb[0].mxu0
    %v11079 = vadd.f32 %v10918, %v11078
    %v11080 = vpop.f32.mrb[0].mxu0
    %11081 = vmatprep.mubr.bf16.mxu0 %v10251
    %11082 = vmatmul.mubr.bf16.gmra.mrb[0].mxu0 %v10250
    %v11083 = vpop.f32.mrb[0].mxu0
    %v11084 = vadd.f32 %v10923, %v11083
    %v11085 = vpop.f32.mrb[0].mxu0
    %v11086 = vpop.f32.mrb[0].mxu0
    %v11087 = vadd.f32 %v10926, %v11086
    %v11088 = vpop.f32.mrb[0].mxu0
    %11089 = vmatprep.mubr.bf16.mxu0 %v10260
    %11090 = vmatmul.mubr.bf16.gmra.mrb[0].mxu0 %v10259
    %v11091 = vpop.f32.mrb[0].mxu0
    %v11092 = vadd.f32 %v10931, %v11091
    %v11093 = vpop.f32.mrb[0].mxu0
    %v11094 = vpop.f32.mrb[0].mxu0
    %v11095 = vadd.f32 %v10934, %v11094
    %v11096 = vpop.f32.mrb[0].mxu0
    %11097 = vmatprep.mubr.bf16.mxu0 %v10269
    %11098 = vmatmul.mubr.bf16.gmra.mrb[0].mxu0 %v10268
    %v11099 = vpop.f32.mrb[0].mxu0
    %v11100 = vadd.f32 %v10939, %v11099
    %v11101 = vpop.f32.mrb[0].mxu0
    %v11102 = vpop.f32.mrb[0].mxu0
    %v11103 = vadd.f32 %v10942, %v11102
    %v11104 = vpop.f32.mrb[0].mxu0
    %11105 = vmatprep.mubr.bf16.mxu0 %v10278
    %11106 = vmatmul.mubr.bf16.gmra.mrb[0].mxu0 %v10277
    %v11107 = vpop.f32.mrb[0].mxu0
    %v11108 = vadd.f32 %v10947, %v11107
    %v11109 = vpop.f32.mrb[0].mxu0
    %v11110 = vpop.f32.mrb[0].mxu0
    %v11111 = vadd.f32 %v10950, %v11110
    %v11112 = vpop.f32.mrb[0].mxu0
    %11113 = vmatprep.mubr.bf16.mxu0 %v10287
    %11114 = vmatmul.mubr.bf16.gmra.mrb[0].mxu0 %v10286
    %v11115 = vpop.f32.mrb[0].mxu0
    %v11116 = vadd.f32 %v10955, %v11115
    %v11117 = vpop.f32.mrb[0].mxu0
    %v11118 = vpop.f32.mrb[0].mxu0
    %v11119 = vadd.f32 %v10958, %v11118
    %v11120 = vpop.f32.mrb[0].mxu0
    %11121 = vmatprep.mubr.bf16.mxu0 %v10296
    %11122 = vmatmul.mubr.bf16.gmra.mrb[0].mxu0 %v10295
    %v11123 = vpop.f32.mrb[0].mxu0
    %v11124 = vadd.f32 %v10963, %v11123
    %v11125 = vpop.f32.mrb[0].mxu0
    %v11126 = vpop.f32.mrb[0].mxu0
    %v11127 = vadd.f32 %v10966, %v11126
    %v11128 = vpop.f32.mrb[0].mxu0
    %11129 = vmatprep.mubr.bf16.mxu0 %v10305
    %11130 = vmatmul.mubr.bf16.gmra.mrb[0].mxu0 %v10304
    %v11131 = vpop.f32.mrb[0].mxu0
    %v11132 = vadd.f32 %v10971, %v11131
    %v11133 = vpop.f32.mrb[0].mxu0
    %v11134 = vpop.f32.mrb[0].mxu0
    %v11135 = vadd.f32 %v10974, %v11134
    %v11136 = vpop.f32.mrb[0].mxu0
    %11137 = vmatprep.mubr.bf16.mxu0 %v10314
    %11138 = vmatmul.mubr.bf16.gmra.mrb[0].mxu0 %v10313
    %v11139 = vpop.f32.mrb[0].mxu0
    %v11140 = vadd.f32 %v10979, %v11139
    %v11141 = vpop.f32.mrb[0].mxu0
    %v11142 = vpop.f32.mrb[0].mxu0
    %v11143 = vadd.f32 %v10982, %v11142
    %v11144 = vpop.f32.mrb[0].mxu0
    %11145 = vmatprep.mubr.bf16.mxu0 %v10323
    %11146 = vmatmul.mubr.bf16.gmra.mrb[0].mxu0 %v10322
    %v11147 = vpop.f32.mrb[0].mxu0
    %v11148 = vadd.f32 %v10987, %v11147
    %v11149 = vpop.f32.mrb[0].mxu0
    %v11150 = vpop.f32.mrb[0].mxu0
    %v11151 = vadd.f32 %v10990, %v11150
    %v11152 = vpop.f32.mrb[0].mxu0
    %11153 = vmatprep.mubr.bf16.mxu0 %v10332
    %11154 = vmatmul.mubr.bf16.gmra.mrb[0].mxu0 %v10331
    %v11155 = vpop.f32.mrb[0].mxu0
    %v11156 = vadd.f32 %v10995, %v11155
    %v11157 = vpop.f32.mrb[0].mxu0
    %v11158 = vpop.f32.mrb[0].mxu0
    %v11159 = vadd.f32 %v10998, %v11158
    %v11160 = vpop.f32.mrb[0].mxu0
    %11161 = vmatprep.mubr.bf16.mxu0 %v10341
    %11162 = vmatmul.mubr.bf16.gmra.mrb[0].mxu0 %v10340
    %v11163 = vpop.f32.mrb[0].mxu0
    %v11164 = vadd.f32 %v11003, %v11163
    %v11165 = vpop.f32.mrb[0].mxu0
    %v11166 = vpop.f32.mrb[0].mxu0
    %v11167 = vadd.f32 %v11006, %v11166
    %v11168 = vpop.f32.mrb[0].mxu0
    %11169 = vmatprep.mubr.bf16.mxu0 %v10350
    %11170 = vmatmul.mubr.bf16.gmra.mrb[0].mxu0 %v10349
    %v11171 = vpop.f32.mrb[0].mxu0
    %v11172 = vadd.f32 %v11011, %v11171
    %v11173 = vpop.f32.mrb[0].mxu0
    %v11174 = vpop.f32.mrb[0].mxu0
    %v11175 = vadd.f32 %v11014, %v11174
    %v11176 = vpop.f32.mrb[0].mxu0
    %11177 = vmatprep.mubr.bf16.mxu0 %v10359
    %11178 = vmatmul.mubr.bf16.gmra.mrb[0].mxu0 %v10358
    %v11179 = vpop.f32.mrb[0].mxu0
    %v11180 = vadd.f32 %v11019, %v11179
    %v11181 = vpop.f32.mrb[0].mxu0
    %v11182 = vpop.f32.mrb[0].mxu0
    %v11183 = vadd.f32 %v11022, %v11182
    %v11184 = vpop.f32.mrb[0].mxu0
    %11185 = vmatprep.mubr.bf16.mxu0 %v10368
    %11186 = vmatmul.mubr.bf16.gmra.mrb[0].mxu0 %v10367
    %v11187 = vpop.f32.mrb[0].mxu0
    %v11188 = vadd.f32 %v11027, %v11187
    %v11189 = vpop.f32.mrb[0].mxu0
    %v11190 = vpop.f32.mrb[0].mxu0
    %v11191 = vadd.f32 %v11030, %v11190
    %v11192 = vpop.f32.mrb[0].mxu0
    %11193 = vmatprep.mubr.bf16.mxu0 %v10377
    %11194 = vmatmul.mubr.bf16.gmra.mrb[0].mxu0 %v10376
    %v11195 = vpop.f32.mrb[0].mxu0
    %v11196 = vadd.f32 %v11035, %v11195
    %v11197 = vpop.f32.mrb[0].mxu0
    %v11198 = vpop.f32.mrb[0].mxu0
    %v11199 = vadd.f32 %v11038, %v11198
    %v11200 = vpop.f32.mrb[0].mxu0
    %11201 = vdwg.mxu0
    %11202 = vmatprep.subr.bf16.mxu0 0
    %11203 = vmatpush1.bf16.msra.mxu0 %v10556
    %11204 = vmatprep.subr.bf16.mxu0 0
    %11205 = vmatpush1.bf16.msra.mxu0 0
    %11206 = vmatprep.subr.bf16.mxu0 0
    %11207 = vmatpush1.bf16.msra.mxu0 0
    %11208 = vmatprep.subr.bf16.mxu0 0
    %11209 = vmatpush1.bf16.msra.mxu0 0
    %11210 = vmatprep.subr.bf16.mxu0 0
    %11211 = vmatpush1.bf16.msra.mxu0 0
    %11212 = vmatprep.subr.bf16.mxu0 0
    %11213 = vmatpush1.bf16.msra.mxu0 0
    %11214 = vmatprep.subr.bf16.mxu0 0
    %11215 = vmatpush1.bf16.msra.mxu0 0
    %11216 = vmatprep.subr.bf16.mxu0 0
    %11217 = vmatpush1.bf16.msra.mxu0 0
    %11218 = vmatprep.subr.bf16.mxu0 0
    %11219 = vmatpush1.bf16.msra.mxu0 0
    %11220 = vmatprep.subr.bf16.mxu0 0
    %11221 = vmatpush1.bf16.msra.mxu0 0
    %11222 = vmatprep.subr.bf16.mxu0 0
    %11223 = vmatpush1.bf16.msra.mxu0 0
    %11224 = vmatprep.subr.bf16.mxu0 0
    %11225 = vmatpush1.bf16.msra.mxu0 0
    %11226 = vmatprep.subr.bf16.mxu0 0
    %11227 = vmatpush1.bf16.msra.mxu0 0
    %11228 = vmatprep.subr.bf16.mxu0 0
    %11229 = vmatpush1.bf16.msra.mxu0 0
    %11230 = vmatprep.subr.bf16.mxu0 0
    %11231 = vmatpush1.bf16.msra.mxu0 0
    %11232 = vmatprep.subr.bf16.mxu0 0
    %11233 = vmatpush1.bf16.msra.mxu0 0
    %11234 = vmatprep.mubr.bf16.mxu0 0
    %11235 = vmatmul.mubr.bf16.gmra.mrb[0].mxu0 %v10508
    %v11236 = vpop.f32.mrb[0].mxu0
    %v11237 = vadd.f32 %v11076, %v11236
    %v11238 = vpop.f32.mrb[0].mxu0
    %v11239 = vpop.f32.mrb[0].mxu0
    %v11240 = vadd.f32 %v11079, %v11239
    %v11241 = vpop.f32.mrb[0].mxu0
    %11242 = vmatprep.mubr.bf16.mxu0 0
    %11243 = vmatmul.mubr.bf16.gmra.mrb[0].mxu0 %v10511
    %v11244 = vpop.f32.mrb[0].mxu0
    %v11245 = vadd.f32 %v11084, %v11244
    %v11246 = vpop.f32.mrb[0].mxu0
    %v11247 = vpop.f32.mrb[0].mxu0
    %v11248 = vadd.f32 %v11087, %v11247
    %v11249 = vpop.f32.mrb[0].mxu0
    %11250 = vmatprep.mubr.bf16.mxu0 0
    %11251 = vmatmul.mubr.bf16.gmra.mrb[0].mxu0 %v10514
    %v11252 = vpop.f32.mrb[0].mxu0
    %v11253 = vadd.f32 %v11092, %v11252
    %v11254 = vpop.f32.mrb[0].mxu0
    %v11255 = vpop.f32.mrb[0].mxu0
    %v11256 = vadd.f32 %v11095, %v11255
    %v11257 = vpop.f32.mrb[0].mxu0
    %11258 = vmatprep.mubr.bf16.mxu0 0
    %11259 = vmatmul.mubr.bf16.gmra.mrb[0].mxu0 %v10517
    %v11260 = vpop.f32.mrb[0].mxu0
    %v11261 = vadd.f32 %v11100, %v11260
    %v11262 = vpop.f32.mrb[0].mxu0
    %v11263 = vpop.f32.mrb[0].mxu0
    %v11264 = vadd.f32 %v11103, %v11263
    %v11265 = vpop.f32.mrb[0].mxu0
    %11266 = vmatprep.mubr.bf16.mxu0 0
    %11267 = vmatmul.mubr.bf16.gmra.mrb[0].mxu0 %v10520
    %v11268 = vpop.f32.mrb[0].mxu0
    %v11269 = vadd.f32 %v11108, %v11268
    %v11270 = vpop.f32.mrb[0].mxu0
    %v11271 = vpop.f32.mrb[0].mxu0
    %v11272 = vadd.f32 %v11111, %v11271
    %v11273 = vpop.f32.mrb[0].mxu0
    %11274 = vmatprep.mubr.bf16.mxu0 0
    %11275 = vmatmul.mubr.bf16.gmra.mrb[0].mxu0 %v10523
    %v11276 = vpop.f32.mrb[0].mxu0
    %v11277 = vadd.f32 %v11116, %v11276
    %v11278 = vpop.f32.mrb[0].mxu0
    %v11279 = vpop.f32.mrb[0].mxu0
    %v11280 = vadd.f32 %v11119, %v11279
    %v11281 = vpop.f32.mrb[0].mxu0
    %11282 = vmatprep.mubr.bf16.mxu0 0
    %11283 = vmatmul.mubr.bf16.gmra.mrb[0].mxu0 %v10526
    %v11284 = vpop.f32.mrb[0].mxu0
    %v11285 = vadd.f32 %v11124, %v11284
    %v11286 = vpop.f32.mrb[0].mxu0
    %v11287 = vpop.f32.mrb[0].mxu0
    %v11288 = vadd.f32 %v11127, %v11287
    %v11289 = vpop.f32.mrb[0].mxu0
    %11290 = vmatprep.mubr.bf16.mxu0 0
    %11291 = vmatmul.mubr.bf16.gmra.mrb[0].mxu0 %v10529
    %v11292 = vpop.f32.mrb[0].mxu0
    %v11293 = vadd.f32 %v11132, %v11292
    %v11294 = vpop.f32.mrb[0].mxu0
    %v11295 = vpop.f32.mrb[0].mxu0
    %v11296 = vadd.f32 %v11135, %v11295
    %v11297 = vpop.f32.mrb[0].mxu0
    %11298 = vmatprep.mubr.bf16.mxu0 0
    %11299 = vmatmul.mubr.bf16.gmra.mrb[0].mxu0 %v10532
    %v11300 = vpop.f32.mrb[0].mxu0
    %v11301 = vadd.f32 %v11140, %v11300
    %v11302 = vpop.f32.mrb[0].mxu0
    %v11303 = vpop.f32.mrb[0].mxu0
    %v11304 = vadd.f32 %v11143, %v11303
    %v11305 = vpop.f32.mrb[0].mxu0
    %11306 = vmatprep.mubr.bf16.mxu0 0
    %11307 = vmatmul.mubr.bf16.gmra.mrb[0].mxu0 %v10535
    %v11308 = vpop.f32.mrb[0].mxu0
    %v11309 = vadd.f32 %v11148, %v11308
    %v11310 = vpop.f32.mrb[0].mxu0
    %v11311 = vpop.f32.mrb[0].mxu0
    %v11312 = vadd.f32 %v11151, %v11311
    %v11313 = vpop.f32.mrb[0].mxu0
    %11314 = vmatprep.mubr.bf16.mxu0 0
    %11315 = vmatmul.mubr.bf16.gmra.mrb[0].mxu0 %v10538
    %v11316 = vpop.f32.mrb[0].mxu0
    %v11317 = vadd.f32 %v11156, %v11316
    %v11318 = vpop.f32.mrb[0].mxu0
    %v11319 = vpop.f32.mrb[0].mxu0
    %v11320 = vadd.f32 %v11159, %v11319
    %v11321 = vpop.f32.mrb[0].mxu0
    %11322 = vmatprep.mubr.bf16.mxu0 0
    %11323 = vmatmul.mubr.bf16.gmra.mrb[0].mxu0 %v10541
    %v11324 = vpop.f32.mrb[0].mxu0
    %v11325 = vadd.f32 %v11164, %v11324
    %v11326 = vpop.f32.mrb[0].mxu0
    %v11327 = vpop.f32.mrb[0].mxu0
    %v11328 = vadd.f32 %v11167, %v11327
    %v11329 = vpop.f32.mrb[0].mxu0
    %11330 = vmatprep.mubr.bf16.mxu0 0
    %11331 = vmatmul.mubr.bf16.gmra.mrb[0].mxu0 %v10544
    %v11332 = vpop.f32.mrb[0].mxu0
    %v11333 = vadd.f32 %v11172, %v11332
    %v11334 = vpop.f32.mrb[0].mxu0
    %v11335 = vpop.f32.mrb[0].mxu0
    %v11336 = vadd.f32 %v11175, %v11335
    %v11337 = vpop.f32.mrb[0].mxu0
    %11338 = vmatprep.mubr.bf16.mxu0 0
    %11339 = vmatmul.mubr.bf16.gmra.mrb[0].mxu0 %v10547
    %v11340 = vpop.f32.mrb[0].mxu0
    %v11341 = vadd.f32 %v11180, %v11340
    %v11342 = vpop.f32.mrb[0].mxu0
    %v11343 = vpop.f32.mrb[0].mxu0
    %v11344 = vadd.f32 %v11183, %v11343
    %v11345 = vpop.f32.mrb[0].mxu0
    %11346 = vmatprep.mubr.bf16.mxu0 0
    %11347 = vmatmul.mubr.bf16.gmra.mrb[0].mxu0 %v10550
    %v11348 = vpop.f32.mrb[0].mxu0
    %v11349 = vadd.f32 %v11188, %v11348
    %v11350 = vpop.f32.mrb[0].mxu0
    %v11351 = vpop.f32.mrb[0].mxu0
    %v11352 = vadd.f32 %v11191, %v11351
    %v11353 = vpop.f32.mrb[0].mxu0
    %11354 = vmatprep.mubr.bf16.mxu0 0
    %11355 = vmatmul.mubr.bf16.gmra.mrb[0].mxu0 %v10553
    %v11356 = vpop.f32.mrb[0].mxu0
    %v11357 = vadd.f32 %v11196, %v11356
    %v11358 = vpop.f32.mrb[0].mxu0
    %v11359 = vpop.f32.mrb[0].mxu0
    %v11360 = vadd.f32 %v11199, %v11359
    %v11361 = vpop.f32.mrb[0].mxu0
    %11362 = vdwg.mxu0
    %v11363 = vmax.f32 %v11237, 0.0
    %v11364 = vmax.f32 %v11240, 0.0
    %v11365 = vmax.f32 %v11245, 0.0
    %v11366 = vmax.f32 %v11248, 0.0
    %v11367 = vmax.f32 %v11253, 0.0
    %v11368 = vmax.f32 %v11256, 0.0
    %v11369 = vmax.f32 %v11261, 0.0
    %v11370 = vmax.f32 %v11264, 0.0
    %v11371 = vmax.f32 %v11269, 0.0
    %v11372 = vmax.f32 %v11272, 0.0
    %v11373 = vmax.f32 %v11277, 0.0
    %v11374 = vmax.f32 %v11280, 0.0
    %v11375 = vmax.f32 %v11285, 0.0
    %v11376 = vmax.f32 %v11288, 0.0
    %v11377 = vmax.f32 %v11293, 0.0
    %v11378 = vmax.f32 %v11296, 0.0
    %v11379 = vmax.f32 %v11301, 0.0
    %v11380 = vmax.f32 %v11304, 0.0
    %v11381 = vmax.f32 %v11309, 0.0
    %v11382 = vmax.f32 %v11312, 0.0
    %v11383 = vmax.f32 %v11317, 0.0
    %v11384 = vmax.f32 %v11320, 0.0
    %v11385 = vmax.f32 %v11325, 0.0
    %v11386 = vmax.f32 %v11328, 0.0
    %v11387 = vmax.f32 %v11333, 0.0
    %v11388 = vmax.f32 %v11336, 0.0
    %v11389 = vmax.f32 %v11341, 0.0
    %v11390 = vmax.f32 %v11344, 0.0
    %v11391 = vmax.f32 %v11349, 0.0
    %v11392 = vmax.f32 %v11352, 0.0
    %v11393 = vmax.f32 %v11357, 0.0
    %v11394 = vmax.f32 %v11360, 0.0
    %vm11395 = vcmask 15360
    %11396 = vst.msk [vmem:[%s22] sm:$0xff] %vm11395, %v11363
    %11397 = vst.msk [vmem:[%s22 + $0x8] sm:$0xff] %vm11395, %v11364
    %11398 = vst.msk [vmem:[%s22 + $0x10] sm:$0xff] %vm11395, %v11365
    %11399 = vst.msk [vmem:[%s22 + $0x18] sm:$0xff] %vm11395, %v11366
    %11400 = vst.msk [vmem:[%s22 + $0x20] sm:$0xff] %vm11395, %v11367
    %11401 = vst.msk [vmem:[%s22 + $0x28] sm:$0xff] %vm11395, %v11368
    %11402 = vst.msk [vmem:[%s22 + $0x30] sm:$0xff] %vm11395, %v11369
    %11403 = vst.msk [vmem:[%s22 + $0x38] sm:$0xff] %vm11395, %v11370
    %11404 = vst.msk [vmem:[%s22 + $0x40] sm:$0xff] %vm11395, %v11371
    %11405 = vst.msk [vmem:[%s22 + $0x48] sm:$0xff] %vm11395, %v11372
    %11406 = vst.msk [vmem:[%s22 + $0x50] sm:$0xff] %vm11395, %v11373
    %11407 = vst.msk [vmem:[%s22 + $0x58] sm:$0xff] %vm11395, %v11374
    %11408 = vst.msk [vmem:[%s22 + $0x60] sm:$0xff] %vm11395, %v11375
    %11409 = vst.msk [vmem:[%s22 + $0x68] sm:$0xff] %vm11395, %v11376
    %11410 = vst.msk [vmem:[%s22 + $0x70] sm:$0xff] %vm11395, %v11377
    %11411 = vst.msk [vmem:[%s22 + $0x78] sm:$0xff] %vm11395, %v11378
    %11412 = vst.msk [vmem:[%s22 + $0x80] sm:$0xff] %vm11395, %v11379
    %11413 = vst.msk [vmem:[%s22 + $0x88] sm:$0xff] %vm11395, %v11380
    %11414 = vst.msk [vmem:[%s22 + $0x90] sm:$0xff] %vm11395, %v11381
    %11415 = vst.msk [vmem:[%s22 + $0x98] sm:$0xff] %vm11395, %v11382
    %11416 = vst.msk [vmem:[%s22 + $0xa0] sm:$0xff] %vm11395, %v11383
    %11417 = vst.msk [vmem:[%s22 + $0xa8] sm:$0xff] %vm11395, %v11384
    %11418 = vst.msk [vmem:[%s22 + $0xb0] sm:$0xff] %vm11395, %v11385
    %11419 = vst.msk [vmem:[%s22 + $0xb8] sm:$0xff] %vm11395, %v11386
    %11420 = vst.msk [vmem:[%s22 + $0xc0] sm:$0xff] %vm11395, %v11387
    %11421 = vst.msk [vmem:[%s22 + $0xc8] sm:$0xff] %vm11395, %v11388
    %11422 = vst.msk [vmem:[%s22 + $0xd0] sm:$0xff] %vm11395, %v11389
    %11423 = vst.msk [vmem:[%s22 + $0xd8] sm:$0xff] %vm11395, %v11390
    %11424 = vst.msk [vmem:[%s22 + $0xe0] sm:$0xff] %vm11395, %v11391
    %11425 = vst.msk [vmem:[%s22 + $0xe8] sm:$0xff] %vm11395, %v11392
    %11426 = vst.msk [vmem:[%s22 + $0xf0] sm:$0xff] %vm11395, %v11393
    %11427 = vst.msk [vmem:[%s22 + $0xf8] sm:$0xff] %vm11395, %v11394
    // Predicated region
    $region126: #{mt_param_model.1} parent=1 // pred_check
      _
    $region127: #{mt_param_model.1} parent=1 // pred_check_branch
      %11429 = sbr.rel (0) target = $region129
    $region128: #{mt_param_model.1} parent=1 // pred_region
      _
    $region129: #{mt_param_model.1} parent=1 // pred_fallthru
      _
    // Predicated region
    $region130: #{mt_param_model.1} parent=1 // pred_check
      _
    $region131: #{mt_param_model.1} parent=1 // pred_check_branch
      %11431 = sbr.rel (0) target = $region133
    $region132: #{mt_param_model.1} parent=1 // pred_region
      _
    $region133: #{mt_param_model.1} parent=1 // pred_fallthru
      _
    %11432 = vsyncpa [#allocation3], 1
    %11433 = vsyncpa [#allocation5], 1
    %11434 = vsyncpa [#allocation8], 1
    %11435 = vsyncpa [#allocation11], 1
    %11436 = vsyncpa [#allocation14], 1

</llo_original>
